<compile_context>
chip_gen: v5e
topology: v5e:2x2
jax: 0.10.0
libtpu: 0.0.40
codegen_flags: <defaults>
</compile_context>

<pallas_src>
import functools

import jax
import jax.numpy as jnp
from jax import lax
from jax.experimental import pallas as pl
from jax.experimental.pallas import tpu as pltpu


def _block_kernel(x_full_ref, x_q_ref,
                  ln1g_ref, ln1b_ref, ln2g_ref, ln2b_ref,
                  wqkv_ref, wp_ref, bp_ref,
                  w1_ref, b1_ref, w2_ref, b2_ref,
                  o_ref, sa_ref, *, num_heads, q_tile):
    qt = pl.program_id(1)
    x_full = x_full_ref[0]                 # (T, E)  f32, full sequence (for K/V)
    x_q = x_q_ref[0]                       # (TQ, E) f32, this step's query rows
    T, E = x_full.shape
    TQ = q_tile
    hs = E // num_heads
    eps = 1e-5

    def layer_norm(v, g, b):               # f32 statistics (biased var, like torch)
        mu = jnp.mean(v, axis=-1, keepdims=True)
        var = jnp.mean((v - mu) * (v - mu), axis=-1, keepdims=True)
        return (v - mu) * lax.rsqrt(var + eps) * g + b

    # ---- self-attention branch ---------------------------------------------
    xn_full = layer_norm(x_full, ln1g_ref[...], ln1b_ref[...])   # (T, E)
    xn_q = layer_norm(x_q, ln1g_ref[...], ln1b_ref[...])         # (TQ, E)

    wqkv = wqkv_ref[...]                                         # (E, 3E) bf16
    # NOTE: PyTorch scales by the embedding dim C (= E), not head_size.
    scale = float(E) ** -0.5
    # Fused projections: bf16 MXU operands, f32 accumulate; scale folded into q.
    q = jnp.dot(xn_q.astype(jnp.bfloat16), wqkv[:, :E],
                preferred_element_type=jnp.float32) * scale      # (TQ, E)
    kv = jnp.dot(xn_full.astype(jnp.bfloat16), wqkv[:, E:],
                 preferred_element_type=jnp.float32)             # (T, 2E)
    k = kv[:, :E]
    v = kv[:, E:]

    # Causal mask generated in-kernel (saves T*T*4B of HBM traffic + VMEM).
    q0 = qt * TQ
    rows = q0 + lax.broadcasted_iota(jnp.int32, (TQ, T), 0)
    cols = lax.broadcasted_iota(jnp.int32, (TQ, T), 1)
    causal = cols <= rows
    neg = jnp.float32(-1e30)

    # Per-head attention; head results written into VMEM scratch slice stores
    # (no cross-lane concatenate). Attention math kept in f32 (v5e-safe).
    for h in range(num_heads):
        qh = q[:, h * hs:(h + 1) * hs]                           # (TQ, hs)
        kh = k[:, h * hs:(h + 1) * hs]                           # (T, hs)
        vh = v[:, h * hs:(h + 1) * hs]                           # (T, hs)
        # q @ k^T without materializing a transpose: contract last axes.
        att = lax.dot_general(qh, kh, (((1,), (1,)), ((), ())),
                              preferred_element_type=jnp.float32)  # (TQ, T)
        att = jnp.where(causal, att, neg)
        m = jnp.max(att, axis=-1, keepdims=True)
        e = jnp.exp(att - m)
        denom = jnp.sum(e, axis=-1, keepdims=True)
        p = e * pl.reciprocal(denom, approx=True)                # EUP reciprocal
        sa_ref[:, h * hs:(h + 1) * hs] = jnp.dot(
            p, vh, preferred_element_type=jnp.float32)

    sa = jnp.dot(sa_ref[...].astype(jnp.bfloat16), wp_ref[...],
                 preferred_element_type=jnp.float32) + bp_ref[...]
    x1 = x_q + sa                                                # residual 1

    # ---- feed-forward branch -------------------------------------------------
    xn2 = layer_norm(x1, ln2g_ref[...], ln2b_ref[...])
    h1 = jnp.dot(xn2.astype(jnp.bfloat16), w1_ref[...],
                 preferred_element_type=jnp.float32) + b1_ref[...]
    h1 = jnp.maximum(h1, 0.0)                                    # ReLU
    ff = jnp.dot(h1.astype(jnp.bfloat16), w2_ref[...],
                 preferred_element_type=jnp.float32) + b2_ref[...]

    o_ref[0] = x1 + ff                                           # residual 2


def block_forward(x, params, *, num_heads, q_tile=None):
    B, T, E = x.shape
    (ln1g, ln1b, ln2g, ln2b, wqkv, wp, bp, w1, b1, w2, b2) = params

    if q_tile is None:
        q_tile = T if T <= 128 else 128
    assert T % q_tile == 0, "T must be a multiple of the query tile"
    nqt = T // q_tile

    rep = lambda shp: pl.BlockSpec(shp, lambda b, qt: (0,) * len(shp))
    kernel = functools.partial(_block_kernel, num_heads=num_heads, q_tile=q_tile)

    return pl.pallas_call(
        kernel,
        out_shape=jax.ShapeDtypeStruct((B, T, E), jnp.float32),
        grid=(B, nqt),
        in_specs=[
            pl.BlockSpec((1, T, E), lambda b, qt: (b, 0, 0)),        # x (full, K/V)
            pl.BlockSpec((1, q_tile, E), lambda b, qt: (b, qt, 0)),  # x (query tile)
            rep((1, E)), rep((1, E)),                                # ln1 gamma/beta
            rep((1, E)), rep((1, E)),                                # ln2 gamma/beta
            rep((E, 3 * E)),                                         # fused Wqkv (bf16)
            rep((E, E)), rep((1, E)),                                # Wproj (bf16), bproj
            rep((E, 4 * E)), rep((1, 4 * E)),                        # W1 (bf16), b1
            rep((4 * E, E)), rep((1, E)),                            # W2 (bf16), b2
        ],
        out_specs=pl.BlockSpec((1, q_tile, E), lambda b, qt: (b, qt, 0)),
        scratch_shapes=[pltpu.VMEM((q_tile, E), jnp.float32)],       # head outputs
        compiler_params=pltpu.CompilerParams(
            dimension_semantics=("parallel", "parallel"),
            vmem_limit_bytes=32 * 1024 * 1024),
    )(x, x, ln1g, ln1b, ln2g, ln2b, wqkv, wp, bp, w1, b1, w2, b2)


def block_reference(x, params, *, num_heads):
    """Plain-JAX reference mirroring the PyTorch forward (dropout = identity)."""
    (ln1g, ln1b, ln2g, ln2b, wqkv, wp, bp, w1, b1, w2, b2) = params
    B, T, E = x.shape
    hs = E // num_heads

    def ln(v, g, b):
        mu = v.mean(-1, keepdims=True)
        var = ((v - mu) ** 2).mean(-1, keepdims=True)
        return (v - mu) / jnp.sqrt(var + 1e-5) * g + b

    mm = lambda a, w: jnp.dot(a.astype(jnp.bfloat16), w,
                              preferred_element_type=jnp.float32)

    xn1 = ln(x, ln1g, ln1b)
    qkv = mm(xn1, wqkv)                                   # (B, T, 3E)
    q = qkv[..., :E] * (float(E) ** -0.5)
    k = qkv[..., E:2 * E]
    v = qkv[..., 2 * E:]
    mask = jnp.tril(jnp.ones((T, T), dtype=bool))
    outs = []
    for h in range(num_heads):
        qh, kh, vh = (t[..., h * hs:(h + 1) * hs] for t in (q, k, v))
        att = jnp.einsum("btd,bsd->bts", qh, kh,
                         precision=lax.Precision.HIGHEST)
        att = jnp.where(mask[None], att, -1e30)
        att = jax.nn.softmax(att, axis=-1)
        outs.append(jnp.einsum("bts,bsd->btd", att, vh,
                               precision=lax.Precision.HIGHEST))
    sa = mm(jnp.concatenate(outs, axis=-1), wp) + bp
    x1 = x + sa
    xn2 = ln(x1, ln2g, ln2b)
    ff = mm(jnp.maximum(mm(xn2, w1) + b1, 0.0), w2) + b2
    return x1 + ff


def make_params(key, embed_size):
    E = embed_size
    ks = jax.random.split(key, 9)
    n = lambda k, shp: (0.08 * jax.random.normal(k, shp)).astype(jnp.float32)
    ln1g = jnp.ones((1, E), jnp.float32)
    ln1b = jnp.zeros((1, E), jnp.float32)
    ln2g = jnp.ones((1, E), jnp.float32)
    ln2b = jnp.zeros((1, E), jnp.float32)
    wq, wk, wv = n(ks[0], (E, E)), n(ks[1], (E, E)), n(ks[2], (E, E))
    wqkv = jnp.concatenate([wq, wk, wv], axis=1).astype(jnp.bfloat16)  # (E, 3E)
    wp = n(ks[3], (E, E)).astype(jnp.bfloat16)
    bp = n(ks[4], (1, E))
    w1 = n(ks[5], (E, 4 * E)).astype(jnp.bfloat16)
    b1 = n(ks[6], (1, 4 * E))
    w2 = n(ks[7], (4 * E, E)).astype(jnp.bfloat16)
    b2 = n(ks[8], (1, E))
    return (ln1g, ln1b, ln2g, ln2b, wqkv, wp, bp, w1, b1, w2, b2)


if __name__ == "__main__":
    # Lane-friendly small config: E multiple of 128, T split into two 128-row
    # query tiles so the (B, T//TQ) grid and causal tile offsets are exercised.
    B, T, E, H = 2, 256, 128, 4
    key = jax.random.PRNGKey(0)
    kx, kp = jax.random.split(key)
    x = jax.random.normal(kx, (B, T, E), dtype=jnp.float32)
    params = make_params(kp, E)

    out = jax.block_until_ready(block_forward(x, params, num_heads=H))
    ref = block_reference(x, params, num_heads=H)

    assert out.shape == (B, T, E)
    max_err = float(jnp.max(jnp.abs(out - ref)))
    assert jnp.allclose(out, ref, rtol=1e-2, atol=1e-2), max_err
    print("KERNEL_OK")
</pallas_src>

<mosaic_0001>
module attributes {stable_mosaic.version = 11 : i64} {
  func.func @_block_kernel(%arg0: i32, %arg1: i32, %arg2: memref<1x256x128xf32, #tpu.memory_space<vmem>>, %arg3: memref<1x128x128xf32, #tpu.memory_space<vmem>>, %arg4: memref<1x128xf32, #tpu.memory_space<vmem>>, %arg5: memref<1x128xf32, #tpu.memory_space<vmem>>, %arg6: memref<1x128xf32, #tpu.memory_space<vmem>>, %arg7: memref<1x128xf32, #tpu.memory_space<vmem>>, %arg8: memref<128x384xbf16, #tpu.memory_space<vmem>>, %arg9: memref<128x128xbf16, #tpu.memory_space<vmem>>, %arg10: memref<1x128xf32, #tpu.memory_space<vmem>>, %arg11: memref<128x512xbf16, #tpu.memory_space<vmem>>, %arg12: memref<1x512xf32, #tpu.memory_space<vmem>>, %arg13: memref<512x128xbf16, #tpu.memory_space<vmem>>, %arg14: memref<1x128xf32, #tpu.memory_space<vmem>>, %arg15: memref<1x128x128xf32, #tpu.memory_space<vmem>>, %arg16: memref<128x128xf32, #tpu.memory_space<vmem>>) attributes {dimension_semantics = [#tpu.dimension_semantics<parallel>, #tpu.dimension_semantics<parallel>], iteration_bounds = array<i64: 2, 2>, scalar_prefetch = 0 : i64, scratch_operands = 1 : i64, tpu.core_type = #tpu.core_type<tc>, window_params = [{transform_indices = @transform_0, window_bounds = array<i64: 1, 256, 128>}, {transform_indices = @transform_1, window_bounds = array<i64: 1, 128, 128>}, {pipeline_mode = #tpu.pipeline_mode<synchronous>, transform_indices = @transform_2, window_bounds = array<i64: 1, 128>}, {pipeline_mode = #tpu.pipeline_mode<synchronous>, transform_indices = @transform_3, window_bounds = array<i64: 1, 128>}, {pipeline_mode = #tpu.pipeline_mode<synchronous>, transform_indices = @transform_4, window_bounds = array<i64: 1, 128>}, {pipeline_mode = #tpu.pipeline_mode<synchronous>, transform_indices = @transform_5, window_bounds = array<i64: 1, 128>}, {pipeline_mode = #tpu.pipeline_mode<synchronous>, transform_indices = @transform_6, window_bounds = array<i64: 128, 384>}, {pipeline_mode = #tpu.pipeline_mode<synchronous>, transform_indices = @transform_7, window_bounds = array<i64: 128, 128>}, {pipeline_mode = #tpu.pipeline_mode<synchronous>, transform_indices = @transform_8, window_bounds = array<i64: 1, 128>}, {pipeline_mode = #tpu.pipeline_mode<synchronous>, transform_indices = @transform_9, window_bounds = array<i64: 128, 512>}, {pipeline_mode = #tpu.pipeline_mode<synchronous>, transform_indices = @transform_10, window_bounds = array<i64: 1, 512>}, {pipeline_mode = #tpu.pipeline_mode<synchronous>, transform_indices = @transform_11, window_bounds = array<i64: 512, 128>}, {pipeline_mode = #tpu.pipeline_mode<synchronous>, transform_indices = @transform_12, window_bounds = array<i64: 1, 128>}, {transform_indices = @transform_13, window_bounds = array<i64: 1, 128, 128>}]} {
    %c0 = arith.constant 0 : index
    %c0_0 = arith.constant 0 : index
    %c0_1 = arith.constant 0 : index
    %0 = vector.load %arg2[%c0, %c0_0, %c0_1] : memref<1x256x128xf32, #tpu.memory_space<vmem>>, vector<1x256x128xf32>
    %1 = vector.shape_cast %0 : vector<1x256x128xf32> to vector<256x128xf32>
    %c0_2 = arith.constant 0 : index
    %c0_3 = arith.constant 0 : index
    %c0_4 = arith.constant 0 : index
    %2 = vector.load %arg3[%c0_2, %c0_3, %c0_4] : memref<1x128x128xf32, #tpu.memory_space<vmem>>, vector<1x128x128xf32>
    %3 = vector.shape_cast %2 : vector<1x128x128xf32> to vector<128x128xf32>
    %c0_5 = arith.constant 0 : index
    %c0_6 = arith.constant 0 : index
    %4 = vector.load %arg4[%c0_5, %c0_6] : memref<1x128xf32, #tpu.memory_space<vmem>>, vector<1x128xf32>
    %c0_7 = arith.constant 0 : index
    %c0_8 = arith.constant 0 : index
    %5 = vector.load %arg5[%c0_7, %c0_8] : memref<1x128xf32, #tpu.memory_space<vmem>>, vector<1x128xf32>
    %cst = arith.constant dense<0.000000e+00> : vector<256xf32>
    %6 = vector.multi_reduction <add>, %1, %cst [1] : vector<256x128xf32> to vector<256xf32>
    %7 = vector.shape_cast %6 : vector<256xf32> to vector<256x1xf32>
    %cst_9 = arith.constant 1.280000e+02 : f32
    %8 = vector.broadcast %cst_9 : f32 to vector<256x1xf32>
    %9 = arith.divf %7, %8 : vector<256x1xf32>
    %10 = vector.broadcast %9 : vector<256x1xf32> to vector<256x128xf32>
    %11 = arith.subf %1, %10 : vector<256x128xf32>
    %12 = vector.broadcast %9 : vector<256x1xf32> to vector<256x128xf32>
    %13 = arith.subf %1, %12 : vector<256x128xf32>
    %14 = arith.mulf %11, %13 : vector<256x128xf32>
    %cst_10 = arith.constant dense<0.000000e+00> : vector<256xf32>
    %15 = vector.multi_reduction <add>, %14, %cst_10 [1] : vector<256x128xf32> to vector<256xf32>
    %16 = vector.shape_cast %15 : vector<256xf32> to vector<256x1xf32>
    %cst_11 = arith.constant 1.280000e+02 : f32
    %17 = vector.broadcast %cst_11 : f32 to vector<256x1xf32>
    %18 = arith.divf %16, %17 : vector<256x1xf32>
    %19 = vector.broadcast %9 : vector<256x1xf32> to vector<256x128xf32>
    %20 = arith.subf %1, %19 : vector<256x128xf32>
    %cst_12 = arith.constant 9.99999974E-6 : f32
    %21 = vector.broadcast %cst_12 : f32 to vector<256x1xf32>
    %22 = arith.addf %18, %21 : vector<256x1xf32>
    %23 = math.rsqrt %22 : vector<256x1xf32>
    %24 = vector.broadcast %23 : vector<256x1xf32> to vector<256x128xf32>
    %25 = arith.mulf %20, %24 : vector<256x128xf32>
    %26 = vector.broadcast %4 : vector<1x128xf32> to vector<256x128xf32>
    %27 = arith.mulf %25, %26 : vector<256x128xf32>
    %28 = vector.broadcast %5 : vector<1x128xf32> to vector<256x128xf32>
    %29 = arith.addf %27, %28 : vector<256x128xf32>
    %c0_13 = arith.constant 0 : index
    %c0_14 = arith.constant 0 : index
    %30 = vector.load %arg4[%c0_13, %c0_14] : memref<1x128xf32, #tpu.memory_space<vmem>>, vector<1x128xf32>
    %c0_15 = arith.constant 0 : index
    %c0_16 = arith.constant 0 : index
    %31 = vector.load %arg5[%c0_15, %c0_16] : memref<1x128xf32, #tpu.memory_space<vmem>>, vector<1x128xf32>
    %cst_17 = arith.constant dense<0.000000e+00> : vector<128xf32>
    %32 = vector.multi_reduction <add>, %3, %cst_17 [1] : vector<128x128xf32> to vector<128xf32>
    %33 = vector.shape_cast %32 : vector<128xf32> to vector<128x1xf32>
    %cst_18 = arith.constant 1.280000e+02 : f32
    %34 = vector.broadcast %cst_18 : f32 to vector<128x1xf32>
    %35 = arith.divf %33, %34 : vector<128x1xf32>
    %36 = vector.broadcast %35 : vector<128x1xf32> to vector<128x128xf32>
    %37 = arith.subf %3, %36 : vector<128x128xf32>
    %38 = vector.broadcast %35 : vector<128x1xf32> to vector<128x128xf32>
    %39 = arith.subf %3, %38 : vector<128x128xf32>
    %40 = arith.mulf %37, %39 : vector<128x128xf32>
    %cst_19 = arith.constant dense<0.000000e+00> : vector<128xf32>
    %41 = vector.multi_reduction <add>, %40, %cst_19 [1] : vector<128x128xf32> to vector<128xf32>
    %42 = vector.shape_cast %41 : vector<128xf32> to vector<128x1xf32>
    %cst_20 = arith.constant 1.280000e+02 : f32
    %43 = vector.broadcast %cst_20 : f32 to vector<128x1xf32>
    %44 = arith.divf %42, %43 : vector<128x1xf32>
    %45 = vector.broadcast %35 : vector<128x1xf32> to vector<128x128xf32>
    %46 = arith.subf %3, %45 : vector<128x128xf32>
    %cst_21 = arith.constant 9.99999974E-6 : f32
    %47 = vector.broadcast %cst_21 : f32 to vector<128x1xf32>
    %48 = arith.addf %44, %47 : vector<128x1xf32>
    %49 = math.rsqrt %48 : vector<128x1xf32>
    %50 = vector.broadcast %49 : vector<128x1xf32> to vector<128x128xf32>
    %51 = arith.mulf %46, %50 : vector<128x128xf32>
    %52 = vector.broadcast %30 : vector<1x128xf32> to vector<128x128xf32>
    %53 = arith.mulf %51, %52 : vector<128x128xf32>
    %54 = vector.broadcast %31 : vector<1x128xf32> to vector<128x128xf32>
    %55 = arith.addf %53, %54 : vector<128x128xf32>
    %c0_22 = arith.constant 0 : index
    %c0_23 = arith.constant 0 : index
    %56 = vector.load %arg8[%c0_22, %c0_23] : memref<128x384xbf16, #tpu.memory_space<vmem>>, vector<128x384xbf16>
    %57 = arith.truncf %55 : vector<128x128xf32> to vector<128x128xbf16>
    %58 = vector.extract_strided_slice %56 {offsets = [0, 0], sizes = [128, 128], strides = [1, 1]} : vector<128x384xbf16> to vector<128x128xbf16>
    %cst_24 = arith.constant dense<0.000000e+00> : vector<128x128xf32>
    %59 = tpu.matmul %57, %58, %cst_24 {dimension_numbers = #tpu.dot_dimension_numbers<[1], [0], [0], [1], [0, 0, 1, 1], [], []>} : vector<128x128xbf16>, vector<128x128xbf16>, vector<128x128xf32> -> vector<128x128xf32>
    %cst_25 = arith.constant 0.0883883461 : f32
    %60 = vector.broadcast %cst_25 : f32 to vector<128x128xf32>
    %61 = arith.mulf %59, %60 : vector<128x128xf32>
    %62 = arith.truncf %29 : vector<256x128xf32> to vector<256x128xbf16>
    %63 = vector.extract_strided_slice %56 {offsets = [0, 128], sizes = [128, 256], strides = [1, 1]} : vector<128x384xbf16> to vector<128x256xbf16>
    %cst_26 = arith.constant dense<0.000000e+00> : vector<256x256xf32>
    %64 = tpu.matmul %62, %63, %cst_26 {dimension_numbers = #tpu.dot_dimension_numbers<[1], [0], [0], [1], [0, 0, 1, 1], [], []>} : vector<256x128xbf16>, vector<128x256xbf16>, vector<256x256xf32> -> vector<256x256xf32>
    %65 = vector.extract_strided_slice %64 {offsets = [0, 0], sizes = [256, 128], strides = [1, 1]} : vector<256x256xf32> to vector<256x128xf32>
    %66 = vector.extract_strided_slice %64 {offsets = [0, 128], sizes = [256, 128], strides = [1, 1]} : vector<256x256xf32> to vector<256x128xf32>
    %c128_i32 = arith.constant 128 : i32
    %67 = arith.muli %arg1, %c128_i32 : i32
    %68 = tpu.iota {dimensions = array<i32: 0>} : vector<128x256xi32>
    %69 = vector.broadcast %67 : i32 to vector<128x256xi32>
    %70 = arith.addi %69, %68 : vector<128x256xi32>
    %71 = tpu.iota {dimensions = array<i32: 1>} : vector<128x256xi32>
    %72 = arith.cmpi sle, %71, %70 : vector<128x256xi32>
    %73 = vector.extract_strided_slice %61 {offsets = [0, 0], sizes = [128, 32], strides = [1, 1]} : vector<128x128xf32> to vector<128x32xf32>
    %74 = vector.extract_strided_slice %65 {offsets = [0, 0], sizes = [256, 32], strides = [1, 1]} : vector<256x128xf32> to vector<256x32xf32>
    %75 = vector.extract_strided_slice %66 {offsets = [0, 0], sizes = [256, 32], strides = [1, 1]} : vector<256x128xf32> to vector<256x32xf32>
    %cst_27 = arith.constant dense<0.000000e+00> : vector<128x256xf32>
    %76 = tpu.matmul %73, %74, %cst_27 {dimension_numbers = #tpu.dot_dimension_numbers<[1], [1], [0], [0], [0, 0, 1, 0], [], []>} : vector<128x32xf32>, vector<256x32xf32>, vector<128x256xf32> -> vector<128x256xf32>
    %cst_28 = arith.constant -1.000000e+30 : f32
    %77 = vector.broadcast %cst_28 : f32 to vector<128x256xf32>
    %78 = arith.select %72, %76, %77 : vector<128x256xi1>, vector<128x256xf32>
    %cst_29 = arith.constant dense<0xFF800000> : vector<128xf32>
    %79 = vector.multi_reduction <maximumf>, %78, %cst_29 [1] : vector<128x256xf32> to vector<128xf32>
    %80 = vector.shape_cast %79 : vector<128xf32> to vector<128x1xf32>
    %81 = vector.broadcast %80 : vector<128x1xf32> to vector<128x256xf32>
    %82 = arith.subf %78, %81 : vector<128x256xf32>
    %83 = math.exp %82 : vector<128x256xf32>
    %cst_30 = arith.constant dense<0.000000e+00> : vector<128xf32>
    %84 = vector.multi_reduction <add>, %83, %cst_30 [1] : vector<128x256xf32> to vector<128xf32>
    %85 = vector.shape_cast %84 : vector<128xf32> to vector<128x1xf32>
    %86 = tpu.reciprocal %85 {approx = true} : vector<128x1xf32> -> vector<128x1xf32>
    %87 = vector.broadcast %86 : vector<128x1xf32> to vector<128x256xf32>
    %88 = arith.mulf %83, %87 : vector<128x256xf32>
    %cst_31 = arith.constant dense<0.000000e+00> : vector<128x32xf32>
    %89 = tpu.matmul %88, %75, %cst_31 {dimension_numbers = #tpu.dot_dimension_numbers<[1], [0], [0], [1], [0, 0, 1, 1], [], []>} : vector<128x256xf32>, vector<256x32xf32>, vector<128x32xf32> -> vector<128x32xf32>
    %c0_32 = arith.constant 0 : index
    %c0_33 = arith.constant 0 : index
    %90 = vector.load %arg16[%c0_32, %c0_33] : memref<128x128xf32, #tpu.memory_space<vmem>>, vector<128x32xf32>
    tpu.vector_store %arg16[%c0_32, %c0_33], %89 {strides = array<i32>} : memref<128x128xf32, #tpu.memory_space<vmem>>, vector<128x32xf32>,
    %91 = vector.extract_strided_slice %61 {offsets = [0, 32], sizes = [128, 32], strides = [1, 1]} : vector<128x128xf32> to vector<128x32xf32>
    %92 = vector.extract_strided_slice %65 {offsets = [0, 32], sizes = [256, 32], strides = [1, 1]} : vector<256x128xf32> to vector<256x32xf32>
    %93 = vector.extract_strided_slice %66 {offsets = [0, 32], sizes = [256, 32], strides = [1, 1]} : vector<256x128xf32> to vector<256x32xf32>
    %cst_34 = arith.constant dense<0.000000e+00> : vector<128x256xf32>
    %94 = tpu.matmul %91, %92, %cst_34 {dimension_numbers = #tpu.dot_dimension_numbers<[1], [1], [0], [0], [0, 0, 1, 0], [], []>} : vector<128x32xf32>, vector<256x32xf32>, vector<128x256xf32> -> vector<128x256xf32>
    %cst_35 = arith.constant -1.000000e+30 : f32
    %95 = vector.broadcast %cst_35 : f32 to vector<128x256xf32>
    %96 = arith.select %72, %94, %95 : vector<128x256xi1>, vector<128x256xf32>
    %cst_36 = arith.constant dense<0xFF800000> : vector<128xf32>
    %97 = vector.multi_reduction <maximumf>, %96, %cst_36 [1] : vector<128x256xf32> to vector<128xf32>
    %98 = vector.shape_cast %97 : vector<128xf32> to vector<128x1xf32>
    %99 = vector.broadcast %98 : vector<128x1xf32> to vector<128x256xf32>
    %100 = arith.subf %96, %99 : vector<128x256xf32>
    %101 = math.exp %100 : vector<128x256xf32>
    %cst_37 = arith.constant dense<0.000000e+00> : vector<128xf32>
    %102 = vector.multi_reduction <add>, %101, %cst_37 [1] : vector<128x256xf32> to vector<128xf32>
    %103 = vector.shape_cast %102 : vector<128xf32> to vector<128x1xf32>
    %104 = tpu.reciprocal %103 {approx = true} : vector<128x1xf32> -> vector<128x1xf32>
    %105 = vector.broadcast %104 : vector<128x1xf32> to vector<128x256xf32>
    %106 = arith.mulf %101, %105 : vector<128x256xf32>
    %cst_38 = arith.constant dense<0.000000e+00> : vector<128x32xf32>
    %107 = tpu.matmul %106, %93, %cst_38 {dimension_numbers = #tpu.dot_dimension_numbers<[1], [0], [0], [1], [0, 0, 1, 1], [], []>} : vector<128x256xf32>, vector<256x32xf32>, vector<128x32xf32> -> vector<128x32xf32>
    %c0_39 = arith.constant 0 : index
    %c32 = arith.constant 32 : index
    %108 = vector.load %arg16[%c0_39, %c32] : memref<128x128xf32, #tpu.memory_space<vmem>>, vector<128x32xf32>
    tpu.vector_store %arg16[%c0_39, %c32], %107 {strides = array<i32>} : memref<128x128xf32, #tpu.memory_space<vmem>>, vector<128x32xf32>,
    %109 = vector.extract_strided_slice %61 {offsets = [0, 64], sizes = [128, 32], strides = [1, 1]} : vector<128x128xf32> to vector<128x32xf32>
    %110 = vector.extract_strided_slice %65 {offsets = [0, 64], sizes = [256, 32], strides = [1, 1]} : vector<256x128xf32> to vector<256x32xf32>
    %111 = vector.extract_strided_slice %66 {offsets = [0, 64], sizes = [256, 32], strides = [1, 1]} : vector<256x128xf32> to vector<256x32xf32>
    %cst_40 = arith.constant dense<0.000000e+00> : vector<128x256xf32>
    %112 = tpu.matmul %109, %110, %cst_40 {dimension_numbers = #tpu.dot_dimension_numbers<[1], [1], [0], [0], [0, 0, 1, 0], [], []>} : vector<128x32xf32>, vector<256x32xf32>, vector<128x256xf32> -> vector<128x256xf32>
    %cst_41 = arith.constant -1.000000e+30 : f32
    %113 = vector.broadcast %cst_41 : f32 to vector<128x256xf32>
    %114 = arith.select %72, %112, %113 : vector<128x256xi1>, vector<128x256xf32>
    %cst_42 = arith.constant dense<0xFF800000> : vector<128xf32>
    %115 = vector.multi_reduction <maximumf>, %114, %cst_42 [1] : vector<128x256xf32> to vector<128xf32>
    %116 = vector.shape_cast %115 : vector<128xf32> to vector<128x1xf32>
    %117 = vector.broadcast %116 : vector<128x1xf32> to vector<128x256xf32>
    %118 = arith.subf %114, %117 : vector<128x256xf32>
    %119 = math.exp %118 : vector<128x256xf32>
    %cst_43 = arith.constant dense<0.000000e+00> : vector<128xf32>
    %120 = vector.multi_reduction <add>, %119, %cst_43 [1] : vector<128x256xf32> to vector<128xf32>
    %121 = vector.shape_cast %120 : vector<128xf32> to vector<128x1xf32>
    %122 = tpu.reciprocal %121 {approx = true} : vector<128x1xf32> -> vector<128x1xf32>
    %123 = vector.broadcast %122 : vector<128x1xf32> to vector<128x256xf32>
    %124 = arith.mulf %119, %123 : vector<128x256xf32>
    %cst_44 = arith.constant dense<0.000000e+00> : vector<128x32xf32>
    %125 = tpu.matmul %124, %111, %cst_44 {dimension_numbers = #tpu.dot_dimension_numbers<[1], [0], [0], [1], [0, 0, 1, 1], [], []>} : vector<128x256xf32>, vector<256x32xf32>, vector<128x32xf32> -> vector<128x32xf32>
    %c0_45 = arith.constant 0 : index
    %c64 = arith.constant 64 : index
    %126 = vector.load %arg16[%c0_45, %c64] : memref<128x128xf32, #tpu.memory_space<vmem>>, vector<128x32xf32>
    tpu.vector_store %arg16[%c0_45, %c64], %125 {strides = array<i32>} : memref<128x128xf32, #tpu.memory_space<vmem>>, vector<128x32xf32>,
    %127 = vector.extract_strided_slice %61 {offsets = [0, 96], sizes = [128, 32], strides = [1, 1]} : vector<128x128xf32> to vector<128x32xf32>
    %128 = vector.extract_strided_slice %65 {offsets = [0, 96], sizes = [256, 32], strides = [1, 1]} : vector<256x128xf32> to vector<256x32xf32>
    %129 = vector.extract_strided_slice %66 {offsets = [0, 96], sizes = [256, 32], strides = [1, 1]} : vector<256x128xf32> to vector<256x32xf32>
    %cst_46 = arith.constant dense<0.000000e+00> : vector<128x256xf32>
    %130 = tpu.matmul %127, %128, %cst_46 {dimension_numbers = #tpu.dot_dimension_numbers<[1], [1], [0], [0], [0, 0, 1, 0], [], []>} : vector<128x32xf32>, vector<256x32xf32>, vector<128x256xf32> -> vector<128x256xf32>
    %cst_47 = arith.constant -1.000000e+30 : f32
    %131 = vector.broadcast %cst_47 : f32 to vector<128x256xf32>
    %132 = arith.select %72, %130, %131 : vector<128x256xi1>, vector<128x256xf32>
    %cst_48 = arith.constant dense<0xFF800000> : vector<128xf32>
    %133 = vector.multi_reduction <maximumf>, %132, %cst_48 [1] : vector<128x256xf32> to vector<128xf32>
    %134 = vector.shape_cast %133 : vector<128xf32> to vector<128x1xf32>
    %135 = vector.broadcast %134 : vector<128x1xf32> to vector<128x256xf32>
    %136 = arith.subf %132, %135 : vector<128x256xf32>
    %137 = math.exp %136 : vector<128x256xf32>
    %cst_49 = arith.constant dense<0.000000e+00> : vector<128xf32>
    %138 = vector.multi_reduction <add>, %137, %cst_49 [1] : vector<128x256xf32> to vector<128xf32>
    %139 = vector.shape_cast %138 : vector<128xf32> to vector<128x1xf32>
    %140 = tpu.reciprocal %139 {approx = true} : vector<128x1xf32> -> vector<128x1xf32>
    %141 = vector.broadcast %140 : vector<128x1xf32> to vector<128x256xf32>
    %142 = arith.mulf %137, %141 : vector<128x256xf32>
    %cst_50 = arith.constant dense<0.000000e+00> : vector<128x32xf32>
    %143 = tpu.matmul %142, %129, %cst_50 {dimension_numbers = #tpu.dot_dimension_numbers<[1], [0], [0], [1], [0, 0, 1, 1], [], []>} : vector<128x256xf32>, vector<256x32xf32>, vector<128x32xf32> -> vector<128x32xf32>
    %c0_51 = arith.constant 0 : index
    %c96 = arith.constant 96 : index
    %144 = vector.load %arg16[%c0_51, %c96] : memref<128x128xf32, #tpu.memory_space<vmem>>, vector<128x32xf32>
    tpu.vector_store %arg16[%c0_51, %c96], %143 {strides = array<i32>} : memref<128x128xf32, #tpu.memory_space<vmem>>, vector<128x32xf32>,
    %c0_52 = arith.constant 0 : index
    %c0_53 = arith.constant 0 : index
    %145 = vector.load %arg16[%c0_52, %c0_53] : memref<128x128xf32, #tpu.memory_space<vmem>>, vector<128x128xf32>
    %146 = arith.truncf %145 : vector<128x128xf32> to vector<128x128xbf16>
    %c0_54 = arith.constant 0 : index
    %c0_55 = arith.constant 0 : index
    %147 = vector.load %arg9[%c0_54, %c0_55] : memref<128x128xbf16, #tpu.memory_space<vmem>>, vector<128x128xbf16>
    %cst_56 = arith.constant dense<0.000000e+00> : vector<128x128xf32>
    %148 = tpu.matmul %146, %147, %cst_56 {dimension_numbers = #tpu.dot_dimension_numbers<[1], [0], [0], [1], [0, 0, 1, 1], [], []>} : vector<128x128xbf16>, vector<128x128xbf16>, vector<128x128xf32> -> vector<128x128xf32>
    %c0_57 = arith.constant 0 : index
    %c0_58 = arith.constant 0 : index
    %149 = vector.load %arg10[%c0_57, %c0_58] : memref<1x128xf32, #tpu.memory_space<vmem>>, vector<1x128xf32>
    %150 = vector.broadcast %149 : vector<1x128xf32> to vector<128x128xf32>
    %151 = arith.addf %148, %150 : vector<128x128xf32>
    %152 = arith.addf %3, %151 : vector<128x128xf32>
    %c0_59 = arith.constant 0 : index
    %c0_60 = arith.constant 0 : index
    %153 = vector.load %arg6[%c0_59, %c0_60] : memref<1x128xf32, #tpu.memory_space<vmem>>, vector<1x128xf32>
    %c0_61 = arith.constant 0 : index
    %c0_62 = arith.constant 0 : index
    %154 = vector.load %arg7[%c0_61, %c0_62] : memref<1x128xf32, #tpu.memory_space<vmem>>, vector<1x128xf32>
    %cst_63 = arith.constant dense<0.000000e+00> : vector<128xf32>
    %155 = vector.multi_reduction <add>, %152, %cst_63 [1] : vector<128x128xf32> to vector<128xf32>
    %156 = vector.shape_cast %155 : vector<128xf32> to vector<128x1xf32>
    %cst_64 = arith.constant 1.280000e+02 : f32
    %157 = vector.broadcast %cst_64 : f32 to vector<128x1xf32>
    %158 = arith.divf %156, %157 : vector<128x1xf32>
    %159 = vector.broadcast %158 : vector<128x1xf32> to vector<128x128xf32>
    %160 = arith.subf %152, %159 : vector<128x128xf32>
    %161 = vector.broadcast %158 : vector<128x1xf32> to vector<128x128xf32>
    %162 = arith.subf %152, %161 : vector<128x128xf32>
    %163 = arith.mulf %160, %162 : vector<128x128xf32>
    %cst_65 = arith.constant dense<0.000000e+00> : vector<128xf32>
    %164 = vector.multi_reduction <add>, %163, %cst_65 [1] : vector<128x128xf32> to vector<128xf32>
    %165 = vector.shape_cast %164 : vector<128xf32> to vector<128x1xf32>
    %cst_66 = arith.constant 1.280000e+02 : f32
    %166 = vector.broadcast %cst_66 : f32 to vector<128x1xf32>
    %167 = arith.divf %165, %166 : vector<128x1xf32>
    %168 = vector.broadcast %158 : vector<128x1xf32> to vector<128x128xf32>
    %169 = arith.subf %152, %168 : vector<128x128xf32>
    %cst_67 = arith.constant 9.99999974E-6 : f32
    %170 = vector.broadcast %cst_67 : f32 to vector<128x1xf32>
    %171 = arith.addf %167, %170 : vector<128x1xf32>
    %172 = math.rsqrt %171 : vector<128x1xf32>
    %173 = vector.broadcast %172 : vector<128x1xf32> to vector<128x128xf32>
    %174 = arith.mulf %169, %173 : vector<128x128xf32>
    %175 = vector.broadcast %153 : vector<1x128xf32> to vector<128x128xf32>
    %176 = arith.mulf %174, %175 : vector<128x128xf32>
    %177 = vector.broadcast %154 : vector<1x128xf32> to vector<128x128xf32>
    %178 = arith.addf %176, %177 : vector<128x128xf32>
    %179 = arith.truncf %178 : vector<128x128xf32> to vector<128x128xbf16>
    %c0_68 = arith.constant 0 : index
    %c0_69 = arith.constant 0 : index
    %180 = vector.load %arg11[%c0_68, %c0_69] : memref<128x512xbf16, #tpu.memory_space<vmem>>, vector<128x512xbf16>
    %cst_70 = arith.constant dense<0.000000e+00> : vector<128x512xf32>
    %181 = tpu.matmul %179, %180, %cst_70 {dimension_numbers = #tpu.dot_dimension_numbers<[1], [0], [0], [1], [0, 0, 1, 1], [], []>} : vector<128x128xbf16>, vector<128x512xbf16>, vector<128x512xf32> -> vector<128x512xf32>
    %c0_71 = arith.constant 0 : index
    %c0_72 = arith.constant 0 : index
    %182 = vector.load %arg12[%c0_71, %c0_72] : memref<1x512xf32, #tpu.memory_space<vmem>>, vector<1x512xf32>
    %183 = vector.broadcast %182 : vector<1x512xf32> to vector<128x512xf32>
    %184 = arith.addf %181, %183 : vector<128x512xf32>
    %cst_73 = arith.constant 0.000000e+00 : f32
    %185 = vector.broadcast %cst_73 : f32 to vector<128x512xf32>
    %186 = arith.maximumf %184, %185 : vector<128x512xf32>
    %187 = arith.truncf %186 : vector<128x512xf32> to vector<128x512xbf16>
    %c0_74 = arith.constant 0 : index
    %c0_75 = arith.constant 0 : index
    %188 = vector.load %arg13[%c0_74, %c0_75] : memref<512x128xbf16, #tpu.memory_space<vmem>>, vector<512x128xbf16>
    %cst_76 = arith.constant dense<0.000000e+00> : vector<128x128xf32>
    %189 = tpu.matmul %187, %188, %cst_76 {dimension_numbers = #tpu.dot_dimension_numbers<[1], [0], [0], [1], [0, 0, 1, 1], [], []>} : vector<128x512xbf16>, vector<512x128xbf16>, vector<128x128xf32> -> vector<128x128xf32>
    %c0_77 = arith.constant 0 : index
    %c0_78 = arith.constant 0 : index
    %190 = vector.load %arg14[%c0_77, %c0_78] : memref<1x128xf32, #tpu.memory_space<vmem>>, vector<1x128xf32>
    %191 = vector.broadcast %190 : vector<1x128xf32> to vector<128x128xf32>
    %192 = arith.addf %189, %191 : vector<128x128xf32>
    %193 = arith.addf %152, %192 : vector<128x128xf32>
    %c0_79 = arith.constant 0 : index
    %c0_80 = arith.constant 0 : index
    %c0_81 = arith.constant 0 : index
    %194 = vector.load %arg15[%c0_79, %c0_80, %c0_81] : memref<1x128x128xf32, #tpu.memory_space<vmem>>, vector<1x128x128xf32>
    %195 = vector.shape_cast %194 : vector<1x128x128xf32> to vector<128x128xf32>
    %196 = vector.shape_cast %193 : vector<128x128xf32> to vector<1x128x128xf32>
    tpu.vector_store %arg15[%c0_79, %c0_80, %c0_81], %196 {strides = array<i32>} : memref<1x128x128xf32, #tpu.memory_space<vmem>>, vector<1x128x128xf32>,
    return
  }
  func.func @transform_0(%arg0: i32, %arg1: i32) -> (i32, i32, i32) {
    %c0_i32 = arith.constant 0 : i32
    %c0_i32_0 = arith.constant 0 : i32
    %c0_i32_1 = arith.constant 0 : i32
    return %arg0, %c0_i32, %c0_i32_0 : i32, i32, i32
  }
  func.func @transform_1(%arg0: i32, %arg1: i32) -> (i32, i32, i32) {
    %c0_i32 = arith.constant 0 : i32
    %c0_i32_0 = arith.constant 0 : i32
    return %arg0, %arg1, %c0_i32 : i32, i32, i32
  }
  func.func @transform_2(%arg0: i32, %arg1: i32) -> (i32, i32) {
    %c0_i32 = arith.constant 0 : i32
    %c0_i32_0 = arith.constant 0 : i32
    %c0_i32_1 = arith.constant 0 : i32
    return %c0_i32, %c0_i32_0 : i32, i32
  }
  func.func @transform_3(%arg0: i32, %arg1: i32) -> (i32, i32) {
    %c0_i32 = arith.constant 0 : i32
    %c0_i32_0 = arith.constant 0 : i32
    %c0_i32_1 = arith.constant 0 : i32
    return %c0_i32, %c0_i32_0 : i32, i32
  }
  func.func @transform_4(%arg0: i32, %arg1: i32) -> (i32, i32) {
    %c0_i32 = arith.constant 0 : i32
    %c0_i32_0 = arith.constant 0 : i32
    %c0_i32_1 = arith.constant 0 : i32
    return %c0_i32, %c0_i32_0 : i32, i32
  }
  func.func @transform_5(%arg0: i32, %arg1: i32) -> (i32, i32) {
    %c0_i32 = arith.constant 0 : i32
    %c0_i32_0 = arith.constant 0 : i32
    %c0_i32_1 = arith.constant 0 : i32
    return %c0_i32, %c0_i32_0 : i32, i32
  }
  func.func @transform_6(%arg0: i32, %arg1: i32) -> (i32, i32) {
    %c0_i32 = arith.constant 0 : i32
    %c0_i32_0 = arith.constant 0 : i32
    %c0_i32_1 = arith.constant 0 : i32
    return %c0_i32, %c0_i32_0 : i32, i32
  }
  func.func @transform_7(%arg0: i32, %arg1: i32) -> (i32, i32) {
    %c0_i32 = arith.constant 0 : i32
    %c0_i32_0 = arith.constant 0 : i32
    %c0_i32_1 = arith.constant 0 : i32
    return %c0_i32, %c0_i32_0 : i32, i32
  }
  func.func @transform_8(%arg0: i32, %arg1: i32) -> (i32, i32) {
    %c0_i32 = arith.constant 0 : i32
    %c0_i32_0 = arith.constant 0 : i32
    %c0_i32_1 = arith.constant 0 : i32
    return %c0_i32, %c0_i32_0 : i32, i32
  }
  func.func @transform_9(%arg0: i32, %arg1: i32) -> (i32, i32) {
    %c0_i32 = arith.constant 0 : i32
    %c0_i32_0 = arith.constant 0 : i32
    %c0_i32_1 = arith.constant 0 : i32
    return %c0_i32, %c0_i32_0 : i32, i32
  }
  func.func @transform_10(%arg0: i32, %arg1: i32) -> (i32, i32) {
    %c0_i32 = arith.constant 0 : i32
    %c0_i32_0 = arith.constant 0 : i32
    %c0_i32_1 = arith.constant 0 : i32
    return %c0_i32, %c0_i32_0 : i32, i32
  }
  func.func @transform_11(%arg0: i32, %arg1: i32) -> (i32, i32) {
    %c0_i32 = arith.constant 0 : i32
    %c0_i32_0 = arith.constant 0 : i32
    %c0_i32_1 = arith.constant 0 : i32
    return %c0_i32, %c0_i32_0 : i32, i32
  }
  func.func @transform_12(%arg0: i32, %arg1: i32) -> (i32, i32) {
    %c0_i32 = arith.constant 0 : i32
    %c0_i32_0 = arith.constant 0 : i32
    %c0_i32_1 = arith.constant 0 : i32
    return %c0_i32, %c0_i32_0 : i32, i32
  }
  func.func @transform_13(%arg0: i32, %arg1: i32) -> (i32, i32, i32) {
    %c0_i32 = arith.constant 0 : i32
    %c0_i32_0 = arith.constant 0 : i32
    return %arg0, %arg1, %c0_i32 : i32, i32, i32
  }
}

</mosaic_0001>

<llo_original>
// kernel: tpu_custom_call.1
$region0: #{tpu_custom_call.1}
  #allocation0 [shape = 'u32[]', space=smem, size = 0x4, offset = 0x4, fixed_abs, tag = 'smem constant byte address 0x4 - core index']
  #allocation1 [shape = 'u32[72,128]{1,0:T(1,128)}', space=vmem, size = 0x9000, scoped, tag = 'internal scratch']
  #allocation2 [shape = 'f32[128,128]{1,0:T(8,128)}', space=vmem, size = 0x10000, scoped, tag = 'scratch operand']
  %s0 = inlined_call_operand.hbm [shape: f32[2,256,128], index: 0, kind: input, shape index: {}]
  %s1 = inlined_call_operand.hbm [shape: f32[2,256,128], index: 1, kind: input, shape index: {}]
  %s2 = inlined_call_operand.vmem [shape: f32[1,128], index: 2, kind: input, shape index: {}]
  %s3 = inlined_call_operand.vmem [shape: f32[1,128], index: 3, kind: input, shape index: {}]
  %s4 = inlined_call_operand.vmem [shape: f32[1,128], index: 4, kind: input, shape index: {}]
  %s5 = inlined_call_operand.hbm [shape: f32[1,128], index: 5, kind: input, shape index: {}]
  %s6 = inlined_call_operand.hbm [shape: bf16[128,384], index: 6, kind: input, shape index: {}]
  %s7 = inlined_call_operand.hbm [shape: bf16[128,128], index: 7, kind: input, shape index: {}]
  %s8 = inlined_call_operand.hbm [shape: f32[1,128], index: 8, kind: input, shape index: {}]
  %s9 = inlined_call_operand.hbm [shape: bf16[128,512], index: 9, kind: input, shape index: {}]
  %s10 = inlined_call_operand.vmem [shape: f32[1,512], index: 10, kind: input, shape index: {}]
  %s11 = inlined_call_operand.hbm [shape: bf16[512,128], index: 11, kind: input, shape index: {}]
  %s12 = inlined_call_operand.vmem [shape: f32[1,128], index: 12, kind: input, shape index: {}]
  %s13 = inlined_call_operand.hbm [shape: f32[2,256,128], index: 13, kind: output, shape index: {}]
  %s14 = sld [smem:[#allocation0]]
  $region117: #{tpu_custom_call.1} parent=0
    _
  %s16 = ssub.s32 1, %s14
  %s17 = scalar_select 0, %s16, %s14
  $region1: #{tpu_custom_call.1} parent=0
    #allocation3 [shape = 'u8[262144]{0}', space=vmem, size = 0x40000, scoped, tag = 'input window, operand 0']
    #allocation4 [shape = 's32[2]{0}', space=sflag, size = 0x8, scoped, tag = 'scoped memory for tpu_custom_call.1']
    #allocation5 [shape = 's32[2]{0}', space=sflag, size = 0x8, scoped, tag = 'scoped memory for tpu_custom_call.1']
    #allocation6 [shape = 'u8[131072]{0}', space=vmem, size = 0x20000, scoped, tag = 'input window, operand 1']
    #allocation7 [shape = 's32[2]{0}', space=sflag, size = 0x8, scoped, tag = 'scoped memory for tpu_custom_call.1']
    #allocation8 [shape = 'u8[512]{0}', space=vmem, size = 0x400, scoped, tag = 'input window, operand 5, single buffered']
    #allocation9 [shape = 'u8[98304]{0}', space=vmem, size = 0x18000, scoped, tag = 'input window, operand 6, single buffered']
    #allocation10 [shape = 's32[1]{0}', space=sflag, size = 0x4, scoped, tag = 'scoped memory for tpu_custom_call.1']
    #allocation11 [shape = 'u8[32768]{0}', space=vmem, size = 0x8000, scoped, tag = 'input window, operand 7, single buffered']
    #allocation12 [shape = 'u8[512]{0}', space=vmem, size = 0x400, scoped, tag = 'input window, operand 8, single buffered']
    #allocation13 [shape = 's32[1]{0}', space=sflag, size = 0x4, scoped, tag = 'scoped memory for tpu_custom_call.1']
    #allocation14 [shape = 'u8[131072]{0}', space=vmem, size = 0x20000, scoped, tag = 'input window, operand 9, single buffered']
    #allocation15 [shape = 'u8[131072]{0}', space=vmem, size = 0x20000, scoped, tag = 'input window, operand 11, single buffered']
    #allocation16 [shape = 's32[1]{0}', space=sflag, size = 0x4, scoped, tag = 'scoped memory for tpu_custom_call.1']
    #allocation17 [shape = 'u8[131072]{0}', space=vmem, size = 0x20000, scoped, tag = 'output window, operand 0']
    %18 = vsyncpa [#allocation4], 0
    %s19 = scalar_lea.sflag [#allocation4], 1
    %20 = vsyncpa %s19, 0
    %21 = vsyncpa [#allocation7], 0
    %s22 = scalar_lea.sflag [#allocation7], 1
    %23 = vsyncpa %s22, 0
    %24 = vsyncpa [#allocation10], 0
    %25 = vsyncpa [#allocation13], 0
    %26 = vsyncpa [#allocation16], 0
    %27 = vsyncpa [#allocation5], 0
    %s28 = scalar_lea.sflag [#allocation5], 1
    %29 = vsyncpa %s28, 0
    loop: start=0, step=1, limit=6
    $region2: #{tpu_custom_call.1} parent=1 // loop_pre_header
      _
    $region3: #{tpu_custom_call.1} parent=1 // loop_header
      %s31 = sphi 0, %s35
      %p32 = scmp.ge.s32.totalorder %s31, 6
      %s38 = sphi 0, %s50
      %s39 = sphi 0, %s46
      %s40 = sphi 0, %s38
      %s41 = sphi 0, %s39
      %s42 = sphi 0, %s40
      %s43 = sphi 0, %s41
      %s53 = sphi 0, %s55
      %s56 = sphi 0, %s53
      %s57 = sphi 0, %s56
      %s73 = sphi 0, %s57
      %s81 = sphi 0, %s83
      %s84 = sphi 0, %s81
      %s85 = sphi 0, %s84
      %s101 = sphi 0, %s85
      %s105 = sphi 0, %s105
      %s107 = sphi 0, %s105
      %s108 = sphi 0, %s107
      %s122 = sphi 0, %s108
      %s126 = sphi 0, %s126
      %s128 = sphi 0, %s126
      %s129 = sphi 0, %s128
      %s143 = sphi 0, %s129
      %s147 = sphi 0, %s147
      %s149 = sphi 0, %s147
      %s150 = sphi 0, %s149
      %s164 = sphi 0, %s150
      %s168 = sphi 0, %s168
      %s170 = sphi 0, %s168
      %s171 = sphi 0, %s170
      %s185 = sphi 0, %s171
      %s189 = sphi 0, %s189
      %s191 = sphi 0, %s189
      %s192 = sphi 0, %s191
      %s206 = sphi 0, %s192
      %s210 = sphi 0, %s210
      %s212 = sphi 0, %s210
      %s213 = sphi 0, %s212
      %s227 = sphi 0, %s213
      %s231 = sphi 0, %s231
      %s233 = sphi 0, %s231
      %s234 = sphi 0, %s233
      %s248 = sphi 0, %s234
      %s252 = sphi 0, %s252
      %s254 = sphi 0, %s252
      %s255 = sphi 0, %s254
      %s269 = sphi 0, %s255
      %s273 = sphi 0, %s273
      %s275 = sphi 0, %s273
      %s276 = sphi 0, %s275
      %s290 = sphi 0, %s276
      %s294 = sphi 0, %s294
      %s296 = sphi 0, %s294
      %s297 = sphi 0, %s296
      %s311 = sphi 0, %s297
      %s315 = sphi 0, %s315
      %s317 = sphi 0, %s315
      %s318 = sphi 0, %s317
      %s332 = sphi 0, %s318
      %s340 = sphi 0, %s342
      %s343 = sphi 0, %s340
      %s344 = sphi 0, %s343
      %s360 = sphi 0, %s344
    $region4: #{tpu_custom_call.1} parent=1 // loop_header_branch
      %34 = sbr.rel (%p32) target = $region8
    $region5: #{tpu_custom_call.1} parent=1 // loop_body
      %s36 = ssub.s32 %s31, 1
      %s37 = ssub.s32 %s31, 2
      %s44 = sadd.s32 1, %s39
      %p45 = scmp.ge.s32.totalorder %s44, 2
      %s46 = scalar_select %p45, 0, %s44
      %s47 = sadd.s32 1, %s38
      %s48 = scalar_select %p45, %s47, %s38
      %p49 = scmp.ge.s32.totalorder %s48, 2
      %s50 = scalar_select %p49, 0, %s48
      %s51 = ssub.s32 %s38, %s50
      %p52 = scmp.eq.s32.totalorder %s51, 0
      %s54 = sadd.s32 %s53, 1
      %s55 = scalar_select %p52, %s53, %s54
      %p58 = pneg %p52
      %p59 = scmp.eq.s32.totalorder %s31, 3
      %p60 = por %p58, %p59
      %p61 = scmp.ne.s32.totalorder %s53, %s56
      %p62 = scmp.eq.s32.totalorder %s31, 0
      %p63 = por %p61, %p62
      %p64 = scmp.ne.s32.totalorder %s53, %s56
      %p65 = scmp.eq.s32.totalorder %s36, 3
      %p66 = por %p64, %p65
      %p67 = scmp.ne.s32.totalorder %s56, %s57
      %p68 = scmp.eq.s32.totalorder %s36, 0
      %p69 = por %p67, %p68
      %p70 = scmp.ne.s32.totalorder %s56, %s57
      %p71 = scmp.eq.s32.totalorder %s37, 3
      %p72 = por %p70, %p71
      %p74 = scmp.ne.s32.totalorder %s57, %s73
      %p75 = scmp.eq.s32.totalorder %s37, 0
      %p76 = por %p74, %p75
      %s77 = ssub.s32 %s38, %s50
      %s78 = ssub.s32 %s39, %s46
      %s79 = sor.u32 %s77, %s78
      %p80 = scmp.eq.s32.totalorder %s79, 0
      %s82 = sadd.s32 %s81, 1
      %s83 = scalar_select %p80, %s81, %s82
      %p86 = pneg %p80
      %p87 = scmp.eq.s32.totalorder %s31, 3
      %p88 = por %p86, %p87
      %p89 = scmp.ne.s32.totalorder %s81, %s84
      %p90 = scmp.eq.s32.totalorder %s31, 0
      %p91 = por %p89, %p90
      %p92 = scmp.ne.s32.totalorder %s81, %s84
      %p93 = scmp.eq.s32.totalorder %s36, 3
      %p94 = por %p92, %p93
      %p95 = scmp.ne.s32.totalorder %s84, %s85
      %p96 = scmp.eq.s32.totalorder %s36, 0
      %p97 = por %p95, %p96
      %p98 = scmp.ne.s32.totalorder %s84, %s85
      %p99 = scmp.eq.s32.totalorder %s37, 3
      %p100 = por %p98, %p99
      %p102 = scmp.ne.s32.totalorder %s85, %s101
      %p103 = scmp.eq.s32.totalorder %s37, 0
      %p104 = por %p102, %p103
      %s106 = sadd.s32 %s105, 1
      %p109 = scmp.eq.s32.totalorder %s31, 3
      %p110 = scmp.ne.s32.totalorder %s105, %s107
      %p111 = scmp.eq.s32.totalorder %s31, 0
      %p112 = por %p110, %p111
      %p113 = scmp.ne.s32.totalorder %s105, %s107
      %p114 = scmp.eq.s32.totalorder %s36, 3
      %p115 = por %p113, %p114
      %p116 = scmp.ne.s32.totalorder %s107, %s108
      %p117 = scmp.eq.s32.totalorder %s36, 0
      %p118 = por %p116, %p117
      %p119 = scmp.ne.s32.totalorder %s107, %s108
      %p120 = scmp.eq.s32.totalorder %s37, 3
      %p121 = por %p119, %p120
      %p123 = scmp.ne.s32.totalorder %s108, %s122
      %p124 = scmp.eq.s32.totalorder %s37, 0
      %p125 = por %p123, %p124
      %s127 = sadd.s32 %s126, 1
      %p130 = scmp.eq.s32.totalorder %s31, 3
      %p131 = scmp.ne.s32.totalorder %s126, %s128
      %p132 = scmp.eq.s32.totalorder %s31, 0
      %p133 = por %p131, %p132
      %p134 = scmp.ne.s32.totalorder %s126, %s128
      %p135 = scmp.eq.s32.totalorder %s36, 3
      %p136 = por %p134, %p135
      %p137 = scmp.ne.s32.totalorder %s128, %s129
      %p138 = scmp.eq.s32.totalorder %s36, 0
      %p139 = por %p137, %p138
      %p140 = scmp.ne.s32.totalorder %s128, %s129
      %p141 = scmp.eq.s32.totalorder %s37, 3
      %p142 = por %p140, %p141
      %p144 = scmp.ne.s32.totalorder %s129, %s143
      %p145 = scmp.eq.s32.totalorder %s37, 0
      %p146 = por %p144, %p145
      %s148 = sadd.s32 %s147, 1
      %p151 = scmp.eq.s32.totalorder %s31, 3
      %p152 = scmp.ne.s32.totalorder %s147, %s149
      %p153 = scmp.eq.s32.totalorder %s31, 0
      %p154 = por %p152, %p153
      %p155 = scmp.ne.s32.totalorder %s147, %s149
      %p156 = scmp.eq.s32.totalorder %s36, 3
      %p157 = por %p155, %p156
      %p158 = scmp.ne.s32.totalorder %s149, %s150
      %p159 = scmp.eq.s32.totalorder %s36, 0
      %p160 = por %p158, %p159
      %p161 = scmp.ne.s32.totalorder %s149, %s150
      %p162 = scmp.eq.s32.totalorder %s37, 3
      %p163 = por %p161, %p162
      %p165 = scmp.ne.s32.totalorder %s150, %s164
      %p166 = scmp.eq.s32.totalorder %s37, 0
      %p167 = por %p165, %p166
      %s169 = sadd.s32 %s168, 1
      %p172 = scmp.eq.s32.totalorder %s31, 3
      %p173 = scmp.ne.s32.totalorder %s168, %s170
      %p174 = scmp.eq.s32.totalorder %s31, 0
      %p175 = por %p173, %p174
      %p176 = scmp.ne.s32.totalorder %s168, %s170
      %p177 = scmp.eq.s32.totalorder %s36, 3
      %p178 = por %p176, %p177
      %p179 = scmp.ne.s32.totalorder %s170, %s171
      %p180 = scmp.eq.s32.totalorder %s36, 0
      %p181 = por %p179, %p180
      %p182 = scmp.ne.s32.totalorder %s170, %s171
      %p183 = scmp.eq.s32.totalorder %s37, 3
      %p184 = por %p182, %p183
      %p186 = scmp.ne.s32.totalorder %s171, %s185
      %p187 = scmp.eq.s32.totalorder %s37, 0
      %p188 = por %p186, %p187
      %s190 = sadd.s32 %s189, 1
      %p193 = scmp.eq.s32.totalorder %s31, 3
      %p194 = scmp.ne.s32.totalorder %s189, %s191
      %p195 = scmp.eq.s32.totalorder %s31, 0
      %p196 = por %p194, %p195
      %p197 = scmp.ne.s32.totalorder %s189, %s191
      %p198 = scmp.eq.s32.totalorder %s36, 3
      %p199 = por %p197, %p198
      %p200 = scmp.ne.s32.totalorder %s191, %s192
      %p201 = scmp.eq.s32.totalorder %s36, 0
      %p202 = por %p200, %p201
      %p203 = scmp.ne.s32.totalorder %s191, %s192
      %p204 = scmp.eq.s32.totalorder %s37, 3
      %p205 = por %p203, %p204
      %p207 = scmp.ne.s32.totalorder %s192, %s206
      %p208 = scmp.eq.s32.totalorder %s37, 0
      %p209 = por %p207, %p208
      %s211 = sadd.s32 %s210, 1
      %p214 = scmp.eq.s32.totalorder %s31, 3
      %p215 = scmp.ne.s32.totalorder %s210, %s212
      %p216 = scmp.eq.s32.totalorder %s31, 0
      %p217 = por %p215, %p216
      %p218 = scmp.ne.s32.totalorder %s210, %s212
      %p219 = scmp.eq.s32.totalorder %s36, 3
      %p220 = por %p218, %p219
      %p221 = scmp.ne.s32.totalorder %s212, %s213
      %p222 = scmp.eq.s32.totalorder %s36, 0
      %p223 = por %p221, %p222
      %p224 = scmp.ne.s32.totalorder %s212, %s213
      %p225 = scmp.eq.s32.totalorder %s37, 3
      %p226 = por %p224, %p225
      %p228 = scmp.ne.s32.totalorder %s213, %s227
      %p229 = scmp.eq.s32.totalorder %s37, 0
      %p230 = por %p228, %p229
      %s232 = sadd.s32 %s231, 1
      %p235 = scmp.eq.s32.totalorder %s31, 3
      %p236 = scmp.ne.s32.totalorder %s231, %s233
      %p237 = scmp.eq.s32.totalorder %s31, 0
      %p238 = por %p236, %p237
      %p239 = scmp.ne.s32.totalorder %s231, %s233
      %p240 = scmp.eq.s32.totalorder %s36, 3
      %p241 = por %p239, %p240
      %p242 = scmp.ne.s32.totalorder %s233, %s234
      %p243 = scmp.eq.s32.totalorder %s36, 0
      %p244 = por %p242, %p243
      %p245 = scmp.ne.s32.totalorder %s233, %s234
      %p246 = scmp.eq.s32.totalorder %s37, 3
      %p247 = por %p245, %p246
      %p249 = scmp.ne.s32.totalorder %s234, %s248
      %p250 = scmp.eq.s32.totalorder %s37, 0
      %p251 = por %p249, %p250
      %s253 = sadd.s32 %s252, 1
      %p256 = scmp.eq.s32.totalorder %s31, 3
      %p257 = scmp.ne.s32.totalorder %s252, %s254
      %p258 = scmp.eq.s32.totalorder %s31, 0
      %p259 = por %p257, %p258
      %p260 = scmp.ne.s32.totalorder %s252, %s254
      %p261 = scmp.eq.s32.totalorder %s36, 3
      %p262 = por %p260, %p261
      %p263 = scmp.ne.s32.totalorder %s254, %s255
      %p264 = scmp.eq.s32.totalorder %s36, 0
      %p265 = por %p263, %p264
      %p266 = scmp.ne.s32.totalorder %s254, %s255
      %p267 = scmp.eq.s32.totalorder %s37, 3
      %p268 = por %p266, %p267
      %p270 = scmp.ne.s32.totalorder %s255, %s269
      %p271 = scmp.eq.s32.totalorder %s37, 0
      %p272 = por %p270, %p271
      %s274 = sadd.s32 %s273, 1
      %p277 = scmp.eq.s32.totalorder %s31, 3
      %p278 = scmp.ne.s32.totalorder %s273, %s275
      %p279 = scmp.eq.s32.totalorder %s31, 0
      %p280 = por %p278, %p279
      %p281 = scmp.ne.s32.totalorder %s273, %s275
      %p282 = scmp.eq.s32.totalorder %s36, 3
      %p283 = por %p281, %p282
      %p284 = scmp.ne.s32.totalorder %s275, %s276
      %p285 = scmp.eq.s32.totalorder %s36, 0
      %p286 = por %p284, %p285
      %p287 = scmp.ne.s32.totalorder %s275, %s276
      %p288 = scmp.eq.s32.totalorder %s37, 3
      %p289 = por %p287, %p288
      %p291 = scmp.ne.s32.totalorder %s276, %s290
      %p292 = scmp.eq.s32.totalorder %s37, 0
      %p293 = por %p291, %p292
      %s295 = sadd.s32 %s294, 1
      %p298 = scmp.eq.s32.totalorder %s31, 3
      %p299 = scmp.ne.s32.totalorder %s294, %s296
      %p300 = scmp.eq.s32.totalorder %s31, 0
      %p301 = por %p299, %p300
      %p302 = scmp.ne.s32.totalorder %s294, %s296
      %p303 = scmp.eq.s32.totalorder %s36, 3
      %p304 = por %p302, %p303
      %p305 = scmp.ne.s32.totalorder %s296, %s297
      %p306 = scmp.eq.s32.totalorder %s36, 0
      %p307 = por %p305, %p306
      %p308 = scmp.ne.s32.totalorder %s296, %s297
      %p309 = scmp.eq.s32.totalorder %s37, 3
      %p310 = por %p308, %p309
      %p312 = scmp.ne.s32.totalorder %s297, %s311
      %p313 = scmp.eq.s32.totalorder %s37, 0
      %p314 = por %p312, %p313
      %s316 = sadd.s32 %s315, 1
      %p319 = scmp.eq.s32.totalorder %s31, 3
      %p320 = scmp.ne.s32.totalorder %s315, %s317
      %p321 = scmp.eq.s32.totalorder %s31, 0
      %p322 = por %p320, %p321
      %p323 = scmp.ne.s32.totalorder %s315, %s317
      %p324 = scmp.eq.s32.totalorder %s36, 3
      %p325 = por %p323, %p324
      %p326 = scmp.ne.s32.totalorder %s317, %s318
      %p327 = scmp.eq.s32.totalorder %s36, 0
      %p328 = por %p326, %p327
      %p329 = scmp.ne.s32.totalorder %s317, %s318
      %p330 = scmp.eq.s32.totalorder %s37, 3
      %p331 = por %p329, %p330
      %p333 = scmp.ne.s32.totalorder %s318, %s332
      %p334 = scmp.eq.s32.totalorder %s37, 0
      %p335 = por %p333, %p334
      %s336 = ssub.s32 %s38, %s50
      %s337 = ssub.s32 %s39, %s46
      %s338 = sor.u32 %s336, %s337
      %p339 = scmp.eq.s32.totalorder %s338, 0
      %s341 = sadd.s32 %s340, 1
      %s342 = scalar_select %p339, %s340, %s341
      %p345 = pneg %p339
      %p346 = scmp.eq.s32.totalorder %s31, 3
      %p347 = por %p345, %p346
      %p348 = scmp.ne.s32.totalorder %s340, %s343
      %p349 = scmp.eq.s32.totalorder %s31, 0
      %p350 = por %p348, %p349
      %p351 = scmp.ne.s32.totalorder %s340, %s343
      %p352 = scmp.eq.s32.totalorder %s36, 3
      %p353 = por %p351, %p352
      %p354 = scmp.ne.s32.totalorder %s343, %s344
      %p355 = scmp.eq.s32.totalorder %s36, 0
      %p356 = por %p354, %p355
      %p357 = scmp.ne.s32.totalorder %s343, %s344
      %p358 = scmp.eq.s32.totalorder %s37, 3
      %p359 = por %p357, %p358
      %p361 = scmp.ne.s32.totalorder %s344, %s360
      %p362 = scmp.eq.s32.totalorder %s37, 0
      %p363 = por %p361, %p362
      %p364 = scmp.le.s32.totalorder 1, %s31
      %p365 = scmp.lt.s32.totalorder %s31, 5
      %p366 = pnand %p364, %p365
      %p367 = pneg %p366
      // Predicated region
      $region9: #{tpu_custom_call.1} parent=5 // pred_check
        _
      $region10: #{tpu_custom_call.1} parent=5 // pred_check_branch
        %369 = sbr.rel (%p366) target = $region12
      $region11: #{tpu_custom_call.1} parent=5 // pred_region
        %s370 = ssub.s32 %s31, 1
        // Predicated region
        $region13: #{tpu_custom_call.1} parent=11 // pred_check
          %p371 = pneg %p118
        $region14: #{tpu_custom_call.1} parent=11 // pred_check_branch
          %373 = sbr.rel (%p371) target = $region16
        $region15: #{tpu_custom_call.1} parent=11 // pred_region
          _
        $region16: #{tpu_custom_call.1} parent=11 // pred_fallthru
          _
        // Predicated region
        $region17: #{tpu_custom_call.1} parent=11 // pred_check
          %p374 = pneg %p139
        $region18: #{tpu_custom_call.1} parent=11 // pred_check_branch
          %376 = sbr.rel (%p374) target = $region20
        $region19: #{tpu_custom_call.1} parent=11 // pred_region
          _
        $region20: #{tpu_custom_call.1} parent=11 // pred_fallthru
          _
        // Predicated region
        $region21: #{tpu_custom_call.1} parent=11 // pred_check
          %p377 = pneg %p160
        $region22: #{tpu_custom_call.1} parent=11 // pred_check_branch
          %379 = sbr.rel (%p377) target = $region24
        $region23: #{tpu_custom_call.1} parent=11 // pred_region
          _
        $region24: #{tpu_custom_call.1} parent=11 // pred_fallthru
          _
        // Predicated region
        $region25: #{tpu_custom_call.1} parent=11 // pred_check
          %p380 = pneg %p181
        $region26: #{tpu_custom_call.1} parent=11 // pred_check_branch
          %382 = sbr.rel (%p380) target = $region28
        $region27: #{tpu_custom_call.1} parent=11 // pred_region
          %384 = vsyncadd [#allocation7], 0
          %s386 = sshll.u32 %s5, 4
          %s387 = int_to_ptr.hbm [resolvable:$true] %s386
          %s388 = sshll.u32 [#allocation8], 4
          %s389 = int_to_ptr.vmem [resolvable:$true] %s388
          %391 = dma.hbm_to_vmem [thread:$0]  %s387, 16, %s389, [#allocation7]
        $region28: #{tpu_custom_call.1} parent=11 // pred_fallthru
          _
        // Predicated region
        $region29: #{tpu_custom_call.1} parent=11 // pred_check
          %p392 = pneg %p202
        $region30: #{tpu_custom_call.1} parent=11 // pred_check_branch
          %394 = sbr.rel (%p392) target = $region32
        $region31: #{tpu_custom_call.1} parent=11 // pred_region
          %396 = vsyncadd [#allocation10], 0
          %s397 = sshll.u32 %s6, 4
          %s398 = int_to_ptr.hbm [resolvable:$true] %s397
          %s399 = sshll.u32 [#allocation9], 4
          %s400 = int_to_ptr.vmem [resolvable:$true] %s399
          %405 = dma.hbm_to_vmem [thread:$0]  %s398, 3072, %s400, [#allocation10], 192, 192, 12
        $region32: #{tpu_custom_call.1} parent=11 // pred_fallthru
          _
        // Predicated region
        $region33: #{tpu_custom_call.1} parent=11 // pred_check
          %p406 = pneg %p223
        $region34: #{tpu_custom_call.1} parent=11 // pred_check_branch
          %408 = sbr.rel (%p406) target = $region36
        $region35: #{tpu_custom_call.1} parent=11 // pred_region
          %410 = vsyncadd [#allocation10], 0
          %s411 = sshll.u32 %s7, 4
          %s412 = int_to_ptr.hbm [resolvable:$true] %s411
          %s413 = sshll.u32 [#allocation11], 4
          %s414 = int_to_ptr.vmem [resolvable:$true] %s413
          %419 = dma.hbm_to_vmem [thread:$0]  %s412, 1024, %s414, [#allocation10], 64, 64, 4
        $region36: #{tpu_custom_call.1} parent=11 // pred_fallthru
          _
        // Predicated region
        $region37: #{tpu_custom_call.1} parent=11 // pred_check
          %p420 = pneg %p244
        $region38: #{tpu_custom_call.1} parent=11 // pred_check_branch
          %422 = sbr.rel (%p420) target = $region40
        $region39: #{tpu_custom_call.1} parent=11 // pred_region
          %424 = vsyncadd [#allocation13], 0
          %s426 = sshll.u32 %s8, 4
          %s427 = int_to_ptr.hbm [resolvable:$true] %s426
          %s428 = sshll.u32 [#allocation12], 4
          %s429 = int_to_ptr.vmem [resolvable:$true] %s428
          %431 = dma.hbm_to_vmem [thread:$0]  %s427, 16, %s429, [#allocation13]
        $region40: #{tpu_custom_call.1} parent=11 // pred_fallthru
          _
        // Predicated region
        $region41: #{tpu_custom_call.1} parent=11 // pred_check
          %p432 = pneg %p265
        $region42: #{tpu_custom_call.1} parent=11 // pred_check_branch
          %434 = sbr.rel (%p432) target = $region44
        $region43: #{tpu_custom_call.1} parent=11 // pred_region
          %436 = vsyncadd [#allocation13], 0
          %s437 = sshll.u32 %s9, 4
          %s438 = int_to_ptr.hbm [resolvable:$true] %s437
          %s439 = sshll.u32 [#allocation14], 4
          %s440 = int_to_ptr.vmem [resolvable:$true] %s439
          %445 = dma.hbm_to_vmem [thread:$0]  %s438, 4096, %s440, [#allocation13], 256, 256, 16
        $region44: #{tpu_custom_call.1} parent=11 // pred_fallthru
          _
        // Predicated region
        $region45: #{tpu_custom_call.1} parent=11 // pred_check
          %p446 = pneg %p286
        $region46: #{tpu_custom_call.1} parent=11 // pred_check_branch
          %448 = sbr.rel (%p446) target = $region48
        $region47: #{tpu_custom_call.1} parent=11 // pred_region
          _
        $region48: #{tpu_custom_call.1} parent=11 // pred_fallthru
          _
        // Predicated region
        $region49: #{tpu_custom_call.1} parent=11 // pred_check
          %p449 = pneg %p307
        $region50: #{tpu_custom_call.1} parent=11 // pred_check_branch
          %451 = sbr.rel (%p449) target = $region52
        $region51: #{tpu_custom_call.1} parent=11 // pred_region
          %453 = vsyncadd [#allocation16], 0
          %s454 = sshll.u32 %s11, 4
          %s455 = int_to_ptr.hbm [resolvable:$true] %s454
          %s456 = sshll.u32 [#allocation15], 4
          %s457 = int_to_ptr.vmem [resolvable:$true] %s456
          %462 = dma.hbm_to_vmem [thread:$0]  %s455, 4096, %s457, [#allocation16], 64, 64, 4
        $region52: #{tpu_custom_call.1} parent=11 // pred_fallthru
          _
        // Predicated region
        $region53: #{tpu_custom_call.1} parent=11 // pred_check
          %p463 = pneg %p328
        $region54: #{tpu_custom_call.1} parent=11 // pred_check_branch
          %465 = sbr.rel (%p463) target = $region56
        $region55: #{tpu_custom_call.1} parent=11 // pred_region
          _
        $region56: #{tpu_custom_call.1} parent=11 // pred_fallthru
          _
      $region12: #{tpu_custom_call.1} parent=5 // pred_fallthru
        _
      %p466 = scmp.lt.s32.totalorder %s31, 4
      // Predicated region
      $region57: #{tpu_custom_call.1} parent=5 // pred_check
        %p467 = pneg %p466
      $region58: #{tpu_custom_call.1} parent=5 // pred_check_branch
        %469 = sbr.rel (%p467) target = $region60
      $region59: #{tpu_custom_call.1} parent=5 // pred_region
        // Predicated region
        $region61: #{tpu_custom_call.1} parent=59 // pred_check
          %p470 = pneg %p63
        $region62: #{tpu_custom_call.1} parent=59 // pred_check_branch
          %472 = sbr.rel (%p470) target = $region64
        $region63: #{tpu_custom_call.1} parent=59 // pred_region
          %s473 = sand.u32 %s53, 1
          %s474 = scalar_lea.sflag [#allocation4], %s473
          %s475 = sand.u32 %s53, 1
          %s476 = smul.addr %s475, 256
          %s477 = scalar_lea.vmem [#allocation3], %s476
          %479 = vsyncadd %s474, 0
          %s480 = smul.addr %s38, 32
          %s481 = smul.addr %s480, 8
          %s482 = scalar_lea.hbm %s0, %s481
          %s483 = sshll.u32 %s482, 4
          %s484 = int_to_ptr.hbm [resolvable:$true] %s483
          %s485 = sshll.u32 %s477, 4
          %s486 = int_to_ptr.vmem [resolvable:$true] %s485
          %491 = dma.hbm_to_vmem [thread:$0]  %s484, 4096, %s486, %s474, 128, 128, 8
        $region64: #{tpu_custom_call.1} parent=59 // pred_fallthru
          _
        // Predicated region
        $region65: #{tpu_custom_call.1} parent=59 // pred_check
          %p492 = pneg %p91
        $region66: #{tpu_custom_call.1} parent=59 // pred_check_branch
          %494 = sbr.rel (%p492) target = $region68
        $region67: #{tpu_custom_call.1} parent=59 // pred_region
          %s495 = sand.u32 %s31, 1
          %s496 = scalar_lea.sflag [#allocation7], %s495
          %s497 = sand.u32 %s81, 1
          %s498 = smul.addr %s497, 128
          %s499 = scalar_lea.vmem [#allocation6], %s498
          %s500 = smul.u32 16, %s39
          %502 = vsyncadd %s496, 0
          %s503 = smul.addr %s38, 32
          %s504 = sadd.s32 %s500, %s503
          %s505 = smul.addr %s504, 8
          %s506 = scalar_lea.hbm %s1, %s505
          %s507 = sshll.u32 %s506, 4
          %s508 = int_to_ptr.hbm [resolvable:$true] %s507
          %s509 = sshll.u32 %s499, 4
          %s510 = int_to_ptr.vmem [resolvable:$true] %s509
          %515 = dma.hbm_to_vmem [thread:$0]  %s508, 2048, %s510, %s496, 128, 128, 8
        $region68: #{tpu_custom_call.1} parent=59 // pred_fallthru
          _
      $region60: #{tpu_custom_call.1} parent=5 // pred_fallthru
        _
      %p516 = scmp.le.s32.totalorder 1, %s31
      %p517 = scmp.lt.s32.totalorder %s31, 5
      %p518 = pnand %p516, %p517
      %p519 = pneg %p518
      // Predicated region
      $region69: #{tpu_custom_call.1} parent=5 // pred_check
        _
      $region70: #{tpu_custom_call.1} parent=5 // pred_check_branch
        %521 = sbr.rel (%p518) target = $region72
      $region71: #{tpu_custom_call.1} parent=5 // pred_region
        %s522 = ssub.s32 %s31, 1
        %s523 = sand.u32 %s56, 1
        %s524 = scalar_lea.sflag [#allocation4], %s523
        %s525 = sand.u32 %s56, 1
        %s526 = smul.addr %s525, 256
        %s527 = scalar_lea.vmem [#allocation3], %s526
        // Predicated region
        $region73: #{tpu_custom_call.1} parent=71 // pred_check
          %p528 = pneg %p69
        $region74: #{tpu_custom_call.1} parent=71 // pred_check_branch
          %530 = sbr.rel (%p528) target = $region76
        $region75: #{tpu_custom_call.1} parent=71 // pred_region
          %532 = dma.done %s524, 4096
        $region76: #{tpu_custom_call.1} parent=71 // pred_fallthru
          _
        %s533 = sand.u32 %s36, 1
        %s534 = scalar_lea.sflag [#allocation7], %s533
        %s535 = sand.u32 %s84, 1
        %s536 = smul.addr %s535, 128
        %s537 = scalar_lea.vmem [#allocation6], %s536
        // Predicated region
        $region77: #{tpu_custom_call.1} parent=71 // pred_check
          %p538 = pneg %p97
        $region78: #{tpu_custom_call.1} parent=71 // pred_check_branch
          %540 = sbr.rel (%p538) target = $region80
        $region79: #{tpu_custom_call.1} parent=71 // pred_region
          %542 = dma.done %s534, 2048
        $region80: #{tpu_custom_call.1} parent=71 // pred_fallthru
          _
        // Predicated region
        $region81: #{tpu_custom_call.1} parent=71 // pred_check
          %p543 = pneg %p181
        $region82: #{tpu_custom_call.1} parent=71 // pred_check_branch
          %545 = sbr.rel (%p543) target = $region84
        $region83: #{tpu_custom_call.1} parent=71 // pred_region
          %547 = dma.done [#allocation7], 16
        $region84: #{tpu_custom_call.1} parent=71 // pred_fallthru
          _
        // Predicated region
        $region85: #{tpu_custom_call.1} parent=71 // pred_check
          %p548 = pneg %p202
        $region86: #{tpu_custom_call.1} parent=71 // pred_check_branch
          %550 = sbr.rel (%p548) target = $region88
        $region87: #{tpu_custom_call.1} parent=71 // pred_region
          %552 = dma.done [#allocation10], 3072
        $region88: #{tpu_custom_call.1} parent=71 // pred_fallthru
          _
        // Predicated region
        $region89: #{tpu_custom_call.1} parent=71 // pred_check
          %p553 = pneg %p223
        $region90: #{tpu_custom_call.1} parent=71 // pred_check_branch
          %555 = sbr.rel (%p553) target = $region92
        $region91: #{tpu_custom_call.1} parent=71 // pred_region
          %557 = dma.done [#allocation10], 1024
        $region92: #{tpu_custom_call.1} parent=71 // pred_fallthru
          _
        // Predicated region
        $region93: #{tpu_custom_call.1} parent=71 // pred_check
          %p558 = pneg %p244
        $region94: #{tpu_custom_call.1} parent=71 // pred_check_branch
          %560 = sbr.rel (%p558) target = $region96
        $region95: #{tpu_custom_call.1} parent=71 // pred_region
          %562 = dma.done [#allocation13], 16
        $region96: #{tpu_custom_call.1} parent=71 // pred_fallthru
          _
        // Predicated region
        $region97: #{tpu_custom_call.1} parent=71 // pred_check
          %p563 = pneg %p265
        $region98: #{tpu_custom_call.1} parent=71 // pred_check_branch
          %565 = sbr.rel (%p563) target = $region100
        $region99: #{tpu_custom_call.1} parent=71 // pred_region
          %567 = dma.done [#allocation13], 4096
        $region100: #{tpu_custom_call.1} parent=71 // pred_fallthru
          _
        // Predicated region
        $region101: #{tpu_custom_call.1} parent=71 // pred_check
          %p568 = pneg %p307
        $region102: #{tpu_custom_call.1} parent=71 // pred_check_branch
          %570 = sbr.rel (%p568) target = $region104
        $region103: #{tpu_custom_call.1} parent=71 // pred_region
          %572 = dma.done [#allocation16], 4096
        $region104: #{tpu_custom_call.1} parent=71 // pred_fallthru
          _
        %s573 = sand.u32 %s56, 1
        %s574 = scalar_lea.sflag [#allocation4], %s573
        %s575 = sand.u32 %s56, 1
        %s576 = smul.addr %s575, 256
        %s577 = scalar_lea.vmem [#allocation3], %s576
        %p578 = pneg %p69
        %p579 = pneg %p66
        %s580 = sand.u32 %s36, 1
        %s581 = scalar_lea.sflag [#allocation7], %s580
        %s582 = sand.u32 %s84, 1
        %s583 = smul.addr %s582, 128
        %s584 = scalar_lea.vmem [#allocation6], %s583
        %p585 = pneg %p97
        %p586 = pneg %p94
        %p587 = pneg %p118
        %p588 = pneg %p115
        %p589 = pneg %p139
        %p590 = pneg %p136
        %p591 = pneg %p160
        %p592 = pneg %p157
        %p593 = pneg %p181
        %p594 = pneg %p178
        %p595 = pneg %p202
        %p596 = pneg %p199
        %p597 = pneg %p223
        %p598 = pneg %p220
        %p599 = pneg %p244
        %p600 = pneg %p241
        %p601 = pneg %p265
        %p602 = pneg %p262
        %p603 = pneg %p286
        %p604 = pneg %p283
        %p605 = pneg %p307
        %p606 = pneg %p304
        %p607 = pneg %p328
        %p608 = pneg %p325
        %p609 = pneg %p356
        %p610 = pneg %p353
        %s611 = sand.u32 %s343, 1
        %s612 = scalar_lea.sflag [#allocation5], %s611
        %s613 = sand.u32 %s343, 1
        %s614 = smul.addr %s613, 128
        %s615 = scalar_lea.vmem [#allocation17], %s614
        %s616 = smul.u32 16, %s41
        %s617 = smul.u32 16, %s41
        %v618 = vld [vmem:[%s527] sm:$0xff]
        %v619 = vld [vmem:[%s527 + $0x8] sm:$0xff]
        %v620 = vld [vmem:[%s527 + $0x10] sm:$0xff]
        %v621 = vld [vmem:[%s527 + $0x18] sm:$0xff]
        %v622 = vld [vmem:[%s527 + $0x20] sm:$0xff]
        %v623 = vld [vmem:[%s527 + $0x28] sm:$0xff]
        %v624 = vld [vmem:[%s527 + $0x30] sm:$0xff]
        %v625 = vld [vmem:[%s527 + $0x38] sm:$0xff]
        %v626 = vld [vmem:[%s527 + $0x40] sm:$0xff]
        %v627 = vld [vmem:[%s527 + $0x48] sm:$0xff]
        %v628 = vld [vmem:[%s527 + $0x50] sm:$0xff]
        %v629 = vld [vmem:[%s527 + $0x58] sm:$0xff]
        %v630 = vld [vmem:[%s527 + $0x60] sm:$0xff]
        %v631 = vld [vmem:[%s527 + $0x68] sm:$0xff]
        %v632 = vld [vmem:[%s527 + $0x70] sm:$0xff]
        %v633 = vld [vmem:[%s527 + $0x78] sm:$0xff]
        %v634 = vld [vmem:[%s527 + $0x80] sm:$0xff]
        %v635 = vld [vmem:[%s527 + $0x88] sm:$0xff]
        %v636 = vld [vmem:[%s527 + $0x90] sm:$0xff]
        %v637 = vld [vmem:[%s527 + $0x98] sm:$0xff]
        %v638 = vld [vmem:[%s527 + $0xa0] sm:$0xff]
        %v639 = vld [vmem:[%s527 + $0xa8] sm:$0xff]
        %v640 = vld [vmem:[%s527 + $0xb0] sm:$0xff]
        %v641 = vld [vmem:[%s527 + $0xb8] sm:$0xff]
        %v642 = vld [vmem:[%s527 + $0xc0] sm:$0xff]
        %v643 = vld [vmem:[%s527 + $0xc8] sm:$0xff]
        %v644 = vld [vmem:[%s527 + $0xd0] sm:$0xff]
        %v645 = vld [vmem:[%s527 + $0xd8] sm:$0xff]
        %v646 = vld [vmem:[%s527 + $0xe0] sm:$0xff]
        %v647 = vld [vmem:[%s527 + $0xe8] sm:$0xff]
        %v648 = vld [vmem:[%s527 + $0xf0] sm:$0xff]
        %v649 = vld [vmem:[%s527 + $0xf8] sm:$0xff]
        %v650 = vld [vmem:[%s537] sm:$0xff]
        %v651 = vld [vmem:[%s537 + $0x8] sm:$0xff]
        %v652 = vld [vmem:[%s537 + $0x10] sm:$0xff]
        %v653 = vld [vmem:[%s537 + $0x18] sm:$0xff]
        %v654 = vld [vmem:[%s537 + $0x20] sm:$0xff]
        %v655 = vld [vmem:[%s537 + $0x28] sm:$0xff]
        %v656 = vld [vmem:[%s537 + $0x30] sm:$0xff]
        %v657 = vld [vmem:[%s537 + $0x38] sm:$0xff]
        %v658 = vld [vmem:[%s537 + $0x40] sm:$0xff]
        %v659 = vld [vmem:[%s537 + $0x48] sm:$0xff]
        %v660 = vld [vmem:[%s537 + $0x50] sm:$0xff]
        %v661 = vld [vmem:[%s537 + $0x58] sm:$0xff]
        %v662 = vld [vmem:[%s537 + $0x60] sm:$0xff]
        %v663 = vld [vmem:[%s537 + $0x68] sm:$0xff]
        %v664 = vld [vmem:[%s537 + $0x70] sm:$0xff]
        %v665 = vld [vmem:[%s537 + $0x78] sm:$0xff]
        %v666 = vld [vmem:[%s2] sm:$0x1]
        %v667 = vld [vmem:[%s3] sm:$0x1]
        %668 = vadd.xlane.f32.xlu0 %v618
        %v669 = vpop.xlane.xlu0 %668
        %670 = vadd.xlane.f32.xlu0 %v619
        %v671 = vpop.xlane.xlu0 %670
        %672 = vadd.xlane.f32.xlu0 %v620
        %v673 = vpop.xlane.xlu0 %672
        %674 = vadd.xlane.f32.xlu0 %v621
        %v675 = vpop.xlane.xlu0 %674
        %676 = vadd.xlane.f32.xlu0 %v622
        %v677 = vpop.xlane.xlu0 %676
        %678 = vadd.xlane.f32.xlu0 %v623
        %v679 = vpop.xlane.xlu0 %678
        %680 = vadd.xlane.f32.xlu0 %v624
        %v681 = vpop.xlane.xlu0 %680
        %682 = vadd.xlane.f32.xlu0 %v625
        %v683 = vpop.xlane.xlu0 %682
        %684 = vadd.xlane.f32.xlu0 %v626
        %v685 = vpop.xlane.xlu0 %684
        %686 = vadd.xlane.f32.xlu0 %v627
        %v687 = vpop.xlane.xlu0 %686
        %688 = vadd.xlane.f32.xlu0 %v628
        %v689 = vpop.xlane.xlu0 %688
        %690 = vadd.xlane.f32.xlu0 %v629
        %v691 = vpop.xlane.xlu0 %690
        %692 = vadd.xlane.f32.xlu0 %v630
        %v693 = vpop.xlane.xlu0 %692
        %694 = vadd.xlane.f32.xlu0 %v631
        %v695 = vpop.xlane.xlu0 %694
        %696 = vadd.xlane.f32.xlu0 %v632
        %v697 = vpop.xlane.xlu0 %696
        %698 = vadd.xlane.f32.xlu0 %v633
        %v699 = vpop.xlane.xlu0 %698
        %700 = vadd.xlane.f32.xlu0 %v634
        %v701 = vpop.xlane.xlu0 %700
        %702 = vadd.xlane.f32.xlu0 %v635
        %v703 = vpop.xlane.xlu0 %702
        %704 = vadd.xlane.f32.xlu0 %v636
        %v705 = vpop.xlane.xlu0 %704
        %706 = vadd.xlane.f32.xlu0 %v637
        %v707 = vpop.xlane.xlu0 %706
        %708 = vadd.xlane.f32.xlu0 %v638
        %v709 = vpop.xlane.xlu0 %708
        %710 = vadd.xlane.f32.xlu0 %v639
        %v711 = vpop.xlane.xlu0 %710
        %712 = vadd.xlane.f32.xlu0 %v640
        %v713 = vpop.xlane.xlu0 %712
        %714 = vadd.xlane.f32.xlu0 %v641
        %v715 = vpop.xlane.xlu0 %714
        %716 = vadd.xlane.f32.xlu0 %v642
        %v717 = vpop.xlane.xlu0 %716
        %718 = vadd.xlane.f32.xlu0 %v643
        %v719 = vpop.xlane.xlu0 %718
        %720 = vadd.xlane.f32.xlu0 %v644
        %v721 = vpop.xlane.xlu0 %720
        %722 = vadd.xlane.f32.xlu0 %v645
        %v723 = vpop.xlane.xlu0 %722
        %724 = vadd.xlane.f32.xlu0 %v646
        %v725 = vpop.xlane.xlu0 %724
        %726 = vadd.xlane.f32.xlu0 %v647
        %v727 = vpop.xlane.xlu0 %726
        %728 = vadd.xlane.f32.xlu0 %v648
        %v729 = vpop.xlane.xlu0 %728
        %730 = vadd.xlane.f32.xlu0 %v649
        %v731 = vpop.xlane.xlu0 %730
        %v732 = vrcp.pop 128.0
        %v733 = vmul.f32 128.0, %v732
        %v734 = vsub.f32 1.0, %v733
        %v735 = vmul.f32 %v732, %v734
        %v736 = vadd.f32 %v732, %v735
        %vm737 = vweird.f32 %v732
        %v738 = vsel %vm737, %v732, %v736
        %v739 = vmul.f32 %v669, %v738
        %v740 = vmul.f32 %v671, %v738
        %v741 = vmul.f32 %v673, %v738
        %v742 = vmul.f32 %v675, %v738
        %v743 = vmul.f32 %v677, %v738
        %v744 = vmul.f32 %v679, %v738
        %v745 = vmul.f32 %v681, %v738
        %v746 = vmul.f32 %v683, %v738
        %v747 = vmul.f32 %v685, %v738
        %v748 = vmul.f32 %v687, %v738
        %v749 = vmul.f32 %v689, %v738
        %v750 = vmul.f32 %v691, %v738
        %v751 = vmul.f32 %v693, %v738
        %v752 = vmul.f32 %v695, %v738
        %v753 = vmul.f32 %v697, %v738
        %v754 = vmul.f32 %v699, %v738
        %v755 = vmul.f32 %v701, %v738
        %v756 = vmul.f32 %v703, %v738
        %v757 = vmul.f32 %v705, %v738
        %v758 = vmul.f32 %v707, %v738
        %v759 = vmul.f32 %v709, %v738
        %v760 = vmul.f32 %v711, %v738
        %v761 = vmul.f32 %v713, %v738
        %v762 = vmul.f32 %v715, %v738
        %v763 = vmul.f32 %v717, %v738
        %v764 = vmul.f32 %v719, %v738
        %v765 = vmul.f32 %v721, %v738
        %v766 = vmul.f32 %v723, %v738
        %v767 = vmul.f32 %v725, %v738
        %v768 = vmul.f32 %v727, %v738
        %v769 = vmul.f32 %v729, %v738
        %v770 = vmul.f32 %v731, %v738
        %v771 = vsub.f32 %v618, %v739
        %v772 = vsub.f32 %v619, %v740
        %v773 = vsub.f32 %v620, %v741
        %v774 = vsub.f32 %v621, %v742
        %v775 = vsub.f32 %v622, %v743
        %v776 = vsub.f32 %v623, %v744
        %v777 = vsub.f32 %v624, %v745
        %v778 = vsub.f32 %v625, %v746
        %v779 = vsub.f32 %v626, %v747
        %v780 = vsub.f32 %v627, %v748
        %v781 = vsub.f32 %v628, %v749
        %v782 = vsub.f32 %v629, %v750
        %v783 = vsub.f32 %v630, %v751
        %v784 = vsub.f32 %v631, %v752
        %v785 = vsub.f32 %v632, %v753
        %v786 = vsub.f32 %v633, %v754
        %v787 = vsub.f32 %v634, %v755
        %v788 = vsub.f32 %v635, %v756
        %v789 = vsub.f32 %v636, %v757
        %v790 = vsub.f32 %v637, %v758
        %v791 = vsub.f32 %v638, %v759
        %v792 = vsub.f32 %v639, %v760
        %v793 = vsub.f32 %v640, %v761
        %v794 = vsub.f32 %v641, %v762
        %v795 = vsub.f32 %v642, %v763
        %v796 = vsub.f32 %v643, %v764
        %v797 = vsub.f32 %v644, %v765
        %v798 = vsub.f32 %v645, %v766
        %v799 = vsub.f32 %v646, %v767
        %v800 = vsub.f32 %v647, %v768
        %v801 = vsub.f32 %v648, %v769
        %v802 = vsub.f32 %v649, %v770
        %v803 = vmul.f32 %v771, %v771
        %v804 = vmul.f32 %v772, %v772
        %v805 = vmul.f32 %v773, %v773
        %v806 = vmul.f32 %v774, %v774
        %v807 = vmul.f32 %v775, %v775
        %v808 = vmul.f32 %v776, %v776
        %v809 = vmul.f32 %v777, %v777
        %v810 = vmul.f32 %v778, %v778
        %v811 = vmul.f32 %v779, %v779
        %v812 = vmul.f32 %v780, %v780
        %v813 = vmul.f32 %v781, %v781
        %v814 = vmul.f32 %v782, %v782
        %v815 = vmul.f32 %v783, %v783
        %v816 = vmul.f32 %v784, %v784
        %v817 = vmul.f32 %v785, %v785
        %v818 = vmul.f32 %v786, %v786
        %v819 = vmul.f32 %v787, %v787
        %v820 = vmul.f32 %v788, %v788
        %v821 = vmul.f32 %v789, %v789
        %v822 = vmul.f32 %v790, %v790
        %v823 = vmul.f32 %v791, %v791
        %v824 = vmul.f32 %v792, %v792
        %v825 = vmul.f32 %v793, %v793
        %v826 = vmul.f32 %v794, %v794
        %v827 = vmul.f32 %v795, %v795
        %v828 = vmul.f32 %v796, %v796
        %v829 = vmul.f32 %v797, %v797
        %v830 = vmul.f32 %v798, %v798
        %v831 = vmul.f32 %v799, %v799
        %v832 = vmul.f32 %v800, %v800
        %v833 = vmul.f32 %v801, %v801
        %v834 = vmul.f32 %v802, %v802
        %835 = vadd.xlane.f32.xlu0 %v803
        %v836 = vpop.xlane.xlu0 %835
        %837 = vadd.xlane.f32.xlu0 %v804
        %v838 = vpop.xlane.xlu0 %837
        %839 = vadd.xlane.f32.xlu0 %v805
        %v840 = vpop.xlane.xlu0 %839
        %841 = vadd.xlane.f32.xlu0 %v806
        %v842 = vpop.xlane.xlu0 %841
        %843 = vadd.xlane.f32.xlu0 %v807
        %v844 = vpop.xlane.xlu0 %843
        %845 = vadd.xlane.f32.xlu0 %v808
        %v846 = vpop.xlane.xlu0 %845
        %847 = vadd.xlane.f32.xlu0 %v809
        %v848 = vpop.xlane.xlu0 %847
        %849 = vadd.xlane.f32.xlu0 %v810
        %v850 = vpop.xlane.xlu0 %849
        %851 = vadd.xlane.f32.xlu0 %v811
        %v852 = vpop.xlane.xlu0 %851
        %853 = vadd.xlane.f32.xlu0 %v812
        %v854 = vpop.xlane.xlu0 %853
        %855 = vadd.xlane.f32.xlu0 %v813
        %v856 = vpop.xlane.xlu0 %855
        %857 = vadd.xlane.f32.xlu0 %v814
        %v858 = vpop.xlane.xlu0 %857
        %859 = vadd.xlane.f32.xlu0 %v815
        %v860 = vpop.xlane.xlu0 %859
        %861 = vadd.xlane.f32.xlu0 %v816
        %v862 = vpop.xlane.xlu0 %861
        %863 = vadd.xlane.f32.xlu0 %v817
        %v864 = vpop.xlane.xlu0 %863
        %865 = vadd.xlane.f32.xlu0 %v818
        %v866 = vpop.xlane.xlu0 %865
        %867 = vadd.xlane.f32.xlu0 %v819
        %v868 = vpop.xlane.xlu0 %867
        %869 = vadd.xlane.f32.xlu0 %v820
        %v870 = vpop.xlane.xlu0 %869
        %871 = vadd.xlane.f32.xlu0 %v821
        %v872 = vpop.xlane.xlu0 %871
        %873 = vadd.xlane.f32.xlu0 %v822
        %v874 = vpop.xlane.xlu0 %873
        %875 = vadd.xlane.f32.xlu0 %v823
        %v876 = vpop.xlane.xlu0 %875
        %877 = vadd.xlane.f32.xlu0 %v824
        %v878 = vpop.xlane.xlu0 %877
        %879 = vadd.xlane.f32.xlu0 %v825
        %v880 = vpop.xlane.xlu0 %879
        %881 = vadd.xlane.f32.xlu0 %v826
        %v882 = vpop.xlane.xlu0 %881
        %883 = vadd.xlane.f32.xlu0 %v827
        %v884 = vpop.xlane.xlu0 %883
        %885 = vadd.xlane.f32.xlu0 %v828
        %v886 = vpop.xlane.xlu0 %885
        %887 = vadd.xlane.f32.xlu0 %v829
        %v888 = vpop.xlane.xlu0 %887
        %889 = vadd.xlane.f32.xlu0 %v830
        %v890 = vpop.xlane.xlu0 %889
        %891 = vadd.xlane.f32.xlu0 %v831
        %v892 = vpop.xlane.xlu0 %891
        %893 = vadd.xlane.f32.xlu0 %v832
        %v894 = vpop.xlane.xlu0 %893
        %895 = vadd.xlane.f32.xlu0 %v833
        %v896 = vpop.xlane.xlu0 %895
        %897 = vadd.xlane.f32.xlu0 %v834
        %v898 = vpop.xlane.xlu0 %897
        %v899 = vmul.f32 %v836, %v738
        %v900 = vmul.f32 %v838, %v738
        %v901 = vmul.f32 %v840, %v738
        %v902 = vmul.f32 %v842, %v738
        %v903 = vmul.f32 %v844, %v738
        %v904 = vmul.f32 %v846, %v738
        %v905 = vmul.f32 %v848, %v738
        %v906 = vmul.f32 %v850, %v738
        %v907 = vmul.f32 %v852, %v738
        %v908 = vmul.f32 %v854, %v738
        %v909 = vmul.f32 %v856, %v738
        %v910 = vmul.f32 %v858, %v738
        %v911 = vmul.f32 %v860, %v738
        %v912 = vmul.f32 %v862, %v738
        %v913 = vmul.f32 %v864, %v738
        %v914 = vmul.f32 %v866, %v738
        %v915 = vmul.f32 %v868, %v738
        %v916 = vmul.f32 %v870, %v738
        %v917 = vmul.f32 %v872, %v738
        %v918 = vmul.f32 %v874, %v738
        %v919 = vmul.f32 %v876, %v738
        %v920 = vmul.f32 %v878, %v738
        %v921 = vmul.f32 %v880, %v738
        %v922 = vmul.f32 %v882, %v738
        %v923 = vmul.f32 %v884, %v738
        %v924 = vmul.f32 %v886, %v738
        %v925 = vmul.f32 %v888, %v738
        %v926 = vmul.f32 %v890, %v738
        %v927 = vmul.f32 %v892, %v738
        %v928 = vmul.f32 %v894, %v738
        %v929 = vmul.f32 %v896, %v738
        %v930 = vmul.f32 %v898, %v738
        %v931 = vadd.f32 %v899, 1e-05
        %v932 = vadd.f32 %v900, 1e-05
        %v933 = vadd.f32 %v901, 1e-05
        %v934 = vadd.f32 %v902, 1e-05
        %v935 = vadd.f32 %v903, 1e-05
        %v936 = vadd.f32 %v904, 1e-05
        %v937 = vadd.f32 %v905, 1e-05
        %v938 = vadd.f32 %v906, 1e-05
        %v939 = vadd.f32 %v907, 1e-05
        %v940 = vadd.f32 %v908, 1e-05
        %v941 = vadd.f32 %v909, 1e-05
        %v942 = vadd.f32 %v910, 1e-05
        %v943 = vadd.f32 %v911, 1e-05
        %v944 = vadd.f32 %v912, 1e-05
        %v945 = vadd.f32 %v913, 1e-05
        %v946 = vadd.f32 %v914, 1e-05
        %v947 = vadd.f32 %v915, 1e-05
        %v948 = vadd.f32 %v916, 1e-05
        %v949 = vadd.f32 %v917, 1e-05
        %v950 = vadd.f32 %v918, 1e-05
        %v951 = vadd.f32 %v919, 1e-05
        %v952 = vadd.f32 %v920, 1e-05
        %v953 = vadd.f32 %v921, 1e-05
        %v954 = vadd.f32 %v922, 1e-05
        %v955 = vadd.f32 %v923, 1e-05
        %v956 = vadd.f32 %v924, 1e-05
        %v957 = vadd.f32 %v925, 1e-05
        %v958 = vadd.f32 %v926, 1e-05
        %v959 = vadd.f32 %v927, 1e-05
        %v960 = vadd.f32 %v928, 1e-05
        %v961 = vadd.f32 %v929, 1e-05
        %v962 = vadd.f32 %v930, 1e-05
        %v963 = vrsqrt.pop %v931
        %v964 = vmul.f32 %v963, %v931
        %v965 = vmul.f32 %v964, %v963
        %v966 = vmul.f32 0.5, %v965
        %v967 = vsub.f32 1.5, %v966
        %v968 = vmul.f32 %v963, %v967
        %vm969 = vweird.f32 %v931
        %vm970 = vweird.f32 %v963
        %vm971 = vmor %vm969, %vm970
        %v972 = vsel %vm971, %v963, %v968
        %v973 = vrsqrt.pop %v932
        %v974 = vmul.f32 %v973, %v932
        %v975 = vmul.f32 %v974, %v973
        %v976 = vmul.f32 0.5, %v975
        %v977 = vsub.f32 1.5, %v976
        %v978 = vmul.f32 %v973, %v977
        %vm979 = vweird.f32 %v932
        %vm980 = vweird.f32 %v973
        %vm981 = vmor %vm979, %vm980
        %v982 = vsel %vm981, %v973, %v978
        %v983 = vrsqrt.pop %v933
        %v984 = vmul.f32 %v983, %v933
        %v985 = vmul.f32 %v984, %v983
        %v986 = vmul.f32 0.5, %v985
        %v987 = vsub.f32 1.5, %v986
        %v988 = vmul.f32 %v983, %v987
        %vm989 = vweird.f32 %v933
        %vm990 = vweird.f32 %v983
        %vm991 = vmor %vm989, %vm990
        %v992 = vsel %vm991, %v983, %v988
        %v993 = vrsqrt.pop %v934
        %v994 = vmul.f32 %v993, %v934
        %v995 = vmul.f32 %v994, %v993
        %v996 = vmul.f32 0.5, %v995
        %v997 = vsub.f32 1.5, %v996
        %v998 = vmul.f32 %v993, %v997
        %vm999 = vweird.f32 %v934
        %vm1000 = vweird.f32 %v993
        %vm1001 = vmor %vm999, %vm1000
        %v1002 = vsel %vm1001, %v993, %v998
        %v1003 = vrsqrt.pop %v935
        %v1004 = vmul.f32 %v1003, %v935
        %v1005 = vmul.f32 %v1004, %v1003
        %v1006 = vmul.f32 0.5, %v1005
        %v1007 = vsub.f32 1.5, %v1006
        %v1008 = vmul.f32 %v1003, %v1007
        %vm1009 = vweird.f32 %v935
        %vm1010 = vweird.f32 %v1003
        %vm1011 = vmor %vm1009, %vm1010
        %v1012 = vsel %vm1011, %v1003, %v1008
        %v1013 = vrsqrt.pop %v936
        %v1014 = vmul.f32 %v1013, %v936
        %v1015 = vmul.f32 %v1014, %v1013
        %v1016 = vmul.f32 0.5, %v1015
        %v1017 = vsub.f32 1.5, %v1016
        %v1018 = vmul.f32 %v1013, %v1017
        %vm1019 = vweird.f32 %v936
        %vm1020 = vweird.f32 %v1013
        %vm1021 = vmor %vm1019, %vm1020
        %v1022 = vsel %vm1021, %v1013, %v1018
        %v1023 = vrsqrt.pop %v937
        %v1024 = vmul.f32 %v1023, %v937
        %v1025 = vmul.f32 %v1024, %v1023
        %v1026 = vmul.f32 0.5, %v1025
        %v1027 = vsub.f32 1.5, %v1026
        %v1028 = vmul.f32 %v1023, %v1027
        %vm1029 = vweird.f32 %v937
        %vm1030 = vweird.f32 %v1023
        %vm1031 = vmor %vm1029, %vm1030
        %v1032 = vsel %vm1031, %v1023, %v1028
        %v1033 = vrsqrt.pop %v938
        %v1034 = vmul.f32 %v1033, %v938
        %v1035 = vmul.f32 %v1034, %v1033
        %v1036 = vmul.f32 0.5, %v1035
        %v1037 = vsub.f32 1.5, %v1036
        %v1038 = vmul.f32 %v1033, %v1037
        %vm1039 = vweird.f32 %v938
        %vm1040 = vweird.f32 %v1033
        %vm1041 = vmor %vm1039, %vm1040
        %v1042 = vsel %vm1041, %v1033, %v1038
        %v1043 = vrsqrt.pop %v939
        %v1044 = vmul.f32 %v1043, %v939
        %v1045 = vmul.f32 %v1044, %v1043
        %v1046 = vmul.f32 0.5, %v1045
        %v1047 = vsub.f32 1.5, %v1046
        %v1048 = vmul.f32 %v1043, %v1047
        %vm1049 = vweird.f32 %v939
        %vm1050 = vweird.f32 %v1043
        %vm1051 = vmor %vm1049, %vm1050
        %v1052 = vsel %vm1051, %v1043, %v1048
        %v1053 = vrsqrt.pop %v940
        %v1054 = vmul.f32 %v1053, %v940
        %v1055 = vmul.f32 %v1054, %v1053
        %v1056 = vmul.f32 0.5, %v1055
        %v1057 = vsub.f32 1.5, %v1056
        %v1058 = vmul.f32 %v1053, %v1057
        %vm1059 = vweird.f32 %v940
        %vm1060 = vweird.f32 %v1053
        %vm1061 = vmor %vm1059, %vm1060
        %v1062 = vsel %vm1061, %v1053, %v1058
        %v1063 = vrsqrt.pop %v941
        %v1064 = vmul.f32 %v1063, %v941
        %v1065 = vmul.f32 %v1064, %v1063
        %v1066 = vmul.f32 0.5, %v1065
        %v1067 = vsub.f32 1.5, %v1066
        %v1068 = vmul.f32 %v1063, %v1067
        %vm1069 = vweird.f32 %v941
        %vm1070 = vweird.f32 %v1063
        %vm1071 = vmor %vm1069, %vm1070
        %v1072 = vsel %vm1071, %v1063, %v1068
        %v1073 = vrsqrt.pop %v942
        %v1074 = vmul.f32 %v1073, %v942
        %v1075 = vmul.f32 %v1074, %v1073
        %v1076 = vmul.f32 0.5, %v1075
        %v1077 = vsub.f32 1.5, %v1076
        %v1078 = vmul.f32 %v1073, %v1077
        %vm1079 = vweird.f32 %v942
        %vm1080 = vweird.f32 %v1073
        %vm1081 = vmor %vm1079, %vm1080
        %v1082 = vsel %vm1081, %v1073, %v1078
        %v1083 = vrsqrt.pop %v943
        %v1084 = vmul.f32 %v1083, %v943
        %v1085 = vmul.f32 %v1084, %v1083
        %v1086 = vmul.f32 0.5, %v1085
        %v1087 = vsub.f32 1.5, %v1086
        %v1088 = vmul.f32 %v1083, %v1087
        %vm1089 = vweird.f32 %v943
        %vm1090 = vweird.f32 %v1083
        %vm1091 = vmor %vm1089, %vm1090
        %v1092 = vsel %vm1091, %v1083, %v1088
        %v1093 = vrsqrt.pop %v944
        %v1094 = vmul.f32 %v1093, %v944
        %v1095 = vmul.f32 %v1094, %v1093
        %v1096 = vmul.f32 0.5, %v1095
        %v1097 = vsub.f32 1.5, %v1096
        %v1098 = vmul.f32 %v1093, %v1097
        %vm1099 = vweird.f32 %v944
        %vm1100 = vweird.f32 %v1093
        %vm1101 = vmor %vm1099, %vm1100
        %v1102 = vsel %vm1101, %v1093, %v1098
        %v1103 = vrsqrt.pop %v945
        %v1104 = vmul.f32 %v1103, %v945
        %v1105 = vmul.f32 %v1104, %v1103
        %v1106 = vmul.f32 0.5, %v1105
        %v1107 = vsub.f32 1.5, %v1106
        %v1108 = vmul.f32 %v1103, %v1107
        %vm1109 = vweird.f32 %v945
        %vm1110 = vweird.f32 %v1103
        %vm1111 = vmor %vm1109, %vm1110
        %v1112 = vsel %vm1111, %v1103, %v1108
        %v1113 = vrsqrt.pop %v946
        %v1114 = vmul.f32 %v1113, %v946
        %v1115 = vmul.f32 %v1114, %v1113
        %v1116 = vmul.f32 0.5, %v1115
        %v1117 = vsub.f32 1.5, %v1116
        %v1118 = vmul.f32 %v1113, %v1117
        %vm1119 = vweird.f32 %v946
        %vm1120 = vweird.f32 %v1113
        %vm1121 = vmor %vm1119, %vm1120
        %v1122 = vsel %vm1121, %v1113, %v1118
        %v1123 = vrsqrt.pop %v947
        %v1124 = vmul.f32 %v1123, %v947
        %v1125 = vmul.f32 %v1124, %v1123
        %v1126 = vmul.f32 0.5, %v1125
        %v1127 = vsub.f32 1.5, %v1126
        %v1128 = vmul.f32 %v1123, %v1127
        %vm1129 = vweird.f32 %v947
        %vm1130 = vweird.f32 %v1123
        %vm1131 = vmor %vm1129, %vm1130
        %v1132 = vsel %vm1131, %v1123, %v1128
        %v1133 = vrsqrt.pop %v948
        %v1134 = vmul.f32 %v1133, %v948
        %v1135 = vmul.f32 %v1134, %v1133
        %v1136 = vmul.f32 0.5, %v1135
        %v1137 = vsub.f32 1.5, %v1136
        %v1138 = vmul.f32 %v1133, %v1137
        %vm1139 = vweird.f32 %v948
        %vm1140 = vweird.f32 %v1133
        %vm1141 = vmor %vm1139, %vm1140
        %v1142 = vsel %vm1141, %v1133, %v1138
        %v1143 = vrsqrt.pop %v949
        %v1144 = vmul.f32 %v1143, %v949
        %v1145 = vmul.f32 %v1144, %v1143
        %v1146 = vmul.f32 0.5, %v1145
        %v1147 = vsub.f32 1.5, %v1146
        %v1148 = vmul.f32 %v1143, %v1147
        %vm1149 = vweird.f32 %v949
        %vm1150 = vweird.f32 %v1143
        %vm1151 = vmor %vm1149, %vm1150
        %v1152 = vsel %vm1151, %v1143, %v1148
        %v1153 = vrsqrt.pop %v950
        %v1154 = vmul.f32 %v1153, %v950
        %v1155 = vmul.f32 %v1154, %v1153
        %v1156 = vmul.f32 0.5, %v1155
        %v1157 = vsub.f32 1.5, %v1156
        %v1158 = vmul.f32 %v1153, %v1157
        %vm1159 = vweird.f32 %v950
        %vm1160 = vweird.f32 %v1153
        %vm1161 = vmor %vm1159, %vm1160
        %v1162 = vsel %vm1161, %v1153, %v1158
        %v1163 = vrsqrt.pop %v951
        %v1164 = vmul.f32 %v1163, %v951
        %v1165 = vmul.f32 %v1164, %v1163
        %v1166 = vmul.f32 0.5, %v1165
        %v1167 = vsub.f32 1.5, %v1166
        %v1168 = vmul.f32 %v1163, %v1167
        %vm1169 = vweird.f32 %v951
        %vm1170 = vweird.f32 %v1163
        %vm1171 = vmor %vm1169, %vm1170
        %v1172 = vsel %vm1171, %v1163, %v1168
        %v1173 = vrsqrt.pop %v952
        %v1174 = vmul.f32 %v1173, %v952
        %v1175 = vmul.f32 %v1174, %v1173
        %v1176 = vmul.f32 0.5, %v1175
        %v1177 = vsub.f32 1.5, %v1176
        %v1178 = vmul.f32 %v1173, %v1177
        %vm1179 = vweird.f32 %v952
        %vm1180 = vweird.f32 %v1173
        %vm1181 = vmor %vm1179, %vm1180
        %v1182 = vsel %vm1181, %v1173, %v1178
        %v1183 = vrsqrt.pop %v953
        %v1184 = vmul.f32 %v1183, %v953
        %v1185 = vmul.f32 %v1184, %v1183
        %v1186 = vmul.f32 0.5, %v1185
        %v1187 = vsub.f32 1.5, %v1186
        %v1188 = vmul.f32 %v1183, %v1187
        %vm1189 = vweird.f32 %v953
        %vm1190 = vweird.f32 %v1183
        %vm1191 = vmor %vm1189, %vm1190
        %v1192 = vsel %vm1191, %v1183, %v1188
        %v1193 = vrsqrt.pop %v954
        %v1194 = vmul.f32 %v1193, %v954
        %v1195 = vmul.f32 %v1194, %v1193
        %v1196 = vmul.f32 0.5, %v1195
        %v1197 = vsub.f32 1.5, %v1196
        %v1198 = vmul.f32 %v1193, %v1197
        %vm1199 = vweird.f32 %v954
        %vm1200 = vweird.f32 %v1193
        %vm1201 = vmor %vm1199, %vm1200
        %v1202 = vsel %vm1201, %v1193, %v1198
        %v1203 = vrsqrt.pop %v955
        %v1204 = vmul.f32 %v1203, %v955
        %v1205 = vmul.f32 %v1204, %v1203
        %v1206 = vmul.f32 0.5, %v1205
        %v1207 = vsub.f32 1.5, %v1206
        %v1208 = vmul.f32 %v1203, %v1207
        %vm1209 = vweird.f32 %v955
        %vm1210 = vweird.f32 %v1203
        %vm1211 = vmor %vm1209, %vm1210
        %v1212 = vsel %vm1211, %v1203, %v1208
        %v1213 = vrsqrt.pop %v956
        %v1214 = vmul.f32 %v1213, %v956
        %v1215 = vmul.f32 %v1214, %v1213
        %v1216 = vmul.f32 0.5, %v1215
        %v1217 = vsub.f32 1.5, %v1216
        %v1218 = vmul.f32 %v1213, %v1217
        %vm1219 = vweird.f32 %v956
        %vm1220 = vweird.f32 %v1213
        %vm1221 = vmor %vm1219, %vm1220
        %v1222 = vsel %vm1221, %v1213, %v1218
        %v1223 = vrsqrt.pop %v957
        %v1224 = vmul.f32 %v1223, %v957
        %v1225 = vmul.f32 %v1224, %v1223
        %v1226 = vmul.f32 0.5, %v1225
        %v1227 = vsub.f32 1.5, %v1226
        %v1228 = vmul.f32 %v1223, %v1227
        %vm1229 = vweird.f32 %v957
        %vm1230 = vweird.f32 %v1223
        %vm1231 = vmor %vm1229, %vm1230
        %v1232 = vsel %vm1231, %v1223, %v1228
        %v1233 = vrsqrt.pop %v958
        %v1234 = vmul.f32 %v1233, %v958
        %v1235 = vmul.f32 %v1234, %v1233
        %v1236 = vmul.f32 0.5, %v1235
        %v1237 = vsub.f32 1.5, %v1236
        %v1238 = vmul.f32 %v1233, %v1237
        %vm1239 = vweird.f32 %v958
        %vm1240 = vweird.f32 %v1233
        %vm1241 = vmor %vm1239, %vm1240
        %v1242 = vsel %vm1241, %v1233, %v1238
        %v1243 = vrsqrt.pop %v959
        %v1244 = vmul.f32 %v1243, %v959
        %v1245 = vmul.f32 %v1244, %v1243
        %v1246 = vmul.f32 0.5, %v1245
        %v1247 = vsub.f32 1.5, %v1246
        %v1248 = vmul.f32 %v1243, %v1247
        %vm1249 = vweird.f32 %v959
        %vm1250 = vweird.f32 %v1243
        %vm1251 = vmor %vm1249, %vm1250
        %v1252 = vsel %vm1251, %v1243, %v1248
        %v1253 = vrsqrt.pop %v960
        %v1254 = vmul.f32 %v1253, %v960
        %v1255 = vmul.f32 %v1254, %v1253
        %v1256 = vmul.f32 0.5, %v1255
        %v1257 = vsub.f32 1.5, %v1256
        %v1258 = vmul.f32 %v1253, %v1257
        %vm1259 = vweird.f32 %v960
        %vm1260 = vweird.f32 %v1253
        %vm1261 = vmor %vm1259, %vm1260
        %v1262 = vsel %vm1261, %v1253, %v1258
        %v1263 = vrsqrt.pop %v961
        %v1264 = vmul.f32 %v1263, %v961
        %v1265 = vmul.f32 %v1264, %v1263
        %v1266 = vmul.f32 0.5, %v1265
        %v1267 = vsub.f32 1.5, %v1266
        %v1268 = vmul.f32 %v1263, %v1267
        %vm1269 = vweird.f32 %v961
        %vm1270 = vweird.f32 %v1263
        %vm1271 = vmor %vm1269, %vm1270
        %v1272 = vsel %vm1271, %v1263, %v1268
        %v1273 = vrsqrt.pop %v962
        %v1274 = vmul.f32 %v1273, %v962
        %v1275 = vmul.f32 %v1274, %v1273
        %v1276 = vmul.f32 0.5, %v1275
        %v1277 = vsub.f32 1.5, %v1276
        %v1278 = vmul.f32 %v1273, %v1277
        %vm1279 = vweird.f32 %v962
        %vm1280 = vweird.f32 %v1273
        %vm1281 = vmor %vm1279, %vm1280
        %v1282 = vsel %vm1281, %v1273, %v1278
        %v1283 = vmul.f32 %v771, %v972
        %v1284 = vmul.f32 %v772, %v982
        %v1285 = vmul.f32 %v773, %v992
        %v1286 = vmul.f32 %v774, %v1002
        %v1287 = vmul.f32 %v775, %v1012
        %v1288 = vmul.f32 %v776, %v1022
        %v1289 = vmul.f32 %v777, %v1032
        %v1290 = vmul.f32 %v778, %v1042
        %v1291 = vmul.f32 %v779, %v1052
        %v1292 = vmul.f32 %v780, %v1062
        %v1293 = vmul.f32 %v781, %v1072
        %v1294 = vmul.f32 %v782, %v1082
        %v1295 = vmul.f32 %v783, %v1092
        %v1296 = vmul.f32 %v784, %v1102
        %v1297 = vmul.f32 %v785, %v1112
        %v1298 = vmul.f32 %v786, %v1122
        %v1299 = vmul.f32 %v787, %v1132
        %v1300 = vmul.f32 %v788, %v1142
        %v1301 = vmul.f32 %v789, %v1152
        %v1302 = vmul.f32 %v790, %v1162
        %v1303 = vmul.f32 %v791, %v1172
        %v1304 = vmul.f32 %v792, %v1182
        %v1305 = vmul.f32 %v793, %v1192
        %v1306 = vmul.f32 %v794, %v1202
        %v1307 = vmul.f32 %v795, %v1212
        %v1308 = vmul.f32 %v796, %v1222
        %v1309 = vmul.f32 %v797, %v1232
        %v1310 = vmul.f32 %v798, %v1242
        %v1311 = vmul.f32 %v799, %v1252
        %v1312 = vmul.f32 %v800, %v1262
        %v1313 = vmul.f32 %v801, %v1272
        %v1314 = vmul.f32 %v802, %v1282
        %v1316 = vperm.slane %v666, 0
        %v1318 = vmul.f32 %v1283, %v1316
        %v1319 = vmul.f32 %v1284, %v1316
        %v1320 = vmul.f32 %v1285, %v1316
        %v1321 = vmul.f32 %v1286, %v1316
        %v1322 = vmul.f32 %v1287, %v1316
        %v1323 = vmul.f32 %v1288, %v1316
        %v1324 = vmul.f32 %v1289, %v1316
        %v1325 = vmul.f32 %v1290, %v1316
        %v1326 = vmul.f32 %v1291, %v1316
        %v1327 = vmul.f32 %v1292, %v1316
        %v1328 = vmul.f32 %v1293, %v1316
        %v1329 = vmul.f32 %v1294, %v1316
        %v1330 = vmul.f32 %v1295, %v1316
        %v1331 = vmul.f32 %v1296, %v1316
        %v1332 = vmul.f32 %v1297, %v1316
        %v1333 = vmul.f32 %v1298, %v1316
        %v1334 = vmul.f32 %v1299, %v1316
        %v1335 = vmul.f32 %v1300, %v1316
        %v1336 = vmul.f32 %v1301, %v1316
        %v1337 = vmul.f32 %v1302, %v1316
        %v1338 = vmul.f32 %v1303, %v1316
        %v1339 = vmul.f32 %v1304, %v1316
        %v1340 = vmul.f32 %v1305, %v1316
        %v1341 = vmul.f32 %v1306, %v1316
        %v1342 = vmul.f32 %v1307, %v1316
        %v1343 = vmul.f32 %v1308, %v1316
        %v1344 = vmul.f32 %v1309, %v1316
        %v1345 = vmul.f32 %v1310, %v1316
        %v1346 = vmul.f32 %v1311, %v1316
        %v1347 = vmul.f32 %v1312, %v1316
        %v1348 = vmul.f32 %v1313, %v1316
        %v1349 = vmul.f32 %v1314, %v1316
        %v1351 = vperm.slane %v667, 0
        %v1353 = vadd.f32 %v1318, %v1351
        %v1354 = vadd.f32 %v1319, %v1351
        %v1355 = vadd.f32 %v1320, %v1351
        %v1356 = vadd.f32 %v1321, %v1351
        %v1357 = vadd.f32 %v1322, %v1351
        %v1358 = vadd.f32 %v1323, %v1351
        %v1359 = vadd.f32 %v1324, %v1351
        %v1360 = vadd.f32 %v1325, %v1351
        %v1361 = vadd.f32 %v1326, %v1351
        %v1362 = vadd.f32 %v1327, %v1351
        %v1363 = vadd.f32 %v1328, %v1351
        %v1364 = vadd.f32 %v1329, %v1351
        %v1365 = vadd.f32 %v1330, %v1351
        %v1366 = vadd.f32 %v1331, %v1351
        %v1367 = vadd.f32 %v1332, %v1351
        %v1368 = vadd.f32 %v1333, %v1351
        %v1369 = vadd.f32 %v1334, %v1351
        %v1370 = vadd.f32 %v1335, %v1351
        %v1371 = vadd.f32 %v1336, %v1351
        %v1372 = vadd.f32 %v1337, %v1351
        %v1373 = vadd.f32 %v1338, %v1351
        %v1374 = vadd.f32 %v1339, %v1351
        %v1375 = vadd.f32 %v1340, %v1351
        %v1376 = vadd.f32 %v1341, %v1351
        %v1377 = vadd.f32 %v1342, %v1351
        %v1378 = vadd.f32 %v1343, %v1351
        %v1379 = vadd.f32 %v1344, %v1351
        %v1380 = vadd.f32 %v1345, %v1351
        %v1381 = vadd.f32 %v1346, %v1351
        %v1382 = vadd.f32 %v1347, %v1351
        %v1383 = vadd.f32 %v1348, %v1351
        %v1384 = vadd.f32 %v1349, %v1351
        %1385 = vadd.xlane.f32.xlu0 %v650
        %v1386 = vpop.xlane.xlu0 %1385
        %1387 = vadd.xlane.f32.xlu0 %v651
        %v1388 = vpop.xlane.xlu0 %1387
        %1389 = vadd.xlane.f32.xlu0 %v652
        %v1390 = vpop.xlane.xlu0 %1389
        %1391 = vadd.xlane.f32.xlu0 %v653
        %v1392 = vpop.xlane.xlu0 %1391
        %1393 = vadd.xlane.f32.xlu0 %v654
        %v1394 = vpop.xlane.xlu0 %1393
        %1395 = vadd.xlane.f32.xlu0 %v655
        %v1396 = vpop.xlane.xlu0 %1395
        %1397 = vadd.xlane.f32.xlu0 %v656
        %v1398 = vpop.xlane.xlu0 %1397
        %1399 = vadd.xlane.f32.xlu0 %v657
        %v1400 = vpop.xlane.xlu0 %1399
        %1401 = vadd.xlane.f32.xlu0 %v658
        %v1402 = vpop.xlane.xlu0 %1401
        %1403 = vadd.xlane.f32.xlu0 %v659
        %v1404 = vpop.xlane.xlu0 %1403
        %1405 = vadd.xlane.f32.xlu0 %v660
        %v1406 = vpop.xlane.xlu0 %1405
        %1407 = vadd.xlane.f32.xlu0 %v661
        %v1408 = vpop.xlane.xlu0 %1407
        %1409 = vadd.xlane.f32.xlu0 %v662
        %v1410 = vpop.xlane.xlu0 %1409
        %1411 = vadd.xlane.f32.xlu0 %v663
        %v1412 = vpop.xlane.xlu0 %1411
        %1413 = vadd.xlane.f32.xlu0 %v664
        %v1414 = vpop.xlane.xlu0 %1413
        %1415 = vadd.xlane.f32.xlu0 %v665
        %v1416 = vpop.xlane.xlu0 %1415
        %v1417 = vmul.f32 %v1386, %v738
        %v1418 = vmul.f32 %v1388, %v738
        %v1419 = vmul.f32 %v1390, %v738
        %v1420 = vmul.f32 %v1392, %v738
        %v1421 = vmul.f32 %v1394, %v738
        %v1422 = vmul.f32 %v1396, %v738
        %v1423 = vmul.f32 %v1398, %v738
        %v1424 = vmul.f32 %v1400, %v738
        %v1425 = vmul.f32 %v1402, %v738
        %v1426 = vmul.f32 %v1404, %v738
        %v1427 = vmul.f32 %v1406, %v738
        %v1428 = vmul.f32 %v1408, %v738
        %v1429 = vmul.f32 %v1410, %v738
        %v1430 = vmul.f32 %v1412, %v738
        %v1431 = vmul.f32 %v1414, %v738
        %v1432 = vmul.f32 %v1416, %v738
        %v1433 = vsub.f32 %v650, %v1417
        %v1434 = vsub.f32 %v651, %v1418
        %v1435 = vsub.f32 %v652, %v1419
        %v1436 = vsub.f32 %v653, %v1420
        %v1437 = vsub.f32 %v654, %v1421
        %v1438 = vsub.f32 %v655, %v1422
        %v1439 = vsub.f32 %v656, %v1423
        %v1440 = vsub.f32 %v657, %v1424
        %v1441 = vsub.f32 %v658, %v1425
        %v1442 = vsub.f32 %v659, %v1426
        %v1443 = vsub.f32 %v660, %v1427
        %v1444 = vsub.f32 %v661, %v1428
        %v1445 = vsub.f32 %v662, %v1429
        %v1446 = vsub.f32 %v663, %v1430
        %v1447 = vsub.f32 %v664, %v1431
        %v1448 = vsub.f32 %v665, %v1432
        %v1449 = vmul.f32 %v1433, %v1433
        %v1450 = vmul.f32 %v1434, %v1434
        %v1451 = vmul.f32 %v1435, %v1435
        %v1452 = vmul.f32 %v1436, %v1436
        %v1453 = vmul.f32 %v1437, %v1437
        %v1454 = vmul.f32 %v1438, %v1438
        %v1455 = vmul.f32 %v1439, %v1439
        %v1456 = vmul.f32 %v1440, %v1440
        %v1457 = vmul.f32 %v1441, %v1441
        %v1458 = vmul.f32 %v1442, %v1442
        %v1459 = vmul.f32 %v1443, %v1443
        %v1460 = vmul.f32 %v1444, %v1444
        %v1461 = vmul.f32 %v1445, %v1445
        %v1462 = vmul.f32 %v1446, %v1446
        %v1463 = vmul.f32 %v1447, %v1447
        %v1464 = vmul.f32 %v1448, %v1448
        %1465 = vadd.xlane.f32.xlu0 %v1449
        %v1466 = vpop.xlane.xlu0 %1465
        %1467 = vadd.xlane.f32.xlu0 %v1450
        %v1468 = vpop.xlane.xlu0 %1467
        %1469 = vadd.xlane.f32.xlu0 %v1451
        %v1470 = vpop.xlane.xlu0 %1469
        %1471 = vadd.xlane.f32.xlu0 %v1452
        %v1472 = vpop.xlane.xlu0 %1471
        %1473 = vadd.xlane.f32.xlu0 %v1453
        %v1474 = vpop.xlane.xlu0 %1473
        %1475 = vadd.xlane.f32.xlu0 %v1454
        %v1476 = vpop.xlane.xlu0 %1475
        %1477 = vadd.xlane.f32.xlu0 %v1455
        %v1478 = vpop.xlane.xlu0 %1477
        %1479 = vadd.xlane.f32.xlu0 %v1456
        %v1480 = vpop.xlane.xlu0 %1479
        %1481 = vadd.xlane.f32.xlu0 %v1457
        %v1482 = vpop.xlane.xlu0 %1481
        %1483 = vadd.xlane.f32.xlu0 %v1458
        %v1484 = vpop.xlane.xlu0 %1483
        %1485 = vadd.xlane.f32.xlu0 %v1459
        %v1486 = vpop.xlane.xlu0 %1485
        %1487 = vadd.xlane.f32.xlu0 %v1460
        %v1488 = vpop.xlane.xlu0 %1487
        %1489 = vadd.xlane.f32.xlu0 %v1461
        %v1490 = vpop.xlane.xlu0 %1489
        %1491 = vadd.xlane.f32.xlu0 %v1462
        %v1492 = vpop.xlane.xlu0 %1491
        %1493 = vadd.xlane.f32.xlu0 %v1463
        %v1494 = vpop.xlane.xlu0 %1493
        %1495 = vadd.xlane.f32.xlu0 %v1464
        %v1496 = vpop.xlane.xlu0 %1495
        %v1497 = vmul.f32 %v1466, %v738
        %v1498 = vmul.f32 %v1468, %v738
        %v1499 = vmul.f32 %v1470, %v738
        %v1500 = vmul.f32 %v1472, %v738
        %v1501 = vmul.f32 %v1474, %v738
        %v1502 = vmul.f32 %v1476, %v738
        %v1503 = vmul.f32 %v1478, %v738
        %v1504 = vmul.f32 %v1480, %v738
        %v1505 = vmul.f32 %v1482, %v738
        %v1506 = vmul.f32 %v1484, %v738
        %v1507 = vmul.f32 %v1486, %v738
        %v1508 = vmul.f32 %v1488, %v738
        %v1509 = vmul.f32 %v1490, %v738
        %v1510 = vmul.f32 %v1492, %v738
        %v1511 = vmul.f32 %v1494, %v738
        %v1512 = vmul.f32 %v1496, %v738
        %v1513 = vadd.f32 %v1497, 1e-05
        %v1514 = vadd.f32 %v1498, 1e-05
        %v1515 = vadd.f32 %v1499, 1e-05
        %v1516 = vadd.f32 %v1500, 1e-05
        %v1517 = vadd.f32 %v1501, 1e-05
        %v1518 = vadd.f32 %v1502, 1e-05
        %v1519 = vadd.f32 %v1503, 1e-05
        %v1520 = vadd.f32 %v1504, 1e-05
        %v1521 = vadd.f32 %v1505, 1e-05
        %v1522 = vadd.f32 %v1506, 1e-05
        %v1523 = vadd.f32 %v1507, 1e-05
        %v1524 = vadd.f32 %v1508, 1e-05
        %v1525 = vadd.f32 %v1509, 1e-05
        %v1526 = vadd.f32 %v1510, 1e-05
        %v1527 = vadd.f32 %v1511, 1e-05
        %v1528 = vadd.f32 %v1512, 1e-05
        %v1529 = vrsqrt.pop %v1513
        %v1530 = vmul.f32 %v1529, %v1513
        %v1531 = vmul.f32 %v1530, %v1529
        %v1532 = vmul.f32 0.5, %v1531
        %v1533 = vsub.f32 1.5, %v1532
        %v1534 = vmul.f32 %v1529, %v1533
        %vm1535 = vweird.f32 %v1513
        %vm1536 = vweird.f32 %v1529
        %vm1537 = vmor %vm1535, %vm1536
        %v1538 = vsel %vm1537, %v1529, %v1534
        %v1539 = vrsqrt.pop %v1514
        %v1540 = vmul.f32 %v1539, %v1514
        %v1541 = vmul.f32 %v1540, %v1539
        %v1542 = vmul.f32 0.5, %v1541
        %v1543 = vsub.f32 1.5, %v1542
        %v1544 = vmul.f32 %v1539, %v1543
        %vm1545 = vweird.f32 %v1514
        %vm1546 = vweird.f32 %v1539
        %vm1547 = vmor %vm1545, %vm1546
        %v1548 = vsel %vm1547, %v1539, %v1544
        %v1549 = vrsqrt.pop %v1515
        %v1550 = vmul.f32 %v1549, %v1515
        %v1551 = vmul.f32 %v1550, %v1549
        %v1552 = vmul.f32 0.5, %v1551
        %v1553 = vsub.f32 1.5, %v1552
        %v1554 = vmul.f32 %v1549, %v1553
        %vm1555 = vweird.f32 %v1515
        %vm1556 = vweird.f32 %v1549
        %vm1557 = vmor %vm1555, %vm1556
        %v1558 = vsel %vm1557, %v1549, %v1554
        %v1559 = vrsqrt.pop %v1516
        %v1560 = vmul.f32 %v1559, %v1516
        %v1561 = vmul.f32 %v1560, %v1559
        %v1562 = vmul.f32 0.5, %v1561
        %v1563 = vsub.f32 1.5, %v1562
        %v1564 = vmul.f32 %v1559, %v1563
        %vm1565 = vweird.f32 %v1516
        %vm1566 = vweird.f32 %v1559
        %vm1567 = vmor %vm1565, %vm1566
        %v1568 = vsel %vm1567, %v1559, %v1564
        %v1569 = vrsqrt.pop %v1517
        %v1570 = vmul.f32 %v1569, %v1517
        %v1571 = vmul.f32 %v1570, %v1569
        %v1572 = vmul.f32 0.5, %v1571
        %v1573 = vsub.f32 1.5, %v1572
        %v1574 = vmul.f32 %v1569, %v1573
        %vm1575 = vweird.f32 %v1517
        %vm1576 = vweird.f32 %v1569
        %vm1577 = vmor %vm1575, %vm1576
        %v1578 = vsel %vm1577, %v1569, %v1574
        %v1579 = vrsqrt.pop %v1518
        %v1580 = vmul.f32 %v1579, %v1518
        %v1581 = vmul.f32 %v1580, %v1579
        %v1582 = vmul.f32 0.5, %v1581
        %v1583 = vsub.f32 1.5, %v1582
        %v1584 = vmul.f32 %v1579, %v1583
        %vm1585 = vweird.f32 %v1518
        %vm1586 = vweird.f32 %v1579
        %vm1587 = vmor %vm1585, %vm1586
        %v1588 = vsel %vm1587, %v1579, %v1584
        %v1589 = vrsqrt.pop %v1519
        %v1590 = vmul.f32 %v1589, %v1519
        %v1591 = vmul.f32 %v1590, %v1589
        %v1592 = vmul.f32 0.5, %v1591
        %v1593 = vsub.f32 1.5, %v1592
        %v1594 = vmul.f32 %v1589, %v1593
        %vm1595 = vweird.f32 %v1519
        %vm1596 = vweird.f32 %v1589
        %vm1597 = vmor %vm1595, %vm1596
        %v1598 = vsel %vm1597, %v1589, %v1594
        %v1599 = vrsqrt.pop %v1520
        %v1600 = vmul.f32 %v1599, %v1520
        %v1601 = vmul.f32 %v1600, %v1599
        %v1602 = vmul.f32 0.5, %v1601
        %v1603 = vsub.f32 1.5, %v1602
        %v1604 = vmul.f32 %v1599, %v1603
        %vm1605 = vweird.f32 %v1520
        %vm1606 = vweird.f32 %v1599
        %vm1607 = vmor %vm1605, %vm1606
        %v1608 = vsel %vm1607, %v1599, %v1604
        %v1609 = vrsqrt.pop %v1521
        %v1610 = vmul.f32 %v1609, %v1521
        %v1611 = vmul.f32 %v1610, %v1609
        %v1612 = vmul.f32 0.5, %v1611
        %v1613 = vsub.f32 1.5, %v1612
        %v1614 = vmul.f32 %v1609, %v1613
        %vm1615 = vweird.f32 %v1521
        %vm1616 = vweird.f32 %v1609
        %vm1617 = vmor %vm1615, %vm1616
        %v1618 = vsel %vm1617, %v1609, %v1614
        %v1619 = vrsqrt.pop %v1522
        %v1620 = vmul.f32 %v1619, %v1522
        %v1621 = vmul.f32 %v1620, %v1619
        %v1622 = vmul.f32 0.5, %v1621
        %v1623 = vsub.f32 1.5, %v1622
        %v1624 = vmul.f32 %v1619, %v1623
        %vm1625 = vweird.f32 %v1522
        %vm1626 = vweird.f32 %v1619
        %vm1627 = vmor %vm1625, %vm1626
        %v1628 = vsel %vm1627, %v1619, %v1624
        %v1629 = vrsqrt.pop %v1523
        %v1630 = vmul.f32 %v1629, %v1523
        %v1631 = vmul.f32 %v1630, %v1629
        %v1632 = vmul.f32 0.5, %v1631
        %v1633 = vsub.f32 1.5, %v1632
        %v1634 = vmul.f32 %v1629, %v1633
        %vm1635 = vweird.f32 %v1523
        %vm1636 = vweird.f32 %v1629
        %vm1637 = vmor %vm1635, %vm1636
        %v1638 = vsel %vm1637, %v1629, %v1634
        %v1639 = vrsqrt.pop %v1524
        %v1640 = vmul.f32 %v1639, %v1524
        %v1641 = vmul.f32 %v1640, %v1639
        %v1642 = vmul.f32 0.5, %v1641
        %v1643 = vsub.f32 1.5, %v1642
        %v1644 = vmul.f32 %v1639, %v1643
        %vm1645 = vweird.f32 %v1524
        %vm1646 = vweird.f32 %v1639
        %vm1647 = vmor %vm1645, %vm1646
        %v1648 = vsel %vm1647, %v1639, %v1644
        %v1649 = vrsqrt.pop %v1525
        %v1650 = vmul.f32 %v1649, %v1525
        %v1651 = vmul.f32 %v1650, %v1649
        %v1652 = vmul.f32 0.5, %v1651
        %v1653 = vsub.f32 1.5, %v1652
        %v1654 = vmul.f32 %v1649, %v1653
        %vm1655 = vweird.f32 %v1525
        %vm1656 = vweird.f32 %v1649
        %vm1657 = vmor %vm1655, %vm1656
        %v1658 = vsel %vm1657, %v1649, %v1654
        %v1659 = vrsqrt.pop %v1526
        %v1660 = vmul.f32 %v1659, %v1526
        %v1661 = vmul.f32 %v1660, %v1659
        %v1662 = vmul.f32 0.5, %v1661
        %v1663 = vsub.f32 1.5, %v1662
        %v1664 = vmul.f32 %v1659, %v1663
        %vm1665 = vweird.f32 %v1526
        %vm1666 = vweird.f32 %v1659
        %vm1667 = vmor %vm1665, %vm1666
        %v1668 = vsel %vm1667, %v1659, %v1664
        %v1669 = vrsqrt.pop %v1527
        %v1670 = vmul.f32 %v1669, %v1527
        %v1671 = vmul.f32 %v1670, %v1669
        %v1672 = vmul.f32 0.5, %v1671
        %v1673 = vsub.f32 1.5, %v1672
        %v1674 = vmul.f32 %v1669, %v1673
        %vm1675 = vweird.f32 %v1527
        %vm1676 = vweird.f32 %v1669
        %vm1677 = vmor %vm1675, %vm1676
        %v1678 = vsel %vm1677, %v1669, %v1674
        %v1679 = vrsqrt.pop %v1528
        %v1680 = vmul.f32 %v1679, %v1528
        %v1681 = vmul.f32 %v1680, %v1679
        %v1682 = vmul.f32 0.5, %v1681
        %v1683 = vsub.f32 1.5, %v1682
        %v1684 = vmul.f32 %v1679, %v1683
        %vm1685 = vweird.f32 %v1528
        %vm1686 = vweird.f32 %v1679
        %vm1687 = vmor %vm1685, %vm1686
        %v1688 = vsel %vm1687, %v1679, %v1684
        %v1689 = vmul.f32 %v1433, %v1538
        %v1690 = vmul.f32 %v1434, %v1548
        %v1691 = vmul.f32 %v1435, %v1558
        %v1692 = vmul.f32 %v1436, %v1568
        %v1693 = vmul.f32 %v1437, %v1578
        %v1694 = vmul.f32 %v1438, %v1588
        %v1695 = vmul.f32 %v1439, %v1598
        %v1696 = vmul.f32 %v1440, %v1608
        %v1697 = vmul.f32 %v1441, %v1618
        %v1698 = vmul.f32 %v1442, %v1628
        %v1699 = vmul.f32 %v1443, %v1638
        %v1700 = vmul.f32 %v1444, %v1648
        %v1701 = vmul.f32 %v1445, %v1658
        %v1702 = vmul.f32 %v1446, %v1668
        %v1703 = vmul.f32 %v1447, %v1678
        %v1704 = vmul.f32 %v1448, %v1688
        %v1705 = vmul.f32 %v1689, %v1316
        %v1706 = vmul.f32 %v1690, %v1316
        %v1707 = vmul.f32 %v1691, %v1316
        %v1708 = vmul.f32 %v1692, %v1316
        %v1709 = vmul.f32 %v1693, %v1316
        %v1710 = vmul.f32 %v1694, %v1316
        %v1711 = vmul.f32 %v1695, %v1316
        %v1712 = vmul.f32 %v1696, %v1316
        %v1713 = vmul.f32 %v1697, %v1316
        %v1714 = vmul.f32 %v1698, %v1316
        %v1715 = vmul.f32 %v1699, %v1316
        %v1716 = vmul.f32 %v1700, %v1316
        %v1717 = vmul.f32 %v1701, %v1316
        %v1718 = vmul.f32 %v1702, %v1316
        %v1719 = vmul.f32 %v1703, %v1316
        %v1720 = vmul.f32 %v1704, %v1316
        %v1721 = vadd.f32 %v1705, %v1351
        %v1722 = vadd.f32 %v1706, %v1351
        %v1723 = vadd.f32 %v1707, %v1351
        %v1724 = vadd.f32 %v1708, %v1351
        %v1725 = vadd.f32 %v1709, %v1351
        %v1726 = vadd.f32 %v1710, %v1351
        %v1727 = vadd.f32 %v1711, %v1351
        %v1728 = vadd.f32 %v1712, %v1351
        %v1729 = vadd.f32 %v1713, %v1351
        %v1730 = vadd.f32 %v1714, %v1351
        %v1731 = vadd.f32 %v1715, %v1351
        %v1732 = vadd.f32 %v1716, %v1351
        %v1733 = vadd.f32 %v1717, %v1351
        %v1734 = vadd.f32 %v1718, %v1351
        %v1735 = vadd.f32 %v1719, %v1351
        %v1736 = vadd.f32 %v1720, %v1351
        %v1737 = vld [vmem:[#allocation9] sm:$0xff]
        %v1738 = vld [vmem:[#allocation9 + $0x8] sm:$0xf]
        %v1739 = vld [vmem:[#allocation9 + $0xc] sm:$0xff]
        %v1740 = vld [vmem:[#allocation9 + $0x14] sm:$0xf]
        %v1741 = vld [vmem:[#allocation9 + $0x18] sm:$0xff]
        %v1742 = vld [vmem:[#allocation9 + $0x20] sm:$0xf]
        %v1743 = vld [vmem:[#allocation9 + $0x24] sm:$0xff]
        %v1744 = vld [vmem:[#allocation9 + $0x2c] sm:$0xf]
        %v1745 = vld [vmem:[#allocation9 + $0x30] sm:$0xff]
        %v1746 = vld [vmem:[#allocation9 + $0x38] sm:$0xf]
        %v1747 = vld [vmem:[#allocation9 + $0x3c] sm:$0xff]
        %v1748 = vld [vmem:[#allocation9 + $0x44] sm:$0xf]
        %v1749 = vld [vmem:[#allocation9 + $0x48] sm:$0xff]
        %v1750 = vld [vmem:[#allocation9 + $0x50] sm:$0xf]
        %v1751 = vld [vmem:[#allocation9 + $0x54] sm:$0xff]
        %v1752 = vld [vmem:[#allocation9 + $0x5c] sm:$0xf]
        %v1753 = vld [vmem:[#allocation9 + $0x60] sm:$0xff]
        %v1754 = vld [vmem:[#allocation9 + $0x68] sm:$0xf]
        %v1755 = vld [vmem:[#allocation9 + $0x6c] sm:$0xff]
        %v1756 = vld [vmem:[#allocation9 + $0x74] sm:$0xf]
        %v1757 = vld [vmem:[#allocation9 + $0x78] sm:$0xff]
        %v1758 = vld [vmem:[#allocation9 + $0x80] sm:$0xf]
        %v1759 = vld [vmem:[#allocation9 + $0x84] sm:$0xff]
        %v1760 = vld [vmem:[#allocation9 + $0x8c] sm:$0xf]
        %v1761 = vld [vmem:[#allocation9 + $0x90] sm:$0xff]
        %v1762 = vld [vmem:[#allocation9 + $0x98] sm:$0xf]
        %v1763 = vld [vmem:[#allocation9 + $0x9c] sm:$0xff]
        %v1764 = vld [vmem:[#allocation9 + $0xa4] sm:$0xf]
        %v1765 = vld [vmem:[#allocation9 + $0xa8] sm:$0xff]
        %v1766 = vld [vmem:[#allocation9 + $0xb0] sm:$0xf]
        %v1767 = vld [vmem:[#allocation9 + $0xb4] sm:$0xff]
        %v1768 = vld [vmem:[#allocation9 + $0xbc] sm:$0xf]
        %v1769 = vpack.c.bf16 %v1722, %v1721
        %v1770 = vpack.c.bf16 %v1724, %v1723
        %v1771 = vpack.c.bf16 %v1726, %v1725
        %v1772 = vpack.c.bf16 %v1728, %v1727
        %v1773 = vpack.c.bf16 %v1730, %v1729
        %v1774 = vpack.c.bf16 %v1732, %v1731
        %v1775 = vpack.c.bf16 %v1734, %v1733
        %v1776 = vpack.c.bf16 %v1736, %v1735
        %v1793 = vunpack.c.l.b16 %v1737
        %v1794 = vunpack.c.l.b16 %v1739
        %v1795 = vunpack.c.l.b16 %v1741
        %v1796 = vunpack.c.l.b16 %v1743
        %v1797 = vunpack.c.l.b16 %v1745
        %v1798 = vunpack.c.l.b16 %v1747
        %v1799 = vunpack.c.l.b16 %v1749
        %v1800 = vunpack.c.l.b16 %v1751
        %v1801 = vunpack.c.l.b16 %v1753
        %v1802 = vunpack.c.l.b16 %v1755
        %v1803 = vunpack.c.l.b16 %v1757
        %v1804 = vunpack.c.l.b16 %v1759
        %v1805 = vunpack.c.l.b16 %v1761
        %v1806 = vunpack.c.l.b16 %v1763
        %v1807 = vunpack.c.l.b16 %v1765
        %v1808 = vunpack.c.l.b16 %v1767
        %v1809 = vpack.c.b16 %v1794, %v1793
        %v1810 = vpack.c.b16 %v1796, %v1795
        %v1811 = vpack.c.b16 %v1798, %v1797
        %v1812 = vpack.c.b16 %v1800, %v1799
        %v1813 = vpack.c.b16 %v1802, %v1801
        %v1814 = vpack.c.b16 %v1804, %v1803
        %v1815 = vpack.c.b16 %v1806, %v1805
        %v1816 = vpack.c.b16 %v1808, %v1807
        %1825 = vmatpush.bf16.msra.mxu0 %v1816
        %1826 = vmatpush.bf16.msra.mxu0 %v1815
        %1827 = vmatpush.bf16.msra.mxu0 %v1814
        %1828 = vmatpush.bf16.msra.mxu0 %v1813
        %1829 = vmatpush.bf16.msra.mxu0 %v1812
        %1830 = vmatpush.bf16.msra.mxu0 %v1811
        %1831 = vmatpush.bf16.msra.mxu0 %v1810
        %1832 = vmatpush.bf16.msra.mxu0 %v1809
        %1833 = vmatmul.bf16.gmra.mxu0 %v1769
        %v1834 = vpop.f32.mrf.mxu0
        %v1835 = vadd.f32 0.0, %v1834
        %v1836 = vpop.f32.mrf.mxu0
        %v1837 = vadd.f32 0.0, %v1836
        %1838 = vmatmul.bf16.gmra.mxu0 %v1770
        %v1839 = vpop.f32.mrf.mxu0
        %v1840 = vadd.f32 0.0, %v1839
        %v1841 = vpop.f32.mrf.mxu0
        %v1842 = vadd.f32 0.0, %v1841
        %1843 = vmatmul.bf16.gmra.mxu0 %v1771
        %v1844 = vpop.f32.mrf.mxu0
        %v1845 = vadd.f32 0.0, %v1844
        %v1846 = vpop.f32.mrf.mxu0
        %v1847 = vadd.f32 0.0, %v1846
        %1848 = vmatmul.bf16.gmra.mxu0 %v1772
        %v1849 = vpop.f32.mrf.mxu0
        %v1850 = vadd.f32 0.0, %v1849
        %v1851 = vpop.f32.mrf.mxu0
        %v1852 = vadd.f32 0.0, %v1851
        %1853 = vmatmul.bf16.gmra.mxu0 %v1773
        %v1854 = vpop.f32.mrf.mxu0
        %v1855 = vadd.f32 0.0, %v1854
        %v1856 = vpop.f32.mrf.mxu0
        %v1857 = vadd.f32 0.0, %v1856
        %1858 = vmatmul.bf16.gmra.mxu0 %v1774
        %v1859 = vpop.f32.mrf.mxu0
        %v1860 = vadd.f32 0.0, %v1859
        %v1861 = vpop.f32.mrf.mxu0
        %v1862 = vadd.f32 0.0, %v1861
        %1863 = vmatmul.bf16.gmra.mxu0 %v1775
        %v1864 = vpop.f32.mrf.mxu0
        %v1865 = vadd.f32 0.0, %v1864
        %v1866 = vpop.f32.mrf.mxu0
        %v1867 = vadd.f32 0.0, %v1866
        %1868 = vmatmul.bf16.gmra.mxu0 %v1776
        %v1869 = vpop.f32.mrf.mxu0
        %v1870 = vadd.f32 0.0, %v1869
        %v1871 = vpop.f32.mrf.mxu0
        %v1872 = vadd.f32 0.0, %v1871
        %1873 = vdwg.mxu0
        %v1874 = vmul.f32 %v1835, 0.088388346
        %v1875 = vmul.f32 %v1837, 0.088388346
        %v1876 = vmul.f32 %v1840, 0.088388346
        %v1877 = vmul.f32 %v1842, 0.088388346
        %v1878 = vmul.f32 %v1845, 0.088388346
        %v1879 = vmul.f32 %v1847, 0.088388346
        %v1880 = vmul.f32 %v1850, 0.088388346
        %v1881 = vmul.f32 %v1852, 0.088388346
        %v1882 = vmul.f32 %v1855, 0.088388346
        %v1883 = vmul.f32 %v1857, 0.088388346
        %v1884 = vmul.f32 %v1860, 0.088388346
        %v1885 = vmul.f32 %v1862, 0.088388346
        %v1886 = vmul.f32 %v1865, 0.088388346
        %v1887 = vmul.f32 %v1867, 0.088388346
        %v1888 = vmul.f32 %v1870, 0.088388346
        %v1889 = vmul.f32 %v1872, 0.088388346
        %v1890 = vpack.c.bf16 %v1354, %v1353
        %v1891 = vpack.c.bf16 %v1356, %v1355
        %v1892 = vpack.c.bf16 %v1358, %v1357
        %v1893 = vpack.c.bf16 %v1360, %v1359
        %v1894 = vpack.c.bf16 %v1362, %v1361
        %v1895 = vpack.c.bf16 %v1364, %v1363
        %v1896 = vpack.c.bf16 %v1366, %v1365
        %v1897 = vpack.c.bf16 %v1368, %v1367
        %v1898 = vpack.c.bf16 %v1370, %v1369
        %v1899 = vpack.c.bf16 %v1372, %v1371
        %v1900 = vpack.c.bf16 %v1374, %v1373
        %v1901 = vpack.c.bf16 %v1376, %v1375
        %v1902 = vpack.c.bf16 %v1378, %v1377
        %v1903 = vpack.c.bf16 %v1380, %v1379
        %v1904 = vpack.c.bf16 %v1382, %v1381
        %v1905 = vpack.c.bf16 %v1384, %v1383
        %v1922 = vunpack.c.h.b16 %v1737
        %v1923 = vunpack.c.l.b16 %v1738
        %v1924 = vunpack.c.h.b16 %v1739
        %v1925 = vunpack.c.l.b16 %v1740
        %v1926 = vunpack.c.h.b16 %v1741
        %v1927 = vunpack.c.l.b16 %v1742
        %v1928 = vunpack.c.h.b16 %v1743
        %v1929 = vunpack.c.l.b16 %v1744
        %v1930 = vunpack.c.h.b16 %v1745
        %v1931 = vunpack.c.l.b16 %v1746
        %v1932 = vunpack.c.h.b16 %v1747
        %v1933 = vunpack.c.l.b16 %v1748
        %v1934 = vunpack.c.h.b16 %v1749
        %v1935 = vunpack.c.l.b16 %v1750
        %v1936 = vunpack.c.h.b16 %v1751
        %v1937 = vunpack.c.l.b16 %v1752
        %v1938 = vunpack.c.h.b16 %v1753
        %v1939 = vunpack.c.l.b16 %v1754
        %v1940 = vunpack.c.h.b16 %v1755
        %v1941 = vunpack.c.l.b16 %v1756
        %v1942 = vunpack.c.h.b16 %v1757
        %v1943 = vunpack.c.l.b16 %v1758
        %v1944 = vunpack.c.h.b16 %v1759
        %v1945 = vunpack.c.l.b16 %v1760
        %v1946 = vunpack.c.h.b16 %v1761
        %v1947 = vunpack.c.l.b16 %v1762
        %v1948 = vunpack.c.h.b16 %v1763
        %v1949 = vunpack.c.l.b16 %v1764
        %v1950 = vunpack.c.h.b16 %v1765
        %v1951 = vunpack.c.l.b16 %v1766
        %v1952 = vunpack.c.h.b16 %v1767
        %v1953 = vunpack.c.l.b16 %v1768
        %v1954 = vpack.c.b16 %v1924, %v1922
        %v1955 = vpack.c.b16 %v1925, %v1923
        %v1956 = vpack.c.b16 %v1928, %v1926
        %v1957 = vpack.c.b16 %v1929, %v1927
        %v1958 = vpack.c.b16 %v1932, %v1930
        %v1959 = vpack.c.b16 %v1933, %v1931
        %v1960 = vpack.c.b16 %v1936, %v1934
        %v1961 = vpack.c.b16 %v1937, %v1935
        %v1962 = vpack.c.b16 %v1940, %v1938
        %v1963 = vpack.c.b16 %v1941, %v1939
        %v1964 = vpack.c.b16 %v1944, %v1942
        %v1965 = vpack.c.b16 %v1945, %v1943
        %v1966 = vpack.c.b16 %v1948, %v1946
        %v1967 = vpack.c.b16 %v1949, %v1947
        %v1968 = vpack.c.b16 %v1952, %v1950
        %v1969 = vpack.c.b16 %v1953, %v1951
        %1986 = vmatpush.bf16.msra.mxu0 %v1968
        %1987 = vmatpush.bf16.msra.mxu0 %v1966
        %1988 = vmatpush.bf16.msra.mxu0 %v1964
        %1989 = vmatpush.bf16.msra.mxu0 %v1962
        %1990 = vmatpush.bf16.msra.mxu0 %v1960
        %1991 = vmatpush.bf16.msra.mxu0 %v1958
        %1992 = vmatpush.bf16.msra.mxu0 %v1956
        %1993 = vmatpush.bf16.msra.mxu0 %v1954
        %1994 = vmatmul.bf16.gmra.mxu0 %v1890
        %v1995 = vpop.f32.mrf.mxu0
        %v1996 = vadd.f32 0.0, %v1995
        %v1997 = vpop.f32.mrf.mxu0
        %v1998 = vadd.f32 0.0, %v1997
        %1999 = vmatmul.bf16.gmra.mxu0 %v1891
        %v2000 = vpop.f32.mrf.mxu0
        %v2001 = vadd.f32 0.0, %v2000
        %v2002 = vpop.f32.mrf.mxu0
        %v2003 = vadd.f32 0.0, %v2002
        %2004 = vmatmul.bf16.gmra.mxu0 %v1892
        %v2005 = vpop.f32.mrf.mxu0
        %v2006 = vadd.f32 0.0, %v2005
        %v2007 = vpop.f32.mrf.mxu0
        %v2008 = vadd.f32 0.0, %v2007
        %2009 = vmatmul.bf16.gmra.mxu0 %v1893
        %v2010 = vpop.f32.mrf.mxu0
        %v2011 = vadd.f32 0.0, %v2010
        %v2012 = vpop.f32.mrf.mxu0
        %v2013 = vadd.f32 0.0, %v2012
        %2014 = vmatmul.bf16.gmra.mxu0 %v1894
        %v2015 = vpop.f32.mrf.mxu0
        %v2016 = vadd.f32 0.0, %v2015
        %v2017 = vpop.f32.mrf.mxu0
        %v2018 = vadd.f32 0.0, %v2017
        %2019 = vmatmul.bf16.gmra.mxu0 %v1895
        %v2020 = vpop.f32.mrf.mxu0
        %v2021 = vadd.f32 0.0, %v2020
        %v2022 = vpop.f32.mrf.mxu0
        %v2023 = vadd.f32 0.0, %v2022
        %2024 = vmatmul.bf16.gmra.mxu0 %v1896
        %v2025 = vpop.f32.mrf.mxu0
        %v2026 = vadd.f32 0.0, %v2025
        %v2027 = vpop.f32.mrf.mxu0
        %v2028 = vadd.f32 0.0, %v2027
        %2029 = vmatmul.bf16.gmra.mxu0 %v1897
        %v2030 = vpop.f32.mrf.mxu0
        %v2031 = vadd.f32 0.0, %v2030
        %v2032 = vpop.f32.mrf.mxu0
        %v2033 = vadd.f32 0.0, %v2032
        %2034 = vmatmul.bf16.gmra.mxu0 %v1898
        %v2035 = vpop.f32.mrf.mxu0
        %v2036 = vadd.f32 0.0, %v2035
        %v2037 = vpop.f32.mrf.mxu0
        %v2038 = vadd.f32 0.0, %v2037
        %2039 = vmatmul.bf16.gmra.mxu0 %v1899
        %v2040 = vpop.f32.mrf.mxu0
        %v2041 = vadd.f32 0.0, %v2040
        %v2042 = vpop.f32.mrf.mxu0
        %v2043 = vadd.f32 0.0, %v2042
        %2044 = vmatmul.bf16.gmra.mxu0 %v1900
        %v2045 = vpop.f32.mrf.mxu0
        %v2046 = vadd.f32 0.0, %v2045
        %v2047 = vpop.f32.mrf.mxu0
        %v2048 = vadd.f32 0.0, %v2047
        %2049 = vmatmul.bf16.gmra.mxu0 %v1901
        %v2050 = vpop.f32.mrf.mxu0
        %v2051 = vadd.f32 0.0, %v2050
        %v2052 = vpop.f32.mrf.mxu0
        %v2053 = vadd.f32 0.0, %v2052
        %2054 = vmatmul.bf16.gmra.mxu0 %v1902
        %v2055 = vpop.f32.mrf.mxu0
        %v2056 = vadd.f32 0.0, %v2055
        %v2057 = vpop.f32.mrf.mxu0
        %v2058 = vadd.f32 0.0, %v2057
        %2059 = vmatmul.bf16.gmra.mxu0 %v1903
        %v2060 = vpop.f32.mrf.mxu0
        %v2061 = vadd.f32 0.0, %v2060
        %v2062 = vpop.f32.mrf.mxu0
        %v2063 = vadd.f32 0.0, %v2062
        %2064 = vmatmul.bf16.gmra.mxu0 %v1904
        %v2065 = vpop.f32.mrf.mxu0
        %v2066 = vadd.f32 0.0, %v2065
        %v2067 = vpop.f32.mrf.mxu0
        %v2068 = vadd.f32 0.0, %v2067
        %2069 = vmatmul.bf16.gmra.mxu0 %v1905
        %v2070 = vpop.f32.mrf.mxu0
        %v2071 = vadd.f32 0.0, %v2070
        %v2072 = vpop.f32.mrf.mxu0
        %v2073 = vadd.f32 0.0, %v2072
        %2074 = vdwg.mxu0
        %2075 = vmatpush.bf16.msra.mxu0 %v1969
        %2076 = vmatpush.bf16.msra.mxu0 %v1967
        %2077 = vmatpush.bf16.msra.mxu0 %v1965
        %2078 = vmatpush.bf16.msra.mxu0 %v1963
        %2079 = vmatpush.bf16.msra.mxu0 %v1961
        %2080 = vmatpush.bf16.msra.mxu0 %v1959
        %2081 = vmatpush.bf16.msra.mxu0 %v1957
        %2082 = vmatpush.bf16.msra.mxu0 %v1955
        %2083 = vmatmul.bf16.gmra.mxu0 %v1890
        %v2084 = vpop.f32.mrf.mxu0
        %v2085 = vadd.f32 0.0, %v2084
        %v2086 = vpop.f32.mrf.mxu0
        %v2087 = vadd.f32 0.0, %v2086
        %2088 = vmatmul.bf16.gmra.mxu0 %v1891
        %v2089 = vpop.f32.mrf.mxu0
        %v2090 = vadd.f32 0.0, %v2089
        %v2091 = vpop.f32.mrf.mxu0
        %v2092 = vadd.f32 0.0, %v2091
        %2093 = vmatmul.bf16.gmra.mxu0 %v1892
        %v2094 = vpop.f32.mrf.mxu0
        %v2095 = vadd.f32 0.0, %v2094
        %v2096 = vpop.f32.mrf.mxu0
        %v2097 = vadd.f32 0.0, %v2096
        %2098 = vmatmul.bf16.gmra.mxu0 %v1893
        %v2099 = vpop.f32.mrf.mxu0
        %v2100 = vadd.f32 0.0, %v2099
        %v2101 = vpop.f32.mrf.mxu0
        %v2102 = vadd.f32 0.0, %v2101
        %2103 = vmatmul.bf16.gmra.mxu0 %v1894
        %v2104 = vpop.f32.mrf.mxu0
        %v2105 = vadd.f32 0.0, %v2104
        %v2106 = vpop.f32.mrf.mxu0
        %v2107 = vadd.f32 0.0, %v2106
        %2108 = vmatmul.bf16.gmra.mxu0 %v1895
        %v2109 = vpop.f32.mrf.mxu0
        %v2110 = vadd.f32 0.0, %v2109
        %v2111 = vpop.f32.mrf.mxu0
        %v2112 = vadd.f32 0.0, %v2111
        %2113 = vmatmul.bf16.gmra.mxu0 %v1896
        %v2114 = vpop.f32.mrf.mxu0
        %v2115 = vadd.f32 0.0, %v2114
        %v2116 = vpop.f32.mrf.mxu0
        %v2117 = vadd.f32 0.0, %v2116
        %2118 = vmatmul.bf16.gmra.mxu0 %v1897
        %v2119 = vpop.f32.mrf.mxu0
        %v2120 = vadd.f32 0.0, %v2119
        %v2121 = vpop.f32.mrf.mxu0
        %v2122 = vadd.f32 0.0, %v2121
        %2123 = vmatmul.bf16.gmra.mxu0 %v1898
        %v2124 = vpop.f32.mrf.mxu0
        %v2125 = vadd.f32 0.0, %v2124
        %v2126 = vpop.f32.mrf.mxu0
        %v2127 = vadd.f32 0.0, %v2126
        %2128 = vmatmul.bf16.gmra.mxu0 %v1899
        %v2129 = vpop.f32.mrf.mxu0
        %v2130 = vadd.f32 0.0, %v2129
        %v2131 = vpop.f32.mrf.mxu0
        %v2132 = vadd.f32 0.0, %v2131
        %2133 = vmatmul.bf16.gmra.mxu0 %v1900
        %v2134 = vpop.f32.mrf.mxu0
        %v2135 = vadd.f32 0.0, %v2134
        %v2136 = vpop.f32.mrf.mxu0
        %v2137 = vadd.f32 0.0, %v2136
        %2138 = vmatmul.bf16.gmra.mxu0 %v1901
        %v2139 = vpop.f32.mrf.mxu0
        %v2140 = vadd.f32 0.0, %v2139
        %v2141 = vpop.f32.mrf.mxu0
        %v2142 = vadd.f32 0.0, %v2141
        %2143 = vmatmul.bf16.gmra.mxu0 %v1902
        %v2144 = vpop.f32.mrf.mxu0
        %v2145 = vadd.f32 0.0, %v2144
        %v2146 = vpop.f32.mrf.mxu0
        %v2147 = vadd.f32 0.0, %v2146
        %2148 = vmatmul.bf16.gmra.mxu0 %v1903
        %v2149 = vpop.f32.mrf.mxu0
        %v2150 = vadd.f32 0.0, %v2149
        %v2151 = vpop.f32.mrf.mxu0
        %v2152 = vadd.f32 0.0, %v2151
        %2153 = vmatmul.bf16.gmra.mxu0 %v1904
        %v2154 = vpop.f32.mrf.mxu0
        %v2155 = vadd.f32 0.0, %v2154
        %v2156 = vpop.f32.mrf.mxu0
        %v2157 = vadd.f32 0.0, %v2156
        %2158 = vmatmul.bf16.gmra.mxu0 %v1905
        %v2159 = vpop.f32.mrf.mxu0
        %v2160 = vadd.f32 0.0, %v2159
        %v2161 = vpop.f32.mrf.mxu0
        %v2162 = vadd.f32 0.0, %v2161
        %2163 = vdwg.mxu0
        %s2164 = smul.u32 %s41, 128
        %v2165 = vlaneseq
        %v2166 = vshrl.u32 %v2165, 7
        %v2167 = vadd.s32 %v2166, 8
        %v2168 = vadd.s32 %v2166, 16
        %v2169 = vadd.s32 %v2166, 24
        %v2170 = vadd.s32 %v2166, 32
        %v2171 = vadd.s32 %v2166, 40
        %v2172 = vadd.s32 %v2166, 48
        %v2173 = vadd.s32 %v2166, 56
        %v2174 = vadd.s32 %v2166, 64
        %v2175 = vadd.s32 %v2166, 72
        %v2176 = vadd.s32 %v2166, 80
        %v2177 = vadd.s32 %v2166, 88
        %v2178 = vadd.s32 %v2166, 96
        %v2179 = vadd.s32 %v2166, 104
        %v2180 = vadd.s32 %v2166, 112
        %v2181 = vadd.s32 %v2166, 120
        %v2182 = vstv %s2164
        %v2183 = vadd.s32 %v2182, %v2166
        %v2184 = vadd.s32 %v2182, %v2167
        %v2185 = vadd.s32 %v2182, %v2168
        %v2186 = vadd.s32 %v2182, %v2169
        %v2187 = vadd.s32 %v2182, %v2170
        %v2188 = vadd.s32 %v2182, %v2171
        %v2189 = vadd.s32 %v2182, %v2172
        %v2190 = vadd.s32 %v2182, %v2173
        %v2191 = vadd.s32 %v2182, %v2174
        %v2192 = vadd.s32 %v2182, %v2175
        %v2193 = vadd.s32 %v2182, %v2176
        %v2194 = vadd.s32 %v2182, %v2177
        %v2195 = vadd.s32 %v2182, %v2178
        %v2196 = vadd.s32 %v2182, %v2179
        %v2197 = vadd.s32 %v2182, %v2180
        %v2198 = vadd.s32 %v2182, %v2181
        %v2199 = vlaneseq
        %v2200 = vand.u32 %v2199, 127
        %v2201 = vadd.s32 %v2200, 128
        %vm2202 = vcmp.le.s32.totalorder %v2200, %v2183
        %vm2203 = vcmp.le.s32.totalorder %v2201, %v2183
        %vm2204 = vcmp.le.s32.totalorder %v2200, %v2184
        %vm2205 = vcmp.le.s32.totalorder %v2201, %v2184
        %vm2206 = vcmp.le.s32.totalorder %v2200, %v2185
        %vm2207 = vcmp.le.s32.totalorder %v2201, %v2185
        %vm2208 = vcmp.le.s32.totalorder %v2200, %v2186
        %vm2209 = vcmp.le.s32.totalorder %v2201, %v2186
        %vm2210 = vcmp.le.s32.totalorder %v2200, %v2187
        %vm2211 = vcmp.le.s32.totalorder %v2201, %v2187
        %vm2212 = vcmp.le.s32.totalorder %v2200, %v2188
        %vm2213 = vcmp.le.s32.totalorder %v2201, %v2188
        %vm2214 = vcmp.le.s32.totalorder %v2200, %v2189
        %vm2215 = vcmp.le.s32.totalorder %v2201, %v2189
        %vm2216 = vcmp.le.s32.totalorder %v2200, %v2190
        %vm2217 = vcmp.le.s32.totalorder %v2201, %v2190
        %vm2218 = vcmp.le.s32.totalorder %v2200, %v2191
        %vm2219 = vcmp.le.s32.totalorder %v2201, %v2191
        %vm2220 = vcmp.le.s32.totalorder %v2200, %v2192
        %vm2221 = vcmp.le.s32.totalorder %v2201, %v2192
        %vm2222 = vcmp.le.s32.totalorder %v2200, %v2193
        %vm2223 = vcmp.le.s32.totalorder %v2201, %v2193
        %vm2224 = vcmp.le.s32.totalorder %v2200, %v2194
        %vm2225 = vcmp.le.s32.totalorder %v2201, %v2194
        %vm2226 = vcmp.le.s32.totalorder %v2200, %v2195
        %vm2227 = vcmp.le.s32.totalorder %v2201, %v2195
        %vm2228 = vcmp.le.s32.totalorder %v2200, %v2196
        %vm2229 = vcmp.le.s32.totalorder %v2201, %v2196
        %vm2230 = vcmp.le.s32.totalorder %v2200, %v2197
        %vm2231 = vcmp.le.s32.totalorder %v2201, %v2197
        %vm2232 = vcmp.le.s32.totalorder %v2200, %v2198
        %vm2233 = vcmp.le.s32.totalorder %v2201, %v2198
        %vm2234 = vcmask 261120
        %v2236 = vsel %vm2234, %v1874, 0
        %v2239 = vsel %vm2234, %v1875, 0
        %v2242 = vsel %vm2234, %v1876, 0
        %v2245 = vsel %vm2234, %v1877, 0
        %v2248 = vsel %vm2234, %v1878, 0
        %v2251 = vsel %vm2234, %v1879, 0
        %v2254 = vsel %vm2234, %v1880, 0
        %v2257 = vsel %vm2234, %v1881, 0
        %v2260 = vsel %vm2234, %v1882, 0
        %v2263 = vsel %vm2234, %v1883, 0
        %v2266 = vsel %vm2234, %v1884, 0
        %v2269 = vsel %vm2234, %v1885, 0
        %v2272 = vsel %vm2234, %v1886, 0
        %v2275 = vsel %vm2234, %v1887, 0
        %v2278 = vsel %vm2234, %v1888, 0
        %v2281 = vsel %vm2234, %v1889, 0
        %v2284 = vsel %vm2234, %v1996, 0
        %v2287 = vsel %vm2234, %v1998, 0
        %v2290 = vsel %vm2234, %v2001, 0
        %v2293 = vsel %vm2234, %v2003, 0
        %v2296 = vsel %vm2234, %v2006, 0
        %v2299 = vsel %vm2234, %v2008, 0
        %v2302 = vsel %vm2234, %v2011, 0
        %v2305 = vsel %vm2234, %v2013, 0
        %v2308 = vsel %vm2234, %v2016, 0
        %v2311 = vsel %vm2234, %v2018, 0
        %v2314 = vsel %vm2234, %v2021, 0
        %v2317 = vsel %vm2234, %v2023, 0
        %v2320 = vsel %vm2234, %v2026, 0
        %v2323 = vsel %vm2234, %v2028, 0
        %v2326 = vsel %vm2234, %v2031, 0
        %v2329 = vsel %vm2234, %v2033, 0
        %v2332 = vsel %vm2234, %v2036, 0
        %v2335 = vsel %vm2234, %v2038, 0
        %v2338 = vsel %vm2234, %v2041, 0
        %v2341 = vsel %vm2234, %v2043, 0
        %v2344 = vsel %vm2234, %v2046, 0
        %v2347 = vsel %vm2234, %v2048, 0
        %v2350 = vsel %vm2234, %v2051, 0
        %v2353 = vsel %vm2234, %v2053, 0
        %v2356 = vsel %vm2234, %v2056, 0
        %v2359 = vsel %vm2234, %v2058, 0
        %v2362 = vsel %vm2234, %v2061, 0
        %v2365 = vsel %vm2234, %v2063, 0
        %v2368 = vsel %vm2234, %v2066, 0
        %v2371 = vsel %vm2234, %v2068, 0
        %v2374 = vsel %vm2234, %v2071, 0
        %v2377 = vsel %vm2234, %v2073, 0
        %2379 = vmatpush.xpose.msra.mxu0 %v2329
        %2380 = vmatpush.xpose.msra.mxu0 %v2326
        %2381 = vmatpush.xpose.msra.mxu0 %v2323
        %2382 = vmatpush.xpose.msra.mxu0 %v2320
        %2383 = vmatpush.xpose.msra.mxu0 %v2317
        %2384 = vmatpush.xpose.msra.mxu0 %v2314
        %2385 = vmatpush.xpose.msra.mxu0 %v2311
        %2386 = vmatpush.xpose.msra.mxu0 %v2308
        %2387 = vmatpush.xpose.msra.mxu0 %v2305
        %2388 = vmatpush.xpose.msra.mxu0 %v2302
        %2389 = vmatpush.xpose.msra.mxu0 %v2299
        %2390 = vmatpush.xpose.msra.mxu0 %v2296
        %2391 = vmatpush.xpose.msra.mxu0 %v2293
        %2392 = vmatpush.xpose.msra.mxu0 %v2290
        %2393 = vmatpush.xpose.msra.mxu0 %v2287
        %2394 = vmatpush.xpose.msra.mxu0 %v2284
        %2395 = vmatmul.f32.gmra.mxu0 %v2236
        %v2396 = vpop.f32.mrf.mxu0
        %v2397 = vadd.f32 0.0, %v2396
        %2398 = vmatmul.f32.gmra.mxu0 %v2239
        %v2399 = vpop.f32.mrf.mxu0
        %v2400 = vadd.f32 0.0, %v2399
        %2401 = vmatmul.f32.gmra.mxu0 %v2242
        %v2402 = vpop.f32.mrf.mxu0
        %v2403 = vadd.f32 0.0, %v2402
        %2404 = vmatmul.f32.gmra.mxu0 %v2245
        %v2405 = vpop.f32.mrf.mxu0
        %v2406 = vadd.f32 0.0, %v2405
        %2407 = vmatmul.f32.gmra.mxu0 %v2248
        %v2408 = vpop.f32.mrf.mxu0
        %v2409 = vadd.f32 0.0, %v2408
        %2410 = vmatmul.f32.gmra.mxu0 %v2251
        %v2411 = vpop.f32.mrf.mxu0
        %v2412 = vadd.f32 0.0, %v2411
        %2413 = vmatmul.f32.gmra.mxu0 %v2254
        %v2414 = vpop.f32.mrf.mxu0
        %v2415 = vadd.f32 0.0, %v2414
        %2416 = vmatmul.f32.gmra.mxu0 %v2257
        %v2417 = vpop.f32.mrf.mxu0
        %v2418 = vadd.f32 0.0, %v2417
        %2419 = vmatmul.f32.gmra.mxu0 %v2260
        %v2420 = vpop.f32.mrf.mxu0
        %v2421 = vadd.f32 0.0, %v2420
        %2422 = vmatmul.f32.gmra.mxu0 %v2263
        %v2423 = vpop.f32.mrf.mxu0
        %v2424 = vadd.f32 0.0, %v2423
        %2425 = vmatmul.f32.gmra.mxu0 %v2266
        %v2426 = vpop.f32.mrf.mxu0
        %v2427 = vadd.f32 0.0, %v2426
        %2428 = vmatmul.f32.gmra.mxu0 %v2269
        %v2429 = vpop.f32.mrf.mxu0
        %v2430 = vadd.f32 0.0, %v2429
        %2431 = vmatmul.f32.gmra.mxu0 %v2272
        %v2432 = vpop.f32.mrf.mxu0
        %v2433 = vadd.f32 0.0, %v2432
        %2434 = vmatmul.f32.gmra.mxu0 %v2275
        %v2435 = vpop.f32.mrf.mxu0
        %v2436 = vadd.f32 0.0, %v2435
        %2437 = vmatmul.f32.gmra.mxu0 %v2278
        %v2438 = vpop.f32.mrf.mxu0
        %v2439 = vadd.f32 0.0, %v2438
        %2440 = vmatmul.f32.gmra.mxu0 %v2281
        %v2441 = vpop.f32.mrf.mxu0
        %v2442 = vadd.f32 0.0, %v2441
        %2443 = vdwg.mxu0
        %2444 = vmatpush.xpose.msra.mxu0 %v2377
        %2445 = vmatpush.xpose.msra.mxu0 %v2374
        %2446 = vmatpush.xpose.msra.mxu0 %v2371
        %2447 = vmatpush.xpose.msra.mxu0 %v2368
        %2448 = vmatpush.xpose.msra.mxu0 %v2365
        %2449 = vmatpush.xpose.msra.mxu0 %v2362
        %2450 = vmatpush.xpose.msra.mxu0 %v2359
        %2451 = vmatpush.xpose.msra.mxu0 %v2356
        %2452 = vmatpush.xpose.msra.mxu0 %v2353
        %2453 = vmatpush.xpose.msra.mxu0 %v2350
        %2454 = vmatpush.xpose.msra.mxu0 %v2347
        %2455 = vmatpush.xpose.msra.mxu0 %v2344
        %2456 = vmatpush.xpose.msra.mxu0 %v2341
        %2457 = vmatpush.xpose.msra.mxu0 %v2338
        %2458 = vmatpush.xpose.msra.mxu0 %v2335
        %2459 = vmatpush.xpose.msra.mxu0 %v2332
        %2460 = vmatmul.f32.gmra.mxu0 %v2236
        %v2461 = vpop.f32.mrf.mxu0
        %v2462 = vadd.f32 0.0, %v2461
        %2463 = vmatmul.f32.gmra.mxu0 %v2239
        %v2464 = vpop.f32.mrf.mxu0
        %v2465 = vadd.f32 0.0, %v2464
        %2466 = vmatmul.f32.gmra.mxu0 %v2242
        %v2467 = vpop.f32.mrf.mxu0
        %v2468 = vadd.f32 0.0, %v2467
        %2469 = vmatmul.f32.gmra.mxu0 %v2245
        %v2470 = vpop.f32.mrf.mxu0
        %v2471 = vadd.f32 0.0, %v2470
        %2472 = vmatmul.f32.gmra.mxu0 %v2248
        %v2473 = vpop.f32.mrf.mxu0
        %v2474 = vadd.f32 0.0, %v2473
        %2475 = vmatmul.f32.gmra.mxu0 %v2251
        %v2476 = vpop.f32.mrf.mxu0
        %v2477 = vadd.f32 0.0, %v2476
        %2478 = vmatmul.f32.gmra.mxu0 %v2254
        %v2479 = vpop.f32.mrf.mxu0
        %v2480 = vadd.f32 0.0, %v2479
        %2481 = vmatmul.f32.gmra.mxu0 %v2257
        %v2482 = vpop.f32.mrf.mxu0
        %v2483 = vadd.f32 0.0, %v2482
        %2484 = vmatmul.f32.gmra.mxu0 %v2260
        %v2485 = vpop.f32.mrf.mxu0
        %v2486 = vadd.f32 0.0, %v2485
        %2487 = vmatmul.f32.gmra.mxu0 %v2263
        %v2488 = vpop.f32.mrf.mxu0
        %v2489 = vadd.f32 0.0, %v2488
        %2490 = vmatmul.f32.gmra.mxu0 %v2266
        %v2491 = vpop.f32.mrf.mxu0
        %v2492 = vadd.f32 0.0, %v2491
        %2493 = vmatmul.f32.gmra.mxu0 %v2269
        %v2494 = vpop.f32.mrf.mxu0
        %v2495 = vadd.f32 0.0, %v2494
        %2496 = vmatmul.f32.gmra.mxu0 %v2272
        %v2497 = vpop.f32.mrf.mxu0
        %v2498 = vadd.f32 0.0, %v2497
        %2499 = vmatmul.f32.gmra.mxu0 %v2275
        %v2500 = vpop.f32.mrf.mxu0
        %v2501 = vadd.f32 0.0, %v2500
        %2502 = vmatmul.f32.gmra.mxu0 %v2278
        %v2503 = vpop.f32.mrf.mxu0
        %v2504 = vadd.f32 0.0, %v2503
        %2505 = vmatmul.f32.gmra.mxu0 %v2281
        %v2506 = vpop.f32.mrf.mxu0
        %v2507 = vadd.f32 0.0, %v2506
        %2508 = vdwg.mxu0
        %v2509 = vsel %vm2202, %v2397, -1e+30
        %v2510 = vsel %vm2203, %v2462, -1e+30
        %v2511 = vsel %vm2204, %v2400, -1e+30
        %v2512 = vsel %vm2205, %v2465, -1e+30
        %v2513 = vsel %vm2206, %v2403, -1e+30
        %v2514 = vsel %vm2207, %v2468, -1e+30
        %v2515 = vsel %vm2208, %v2406, -1e+30
        %v2516 = vsel %vm2209, %v2471, -1e+30
        %v2517 = vsel %vm2210, %v2409, -1e+30
        %v2518 = vsel %vm2211, %v2474, -1e+30
        %v2519 = vsel %vm2212, %v2412, -1e+30
        %v2520 = vsel %vm2213, %v2477, -1e+30
        %v2521 = vsel %vm2214, %v2415, -1e+30
        %v2522 = vsel %vm2215, %v2480, -1e+30
        %v2523 = vsel %vm2216, %v2418, -1e+30
        %v2524 = vsel %vm2217, %v2483, -1e+30
        %v2525 = vsel %vm2218, %v2421, -1e+30
        %v2526 = vsel %vm2219, %v2486, -1e+30
        %v2527 = vsel %vm2220, %v2424, -1e+30
        %v2528 = vsel %vm2221, %v2489, -1e+30
        %v2529 = vsel %vm2222, %v2427, -1e+30
        %v2530 = vsel %vm2223, %v2492, -1e+30
        %v2531 = vsel %vm2224, %v2430, -1e+30
        %v2532 = vsel %vm2225, %v2495, -1e+30
        %v2533 = vsel %vm2226, %v2433, -1e+30
        %v2534 = vsel %vm2227, %v2498, -1e+30
        %v2535 = vsel %vm2228, %v2436, -1e+30
        %v2536 = vsel %vm2229, %v2501, -1e+30
        %v2537 = vsel %vm2230, %v2439, -1e+30
        %v2538 = vsel %vm2231, %v2504, -1e+30
        %v2539 = vsel %vm2232, %v2442, -1e+30
        %v2540 = vsel %vm2233, %v2507, -1e+30
        %v2541 = vmax.f32 %v2509, %v2510
        %2542 = vmax.xlane.f32.xlu0 %v2541
        %v2543 = vpop.xlane.xlu0 %2542
        %v2544 = vmax.f32 %v2511, %v2512
        %2545 = vmax.xlane.f32.xlu0 %v2544
        %v2546 = vpop.xlane.xlu0 %2545
        %v2547 = vmax.f32 %v2513, %v2514
        %2548 = vmax.xlane.f32.xlu0 %v2547
        %v2549 = vpop.xlane.xlu0 %2548
        %v2550 = vmax.f32 %v2515, %v2516
        %2551 = vmax.xlane.f32.xlu0 %v2550
        %v2552 = vpop.xlane.xlu0 %2551
        %v2553 = vmax.f32 %v2517, %v2518
        %2554 = vmax.xlane.f32.xlu0 %v2553
        %v2555 = vpop.xlane.xlu0 %2554
        %v2556 = vmax.f32 %v2519, %v2520
        %2557 = vmax.xlane.f32.xlu0 %v2556
        %v2558 = vpop.xlane.xlu0 %2557
        %v2559 = vmax.f32 %v2521, %v2522
        %2560 = vmax.xlane.f32.xlu0 %v2559
        %v2561 = vpop.xlane.xlu0 %2560
        %v2562 = vmax.f32 %v2523, %v2524
        %2563 = vmax.xlane.f32.xlu0 %v2562
        %v2564 = vpop.xlane.xlu0 %2563
        %v2565 = vmax.f32 %v2525, %v2526
        %2566 = vmax.xlane.f32.xlu0 %v2565
        %v2567 = vpop.xlane.xlu0 %2566
        %v2568 = vmax.f32 %v2527, %v2528
        %2569 = vmax.xlane.f32.xlu0 %v2568
        %v2570 = vpop.xlane.xlu0 %2569
        %v2571 = vmax.f32 %v2529, %v2530
        %2572 = vmax.xlane.f32.xlu0 %v2571
        %v2573 = vpop.xlane.xlu0 %2572
        %v2574 = vmax.f32 %v2531, %v2532
        %2575 = vmax.xlane.f32.xlu0 %v2574
        %v2576 = vpop.xlane.xlu0 %2575
        %v2577 = vmax.f32 %v2533, %v2534
        %2578 = vmax.xlane.f32.xlu0 %v2577
        %v2579 = vpop.xlane.xlu0 %2578
        %v2580 = vmax.f32 %v2535, %v2536
        %2581 = vmax.xlane.f32.xlu0 %v2580
        %v2582 = vpop.xlane.xlu0 %2581
        %v2583 = vmax.f32 %v2537, %v2538
        %2584 = vmax.xlane.f32.xlu0 %v2583
        %v2585 = vpop.xlane.xlu0 %2584
        %v2586 = vmax.f32 %v2539, %v2540
        %2587 = vmax.xlane.f32.xlu0 %v2586
        %v2588 = vpop.xlane.xlu0 %2587
        %v2589 = vsub.f32 %v2509, %v2543
        %v2590 = vsub.f32 %v2510, %v2543
        %v2591 = vsub.f32 %v2511, %v2546
        %v2592 = vsub.f32 %v2512, %v2546
        %v2593 = vsub.f32 %v2513, %v2549
        %v2594 = vsub.f32 %v2514, %v2549
        %v2595 = vsub.f32 %v2515, %v2552
        %v2596 = vsub.f32 %v2516, %v2552
        %v2597 = vsub.f32 %v2517, %v2555
        %v2598 = vsub.f32 %v2518, %v2555
        %v2599 = vsub.f32 %v2519, %v2558
        %v2600 = vsub.f32 %v2520, %v2558
        %v2601 = vsub.f32 %v2521, %v2561
        %v2602 = vsub.f32 %v2522, %v2561
        %v2603 = vsub.f32 %v2523, %v2564
        %v2604 = vsub.f32 %v2524, %v2564
        %v2605 = vsub.f32 %v2525, %v2567
        %v2606 = vsub.f32 %v2526, %v2567
        %v2607 = vsub.f32 %v2527, %v2570
        %v2608 = vsub.f32 %v2528, %v2570
        %v2609 = vsub.f32 %v2529, %v2573
        %v2610 = vsub.f32 %v2530, %v2573
        %v2611 = vsub.f32 %v2531, %v2576
        %v2612 = vsub.f32 %v2532, %v2576
        %v2613 = vsub.f32 %v2533, %v2579
        %v2614 = vsub.f32 %v2534, %v2579
        %v2615 = vsub.f32 %v2535, %v2582
        %v2616 = vsub.f32 %v2536, %v2582
        %v2617 = vsub.f32 %v2537, %v2585
        %v2618 = vsub.f32 %v2538, %v2585
        %v2619 = vsub.f32 %v2539, %v2588
        %v2620 = vsub.f32 %v2540, %v2588
        %v2621 = vmul.f32 %v2589, 1.442695
        %v2622 = vpow.pop %v2621
        %v2623 = vmul.f32 %v2590, 1.442695
        %v2624 = vpow.pop %v2623
        %v2625 = vmul.f32 %v2591, 1.442695
        %v2626 = vpow.pop %v2625
        %v2627 = vmul.f32 %v2592, 1.442695
        %v2628 = vpow.pop %v2627
        %v2629 = vmul.f32 %v2593, 1.442695
        %v2630 = vpow.pop %v2629
        %v2631 = vmul.f32 %v2594, 1.442695
        %v2632 = vpow.pop %v2631
        %v2633 = vmul.f32 %v2595, 1.442695
        %v2634 = vpow.pop %v2633
        %v2635 = vmul.f32 %v2596, 1.442695
        %v2636 = vpow.pop %v2635
        %v2637 = vmul.f32 %v2597, 1.442695
        %v2638 = vpow.pop %v2637
        %v2639 = vmul.f32 %v2598, 1.442695
        %v2640 = vpow.pop %v2639
        %v2641 = vmul.f32 %v2599, 1.442695
        %v2642 = vpow.pop %v2641
        %v2643 = vmul.f32 %v2600, 1.442695
        %v2644 = vpow.pop %v2643
        %v2645 = vmul.f32 %v2601, 1.442695
        %v2646 = vpow.pop %v2645
        %v2647 = vmul.f32 %v2602, 1.442695
        %v2648 = vpow.pop %v2647
        %v2649 = vmul.f32 %v2603, 1.442695
        %v2650 = vpow.pop %v2649
        %v2651 = vmul.f32 %v2604, 1.442695
        %v2652 = vpow.pop %v2651
        %v2653 = vmul.f32 %v2605, 1.442695
        %v2654 = vpow.pop %v2653
        %v2655 = vmul.f32 %v2606, 1.442695
        %v2656 = vpow.pop %v2655
        %v2657 = vmul.f32 %v2607, 1.442695
        %v2658 = vpow.pop %v2657
        %v2659 = vmul.f32 %v2608, 1.442695
        %v2660 = vpow.pop %v2659
        %v2661 = vmul.f32 %v2609, 1.442695
        %v2662 = vpow.pop %v2661
        %v2663 = vmul.f32 %v2610, 1.442695
        %v2664 = vpow.pop %v2663
        %v2665 = vmul.f32 %v2611, 1.442695
        %v2666 = vpow.pop %v2665
        %v2667 = vmul.f32 %v2612, 1.442695
        %v2668 = vpow.pop %v2667
        %v2669 = vmul.f32 %v2613, 1.442695
        %v2670 = vpow.pop %v2669
        %v2671 = vmul.f32 %v2614, 1.442695
        %v2672 = vpow.pop %v2671
        %v2673 = vmul.f32 %v2615, 1.442695
        %v2674 = vpow.pop %v2673
        %v2675 = vmul.f32 %v2616, 1.442695
        %v2676 = vpow.pop %v2675
        %v2677 = vmul.f32 %v2617, 1.442695
        %v2678 = vpow.pop %v2677
        %v2679 = vmul.f32 %v2618, 1.442695
        %v2680 = vpow.pop %v2679
        %v2681 = vmul.f32 %v2619, 1.442695
        %v2682 = vpow.pop %v2681
        %v2683 = vmul.f32 %v2620, 1.442695
        %v2684 = vpow.pop %v2683
        %v2685 = vadd.f32 %v2622, %v2624
        %2686 = vadd.xlane.f32.xlu0 %v2685
        %v2687 = vpop.xlane.xlu0 %2686
        %v2688 = vadd.f32 %v2626, %v2628
        %2689 = vadd.xlane.f32.xlu0 %v2688
        %v2690 = vpop.xlane.xlu0 %2689
        %v2691 = vadd.f32 %v2630, %v2632
        %2692 = vadd.xlane.f32.xlu0 %v2691
        %v2693 = vpop.xlane.xlu0 %2692
        %v2694 = vadd.f32 %v2634, %v2636
        %2695 = vadd.xlane.f32.xlu0 %v2694
        %v2696 = vpop.xlane.xlu0 %2695
        %v2697 = vadd.f32 %v2638, %v2640
        %2698 = vadd.xlane.f32.xlu0 %v2697
        %v2699 = vpop.xlane.xlu0 %2698
        %v2700 = vadd.f32 %v2642, %v2644
        %2701 = vadd.xlane.f32.xlu0 %v2700
        %v2702 = vpop.xlane.xlu0 %2701
        %v2703 = vadd.f32 %v2646, %v2648
        %2704 = vadd.xlane.f32.xlu0 %v2703
        %v2705 = vpop.xlane.xlu0 %2704
        %v2706 = vadd.f32 %v2650, %v2652
        %2707 = vadd.xlane.f32.xlu0 %v2706
        %v2708 = vpop.xlane.xlu0 %2707
        %v2709 = vadd.f32 %v2654, %v2656
        %2710 = vadd.xlane.f32.xlu0 %v2709
        %v2711 = vpop.xlane.xlu0 %2710
        %v2712 = vadd.f32 %v2658, %v2660
        %2713 = vadd.xlane.f32.xlu0 %v2712
        %v2714 = vpop.xlane.xlu0 %2713
        %v2715 = vadd.f32 %v2662, %v2664
        %2716 = vadd.xlane.f32.xlu0 %v2715
        %v2717 = vpop.xlane.xlu0 %2716
        %v2718 = vadd.f32 %v2666, %v2668
        %2719 = vadd.xlane.f32.xlu0 %v2718
        %v2720 = vpop.xlane.xlu0 %2719
        %v2721 = vadd.f32 %v2670, %v2672
        %2722 = vadd.xlane.f32.xlu0 %v2721
        %v2723 = vpop.xlane.xlu0 %2722
        %v2724 = vadd.f32 %v2674, %v2676
        %2725 = vadd.xlane.f32.xlu0 %v2724
        %v2726 = vpop.xlane.xlu0 %2725
        %v2727 = vadd.f32 %v2678, %v2680
        %2728 = vadd.xlane.f32.xlu0 %v2727
        %v2729 = vpop.xlane.xlu0 %2728
        %v2730 = vadd.f32 %v2682, %v2684
        %2731 = vadd.xlane.f32.xlu0 %v2730
        %v2732 = vpop.xlane.xlu0 %2731
        %v2733 = vrcp.pop %v2687
        %v2734 = vrcp.pop %v2690
        %v2735 = vrcp.pop %v2693
        %v2736 = vrcp.pop %v2696
        %v2737 = vrcp.pop %v2699
        %v2738 = vrcp.pop %v2702
        %v2739 = vrcp.pop %v2705
        %v2740 = vrcp.pop %v2708
        %v2741 = vrcp.pop %v2711
        %v2742 = vrcp.pop %v2714
        %v2743 = vrcp.pop %v2717
        %v2744 = vrcp.pop %v2720
        %v2745 = vrcp.pop %v2723
        %v2746 = vrcp.pop %v2726
        %v2747 = vrcp.pop %v2729
        %v2748 = vrcp.pop %v2732
        %v2749 = vmul.f32 %v2622, %v2733
        %v2750 = vmul.f32 %v2624, %v2733
        %v2751 = vmul.f32 %v2626, %v2734
        %v2752 = vmul.f32 %v2628, %v2734
        %v2753 = vmul.f32 %v2630, %v2735
        %v2754 = vmul.f32 %v2632, %v2735
        %v2755 = vmul.f32 %v2634, %v2736
        %v2756 = vmul.f32 %v2636, %v2736
        %v2757 = vmul.f32 %v2638, %v2737
        %v2758 = vmul.f32 %v2640, %v2737
        %v2759 = vmul.f32 %v2642, %v2738
        %v2760 = vmul.f32 %v2644, %v2738
        %v2761 = vmul.f32 %v2646, %v2739
        %v2762 = vmul.f32 %v2648, %v2739
        %v2763 = vmul.f32 %v2650, %v2740
        %v2764 = vmul.f32 %v2652, %v2740
        %v2765 = vmul.f32 %v2654, %v2741
        %v2766 = vmul.f32 %v2656, %v2741
        %v2767 = vmul.f32 %v2658, %v2742
        %v2768 = vmul.f32 %v2660, %v2742
        %v2769 = vmul.f32 %v2662, %v2743
        %v2770 = vmul.f32 %v2664, %v2743
        %v2771 = vmul.f32 %v2666, %v2744
        %v2772 = vmul.f32 %v2668, %v2744
        %v2773 = vmul.f32 %v2670, %v2745
        %v2774 = vmul.f32 %v2672, %v2745
        %v2775 = vmul.f32 %v2674, %v2746
        %v2776 = vmul.f32 %v2676, %v2746
        %v2777 = vmul.f32 %v2678, %v2747
        %v2778 = vmul.f32 %v2680, %v2747
        %v2779 = vmul.f32 %v2682, %v2748
        %v2780 = vmul.f32 %v2684, %v2748
        %2781 = vmatpush.msra.mxu0 %v2122
        %2782 = vmatpush.msra.mxu0 %v2120
        %2783 = vmatpush.msra.mxu0 %v2117
        %2784 = vmatpush.msra.mxu0 %v2115
        %2785 = vmatpush.msra.mxu0 %v2112
        %2786 = vmatpush.msra.mxu0 %v2110
        %2787 = vmatpush.msra.mxu0 %v2107
        %2788 = vmatpush.msra.mxu0 %v2105
        %2789 = vmatpush.msra.mxu0 %v2102
        %2790 = vmatpush.msra.mxu0 %v2100
        %2791 = vmatpush.msra.mxu0 %v2097
        %2792 = vmatpush.msra.mxu0 %v2095
        %2793 = vmatpush.msra.mxu0 %v2092
        %2794 = vmatpush.msra.mxu0 %v2090
        %2795 = vmatpush.msra.mxu0 %v2087
        %2796 = vmatpush.msra.mxu0 %v2085
        %2797 = vmatmul.f32.gmra.mxu0 %v2749
        %v2798 = vpop.f32.mrf.mxu0
        %v2799 = vadd.f32 0.0, %v2798
        %2800 = vmatmul.f32.gmra.mxu0 %v2751
        %v2801 = vpop.f32.mrf.mxu0
        %v2802 = vadd.f32 0.0, %v2801
        %2803 = vmatmul.f32.gmra.mxu0 %v2753
        %v2804 = vpop.f32.mrf.mxu0
        %v2805 = vadd.f32 0.0, %v2804
        %2806 = vmatmul.f32.gmra.mxu0 %v2755
        %v2807 = vpop.f32.mrf.mxu0
        %v2808 = vadd.f32 0.0, %v2807
        %2809 = vmatmul.f32.gmra.mxu0 %v2757
        %v2810 = vpop.f32.mrf.mxu0
        %v2811 = vadd.f32 0.0, %v2810
        %2812 = vmatmul.f32.gmra.mxu0 %v2759
        %v2813 = vpop.f32.mrf.mxu0
        %v2814 = vadd.f32 0.0, %v2813
        %2815 = vmatmul.f32.gmra.mxu0 %v2761
        %v2816 = vpop.f32.mrf.mxu0
        %v2817 = vadd.f32 0.0, %v2816
        %2818 = vmatmul.f32.gmra.mxu0 %v2763
        %v2819 = vpop.f32.mrf.mxu0
        %v2820 = vadd.f32 0.0, %v2819
        %2821 = vmatmul.f32.gmra.mxu0 %v2765
        %v2822 = vpop.f32.mrf.mxu0
        %v2823 = vadd.f32 0.0, %v2822
        %2824 = vmatmul.f32.gmra.mxu0 %v2767
        %v2825 = vpop.f32.mrf.mxu0
        %v2826 = vadd.f32 0.0, %v2825
        %2827 = vmatmul.f32.gmra.mxu0 %v2769
        %v2828 = vpop.f32.mrf.mxu0
        %v2829 = vadd.f32 0.0, %v2828
        %2830 = vmatmul.f32.gmra.mxu0 %v2771
        %v2831 = vpop.f32.mrf.mxu0
        %v2832 = vadd.f32 0.0, %v2831
        %2833 = vmatmul.f32.gmra.mxu0 %v2773
        %v2834 = vpop.f32.mrf.mxu0
        %v2835 = vadd.f32 0.0, %v2834
        %2836 = vmatmul.f32.gmra.mxu0 %v2775
        %v2837 = vpop.f32.mrf.mxu0
        %v2838 = vadd.f32 0.0, %v2837
        %2839 = vmatmul.f32.gmra.mxu0 %v2777
        %v2840 = vpop.f32.mrf.mxu0
        %v2841 = vadd.f32 0.0, %v2840
        %2842 = vmatmul.f32.gmra.mxu0 %v2779
        %v2843 = vpop.f32.mrf.mxu0
        %v2844 = vadd.f32 0.0, %v2843
        %2845 = vdwg.mxu0
        %2846 = vmatpush.msra.mxu0 %v2162
        %2847 = vmatpush.msra.mxu0 %v2160
        %2848 = vmatpush.msra.mxu0 %v2157
        %2849 = vmatpush.msra.mxu0 %v2155
        %2850 = vmatpush.msra.mxu0 %v2152
        %2851 = vmatpush.msra.mxu0 %v2150
        %2852 = vmatpush.msra.mxu0 %v2147
        %2853 = vmatpush.msra.mxu0 %v2145
        %2854 = vmatpush.msra.mxu0 %v2142
        %2855 = vmatpush.msra.mxu0 %v2140
        %2856 = vmatpush.msra.mxu0 %v2137
        %2857 = vmatpush.msra.mxu0 %v2135
        %2858 = vmatpush.msra.mxu0 %v2132
        %2859 = vmatpush.msra.mxu0 %v2130
        %2860 = vmatpush.msra.mxu0 %v2127
        %2861 = vmatpush.msra.mxu0 %v2125
        %2862 = vmatmul.f32.gmra.mxu0 %v2750
        %v2863 = vpop.f32.mrf.mxu0
        %v2864 = vadd.f32 %v2799, %v2863
        %2865 = vmatmul.f32.gmra.mxu0 %v2752
        %v2866 = vpop.f32.mrf.mxu0
        %v2867 = vadd.f32 %v2802, %v2866
        %2868 = vmatmul.f32.gmra.mxu0 %v2754
        %v2869 = vpop.f32.mrf.mxu0
        %v2870 = vadd.f32 %v2805, %v2869
        %2871 = vmatmul.f32.gmra.mxu0 %v2756
        %v2872 = vpop.f32.mrf.mxu0
        %v2873 = vadd.f32 %v2808, %v2872
        %2874 = vmatmul.f32.gmra.mxu0 %v2758
        %v2875 = vpop.f32.mrf.mxu0
        %v2876 = vadd.f32 %v2811, %v2875
        %2877 = vmatmul.f32.gmra.mxu0 %v2760
        %v2878 = vpop.f32.mrf.mxu0
        %v2879 = vadd.f32 %v2814, %v2878
        %2880 = vmatmul.f32.gmra.mxu0 %v2762
        %v2881 = vpop.f32.mrf.mxu0
        %v2882 = vadd.f32 %v2817, %v2881
        %2883 = vmatmul.f32.gmra.mxu0 %v2764
        %v2884 = vpop.f32.mrf.mxu0
        %v2885 = vadd.f32 %v2820, %v2884
        %2886 = vmatmul.f32.gmra.mxu0 %v2766
        %v2887 = vpop.f32.mrf.mxu0
        %v2888 = vadd.f32 %v2823, %v2887
        %2889 = vmatmul.f32.gmra.mxu0 %v2768
        %v2890 = vpop.f32.mrf.mxu0
        %v2891 = vadd.f32 %v2826, %v2890
        %2892 = vmatmul.f32.gmra.mxu0 %v2770
        %v2893 = vpop.f32.mrf.mxu0
        %v2894 = vadd.f32 %v2829, %v2893
        %2895 = vmatmul.f32.gmra.mxu0 %v2772
        %v2896 = vpop.f32.mrf.mxu0
        %v2897 = vadd.f32 %v2832, %v2896
        %2898 = vmatmul.f32.gmra.mxu0 %v2774
        %v2899 = vpop.f32.mrf.mxu0
        %v2900 = vadd.f32 %v2835, %v2899
        %2901 = vmatmul.f32.gmra.mxu0 %v2776
        %v2902 = vpop.f32.mrf.mxu0
        %v2903 = vadd.f32 %v2838, %v2902
        %2904 = vmatmul.f32.gmra.mxu0 %v2778
        %v2905 = vpop.f32.mrf.mxu0
        %v2906 = vadd.f32 %v2841, %v2905
        %2907 = vmatmul.f32.gmra.mxu0 %v2780
        %v2908 = vpop.f32.mrf.mxu0
        %v2909 = vadd.f32 %v2844, %v2908
        %2910 = vdwg.mxu0
        %2911 = vst.msk [vmem:[#allocation2] sm:$0xff] %vm2234, %v2864
        %2912 = vst.msk [vmem:[#allocation2 + $0x8] sm:$0xff] %vm2234, %v2867
        %2913 = vst.msk [vmem:[#allocation2 + $0x10] sm:$0xff] %vm2234, %v2870
        %2914 = vst.msk [vmem:[#allocation2 + $0x18] sm:$0xff] %vm2234, %v2873
        %2915 = vst.msk [vmem:[#allocation2 + $0x20] sm:$0xff] %vm2234, %v2876
        %2916 = vst.msk [vmem:[#allocation2 + $0x28] sm:$0xff] %vm2234, %v2879
        %2917 = vst.msk [vmem:[#allocation2 + $0x30] sm:$0xff] %vm2234, %v2882
        %2918 = vst.msk [vmem:[#allocation2 + $0x38] sm:$0xff] %vm2234, %v2885
        %2919 = vst.msk [vmem:[#allocation2 + $0x40] sm:$0xff] %vm2234, %v2888
        %2920 = vst.msk [vmem:[#allocation2 + $0x48] sm:$0xff] %vm2234, %v2891
        %2921 = vst.msk [vmem:[#allocation2 + $0x50] sm:$0xff] %vm2234, %v2894
        %2922 = vst.msk [vmem:[#allocation2 + $0x58] sm:$0xff] %vm2234, %v2897
        %2923 = vst.msk [vmem:[#allocation2 + $0x60] sm:$0xff] %vm2234, %v2900
        %2924 = vst.msk [vmem:[#allocation2 + $0x68] sm:$0xff] %vm2234, %v2903
        %2925 = vst.msk [vmem:[#allocation2 + $0x70] sm:$0xff] %vm2234, %v2906
        %2926 = vst.msk [vmem:[#allocation2 + $0x78] sm:$0xff] %vm2234, %v2909
        %2927 = vrot.lane.b32.xlu0 %v1874, 96
        %v2928 = vpop.permute.xlu0 %2927
        %2929 = vrot.lane.b32.xlu0 %v1875, 96
        %v2930 = vpop.permute.xlu0 %2929
        %2931 = vrot.lane.b32.xlu0 %v1876, 96
        %v2932 = vpop.permute.xlu0 %2931
        %2933 = vrot.lane.b32.xlu0 %v1877, 96
        %v2934 = vpop.permute.xlu0 %2933
        %2935 = vrot.lane.b32.xlu0 %v1878, 96
        %v2936 = vpop.permute.xlu0 %2935
        %2937 = vrot.lane.b32.xlu0 %v1879, 96
        %v2938 = vpop.permute.xlu0 %2937
        %2939 = vrot.lane.b32.xlu0 %v1880, 96
        %v2940 = vpop.permute.xlu0 %2939
        %2941 = vrot.lane.b32.xlu0 %v1881, 96
        %v2942 = vpop.permute.xlu0 %2941
        %2943 = vrot.lane.b32.xlu0 %v1882, 96
        %v2944 = vpop.permute.xlu0 %2943
        %2945 = vrot.lane.b32.xlu0 %v1883, 96
        %v2946 = vpop.permute.xlu0 %2945
        %2947 = vrot.lane.b32.xlu0 %v1884, 96
        %v2948 = vpop.permute.xlu0 %2947
        %2949 = vrot.lane.b32.xlu0 %v1885, 96
        %v2950 = vpop.permute.xlu0 %2949
        %2951 = vrot.lane.b32.xlu0 %v1886, 96
        %v2952 = vpop.permute.xlu0 %2951
        %2953 = vrot.lane.b32.xlu0 %v1887, 96
        %v2954 = vpop.permute.xlu0 %2953
        %2955 = vrot.lane.b32.xlu0 %v1888, 96
        %v2956 = vpop.permute.xlu0 %2955
        %2957 = vrot.lane.b32.xlu0 %v1889, 96
        %v2958 = vpop.permute.xlu0 %2957
        %2959 = vrot.lane.b32.xlu0 %v1996, 96
        %v2960 = vpop.permute.xlu0 %2959
        %2961 = vrot.lane.b32.xlu0 %v1998, 96
        %v2962 = vpop.permute.xlu0 %2961
        %2963 = vrot.lane.b32.xlu0 %v2001, 96
        %v2964 = vpop.permute.xlu0 %2963
        %2965 = vrot.lane.b32.xlu0 %v2003, 96
        %v2966 = vpop.permute.xlu0 %2965
        %2967 = vrot.lane.b32.xlu0 %v2006, 96
        %v2968 = vpop.permute.xlu0 %2967
        %2969 = vrot.lane.b32.xlu0 %v2008, 96
        %v2970 = vpop.permute.xlu0 %2969
        %2971 = vrot.lane.b32.xlu0 %v2011, 96
        %v2972 = vpop.permute.xlu0 %2971
        %2973 = vrot.lane.b32.xlu0 %v2013, 96
        %v2974 = vpop.permute.xlu0 %2973
        %2975 = vrot.lane.b32.xlu0 %v2016, 96
        %v2976 = vpop.permute.xlu0 %2975
        %2977 = vrot.lane.b32.xlu0 %v2018, 96
        %v2978 = vpop.permute.xlu0 %2977
        %2979 = vrot.lane.b32.xlu0 %v2021, 96
        %v2980 = vpop.permute.xlu0 %2979
        %2981 = vrot.lane.b32.xlu0 %v2023, 96
        %v2982 = vpop.permute.xlu0 %2981
        %2983 = vrot.lane.b32.xlu0 %v2026, 96
        %v2984 = vpop.permute.xlu0 %2983
        %2985 = vrot.lane.b32.xlu0 %v2028, 96
        %v2986 = vpop.permute.xlu0 %2985
        %2987 = vrot.lane.b32.xlu0 %v2031, 96
        %v2988 = vpop.permute.xlu0 %2987
        %2989 = vrot.lane.b32.xlu0 %v2033, 96
        %v2990 = vpop.permute.xlu0 %2989
        %2991 = vrot.lane.b32.xlu0 %v2036, 96
        %v2992 = vpop.permute.xlu0 %2991
        %2993 = vrot.lane.b32.xlu0 %v2038, 96
        %v2994 = vpop.permute.xlu0 %2993
        %2995 = vrot.lane.b32.xlu0 %v2041, 96
        %v2996 = vpop.permute.xlu0 %2995
        %2997 = vrot.lane.b32.xlu0 %v2043, 96
        %v2998 = vpop.permute.xlu0 %2997
        %2999 = vrot.lane.b32.xlu0 %v2046, 96
        %v3000 = vpop.permute.xlu0 %2999
        %3001 = vrot.lane.b32.xlu0 %v2048, 96
        %v3002 = vpop.permute.xlu0 %3001
        %3003 = vrot.lane.b32.xlu0 %v2051, 96
        %v3004 = vpop.permute.xlu0 %3003
        %3005 = vrot.lane.b32.xlu0 %v2053, 96
        %v3006 = vpop.permute.xlu0 %3005
        %3007 = vrot.lane.b32.xlu0 %v2056, 96
        %v3008 = vpop.permute.xlu0 %3007
        %3009 = vrot.lane.b32.xlu0 %v2058, 96
        %v3010 = vpop.permute.xlu0 %3009
        %3011 = vrot.lane.b32.xlu0 %v2061, 96
        %v3012 = vpop.permute.xlu0 %3011
        %3013 = vrot.lane.b32.xlu0 %v2063, 96
        %v3014 = vpop.permute.xlu0 %3013
        %3015 = vrot.lane.b32.xlu0 %v2066, 96
        %v3016 = vpop.permute.xlu0 %3015
        %3017 = vrot.lane.b32.xlu0 %v2068, 96
        %v3018 = vpop.permute.xlu0 %3017
        %3019 = vrot.lane.b32.xlu0 %v2071, 96
        %v3020 = vpop.permute.xlu0 %3019
        %3021 = vrot.lane.b32.xlu0 %v2073, 96
        %v3022 = vpop.permute.xlu0 %3021
        %v3023 = vsel %vm2234, %v2928, 0
        %v3025 = vsel %vm2234, %v2930, 0
        %v3027 = vsel %vm2234, %v2932, 0
        %v3029 = vsel %vm2234, %v2934, 0
        %v3031 = vsel %vm2234, %v2936, 0
        %v3033 = vsel %vm2234, %v2938, 0
        %v3035 = vsel %vm2234, %v2940, 0
        %v3037 = vsel %vm2234, %v2942, 0
        %v3039 = vsel %vm2234, %v2944, 0
        %v3041 = vsel %vm2234, %v2946, 0
        %v3043 = vsel %vm2234, %v2948, 0
        %v3045 = vsel %vm2234, %v2950, 0
        %v3047 = vsel %vm2234, %v2952, 0
        %v3049 = vsel %vm2234, %v2954, 0
        %v3051 = vsel %vm2234, %v2956, 0
        %v3053 = vsel %vm2234, %v2958, 0
        %v3055 = vsel %vm2234, %v2960, 0
        %v3057 = vsel %vm2234, %v2962, 0
        %v3059 = vsel %vm2234, %v2964, 0
        %v3061 = vsel %vm2234, %v2966, 0
        %v3063 = vsel %vm2234, %v2968, 0
        %v3065 = vsel %vm2234, %v2970, 0
        %v3067 = vsel %vm2234, %v2972, 0
        %v3069 = vsel %vm2234, %v2974, 0
        %v3071 = vsel %vm2234, %v2976, 0
        %v3073 = vsel %vm2234, %v2978, 0
        %v3075 = vsel %vm2234, %v2980, 0
        %v3077 = vsel %vm2234, %v2982, 0
        %v3079 = vsel %vm2234, %v2984, 0
        %v3081 = vsel %vm2234, %v2986, 0
        %v3083 = vsel %vm2234, %v2988, 0
        %v3085 = vsel %vm2234, %v2990, 0
        %v3087 = vsel %vm2234, %v2992, 0
        %v3089 = vsel %vm2234, %v2994, 0
        %v3091 = vsel %vm2234, %v2996, 0
        %v3093 = vsel %vm2234, %v2998, 0
        %v3095 = vsel %vm2234, %v3000, 0
        %v3097 = vsel %vm2234, %v3002, 0
        %v3099 = vsel %vm2234, %v3004, 0
        %v3101 = vsel %vm2234, %v3006, 0
        %v3103 = vsel %vm2234, %v3008, 0
        %v3105 = vsel %vm2234, %v3010, 0
        %v3107 = vsel %vm2234, %v3012, 0
        %v3109 = vsel %vm2234, %v3014, 0
        %v3111 = vsel %vm2234, %v3016, 0
        %v3113 = vsel %vm2234, %v3018, 0
        %v3115 = vsel %vm2234, %v3020, 0
        %v3117 = vsel %vm2234, %v3022, 0
        %3119 = vmatpush.xpose.msra.mxu0 %v3085
        %3120 = vmatpush.xpose.msra.mxu0 %v3083
        %3121 = vmatpush.xpose.msra.mxu0 %v3081
        %3122 = vmatpush.xpose.msra.mxu0 %v3079
        %3123 = vmatpush.xpose.msra.mxu0 %v3077
        %3124 = vmatpush.xpose.msra.mxu0 %v3075
        %3125 = vmatpush.xpose.msra.mxu0 %v3073
        %3126 = vmatpush.xpose.msra.mxu0 %v3071
        %3127 = vmatpush.xpose.msra.mxu0 %v3069
        %3128 = vmatpush.xpose.msra.mxu0 %v3067
        %3129 = vmatpush.xpose.msra.mxu0 %v3065
        %3130 = vmatpush.xpose.msra.mxu0 %v3063
        %3131 = vmatpush.xpose.msra.mxu0 %v3061
        %3132 = vmatpush.xpose.msra.mxu0 %v3059
        %3133 = vmatpush.xpose.msra.mxu0 %v3057
        %3134 = vmatpush.xpose.msra.mxu0 %v3055
        %3135 = vmatmul.f32.gmra.mxu0 %v3023
        %v3136 = vpop.f32.mrf.mxu0
        %v3137 = vadd.f32 0.0, %v3136
        %3138 = vmatmul.f32.gmra.mxu0 %v3025
        %v3139 = vpop.f32.mrf.mxu0
        %v3140 = vadd.f32 0.0, %v3139
        %3141 = vmatmul.f32.gmra.mxu0 %v3027
        %v3142 = vpop.f32.mrf.mxu0
        %v3143 = vadd.f32 0.0, %v3142
        %3144 = vmatmul.f32.gmra.mxu0 %v3029
        %v3145 = vpop.f32.mrf.mxu0
        %v3146 = vadd.f32 0.0, %v3145
        %3147 = vmatmul.f32.gmra.mxu0 %v3031
        %v3148 = vpop.f32.mrf.mxu0
        %v3149 = vadd.f32 0.0, %v3148
        %3150 = vmatmul.f32.gmra.mxu0 %v3033
        %v3151 = vpop.f32.mrf.mxu0
        %v3152 = vadd.f32 0.0, %v3151
        %3153 = vmatmul.f32.gmra.mxu0 %v3035
        %v3154 = vpop.f32.mrf.mxu0
        %v3155 = vadd.f32 0.0, %v3154
        %3156 = vmatmul.f32.gmra.mxu0 %v3037
        %v3157 = vpop.f32.mrf.mxu0
        %v3158 = vadd.f32 0.0, %v3157
        %3159 = vmatmul.f32.gmra.mxu0 %v3039
        %v3160 = vpop.f32.mrf.mxu0
        %v3161 = vadd.f32 0.0, %v3160
        %3162 = vmatmul.f32.gmra.mxu0 %v3041
        %v3163 = vpop.f32.mrf.mxu0
        %v3164 = vadd.f32 0.0, %v3163
        %3165 = vmatmul.f32.gmra.mxu0 %v3043
        %v3166 = vpop.f32.mrf.mxu0
        %v3167 = vadd.f32 0.0, %v3166
        %3168 = vmatmul.f32.gmra.mxu0 %v3045
        %v3169 = vpop.f32.mrf.mxu0
        %v3170 = vadd.f32 0.0, %v3169
        %3171 = vmatmul.f32.gmra.mxu0 %v3047
        %v3172 = vpop.f32.mrf.mxu0
        %v3173 = vadd.f32 0.0, %v3172
        %3174 = vmatmul.f32.gmra.mxu0 %v3049
        %v3175 = vpop.f32.mrf.mxu0
        %v3176 = vadd.f32 0.0, %v3175
        %3177 = vmatmul.f32.gmra.mxu0 %v3051
        %v3178 = vpop.f32.mrf.mxu0
        %v3179 = vadd.f32 0.0, %v3178
        %3180 = vmatmul.f32.gmra.mxu0 %v3053
        %v3181 = vpop.f32.mrf.mxu0
        %v3182 = vadd.f32 0.0, %v3181
        %3183 = vdwg.mxu0
        %3184 = vmatpush.xpose.msra.mxu0 %v3117
        %3185 = vmatpush.xpose.msra.mxu0 %v3115
        %3186 = vmatpush.xpose.msra.mxu0 %v3113
        %3187 = vmatpush.xpose.msra.mxu0 %v3111
        %3188 = vmatpush.xpose.msra.mxu0 %v3109
        %3189 = vmatpush.xpose.msra.mxu0 %v3107
        %3190 = vmatpush.xpose.msra.mxu0 %v3105
        %3191 = vmatpush.xpose.msra.mxu0 %v3103
        %3192 = vmatpush.xpose.msra.mxu0 %v3101
        %3193 = vmatpush.xpose.msra.mxu0 %v3099
        %3194 = vmatpush.xpose.msra.mxu0 %v3097
        %3195 = vmatpush.xpose.msra.mxu0 %v3095
        %3196 = vmatpush.xpose.msra.mxu0 %v3093
        %3197 = vmatpush.xpose.msra.mxu0 %v3091
        %3198 = vmatpush.xpose.msra.mxu0 %v3089
        %3199 = vmatpush.xpose.msra.mxu0 %v3087
        %3200 = vmatmul.f32.gmra.mxu0 %v3023
        %v3201 = vpop.f32.mrf.mxu0
        %v3202 = vadd.f32 0.0, %v3201
        %3203 = vmatmul.f32.gmra.mxu0 %v3025
        %v3204 = vpop.f32.mrf.mxu0
        %v3205 = vadd.f32 0.0, %v3204
        %3206 = vmatmul.f32.gmra.mxu0 %v3027
        %v3207 = vpop.f32.mrf.mxu0
        %v3208 = vadd.f32 0.0, %v3207
        %3209 = vmatmul.f32.gmra.mxu0 %v3029
        %v3210 = vpop.f32.mrf.mxu0
        %v3211 = vadd.f32 0.0, %v3210
        %3212 = vmatmul.f32.gmra.mxu0 %v3031
        %v3213 = vpop.f32.mrf.mxu0
        %v3214 = vadd.f32 0.0, %v3213
        %3215 = vmatmul.f32.gmra.mxu0 %v3033
        %v3216 = vpop.f32.mrf.mxu0
        %v3217 = vadd.f32 0.0, %v3216
        %3218 = vmatmul.f32.gmra.mxu0 %v3035
        %v3219 = vpop.f32.mrf.mxu0
        %v3220 = vadd.f32 0.0, %v3219
        %3221 = vmatmul.f32.gmra.mxu0 %v3037
        %v3222 = vpop.f32.mrf.mxu0
        %v3223 = vadd.f32 0.0, %v3222
        %3224 = vmatmul.f32.gmra.mxu0 %v3039
        %v3225 = vpop.f32.mrf.mxu0
        %v3226 = vadd.f32 0.0, %v3225
        %3227 = vmatmul.f32.gmra.mxu0 %v3041
        %v3228 = vpop.f32.mrf.mxu0
        %v3229 = vadd.f32 0.0, %v3228
        %3230 = vmatmul.f32.gmra.mxu0 %v3043
        %v3231 = vpop.f32.mrf.mxu0
        %v3232 = vadd.f32 0.0, %v3231
        %3233 = vmatmul.f32.gmra.mxu0 %v3045
        %v3234 = vpop.f32.mrf.mxu0
        %v3235 = vadd.f32 0.0, %v3234
        %3236 = vmatmul.f32.gmra.mxu0 %v3047
        %v3237 = vpop.f32.mrf.mxu0
        %v3238 = vadd.f32 0.0, %v3237
        %3239 = vmatmul.f32.gmra.mxu0 %v3049
        %v3240 = vpop.f32.mrf.mxu0
        %v3241 = vadd.f32 0.0, %v3240
        %3242 = vmatmul.f32.gmra.mxu0 %v3051
        %v3243 = vpop.f32.mrf.mxu0
        %v3244 = vadd.f32 0.0, %v3243
        %3245 = vmatmul.f32.gmra.mxu0 %v3053
        %v3246 = vpop.f32.mrf.mxu0
        %v3247 = vadd.f32 0.0, %v3246
        %3248 = vdwg.mxu0
        %v3249 = vsel %vm2202, %v3137, -1e+30
        %v3250 = vsel %vm2203, %v3202, -1e+30
        %v3251 = vsel %vm2204, %v3140, -1e+30
        %v3252 = vsel %vm2205, %v3205, -1e+30
        %v3253 = vsel %vm2206, %v3143, -1e+30
        %v3254 = vsel %vm2207, %v3208, -1e+30
        %v3255 = vsel %vm2208, %v3146, -1e+30
        %v3256 = vsel %vm2209, %v3211, -1e+30
        %v3257 = vsel %vm2210, %v3149, -1e+30
        %v3258 = vsel %vm2211, %v3214, -1e+30
        %v3259 = vsel %vm2212, %v3152, -1e+30
        %v3260 = vsel %vm2213, %v3217, -1e+30
        %v3261 = vsel %vm2214, %v3155, -1e+30
        %v3262 = vsel %vm2215, %v3220, -1e+30
        %v3263 = vsel %vm2216, %v3158, -1e+30
        %v3264 = vsel %vm2217, %v3223, -1e+30
        %v3265 = vsel %vm2218, %v3161, -1e+30
        %v3266 = vsel %vm2219, %v3226, -1e+30
        %v3267 = vsel %vm2220, %v3164, -1e+30
        %v3268 = vsel %vm2221, %v3229, -1e+30
        %v3269 = vsel %vm2222, %v3167, -1e+30
        %v3270 = vsel %vm2223, %v3232, -1e+30
        %v3271 = vsel %vm2224, %v3170, -1e+30
        %v3272 = vsel %vm2225, %v3235, -1e+30
        %v3273 = vsel %vm2226, %v3173, -1e+30
        %v3274 = vsel %vm2227, %v3238, -1e+30
        %v3275 = vsel %vm2228, %v3176, -1e+30
        %v3276 = vsel %vm2229, %v3241, -1e+30
        %v3277 = vsel %vm2230, %v3179, -1e+30
        %v3278 = vsel %vm2231, %v3244, -1e+30
        %v3279 = vsel %vm2232, %v3182, -1e+30
        %v3280 = vsel %vm2233, %v3247, -1e+30
        %v3281 = vmax.f32 %v3249, %v3250
        %3282 = vmax.xlane.f32.xlu0 %v3281
        %v3283 = vpop.xlane.xlu0 %3282
        %v3284 = vmax.f32 %v3251, %v3252
        %3285 = vmax.xlane.f32.xlu0 %v3284
        %v3286 = vpop.xlane.xlu0 %3285
        %v3287 = vmax.f32 %v3253, %v3254
        %3288 = vmax.xlane.f32.xlu0 %v3287
        %v3289 = vpop.xlane.xlu0 %3288
        %v3290 = vmax.f32 %v3255, %v3256
        %3291 = vmax.xlane.f32.xlu0 %v3290
        %v3292 = vpop.xlane.xlu0 %3291
        %v3293 = vmax.f32 %v3257, %v3258
        %3294 = vmax.xlane.f32.xlu0 %v3293
        %v3295 = vpop.xlane.xlu0 %3294
        %v3296 = vmax.f32 %v3259, %v3260
        %3297 = vmax.xlane.f32.xlu0 %v3296
        %v3298 = vpop.xlane.xlu0 %3297
        %v3299 = vmax.f32 %v3261, %v3262
        %3300 = vmax.xlane.f32.xlu0 %v3299
        %v3301 = vpop.xlane.xlu0 %3300
        %v3302 = vmax.f32 %v3263, %v3264
        %3303 = vmax.xlane.f32.xlu0 %v3302
        %v3304 = vpop.xlane.xlu0 %3303
        %v3305 = vmax.f32 %v3265, %v3266
        %3306 = vmax.xlane.f32.xlu0 %v3305
        %v3307 = vpop.xlane.xlu0 %3306
        %v3308 = vmax.f32 %v3267, %v3268
        %3309 = vmax.xlane.f32.xlu0 %v3308
        %v3310 = vpop.xlane.xlu0 %3309
        %v3311 = vmax.f32 %v3269, %v3270
        %3312 = vmax.xlane.f32.xlu0 %v3311
        %v3313 = vpop.xlane.xlu0 %3312
        %v3314 = vmax.f32 %v3271, %v3272
        %3315 = vmax.xlane.f32.xlu0 %v3314
        %v3316 = vpop.xlane.xlu0 %3315
        %v3317 = vmax.f32 %v3273, %v3274
        %3318 = vmax.xlane.f32.xlu0 %v3317
        %v3319 = vpop.xlane.xlu0 %3318
        %v3320 = vmax.f32 %v3275, %v3276
        %3321 = vmax.xlane.f32.xlu0 %v3320
        %v3322 = vpop.xlane.xlu0 %3321
        %v3323 = vmax.f32 %v3277, %v3278
        %3324 = vmax.xlane.f32.xlu0 %v3323
        %v3325 = vpop.xlane.xlu0 %3324
        %v3326 = vmax.f32 %v3279, %v3280
        %3327 = vmax.xlane.f32.xlu0 %v3326
        %v3328 = vpop.xlane.xlu0 %3327
        %v3329 = vsub.f32 %v3249, %v3283
        %v3330 = vsub.f32 %v3250, %v3283
        %v3331 = vsub.f32 %v3251, %v3286
        %v3332 = vsub.f32 %v3252, %v3286
        %v3333 = vsub.f32 %v3253, %v3289
        %v3334 = vsub.f32 %v3254, %v3289
        %v3335 = vsub.f32 %v3255, %v3292
        %v3336 = vsub.f32 %v3256, %v3292
        %v3337 = vsub.f32 %v3257, %v3295
        %v3338 = vsub.f32 %v3258, %v3295
        %v3339 = vsub.f32 %v3259, %v3298
        %v3340 = vsub.f32 %v3260, %v3298
        %v3341 = vsub.f32 %v3261, %v3301
        %v3342 = vsub.f32 %v3262, %v3301
        %v3343 = vsub.f32 %v3263, %v3304
        %v3344 = vsub.f32 %v3264, %v3304
        %v3345 = vsub.f32 %v3265, %v3307
        %v3346 = vsub.f32 %v3266, %v3307
        %v3347 = vsub.f32 %v3267, %v3310
        %v3348 = vsub.f32 %v3268, %v3310
        %v3349 = vsub.f32 %v3269, %v3313
        %v3350 = vsub.f32 %v3270, %v3313
        %v3351 = vsub.f32 %v3271, %v3316
        %v3352 = vsub.f32 %v3272, %v3316
        %v3353 = vsub.f32 %v3273, %v3319
        %v3354 = vsub.f32 %v3274, %v3319
        %v3355 = vsub.f32 %v3275, %v3322
        %v3356 = vsub.f32 %v3276, %v3322
        %v3357 = vsub.f32 %v3277, %v3325
        %v3358 = vsub.f32 %v3278, %v3325
        %v3359 = vsub.f32 %v3279, %v3328
        %v3360 = vsub.f32 %v3280, %v3328
        %v3361 = vmul.f32 %v3329, 1.442695
        %v3362 = vpow.pop %v3361
        %v3363 = vmul.f32 %v3330, 1.442695
        %v3364 = vpow.pop %v3363
        %v3365 = vmul.f32 %v3331, 1.442695
        %v3366 = vpow.pop %v3365
        %v3367 = vmul.f32 %v3332, 1.442695
        %v3368 = vpow.pop %v3367
        %v3369 = vmul.f32 %v3333, 1.442695
        %v3370 = vpow.pop %v3369
        %v3371 = vmul.f32 %v3334, 1.442695
        %v3372 = vpow.pop %v3371
        %v3373 = vmul.f32 %v3335, 1.442695
        %v3374 = vpow.pop %v3373
        %v3375 = vmul.f32 %v3336, 1.442695
        %v3376 = vpow.pop %v3375
        %v3377 = vmul.f32 %v3337, 1.442695
        %v3378 = vpow.pop %v3377
        %v3379 = vmul.f32 %v3338, 1.442695
        %v3380 = vpow.pop %v3379
        %v3381 = vmul.f32 %v3339, 1.442695
        %v3382 = vpow.pop %v3381
        %v3383 = vmul.f32 %v3340, 1.442695
        %v3384 = vpow.pop %v3383
        %v3385 = vmul.f32 %v3341, 1.442695
        %v3386 = vpow.pop %v3385
        %v3387 = vmul.f32 %v3342, 1.442695
        %v3388 = vpow.pop %v3387
        %v3389 = vmul.f32 %v3343, 1.442695
        %v3390 = vpow.pop %v3389
        %v3391 = vmul.f32 %v3344, 1.442695
        %v3392 = vpow.pop %v3391
        %v3393 = vmul.f32 %v3345, 1.442695
        %v3394 = vpow.pop %v3393
        %v3395 = vmul.f32 %v3346, 1.442695
        %v3396 = vpow.pop %v3395
        %v3397 = vmul.f32 %v3347, 1.442695
        %v3398 = vpow.pop %v3397
        %v3399 = vmul.f32 %v3348, 1.442695
        %v3400 = vpow.pop %v3399
        %v3401 = vmul.f32 %v3349, 1.442695
        %v3402 = vpow.pop %v3401
        %v3403 = vmul.f32 %v3350, 1.442695
        %v3404 = vpow.pop %v3403
        %v3405 = vmul.f32 %v3351, 1.442695
        %v3406 = vpow.pop %v3405
        %v3407 = vmul.f32 %v3352, 1.442695
        %v3408 = vpow.pop %v3407
        %v3409 = vmul.f32 %v3353, 1.442695
        %v3410 = vpow.pop %v3409
        %v3411 = vmul.f32 %v3354, 1.442695
        %v3412 = vpow.pop %v3411
        %v3413 = vmul.f32 %v3355, 1.442695
        %v3414 = vpow.pop %v3413
        %v3415 = vmul.f32 %v3356, 1.442695
        %v3416 = vpow.pop %v3415
        %v3417 = vmul.f32 %v3357, 1.442695
        %v3418 = vpow.pop %v3417
        %v3419 = vmul.f32 %v3358, 1.442695
        %v3420 = vpow.pop %v3419
        %v3421 = vmul.f32 %v3359, 1.442695
        %v3422 = vpow.pop %v3421
        %v3423 = vmul.f32 %v3360, 1.442695
        %v3424 = vpow.pop %v3423
        %v3425 = vadd.f32 %v3362, %v3364
        %3426 = vadd.xlane.f32.xlu0 %v3425
        %v3427 = vpop.xlane.xlu0 %3426
        %v3428 = vadd.f32 %v3366, %v3368
        %3429 = vadd.xlane.f32.xlu0 %v3428
        %v3430 = vpop.xlane.xlu0 %3429
        %v3431 = vadd.f32 %v3370, %v3372
        %3432 = vadd.xlane.f32.xlu0 %v3431
        %v3433 = vpop.xlane.xlu0 %3432
        %v3434 = vadd.f32 %v3374, %v3376
        %3435 = vadd.xlane.f32.xlu0 %v3434
        %v3436 = vpop.xlane.xlu0 %3435
        %v3437 = vadd.f32 %v3378, %v3380
        %3438 = vadd.xlane.f32.xlu0 %v3437
        %v3439 = vpop.xlane.xlu0 %3438
        %v3440 = vadd.f32 %v3382, %v3384
        %3441 = vadd.xlane.f32.xlu0 %v3440
        %v3442 = vpop.xlane.xlu0 %3441
        %v3443 = vadd.f32 %v3386, %v3388
        %3444 = vadd.xlane.f32.xlu0 %v3443
        %v3445 = vpop.xlane.xlu0 %3444
        %v3446 = vadd.f32 %v3390, %v3392
        %3447 = vadd.xlane.f32.xlu0 %v3446
        %v3448 = vpop.xlane.xlu0 %3447
        %v3449 = vadd.f32 %v3394, %v3396
        %3450 = vadd.xlane.f32.xlu0 %v3449
        %v3451 = vpop.xlane.xlu0 %3450
        %v3452 = vadd.f32 %v3398, %v3400
        %3453 = vadd.xlane.f32.xlu0 %v3452
        %v3454 = vpop.xlane.xlu0 %3453
        %v3455 = vadd.f32 %v3402, %v3404
        %3456 = vadd.xlane.f32.xlu0 %v3455
        %v3457 = vpop.xlane.xlu0 %3456
        %v3458 = vadd.f32 %v3406, %v3408
        %3459 = vadd.xlane.f32.xlu0 %v3458
        %v3460 = vpop.xlane.xlu0 %3459
        %v3461 = vadd.f32 %v3410, %v3412
        %3462 = vadd.xlane.f32.xlu0 %v3461
        %v3463 = vpop.xlane.xlu0 %3462
        %v3464 = vadd.f32 %v3414, %v3416
        %3465 = vadd.xlane.f32.xlu0 %v3464
        %v3466 = vpop.xlane.xlu0 %3465
        %v3467 = vadd.f32 %v3418, %v3420
        %3468 = vadd.xlane.f32.xlu0 %v3467
        %v3469 = vpop.xlane.xlu0 %3468
        %v3470 = vadd.f32 %v3422, %v3424
        %3471 = vadd.xlane.f32.xlu0 %v3470
        %v3472 = vpop.xlane.xlu0 %3471
        %v3473 = vrcp.pop %v3427
        %v3474 = vrcp.pop %v3430
        %v3475 = vrcp.pop %v3433
        %v3476 = vrcp.pop %v3436
        %v3477 = vrcp.pop %v3439
        %v3478 = vrcp.pop %v3442
        %v3479 = vrcp.pop %v3445
        %v3480 = vrcp.pop %v3448
        %v3481 = vrcp.pop %v3451
        %v3482 = vrcp.pop %v3454
        %v3483 = vrcp.pop %v3457
        %v3484 = vrcp.pop %v3460
        %v3485 = vrcp.pop %v3463
        %v3486 = vrcp.pop %v3466
        %v3487 = vrcp.pop %v3469
        %v3488 = vrcp.pop %v3472
        %v3489 = vmul.f32 %v3362, %v3473
        %v3490 = vmul.f32 %v3364, %v3473
        %v3491 = vmul.f32 %v3366, %v3474
        %v3492 = vmul.f32 %v3368, %v3474
        %v3493 = vmul.f32 %v3370, %v3475
        %v3494 = vmul.f32 %v3372, %v3475
        %v3495 = vmul.f32 %v3374, %v3476
        %v3496 = vmul.f32 %v3376, %v3476
        %v3497 = vmul.f32 %v3378, %v3477
        %v3498 = vmul.f32 %v3380, %v3477
        %v3499 = vmul.f32 %v3382, %v3478
        %v3500 = vmul.f32 %v3384, %v3478
        %v3501 = vmul.f32 %v3386, %v3479
        %v3502 = vmul.f32 %v3388, %v3479
        %v3503 = vmul.f32 %v3390, %v3480
        %v3504 = vmul.f32 %v3392, %v3480
        %v3505 = vmul.f32 %v3394, %v3481
        %v3506 = vmul.f32 %v3396, %v3481
        %v3507 = vmul.f32 %v3398, %v3482
        %v3508 = vmul.f32 %v3400, %v3482
        %v3509 = vmul.f32 %v3402, %v3483
        %v3510 = vmul.f32 %v3404, %v3483
        %v3511 = vmul.f32 %v3406, %v3484
        %v3512 = vmul.f32 %v3408, %v3484
        %v3513 = vmul.f32 %v3410, %v3485
        %v3514 = vmul.f32 %v3412, %v3485
        %v3515 = vmul.f32 %v3414, %v3486
        %v3516 = vmul.f32 %v3416, %v3486
        %v3517 = vmul.f32 %v3418, %v3487
        %v3518 = vmul.f32 %v3420, %v3487
        %v3519 = vmul.f32 %v3422, %v3488
        %v3520 = vmul.f32 %v3424, %v3488
        %3553 = vrot.lane.b32.xlu0 %v2085, 96
        %v3554 = vpop.permute.xlu0 %3553
        %3555 = vrot.lane.b32.xlu0 %v2087, 96
        %v3556 = vpop.permute.xlu0 %3555
        %3557 = vrot.lane.b32.xlu0 %v2090, 96
        %v3558 = vpop.permute.xlu0 %3557
        %3559 = vrot.lane.b32.xlu0 %v2092, 96
        %v3560 = vpop.permute.xlu0 %3559
        %3561 = vrot.lane.b32.xlu0 %v2095, 96
        %v3562 = vpop.permute.xlu0 %3561
        %3563 = vrot.lane.b32.xlu0 %v2097, 96
        %v3564 = vpop.permute.xlu0 %3563
        %3565 = vrot.lane.b32.xlu0 %v2100, 96
        %v3566 = vpop.permute.xlu0 %3565
        %3567 = vrot.lane.b32.xlu0 %v2102, 96
        %v3568 = vpop.permute.xlu0 %3567
        %3569 = vrot.lane.b32.xlu0 %v2105, 96
        %v3570 = vpop.permute.xlu0 %3569
        %3571 = vrot.lane.b32.xlu0 %v2107, 96
        %v3572 = vpop.permute.xlu0 %3571
        %3573 = vrot.lane.b32.xlu0 %v2110, 96
        %v3574 = vpop.permute.xlu0 %3573
        %3575 = vrot.lane.b32.xlu0 %v2112, 96
        %v3576 = vpop.permute.xlu0 %3575
        %3577 = vrot.lane.b32.xlu0 %v2115, 96
        %v3578 = vpop.permute.xlu0 %3577
        %3579 = vrot.lane.b32.xlu0 %v2117, 96
        %v3580 = vpop.permute.xlu0 %3579
        %3581 = vrot.lane.b32.xlu0 %v2120, 96
        %v3582 = vpop.permute.xlu0 %3581
        %3583 = vrot.lane.b32.xlu0 %v2122, 96
        %v3584 = vpop.permute.xlu0 %3583
        %3585 = vrot.lane.b32.xlu0 %v2125, 96
        %v3586 = vpop.permute.xlu0 %3585
        %3587 = vrot.lane.b32.xlu0 %v2127, 96
        %v3588 = vpop.permute.xlu0 %3587
        %3589 = vrot.lane.b32.xlu0 %v2130, 96
        %v3590 = vpop.permute.xlu0 %3589
        %3591 = vrot.lane.b32.xlu0 %v2132, 96
        %v3592 = vpop.permute.xlu0 %3591
        %3593 = vrot.lane.b32.xlu0 %v2135, 96
        %v3594 = vpop.permute.xlu0 %3593
        %3595 = vrot.lane.b32.xlu0 %v2137, 96
        %v3596 = vpop.permute.xlu0 %3595
        %3597 = vrot.lane.b32.xlu0 %v2140, 96
        %v3598 = vpop.permute.xlu0 %3597
        %3599 = vrot.lane.b32.xlu0 %v2142, 96
        %v3600 = vpop.permute.xlu0 %3599
        %3601 = vrot.lane.b32.xlu0 %v2145, 96
        %v3602 = vpop.permute.xlu0 %3601
        %3603 = vrot.lane.b32.xlu0 %v2147, 96
        %v3604 = vpop.permute.xlu0 %3603
        %3605 = vrot.lane.b32.xlu0 %v2150, 96
        %v3606 = vpop.permute.xlu0 %3605
        %3607 = vrot.lane.b32.xlu0 %v2152, 96
        %v3608 = vpop.permute.xlu0 %3607
        %3609 = vrot.lane.b32.xlu0 %v2155, 96
        %v3610 = vpop.permute.xlu0 %3609
        %3611 = vrot.lane.b32.xlu0 %v2157, 96
        %v3612 = vpop.permute.xlu0 %3611
        %3613 = vrot.lane.b32.xlu0 %v2160, 96
        %v3614 = vpop.permute.xlu0 %3613
        %3615 = vrot.lane.b32.xlu0 %v2162, 96
        %v3616 = vpop.permute.xlu0 %3615
        %3649 = vmatpush.msra.mxu0 %v3584
        %3650 = vmatpush.msra.mxu0 %v3582
        %3651 = vmatpush.msra.mxu0 %v3580
        %3652 = vmatpush.msra.mxu0 %v3578
        %3653 = vmatpush.msra.mxu0 %v3576
        %3654 = vmatpush.msra.mxu0 %v3574
        %3655 = vmatpush.msra.mxu0 %v3572
        %3656 = vmatpush.msra.mxu0 %v3570
        %3657 = vmatpush.msra.mxu0 %v3568
        %3658 = vmatpush.msra.mxu0 %v3566
        %3659 = vmatpush.msra.mxu0 %v3564
        %3660 = vmatpush.msra.mxu0 %v3562
        %3661 = vmatpush.msra.mxu0 %v3560
        %3662 = vmatpush.msra.mxu0 %v3558
        %3663 = vmatpush.msra.mxu0 %v3556
        %3664 = vmatpush.msra.mxu0 %v3554
        %3665 = vmatmul.f32.gmra.mxu0 %v3489
        %v3666 = vpop.f32.mrf.mxu0
        %v3667 = vadd.f32 0.0, %v3666
        %3668 = vmatmul.f32.gmra.mxu0 %v3491
        %v3669 = vpop.f32.mrf.mxu0
        %v3670 = vadd.f32 0.0, %v3669
        %3671 = vmatmul.f32.gmra.mxu0 %v3493
        %v3672 = vpop.f32.mrf.mxu0
        %v3673 = vadd.f32 0.0, %v3672
        %3674 = vmatmul.f32.gmra.mxu0 %v3495
        %v3675 = vpop.f32.mrf.mxu0
        %v3676 = vadd.f32 0.0, %v3675
        %3677 = vmatmul.f32.gmra.mxu0 %v3497
        %v3678 = vpop.f32.mrf.mxu0
        %v3679 = vadd.f32 0.0, %v3678
        %3680 = vmatmul.f32.gmra.mxu0 %v3499
        %v3681 = vpop.f32.mrf.mxu0
        %v3682 = vadd.f32 0.0, %v3681
        %3683 = vmatmul.f32.gmra.mxu0 %v3501
        %v3684 = vpop.f32.mrf.mxu0
        %v3685 = vadd.f32 0.0, %v3684
        %3686 = vmatmul.f32.gmra.mxu0 %v3503
        %v3687 = vpop.f32.mrf.mxu0
        %v3688 = vadd.f32 0.0, %v3687
        %3689 = vmatmul.f32.gmra.mxu0 %v3505
        %v3690 = vpop.f32.mrf.mxu0
        %v3691 = vadd.f32 0.0, %v3690
        %3692 = vmatmul.f32.gmra.mxu0 %v3507
        %v3693 = vpop.f32.mrf.mxu0
        %v3694 = vadd.f32 0.0, %v3693
        %3695 = vmatmul.f32.gmra.mxu0 %v3509
        %v3696 = vpop.f32.mrf.mxu0
        %v3697 = vadd.f32 0.0, %v3696
        %3698 = vmatmul.f32.gmra.mxu0 %v3511
        %v3699 = vpop.f32.mrf.mxu0
        %v3700 = vadd.f32 0.0, %v3699
        %3701 = vmatmul.f32.gmra.mxu0 %v3513
        %v3702 = vpop.f32.mrf.mxu0
        %v3703 = vadd.f32 0.0, %v3702
        %3704 = vmatmul.f32.gmra.mxu0 %v3515
        %v3705 = vpop.f32.mrf.mxu0
        %v3706 = vadd.f32 0.0, %v3705
        %3707 = vmatmul.f32.gmra.mxu0 %v3517
        %v3708 = vpop.f32.mrf.mxu0
        %v3709 = vadd.f32 0.0, %v3708
        %3710 = vmatmul.f32.gmra.mxu0 %v3519
        %v3711 = vpop.f32.mrf.mxu0
        %v3712 = vadd.f32 0.0, %v3711
        %3713 = vdwg.mxu0
        %3714 = vmatpush.msra.mxu0 %v3616
        %3715 = vmatpush.msra.mxu0 %v3614
        %3716 = vmatpush.msra.mxu0 %v3612
        %3717 = vmatpush.msra.mxu0 %v3610
        %3718 = vmatpush.msra.mxu0 %v3608
        %3719 = vmatpush.msra.mxu0 %v3606
        %3720 = vmatpush.msra.mxu0 %v3604
        %3721 = vmatpush.msra.mxu0 %v3602
        %3722 = vmatpush.msra.mxu0 %v3600
        %3723 = vmatpush.msra.mxu0 %v3598
        %3724 = vmatpush.msra.mxu0 %v3596
        %3725 = vmatpush.msra.mxu0 %v3594
        %3726 = vmatpush.msra.mxu0 %v3592
        %3727 = vmatpush.msra.mxu0 %v3590
        %3728 = vmatpush.msra.mxu0 %v3588
        %3729 = vmatpush.msra.mxu0 %v3586
        %3730 = vmatmul.f32.gmra.mxu0 %v3490
        %v3731 = vpop.f32.mrf.mxu0
        %v3732 = vadd.f32 %v3667, %v3731
        %3733 = vmatmul.f32.gmra.mxu0 %v3492
        %v3734 = vpop.f32.mrf.mxu0
        %v3735 = vadd.f32 %v3670, %v3734
        %3736 = vmatmul.f32.gmra.mxu0 %v3494
        %v3737 = vpop.f32.mrf.mxu0
        %v3738 = vadd.f32 %v3673, %v3737
        %3739 = vmatmul.f32.gmra.mxu0 %v3496
        %v3740 = vpop.f32.mrf.mxu0
        %v3741 = vadd.f32 %v3676, %v3740
        %3742 = vmatmul.f32.gmra.mxu0 %v3498
        %v3743 = vpop.f32.mrf.mxu0
        %v3744 = vadd.f32 %v3679, %v3743
        %3745 = vmatmul.f32.gmra.mxu0 %v3500
        %v3746 = vpop.f32.mrf.mxu0
        %v3747 = vadd.f32 %v3682, %v3746
        %3748 = vmatmul.f32.gmra.mxu0 %v3502
        %v3749 = vpop.f32.mrf.mxu0
        %v3750 = vadd.f32 %v3685, %v3749
        %3751 = vmatmul.f32.gmra.mxu0 %v3504
        %v3752 = vpop.f32.mrf.mxu0
        %v3753 = vadd.f32 %v3688, %v3752
        %3754 = vmatmul.f32.gmra.mxu0 %v3506
        %v3755 = vpop.f32.mrf.mxu0
        %v3756 = vadd.f32 %v3691, %v3755
        %3757 = vmatmul.f32.gmra.mxu0 %v3508
        %v3758 = vpop.f32.mrf.mxu0
        %v3759 = vadd.f32 %v3694, %v3758
        %3760 = vmatmul.f32.gmra.mxu0 %v3510
        %v3761 = vpop.f32.mrf.mxu0
        %v3762 = vadd.f32 %v3697, %v3761
        %3763 = vmatmul.f32.gmra.mxu0 %v3512
        %v3764 = vpop.f32.mrf.mxu0
        %v3765 = vadd.f32 %v3700, %v3764
        %3766 = vmatmul.f32.gmra.mxu0 %v3514
        %v3767 = vpop.f32.mrf.mxu0
        %v3768 = vadd.f32 %v3703, %v3767
        %3769 = vmatmul.f32.gmra.mxu0 %v3516
        %v3770 = vpop.f32.mrf.mxu0
        %v3771 = vadd.f32 %v3706, %v3770
        %3772 = vmatmul.f32.gmra.mxu0 %v3518
        %v3773 = vpop.f32.mrf.mxu0
        %v3774 = vadd.f32 %v3709, %v3773
        %3775 = vmatmul.f32.gmra.mxu0 %v3520
        %v3776 = vpop.f32.mrf.mxu0
        %v3777 = vadd.f32 %v3712, %v3776
        %3778 = vdwg.mxu0
        %3795 = vrot.lane.b32.xlu0 %v3732, 32
        %v3796 = vpop.permute.xlu0 %3795
        %3797 = vrot.lane.b32.xlu0 %v3735, 32
        %v3798 = vpop.permute.xlu0 %3797
        %3799 = vrot.lane.b32.xlu0 %v3738, 32
        %v3800 = vpop.permute.xlu0 %3799
        %3801 = vrot.lane.b32.xlu0 %v3741, 32
        %v3802 = vpop.permute.xlu0 %3801
        %3803 = vrot.lane.b32.xlu0 %v3744, 32
        %v3804 = vpop.permute.xlu0 %3803
        %3805 = vrot.lane.b32.xlu0 %v3747, 32
        %v3806 = vpop.permute.xlu0 %3805
        %3807 = vrot.lane.b32.xlu0 %v3750, 32
        %v3808 = vpop.permute.xlu0 %3807
        %3809 = vrot.lane.b32.xlu0 %v3753, 32
        %v3810 = vpop.permute.xlu0 %3809
        %3811 = vrot.lane.b32.xlu0 %v3756, 32
        %v3812 = vpop.permute.xlu0 %3811
        %3813 = vrot.lane.b32.xlu0 %v3759, 32
        %v3814 = vpop.permute.xlu0 %3813
        %3815 = vrot.lane.b32.xlu0 %v3762, 32
        %v3816 = vpop.permute.xlu0 %3815
        %3817 = vrot.lane.b32.xlu0 %v3765, 32
        %v3818 = vpop.permute.xlu0 %3817
        %3819 = vrot.lane.b32.xlu0 %v3768, 32
        %v3820 = vpop.permute.xlu0 %3819
        %3821 = vrot.lane.b32.xlu0 %v3771, 32
        %v3822 = vpop.permute.xlu0 %3821
        %3823 = vrot.lane.b32.xlu0 %v3774, 32
        %v3824 = vpop.permute.xlu0 %3823
        %3825 = vrot.lane.b32.xlu0 %v3777, 32
        %v3826 = vpop.permute.xlu0 %3825
        %vm3843 = vcmask 523520
        %3844 = vst.msk [vmem:[#allocation2] sm:$0xff] %vm3843, %v3796
        %3845 = vst.msk [vmem:[#allocation2 + $0x8] sm:$0xff] %vm3843, %v3798
        %3846 = vst.msk [vmem:[#allocation2 + $0x10] sm:$0xff] %vm3843, %v3800
        %3847 = vst.msk [vmem:[#allocation2 + $0x18] sm:$0xff] %vm3843, %v3802
        %3848 = vst.msk [vmem:[#allocation2 + $0x20] sm:$0xff] %vm3843, %v3804
        %3849 = vst.msk [vmem:[#allocation2 + $0x28] sm:$0xff] %vm3843, %v3806
        %3850 = vst.msk [vmem:[#allocation2 + $0x30] sm:$0xff] %vm3843, %v3808
        %3851 = vst.msk [vmem:[#allocation2 + $0x38] sm:$0xff] %vm3843, %v3810
        %3852 = vst.msk [vmem:[#allocation2 + $0x40] sm:$0xff] %vm3843, %v3812
        %3853 = vst.msk [vmem:[#allocation2 + $0x48] sm:$0xff] %vm3843, %v3814
        %3854 = vst.msk [vmem:[#allocation2 + $0x50] sm:$0xff] %vm3843, %v3816
        %3855 = vst.msk [vmem:[#allocation2 + $0x58] sm:$0xff] %vm3843, %v3818
        %3856 = vst.msk [vmem:[#allocation2 + $0x60] sm:$0xff] %vm3843, %v3820
        %3857 = vst.msk [vmem:[#allocation2 + $0x68] sm:$0xff] %vm3843, %v3822
        %3858 = vst.msk [vmem:[#allocation2 + $0x70] sm:$0xff] %vm3843, %v3824
        %3859 = vst.msk [vmem:[#allocation2 + $0x78] sm:$0xff] %vm3843, %v3826
        %3860 = vrot.lane.b32.xlu0 %v1874, 64
        %v3861 = vpop.permute.xlu0 %3860
        %3862 = vrot.lane.b32.xlu0 %v1875, 64
        %v3863 = vpop.permute.xlu0 %3862
        %3864 = vrot.lane.b32.xlu0 %v1876, 64
        %v3865 = vpop.permute.xlu0 %3864
        %3866 = vrot.lane.b32.xlu0 %v1877, 64
        %v3867 = vpop.permute.xlu0 %3866
        %3868 = vrot.lane.b32.xlu0 %v1878, 64
        %v3869 = vpop.permute.xlu0 %3868
        %3870 = vrot.lane.b32.xlu0 %v1879, 64
        %v3871 = vpop.permute.xlu0 %3870
        %3872 = vrot.lane.b32.xlu0 %v1880, 64
        %v3873 = vpop.permute.xlu0 %3872
        %3874 = vrot.lane.b32.xlu0 %v1881, 64
        %v3875 = vpop.permute.xlu0 %3874
        %3876 = vrot.lane.b32.xlu0 %v1882, 64
        %v3877 = vpop.permute.xlu0 %3876
        %3878 = vrot.lane.b32.xlu0 %v1883, 64
        %v3879 = vpop.permute.xlu0 %3878
        %3880 = vrot.lane.b32.xlu0 %v1884, 64
        %v3881 = vpop.permute.xlu0 %3880
        %3882 = vrot.lane.b32.xlu0 %v1885, 64
        %v3883 = vpop.permute.xlu0 %3882
        %3884 = vrot.lane.b32.xlu0 %v1886, 64
        %v3885 = vpop.permute.xlu0 %3884
        %3886 = vrot.lane.b32.xlu0 %v1887, 64
        %v3887 = vpop.permute.xlu0 %3886
        %3888 = vrot.lane.b32.xlu0 %v1888, 64
        %v3889 = vpop.permute.xlu0 %3888
        %3890 = vrot.lane.b32.xlu0 %v1889, 64
        %v3891 = vpop.permute.xlu0 %3890
        %3892 = vrot.lane.b32.xlu0 %v1996, 64
        %v3893 = vpop.permute.xlu0 %3892
        %3894 = vrot.lane.b32.xlu0 %v1998, 64
        %v3895 = vpop.permute.xlu0 %3894
        %3896 = vrot.lane.b32.xlu0 %v2001, 64
        %v3897 = vpop.permute.xlu0 %3896
        %3898 = vrot.lane.b32.xlu0 %v2003, 64
        %v3899 = vpop.permute.xlu0 %3898
        %3900 = vrot.lane.b32.xlu0 %v2006, 64
        %v3901 = vpop.permute.xlu0 %3900
        %3902 = vrot.lane.b32.xlu0 %v2008, 64
        %v3903 = vpop.permute.xlu0 %3902
        %3904 = vrot.lane.b32.xlu0 %v2011, 64
        %v3905 = vpop.permute.xlu0 %3904
        %3906 = vrot.lane.b32.xlu0 %v2013, 64
        %v3907 = vpop.permute.xlu0 %3906
        %3908 = vrot.lane.b32.xlu0 %v2016, 64
        %v3909 = vpop.permute.xlu0 %3908
        %3910 = vrot.lane.b32.xlu0 %v2018, 64
        %v3911 = vpop.permute.xlu0 %3910
        %3912 = vrot.lane.b32.xlu0 %v2021, 64
        %v3913 = vpop.permute.xlu0 %3912
        %3914 = vrot.lane.b32.xlu0 %v2023, 64
        %v3915 = vpop.permute.xlu0 %3914
        %3916 = vrot.lane.b32.xlu0 %v2026, 64
        %v3917 = vpop.permute.xlu0 %3916
        %3918 = vrot.lane.b32.xlu0 %v2028, 64
        %v3919 = vpop.permute.xlu0 %3918
        %3920 = vrot.lane.b32.xlu0 %v2031, 64
        %v3921 = vpop.permute.xlu0 %3920
        %3922 = vrot.lane.b32.xlu0 %v2033, 64
        %v3923 = vpop.permute.xlu0 %3922
        %3924 = vrot.lane.b32.xlu0 %v2036, 64
        %v3925 = vpop.permute.xlu0 %3924
        %3926 = vrot.lane.b32.xlu0 %v2038, 64
        %v3927 = vpop.permute.xlu0 %3926
        %3928 = vrot.lane.b32.xlu0 %v2041, 64
        %v3929 = vpop.permute.xlu0 %3928
        %3930 = vrot.lane.b32.xlu0 %v2043, 64
        %v3931 = vpop.permute.xlu0 %3930
        %3932 = vrot.lane.b32.xlu0 %v2046, 64
        %v3933 = vpop.permute.xlu0 %3932
        %3934 = vrot.lane.b32.xlu0 %v2048, 64
        %v3935 = vpop.permute.xlu0 %3934
        %3936 = vrot.lane.b32.xlu0 %v2051, 64
        %v3937 = vpop.permute.xlu0 %3936
        %3938 = vrot.lane.b32.xlu0 %v2053, 64
        %v3939 = vpop.permute.xlu0 %3938
        %3940 = vrot.lane.b32.xlu0 %v2056, 64
        %v3941 = vpop.permute.xlu0 %3940
        %3942 = vrot.lane.b32.xlu0 %v2058, 64
        %v3943 = vpop.permute.xlu0 %3942
        %3944 = vrot.lane.b32.xlu0 %v2061, 64
        %v3945 = vpop.permute.xlu0 %3944
        %3946 = vrot.lane.b32.xlu0 %v2063, 64
        %v3947 = vpop.permute.xlu0 %3946
        %3948 = vrot.lane.b32.xlu0 %v2066, 64
        %v3949 = vpop.permute.xlu0 %3948
        %3950 = vrot.lane.b32.xlu0 %v2068, 64
        %v3951 = vpop.permute.xlu0 %3950
        %3952 = vrot.lane.b32.xlu0 %v2071, 64
        %v3953 = vpop.permute.xlu0 %3952
        %3954 = vrot.lane.b32.xlu0 %v2073, 64
        %v3955 = vpop.permute.xlu0 %3954
        %v3956 = vsel %vm2234, %v3861, 0
        %v3958 = vsel %vm2234, %v3863, 0
        %v3960 = vsel %vm2234, %v3865, 0
        %v3962 = vsel %vm2234, %v3867, 0
        %v3964 = vsel %vm2234, %v3869, 0
        %v3966 = vsel %vm2234, %v3871, 0
        %v3968 = vsel %vm2234, %v3873, 0
        %v3970 = vsel %vm2234, %v3875, 0
        %v3972 = vsel %vm2234, %v3877, 0
        %v3974 = vsel %vm2234, %v3879, 0
        %v3976 = vsel %vm2234, %v3881, 0
        %v3978 = vsel %vm2234, %v3883, 0
        %v3980 = vsel %vm2234, %v3885, 0
        %v3982 = vsel %vm2234, %v3887, 0
        %v3984 = vsel %vm2234, %v3889, 0
        %v3986 = vsel %vm2234, %v3891, 0
        %v3988 = vsel %vm2234, %v3893, 0
        %v3990 = vsel %vm2234, %v3895, 0
        %v3992 = vsel %vm2234, %v3897, 0
        %v3994 = vsel %vm2234, %v3899, 0
        %v3996 = vsel %vm2234, %v3901, 0
        %v3998 = vsel %vm2234, %v3903, 0
        %v4000 = vsel %vm2234, %v3905, 0
        %v4002 = vsel %vm2234, %v3907, 0
        %v4004 = vsel %vm2234, %v3909, 0
        %v4006 = vsel %vm2234, %v3911, 0
        %v4008 = vsel %vm2234, %v3913, 0
        %v4010 = vsel %vm2234, %v3915, 0
        %v4012 = vsel %vm2234, %v3917, 0
        %v4014 = vsel %vm2234, %v3919, 0
        %v4016 = vsel %vm2234, %v3921, 0
        %v4018 = vsel %vm2234, %v3923, 0
        %v4020 = vsel %vm2234, %v3925, 0
        %v4022 = vsel %vm2234, %v3927, 0
        %v4024 = vsel %vm2234, %v3929, 0
        %v4026 = vsel %vm2234, %v3931, 0
        %v4028 = vsel %vm2234, %v3933, 0
        %v4030 = vsel %vm2234, %v3935, 0
        %v4032 = vsel %vm2234, %v3937, 0
        %v4034 = vsel %vm2234, %v3939, 0
        %v4036 = vsel %vm2234, %v3941, 0
        %v4038 = vsel %vm2234, %v3943, 0
        %v4040 = vsel %vm2234, %v3945, 0
        %v4042 = vsel %vm2234, %v3947, 0
        %v4044 = vsel %vm2234, %v3949, 0
        %v4046 = vsel %vm2234, %v3951, 0
        %v4048 = vsel %vm2234, %v3953, 0
        %v4050 = vsel %vm2234, %v3955, 0
        %4052 = vmatpush.xpose.msra.mxu0 %v4018
        %4053 = vmatpush.xpose.msra.mxu0 %v4016
        %4054 = vmatpush.xpose.msra.mxu0 %v4014
        %4055 = vmatpush.xpose.msra.mxu0 %v4012
        %4056 = vmatpush.xpose.msra.mxu0 %v4010
        %4057 = vmatpush.xpose.msra.mxu0 %v4008
        %4058 = vmatpush.xpose.msra.mxu0 %v4006
        %4059 = vmatpush.xpose.msra.mxu0 %v4004
        %4060 = vmatpush.xpose.msra.mxu0 %v4002
        %4061 = vmatpush.xpose.msra.mxu0 %v4000
        %4062 = vmatpush.xpose.msra.mxu0 %v3998
        %4063 = vmatpush.xpose.msra.mxu0 %v3996
        %4064 = vmatpush.xpose.msra.mxu0 %v3994
        %4065 = vmatpush.xpose.msra.mxu0 %v3992
        %4066 = vmatpush.xpose.msra.mxu0 %v3990
        %4067 = vmatpush.xpose.msra.mxu0 %v3988
        %4068 = vmatmul.f32.gmra.mxu0 %v3956
        %v4069 = vpop.f32.mrf.mxu0
        %v4070 = vadd.f32 0.0, %v4069
        %4071 = vmatmul.f32.gmra.mxu0 %v3958
        %v4072 = vpop.f32.mrf.mxu0
        %v4073 = vadd.f32 0.0, %v4072
        %4074 = vmatmul.f32.gmra.mxu0 %v3960
        %v4075 = vpop.f32.mrf.mxu0
        %v4076 = vadd.f32 0.0, %v4075
        %4077 = vmatmul.f32.gmra.mxu0 %v3962
        %v4078 = vpop.f32.mrf.mxu0
        %v4079 = vadd.f32 0.0, %v4078
        %4080 = vmatmul.f32.gmra.mxu0 %v3964
        %v4081 = vpop.f32.mrf.mxu0
        %v4082 = vadd.f32 0.0, %v4081
        %4083 = vmatmul.f32.gmra.mxu0 %v3966
        %v4084 = vpop.f32.mrf.mxu0
        %v4085 = vadd.f32 0.0, %v4084
        %4086 = vmatmul.f32.gmra.mxu0 %v3968
        %v4087 = vpop.f32.mrf.mxu0
        %v4088 = vadd.f32 0.0, %v4087
        %4089 = vmatmul.f32.gmra.mxu0 %v3970
        %v4090 = vpop.f32.mrf.mxu0
        %v4091 = vadd.f32 0.0, %v4090
        %4092 = vmatmul.f32.gmra.mxu0 %v3972
        %v4093 = vpop.f32.mrf.mxu0
        %v4094 = vadd.f32 0.0, %v4093
        %4095 = vmatmul.f32.gmra.mxu0 %v3974
        %v4096 = vpop.f32.mrf.mxu0
        %v4097 = vadd.f32 0.0, %v4096
        %4098 = vmatmul.f32.gmra.mxu0 %v3976
        %v4099 = vpop.f32.mrf.mxu0
        %v4100 = vadd.f32 0.0, %v4099
        %4101 = vmatmul.f32.gmra.mxu0 %v3978
        %v4102 = vpop.f32.mrf.mxu0
        %v4103 = vadd.f32 0.0, %v4102
        %4104 = vmatmul.f32.gmra.mxu0 %v3980
        %v4105 = vpop.f32.mrf.mxu0
        %v4106 = vadd.f32 0.0, %v4105
        %4107 = vmatmul.f32.gmra.mxu0 %v3982
        %v4108 = vpop.f32.mrf.mxu0
        %v4109 = vadd.f32 0.0, %v4108
        %4110 = vmatmul.f32.gmra.mxu0 %v3984
        %v4111 = vpop.f32.mrf.mxu0
        %v4112 = vadd.f32 0.0, %v4111
        %4113 = vmatmul.f32.gmra.mxu0 %v3986
        %v4114 = vpop.f32.mrf.mxu0
        %v4115 = vadd.f32 0.0, %v4114
        %4116 = vdwg.mxu0
        %4117 = vmatpush.xpose.msra.mxu0 %v4050
        %4118 = vmatpush.xpose.msra.mxu0 %v4048
        %4119 = vmatpush.xpose.msra.mxu0 %v4046
        %4120 = vmatpush.xpose.msra.mxu0 %v4044
        %4121 = vmatpush.xpose.msra.mxu0 %v4042
        %4122 = vmatpush.xpose.msra.mxu0 %v4040
        %4123 = vmatpush.xpose.msra.mxu0 %v4038
        %4124 = vmatpush.xpose.msra.mxu0 %v4036
        %4125 = vmatpush.xpose.msra.mxu0 %v4034
        %4126 = vmatpush.xpose.msra.mxu0 %v4032
        %4127 = vmatpush.xpose.msra.mxu0 %v4030
        %4128 = vmatpush.xpose.msra.mxu0 %v4028
        %4129 = vmatpush.xpose.msra.mxu0 %v4026
        %4130 = vmatpush.xpose.msra.mxu0 %v4024
        %4131 = vmatpush.xpose.msra.mxu0 %v4022
        %4132 = vmatpush.xpose.msra.mxu0 %v4020
        %4133 = vmatmul.f32.gmra.mxu0 %v3956
        %v4134 = vpop.f32.mrf.mxu0
        %v4135 = vadd.f32 0.0, %v4134
        %4136 = vmatmul.f32.gmra.mxu0 %v3958
        %v4137 = vpop.f32.mrf.mxu0
        %v4138 = vadd.f32 0.0, %v4137
        %4139 = vmatmul.f32.gmra.mxu0 %v3960
        %v4140 = vpop.f32.mrf.mxu0
        %v4141 = vadd.f32 0.0, %v4140
        %4142 = vmatmul.f32.gmra.mxu0 %v3962
        %v4143 = vpop.f32.mrf.mxu0
        %v4144 = vadd.f32 0.0, %v4143
        %4145 = vmatmul.f32.gmra.mxu0 %v3964
        %v4146 = vpop.f32.mrf.mxu0
        %v4147 = vadd.f32 0.0, %v4146
        %4148 = vmatmul.f32.gmra.mxu0 %v3966
        %v4149 = vpop.f32.mrf.mxu0
        %v4150 = vadd.f32 0.0, %v4149
        %4151 = vmatmul.f32.gmra.mxu0 %v3968
        %v4152 = vpop.f32.mrf.mxu0
        %v4153 = vadd.f32 0.0, %v4152
        %4154 = vmatmul.f32.gmra.mxu0 %v3970
        %v4155 = vpop.f32.mrf.mxu0
        %v4156 = vadd.f32 0.0, %v4155
        %4157 = vmatmul.f32.gmra.mxu0 %v3972
        %v4158 = vpop.f32.mrf.mxu0
        %v4159 = vadd.f32 0.0, %v4158
        %4160 = vmatmul.f32.gmra.mxu0 %v3974
        %v4161 = vpop.f32.mrf.mxu0
        %v4162 = vadd.f32 0.0, %v4161
        %4163 = vmatmul.f32.gmra.mxu0 %v3976
        %v4164 = vpop.f32.mrf.mxu0
        %v4165 = vadd.f32 0.0, %v4164
        %4166 = vmatmul.f32.gmra.mxu0 %v3978
        %v4167 = vpop.f32.mrf.mxu0
        %v4168 = vadd.f32 0.0, %v4167
        %4169 = vmatmul.f32.gmra.mxu0 %v3980
        %v4170 = vpop.f32.mrf.mxu0
        %v4171 = vadd.f32 0.0, %v4170
        %4172 = vmatmul.f32.gmra.mxu0 %v3982
        %v4173 = vpop.f32.mrf.mxu0
        %v4174 = vadd.f32 0.0, %v4173
        %4175 = vmatmul.f32.gmra.mxu0 %v3984
        %v4176 = vpop.f32.mrf.mxu0
        %v4177 = vadd.f32 0.0, %v4176
        %4178 = vmatmul.f32.gmra.mxu0 %v3986
        %v4179 = vpop.f32.mrf.mxu0
        %v4180 = vadd.f32 0.0, %v4179
        %4181 = vdwg.mxu0
        %v4182 = vsel %vm2202, %v4070, -1e+30
        %v4183 = vsel %vm2203, %v4135, -1e+30
        %v4184 = vsel %vm2204, %v4073, -1e+30
        %v4185 = vsel %vm2205, %v4138, -1e+30
        %v4186 = vsel %vm2206, %v4076, -1e+30
        %v4187 = vsel %vm2207, %v4141, -1e+30
        %v4188 = vsel %vm2208, %v4079, -1e+30
        %v4189 = vsel %vm2209, %v4144, -1e+30
        %v4190 = vsel %vm2210, %v4082, -1e+30
        %v4191 = vsel %vm2211, %v4147, -1e+30
        %v4192 = vsel %vm2212, %v4085, -1e+30
        %v4193 = vsel %vm2213, %v4150, -1e+30
        %v4194 = vsel %vm2214, %v4088, -1e+30
        %v4195 = vsel %vm2215, %v4153, -1e+30
        %v4196 = vsel %vm2216, %v4091, -1e+30
        %v4197 = vsel %vm2217, %v4156, -1e+30
        %v4198 = vsel %vm2218, %v4094, -1e+30
        %v4199 = vsel %vm2219, %v4159, -1e+30
        %v4200 = vsel %vm2220, %v4097, -1e+30
        %v4201 = vsel %vm2221, %v4162, -1e+30
        %v4202 = vsel %vm2222, %v4100, -1e+30
        %v4203 = vsel %vm2223, %v4165, -1e+30
        %v4204 = vsel %vm2224, %v4103, -1e+30
        %v4205 = vsel %vm2225, %v4168, -1e+30
        %v4206 = vsel %vm2226, %v4106, -1e+30
        %v4207 = vsel %vm2227, %v4171, -1e+30
        %v4208 = vsel %vm2228, %v4109, -1e+30
        %v4209 = vsel %vm2229, %v4174, -1e+30
        %v4210 = vsel %vm2230, %v4112, -1e+30
        %v4211 = vsel %vm2231, %v4177, -1e+30
        %v4212 = vsel %vm2232, %v4115, -1e+30
        %v4213 = vsel %vm2233, %v4180, -1e+30
        %v4214 = vmax.f32 %v4182, %v4183
        %4215 = vmax.xlane.f32.xlu0 %v4214
        %v4216 = vpop.xlane.xlu0 %4215
        %v4217 = vmax.f32 %v4184, %v4185
        %4218 = vmax.xlane.f32.xlu0 %v4217
        %v4219 = vpop.xlane.xlu0 %4218
        %v4220 = vmax.f32 %v4186, %v4187
        %4221 = vmax.xlane.f32.xlu0 %v4220
        %v4222 = vpop.xlane.xlu0 %4221
        %v4223 = vmax.f32 %v4188, %v4189
        %4224 = vmax.xlane.f32.xlu0 %v4223
        %v4225 = vpop.xlane.xlu0 %4224
        %v4226 = vmax.f32 %v4190, %v4191
        %4227 = vmax.xlane.f32.xlu0 %v4226
        %v4228 = vpop.xlane.xlu0 %4227
        %v4229 = vmax.f32 %v4192, %v4193
        %4230 = vmax.xlane.f32.xlu0 %v4229
        %v4231 = vpop.xlane.xlu0 %4230
        %v4232 = vmax.f32 %v4194, %v4195
        %4233 = vmax.xlane.f32.xlu0 %v4232
        %v4234 = vpop.xlane.xlu0 %4233
        %v4235 = vmax.f32 %v4196, %v4197
        %4236 = vmax.xlane.f32.xlu0 %v4235
        %v4237 = vpop.xlane.xlu0 %4236
        %v4238 = vmax.f32 %v4198, %v4199
        %4239 = vmax.xlane.f32.xlu0 %v4238
        %v4240 = vpop.xlane.xlu0 %4239
        %v4241 = vmax.f32 %v4200, %v4201
        %4242 = vmax.xlane.f32.xlu0 %v4241
        %v4243 = vpop.xlane.xlu0 %4242
        %v4244 = vmax.f32 %v4202, %v4203
        %4245 = vmax.xlane.f32.xlu0 %v4244
        %v4246 = vpop.xlane.xlu0 %4245
        %v4247 = vmax.f32 %v4204, %v4205
        %4248 = vmax.xlane.f32.xlu0 %v4247
        %v4249 = vpop.xlane.xlu0 %4248
        %v4250 = vmax.f32 %v4206, %v4207
        %4251 = vmax.xlane.f32.xlu0 %v4250
        %v4252 = vpop.xlane.xlu0 %4251
        %v4253 = vmax.f32 %v4208, %v4209
        %4254 = vmax.xlane.f32.xlu0 %v4253
        %v4255 = vpop.xlane.xlu0 %4254
        %v4256 = vmax.f32 %v4210, %v4211
        %4257 = vmax.xlane.f32.xlu0 %v4256
        %v4258 = vpop.xlane.xlu0 %4257
        %v4259 = vmax.f32 %v4212, %v4213
        %4260 = vmax.xlane.f32.xlu0 %v4259
        %v4261 = vpop.xlane.xlu0 %4260
        %v4262 = vsub.f32 %v4182, %v4216
        %v4263 = vsub.f32 %v4183, %v4216
        %v4264 = vsub.f32 %v4184, %v4219
        %v4265 = vsub.f32 %v4185, %v4219
        %v4266 = vsub.f32 %v4186, %v4222
        %v4267 = vsub.f32 %v4187, %v4222
        %v4268 = vsub.f32 %v4188, %v4225
        %v4269 = vsub.f32 %v4189, %v4225
        %v4270 = vsub.f32 %v4190, %v4228
        %v4271 = vsub.f32 %v4191, %v4228
        %v4272 = vsub.f32 %v4192, %v4231
        %v4273 = vsub.f32 %v4193, %v4231
        %v4274 = vsub.f32 %v4194, %v4234
        %v4275 = vsub.f32 %v4195, %v4234
        %v4276 = vsub.f32 %v4196, %v4237
        %v4277 = vsub.f32 %v4197, %v4237
        %v4278 = vsub.f32 %v4198, %v4240
        %v4279 = vsub.f32 %v4199, %v4240
        %v4280 = vsub.f32 %v4200, %v4243
        %v4281 = vsub.f32 %v4201, %v4243
        %v4282 = vsub.f32 %v4202, %v4246
        %v4283 = vsub.f32 %v4203, %v4246
        %v4284 = vsub.f32 %v4204, %v4249
        %v4285 = vsub.f32 %v4205, %v4249
        %v4286 = vsub.f32 %v4206, %v4252
        %v4287 = vsub.f32 %v4207, %v4252
        %v4288 = vsub.f32 %v4208, %v4255
        %v4289 = vsub.f32 %v4209, %v4255
        %v4290 = vsub.f32 %v4210, %v4258
        %v4291 = vsub.f32 %v4211, %v4258
        %v4292 = vsub.f32 %v4212, %v4261
        %v4293 = vsub.f32 %v4213, %v4261
        %v4294 = vmul.f32 %v4262, 1.442695
        %v4295 = vpow.pop %v4294
        %v4296 = vmul.f32 %v4263, 1.442695
        %v4297 = vpow.pop %v4296
        %v4298 = vmul.f32 %v4264, 1.442695
        %v4299 = vpow.pop %v4298
        %v4300 = vmul.f32 %v4265, 1.442695
        %v4301 = vpow.pop %v4300
        %v4302 = vmul.f32 %v4266, 1.442695
        %v4303 = vpow.pop %v4302
        %v4304 = vmul.f32 %v4267, 1.442695
        %v4305 = vpow.pop %v4304
        %v4306 = vmul.f32 %v4268, 1.442695
        %v4307 = vpow.pop %v4306
        %v4308 = vmul.f32 %v4269, 1.442695
        %v4309 = vpow.pop %v4308
        %v4310 = vmul.f32 %v4270, 1.442695
        %v4311 = vpow.pop %v4310
        %v4312 = vmul.f32 %v4271, 1.442695
        %v4313 = vpow.pop %v4312
        %v4314 = vmul.f32 %v4272, 1.442695
        %v4315 = vpow.pop %v4314
        %v4316 = vmul.f32 %v4273, 1.442695
        %v4317 = vpow.pop %v4316
        %v4318 = vmul.f32 %v4274, 1.442695
        %v4319 = vpow.pop %v4318
        %v4320 = vmul.f32 %v4275, 1.442695
        %v4321 = vpow.pop %v4320
        %v4322 = vmul.f32 %v4276, 1.442695
        %v4323 = vpow.pop %v4322
        %v4324 = vmul.f32 %v4277, 1.442695
        %v4325 = vpow.pop %v4324
        %v4326 = vmul.f32 %v4278, 1.442695
        %v4327 = vpow.pop %v4326
        %v4328 = vmul.f32 %v4279, 1.442695
        %v4329 = vpow.pop %v4328
        %v4330 = vmul.f32 %v4280, 1.442695
        %v4331 = vpow.pop %v4330
        %v4332 = vmul.f32 %v4281, 1.442695
        %v4333 = vpow.pop %v4332
        %v4334 = vmul.f32 %v4282, 1.442695
        %v4335 = vpow.pop %v4334
        %v4336 = vmul.f32 %v4283, 1.442695
        %v4337 = vpow.pop %v4336
        %v4338 = vmul.f32 %v4284, 1.442695
        %v4339 = vpow.pop %v4338
        %v4340 = vmul.f32 %v4285, 1.442695
        %v4341 = vpow.pop %v4340
        %v4342 = vmul.f32 %v4286, 1.442695
        %v4343 = vpow.pop %v4342
        %v4344 = vmul.f32 %v4287, 1.442695
        %v4345 = vpow.pop %v4344
        %v4346 = vmul.f32 %v4288, 1.442695
        %v4347 = vpow.pop %v4346
        %v4348 = vmul.f32 %v4289, 1.442695
        %v4349 = vpow.pop %v4348
        %v4350 = vmul.f32 %v4290, 1.442695
        %v4351 = vpow.pop %v4350
        %v4352 = vmul.f32 %v4291, 1.442695
        %v4353 = vpow.pop %v4352
        %v4354 = vmul.f32 %v4292, 1.442695
        %v4355 = vpow.pop %v4354
        %v4356 = vmul.f32 %v4293, 1.442695
        %v4357 = vpow.pop %v4356
        %v4358 = vadd.f32 %v4295, %v4297
        %4359 = vadd.xlane.f32.xlu0 %v4358
        %v4360 = vpop.xlane.xlu0 %4359
        %v4361 = vadd.f32 %v4299, %v4301
        %4362 = vadd.xlane.f32.xlu0 %v4361
        %v4363 = vpop.xlane.xlu0 %4362
        %v4364 = vadd.f32 %v4303, %v4305
        %4365 = vadd.xlane.f32.xlu0 %v4364
        %v4366 = vpop.xlane.xlu0 %4365
        %v4367 = vadd.f32 %v4307, %v4309
        %4368 = vadd.xlane.f32.xlu0 %v4367
        %v4369 = vpop.xlane.xlu0 %4368
        %v4370 = vadd.f32 %v4311, %v4313
        %4371 = vadd.xlane.f32.xlu0 %v4370
        %v4372 = vpop.xlane.xlu0 %4371
        %v4373 = vadd.f32 %v4315, %v4317
        %4374 = vadd.xlane.f32.xlu0 %v4373
        %v4375 = vpop.xlane.xlu0 %4374
        %v4376 = vadd.f32 %v4319, %v4321
        %4377 = vadd.xlane.f32.xlu0 %v4376
        %v4378 = vpop.xlane.xlu0 %4377
        %v4379 = vadd.f32 %v4323, %v4325
        %4380 = vadd.xlane.f32.xlu0 %v4379
        %v4381 = vpop.xlane.xlu0 %4380
        %v4382 = vadd.f32 %v4327, %v4329
        %4383 = vadd.xlane.f32.xlu0 %v4382
        %v4384 = vpop.xlane.xlu0 %4383
        %v4385 = vadd.f32 %v4331, %v4333
        %4386 = vadd.xlane.f32.xlu0 %v4385
        %v4387 = vpop.xlane.xlu0 %4386
        %v4388 = vadd.f32 %v4335, %v4337
        %4389 = vadd.xlane.f32.xlu0 %v4388
        %v4390 = vpop.xlane.xlu0 %4389
        %v4391 = vadd.f32 %v4339, %v4341
        %4392 = vadd.xlane.f32.xlu0 %v4391
        %v4393 = vpop.xlane.xlu0 %4392
        %v4394 = vadd.f32 %v4343, %v4345
        %4395 = vadd.xlane.f32.xlu0 %v4394
        %v4396 = vpop.xlane.xlu0 %4395
        %v4397 = vadd.f32 %v4347, %v4349
        %4398 = vadd.xlane.f32.xlu0 %v4397
        %v4399 = vpop.xlane.xlu0 %4398
        %v4400 = vadd.f32 %v4351, %v4353
        %4401 = vadd.xlane.f32.xlu0 %v4400
        %v4402 = vpop.xlane.xlu0 %4401
        %v4403 = vadd.f32 %v4355, %v4357
        %4404 = vadd.xlane.f32.xlu0 %v4403
        %v4405 = vpop.xlane.xlu0 %4404
        %v4406 = vrcp.pop %v4360
        %v4407 = vrcp.pop %v4363
        %v4408 = vrcp.pop %v4366
        %v4409 = vrcp.pop %v4369
        %v4410 = vrcp.pop %v4372
        %v4411 = vrcp.pop %v4375
        %v4412 = vrcp.pop %v4378
        %v4413 = vrcp.pop %v4381
        %v4414 = vrcp.pop %v4384
        %v4415 = vrcp.pop %v4387
        %v4416 = vrcp.pop %v4390
        %v4417 = vrcp.pop %v4393
        %v4418 = vrcp.pop %v4396
        %v4419 = vrcp.pop %v4399
        %v4420 = vrcp.pop %v4402
        %v4421 = vrcp.pop %v4405
        %v4422 = vmul.f32 %v4295, %v4406
        %v4423 = vmul.f32 %v4297, %v4406
        %v4424 = vmul.f32 %v4299, %v4407
        %v4425 = vmul.f32 %v4301, %v4407
        %v4426 = vmul.f32 %v4303, %v4408
        %v4427 = vmul.f32 %v4305, %v4408
        %v4428 = vmul.f32 %v4307, %v4409
        %v4429 = vmul.f32 %v4309, %v4409
        %v4430 = vmul.f32 %v4311, %v4410
        %v4431 = vmul.f32 %v4313, %v4410
        %v4432 = vmul.f32 %v4315, %v4411
        %v4433 = vmul.f32 %v4317, %v4411
        %v4434 = vmul.f32 %v4319, %v4412
        %v4435 = vmul.f32 %v4321, %v4412
        %v4436 = vmul.f32 %v4323, %v4413
        %v4437 = vmul.f32 %v4325, %v4413
        %v4438 = vmul.f32 %v4327, %v4414
        %v4439 = vmul.f32 %v4329, %v4414
        %v4440 = vmul.f32 %v4331, %v4415
        %v4441 = vmul.f32 %v4333, %v4415
        %v4442 = vmul.f32 %v4335, %v4416
        %v4443 = vmul.f32 %v4337, %v4416
        %v4444 = vmul.f32 %v4339, %v4417
        %v4445 = vmul.f32 %v4341, %v4417
        %v4446 = vmul.f32 %v4343, %v4418
        %v4447 = vmul.f32 %v4345, %v4418
        %v4448 = vmul.f32 %v4347, %v4419
        %v4449 = vmul.f32 %v4349, %v4419
        %v4450 = vmul.f32 %v4351, %v4420
        %v4451 = vmul.f32 %v4353, %v4420
        %v4452 = vmul.f32 %v4355, %v4421
        %v4453 = vmul.f32 %v4357, %v4421
        %4454 = vrot.lane.b32.xlu0 %v2085, 64
        %v4455 = vpop.permute.xlu0 %4454
        %4456 = vrot.lane.b32.xlu0 %v2087, 64
        %v4457 = vpop.permute.xlu0 %4456
        %4458 = vrot.lane.b32.xlu0 %v2090, 64
        %v4459 = vpop.permute.xlu0 %4458
        %4460 = vrot.lane.b32.xlu0 %v2092, 64
        %v4461 = vpop.permute.xlu0 %4460
        %4462 = vrot.lane.b32.xlu0 %v2095, 64
        %v4463 = vpop.permute.xlu0 %4462
        %4464 = vrot.lane.b32.xlu0 %v2097, 64
        %v4465 = vpop.permute.xlu0 %4464
        %4466 = vrot.lane.b32.xlu0 %v2100, 64
        %v4467 = vpop.permute.xlu0 %4466
        %4468 = vrot.lane.b32.xlu0 %v2102, 64
        %v4469 = vpop.permute.xlu0 %4468
        %4470 = vrot.lane.b32.xlu0 %v2105, 64
        %v4471 = vpop.permute.xlu0 %4470
        %4472 = vrot.lane.b32.xlu0 %v2107, 64
        %v4473 = vpop.permute.xlu0 %4472
        %4474 = vrot.lane.b32.xlu0 %v2110, 64
        %v4475 = vpop.permute.xlu0 %4474
        %4476 = vrot.lane.b32.xlu0 %v2112, 64
        %v4477 = vpop.permute.xlu0 %4476
        %4478 = vrot.lane.b32.xlu0 %v2115, 64
        %v4479 = vpop.permute.xlu0 %4478
        %4480 = vrot.lane.b32.xlu0 %v2117, 64
        %v4481 = vpop.permute.xlu0 %4480
        %4482 = vrot.lane.b32.xlu0 %v2120, 64
        %v4483 = vpop.permute.xlu0 %4482
        %4484 = vrot.lane.b32.xlu0 %v2122, 64
        %v4485 = vpop.permute.xlu0 %4484
        %4486 = vrot.lane.b32.xlu0 %v2125, 64
        %v4487 = vpop.permute.xlu0 %4486
        %4488 = vrot.lane.b32.xlu0 %v2127, 64
        %v4489 = vpop.permute.xlu0 %4488
        %4490 = vrot.lane.b32.xlu0 %v2130, 64
        %v4491 = vpop.permute.xlu0 %4490
        %4492 = vrot.lane.b32.xlu0 %v2132, 64
        %v4493 = vpop.permute.xlu0 %4492
        %4494 = vrot.lane.b32.xlu0 %v2135, 64
        %v4495 = vpop.permute.xlu0 %4494
        %4496 = vrot.lane.b32.xlu0 %v2137, 64
        %v4497 = vpop.permute.xlu0 %4496
        %4498 = vrot.lane.b32.xlu0 %v2140, 64
        %v4499 = vpop.permute.xlu0 %4498
        %4500 = vrot.lane.b32.xlu0 %v2142, 64
        %v4501 = vpop.permute.xlu0 %4500
        %4502 = vrot.lane.b32.xlu0 %v2145, 64
        %v4503 = vpop.permute.xlu0 %4502
        %4504 = vrot.lane.b32.xlu0 %v2147, 64
        %v4505 = vpop.permute.xlu0 %4504
        %4506 = vrot.lane.b32.xlu0 %v2150, 64
        %v4507 = vpop.permute.xlu0 %4506
        %4508 = vrot.lane.b32.xlu0 %v2152, 64
        %v4509 = vpop.permute.xlu0 %4508
        %4510 = vrot.lane.b32.xlu0 %v2155, 64
        %v4511 = vpop.permute.xlu0 %4510
        %4512 = vrot.lane.b32.xlu0 %v2157, 64
        %v4513 = vpop.permute.xlu0 %4512
        %4514 = vrot.lane.b32.xlu0 %v2160, 64
        %v4515 = vpop.permute.xlu0 %4514
        %4516 = vrot.lane.b32.xlu0 %v2162, 64
        %v4517 = vpop.permute.xlu0 %4516
        %4550 = vmatpush.msra.mxu0 %v4485
        %4551 = vmatpush.msra.mxu0 %v4483
        %4552 = vmatpush.msra.mxu0 %v4481
        %4553 = vmatpush.msra.mxu0 %v4479
        %4554 = vmatpush.msra.mxu0 %v4477
        %4555 = vmatpush.msra.mxu0 %v4475
        %4556 = vmatpush.msra.mxu0 %v4473
        %4557 = vmatpush.msra.mxu0 %v4471
        %4558 = vmatpush.msra.mxu0 %v4469
        %4559 = vmatpush.msra.mxu0 %v4467
        %4560 = vmatpush.msra.mxu0 %v4465
        %4561 = vmatpush.msra.mxu0 %v4463
        %4562 = vmatpush.msra.mxu0 %v4461
        %4563 = vmatpush.msra.mxu0 %v4459
        %4564 = vmatpush.msra.mxu0 %v4457
        %4565 = vmatpush.msra.mxu0 %v4455
        %4566 = vmatmul.f32.gmra.mxu0 %v4422
        %v4567 = vpop.f32.mrf.mxu0
        %v4568 = vadd.f32 0.0, %v4567
        %4569 = vmatmul.f32.gmra.mxu0 %v4424
        %v4570 = vpop.f32.mrf.mxu0
        %v4571 = vadd.f32 0.0, %v4570
        %4572 = vmatmul.f32.gmra.mxu0 %v4426
        %v4573 = vpop.f32.mrf.mxu0
        %v4574 = vadd.f32 0.0, %v4573
        %4575 = vmatmul.f32.gmra.mxu0 %v4428
        %v4576 = vpop.f32.mrf.mxu0
        %v4577 = vadd.f32 0.0, %v4576
        %4578 = vmatmul.f32.gmra.mxu0 %v4430
        %v4579 = vpop.f32.mrf.mxu0
        %v4580 = vadd.f32 0.0, %v4579
        %4581 = vmatmul.f32.gmra.mxu0 %v4432
        %v4582 = vpop.f32.mrf.mxu0
        %v4583 = vadd.f32 0.0, %v4582
        %4584 = vmatmul.f32.gmra.mxu0 %v4434
        %v4585 = vpop.f32.mrf.mxu0
        %v4586 = vadd.f32 0.0, %v4585
        %4587 = vmatmul.f32.gmra.mxu0 %v4436
        %v4588 = vpop.f32.mrf.mxu0
        %v4589 = vadd.f32 0.0, %v4588
        %4590 = vmatmul.f32.gmra.mxu0 %v4438
        %v4591 = vpop.f32.mrf.mxu0
        %v4592 = vadd.f32 0.0, %v4591
        %4593 = vmatmul.f32.gmra.mxu0 %v4440
        %v4594 = vpop.f32.mrf.mxu0
        %v4595 = vadd.f32 0.0, %v4594
        %4596 = vmatmul.f32.gmra.mxu0 %v4442
        %v4597 = vpop.f32.mrf.mxu0
        %v4598 = vadd.f32 0.0, %v4597
        %4599 = vmatmul.f32.gmra.mxu0 %v4444
        %v4600 = vpop.f32.mrf.mxu0
        %v4601 = vadd.f32 0.0, %v4600
        %4602 = vmatmul.f32.gmra.mxu0 %v4446
        %v4603 = vpop.f32.mrf.mxu0
        %v4604 = vadd.f32 0.0, %v4603
        %4605 = vmatmul.f32.gmra.mxu0 %v4448
        %v4606 = vpop.f32.mrf.mxu0
        %v4607 = vadd.f32 0.0, %v4606
        %4608 = vmatmul.f32.gmra.mxu0 %v4450
        %v4609 = vpop.f32.mrf.mxu0
        %v4610 = vadd.f32 0.0, %v4609
        %4611 = vmatmul.f32.gmra.mxu0 %v4452
        %v4612 = vpop.f32.mrf.mxu0
        %v4613 = vadd.f32 0.0, %v4612
        %4614 = vdwg.mxu0
        %4615 = vmatpush.msra.mxu0 %v4517
        %4616 = vmatpush.msra.mxu0 %v4515
        %4617 = vmatpush.msra.mxu0 %v4513
        %4618 = vmatpush.msra.mxu0 %v4511
        %4619 = vmatpush.msra.mxu0 %v4509
        %4620 = vmatpush.msra.mxu0 %v4507
        %4621 = vmatpush.msra.mxu0 %v4505
        %4622 = vmatpush.msra.mxu0 %v4503
        %4623 = vmatpush.msra.mxu0 %v4501
        %4624 = vmatpush.msra.mxu0 %v4499
        %4625 = vmatpush.msra.mxu0 %v4497
        %4626 = vmatpush.msra.mxu0 %v4495
        %4627 = vmatpush.msra.mxu0 %v4493
        %4628 = vmatpush.msra.mxu0 %v4491
        %4629 = vmatpush.msra.mxu0 %v4489
        %4630 = vmatpush.msra.mxu0 %v4487
        %4631 = vmatmul.f32.gmra.mxu0 %v4423
        %v4632 = vpop.f32.mrf.mxu0
        %v4633 = vadd.f32 %v4568, %v4632
        %4634 = vmatmul.f32.gmra.mxu0 %v4425
        %v4635 = vpop.f32.mrf.mxu0
        %v4636 = vadd.f32 %v4571, %v4635
        %4637 = vmatmul.f32.gmra.mxu0 %v4427
        %v4638 = vpop.f32.mrf.mxu0
        %v4639 = vadd.f32 %v4574, %v4638
        %4640 = vmatmul.f32.gmra.mxu0 %v4429
        %v4641 = vpop.f32.mrf.mxu0
        %v4642 = vadd.f32 %v4577, %v4641
        %4643 = vmatmul.f32.gmra.mxu0 %v4431
        %v4644 = vpop.f32.mrf.mxu0
        %v4645 = vadd.f32 %v4580, %v4644
        %4646 = vmatmul.f32.gmra.mxu0 %v4433
        %v4647 = vpop.f32.mrf.mxu0
        %v4648 = vadd.f32 %v4583, %v4647
        %4649 = vmatmul.f32.gmra.mxu0 %v4435
        %v4650 = vpop.f32.mrf.mxu0
        %v4651 = vadd.f32 %v4586, %v4650
        %4652 = vmatmul.f32.gmra.mxu0 %v4437
        %v4653 = vpop.f32.mrf.mxu0
        %v4654 = vadd.f32 %v4589, %v4653
        %4655 = vmatmul.f32.gmra.mxu0 %v4439
        %v4656 = vpop.f32.mrf.mxu0
        %v4657 = vadd.f32 %v4592, %v4656
        %4658 = vmatmul.f32.gmra.mxu0 %v4441
        %v4659 = vpop.f32.mrf.mxu0
        %v4660 = vadd.f32 %v4595, %v4659
        %4661 = vmatmul.f32.gmra.mxu0 %v4443
        %v4662 = vpop.f32.mrf.mxu0
        %v4663 = vadd.f32 %v4598, %v4662
        %4664 = vmatmul.f32.gmra.mxu0 %v4445
        %v4665 = vpop.f32.mrf.mxu0
        %v4666 = vadd.f32 %v4601, %v4665
        %4667 = vmatmul.f32.gmra.mxu0 %v4447
        %v4668 = vpop.f32.mrf.mxu0
        %v4669 = vadd.f32 %v4604, %v4668
        %4670 = vmatmul.f32.gmra.mxu0 %v4449
        %v4671 = vpop.f32.mrf.mxu0
        %v4672 = vadd.f32 %v4607, %v4671
        %4673 = vmatmul.f32.gmra.mxu0 %v4451
        %v4674 = vpop.f32.mrf.mxu0
        %v4675 = vadd.f32 %v4610, %v4674
        %4676 = vmatmul.f32.gmra.mxu0 %v4453
        %v4677 = vpop.f32.mrf.mxu0
        %v4678 = vadd.f32 %v4613, %v4677
        %4679 = vdwg.mxu0
        %4696 = vrot.lane.b32.xlu0 %v4633, 64
        %v4697 = vpop.permute.xlu0 %4696
        %4698 = vrot.lane.b32.xlu0 %v4636, 64
        %v4699 = vpop.permute.xlu0 %4698
        %4700 = vrot.lane.b32.xlu0 %v4639, 64
        %v4701 = vpop.permute.xlu0 %4700
        %4702 = vrot.lane.b32.xlu0 %v4642, 64
        %v4703 = vpop.permute.xlu0 %4702
        %4704 = vrot.lane.b32.xlu0 %v4645, 64
        %v4705 = vpop.permute.xlu0 %4704
        %4706 = vrot.lane.b32.xlu0 %v4648, 64
        %v4707 = vpop.permute.xlu0 %4706
        %4708 = vrot.lane.b32.xlu0 %v4651, 64
        %v4709 = vpop.permute.xlu0 %4708
        %4710 = vrot.lane.b32.xlu0 %v4654, 64
        %v4711 = vpop.permute.xlu0 %4710
        %4712 = vrot.lane.b32.xlu0 %v4657, 64
        %v4713 = vpop.permute.xlu0 %4712
        %4714 = vrot.lane.b32.xlu0 %v4660, 64
        %v4715 = vpop.permute.xlu0 %4714
        %4716 = vrot.lane.b32.xlu0 %v4663, 64
        %v4717 = vpop.permute.xlu0 %4716
        %4718 = vrot.lane.b32.xlu0 %v4666, 64
        %v4719 = vpop.permute.xlu0 %4718
        %4720 = vrot.lane.b32.xlu0 %v4669, 64
        %v4721 = vpop.permute.xlu0 %4720
        %4722 = vrot.lane.b32.xlu0 %v4672, 64
        %v4723 = vpop.permute.xlu0 %4722
        %4724 = vrot.lane.b32.xlu0 %v4675, 64
        %v4725 = vpop.permute.xlu0 %4724
        %4726 = vrot.lane.b32.xlu0 %v4678, 64
        %v4727 = vpop.permute.xlu0 %4726
        %vm4744 = vcmask 785920
        %4745 = vst.msk [vmem:[#allocation2] sm:$0xff] %vm4744, %v4697
        %4746 = vst.msk [vmem:[#allocation2 + $0x8] sm:$0xff] %vm4744, %v4699
        %4747 = vst.msk [vmem:[#allocation2 + $0x10] sm:$0xff] %vm4744, %v4701
        %4748 = vst.msk [vmem:[#allocation2 + $0x18] sm:$0xff] %vm4744, %v4703
        %4749 = vst.msk [vmem:[#allocation2 + $0x20] sm:$0xff] %vm4744, %v4705
        %4750 = vst.msk [vmem:[#allocation2 + $0x28] sm:$0xff] %vm4744, %v4707
        %4751 = vst.msk [vmem:[#allocation2 + $0x30] sm:$0xff] %vm4744, %v4709
        %4752 = vst.msk [vmem:[#allocation2 + $0x38] sm:$0xff] %vm4744, %v4711
        %4753 = vst.msk [vmem:[#allocation2 + $0x40] sm:$0xff] %vm4744, %v4713
        %4754 = vst.msk [vmem:[#allocation2 + $0x48] sm:$0xff] %vm4744, %v4715
        %4755 = vst.msk [vmem:[#allocation2 + $0x50] sm:$0xff] %vm4744, %v4717
        %4756 = vst.msk [vmem:[#allocation2 + $0x58] sm:$0xff] %vm4744, %v4719
        %4757 = vst.msk [vmem:[#allocation2 + $0x60] sm:$0xff] %vm4744, %v4721
        %4758 = vst.msk [vmem:[#allocation2 + $0x68] sm:$0xff] %vm4744, %v4723
        %4759 = vst.msk [vmem:[#allocation2 + $0x70] sm:$0xff] %vm4744, %v4725
        %4760 = vst.msk [vmem:[#allocation2 + $0x78] sm:$0xff] %vm4744, %v4727
        %4761 = vrot.lane.b32.xlu0 %v1874, 32
        %v4762 = vpop.permute.xlu0 %4761
        %4763 = vrot.lane.b32.xlu0 %v1875, 32
        %v4764 = vpop.permute.xlu0 %4763
        %4765 = vrot.lane.b32.xlu0 %v1876, 32
        %v4766 = vpop.permute.xlu0 %4765
        %4767 = vrot.lane.b32.xlu0 %v1877, 32
        %v4768 = vpop.permute.xlu0 %4767
        %4769 = vrot.lane.b32.xlu0 %v1878, 32
        %v4770 = vpop.permute.xlu0 %4769
        %4771 = vrot.lane.b32.xlu0 %v1879, 32
        %v4772 = vpop.permute.xlu0 %4771
        %4773 = vrot.lane.b32.xlu0 %v1880, 32
        %v4774 = vpop.permute.xlu0 %4773
        %4775 = vrot.lane.b32.xlu0 %v1881, 32
        %v4776 = vpop.permute.xlu0 %4775
        %4777 = vrot.lane.b32.xlu0 %v1882, 32
        %v4778 = vpop.permute.xlu0 %4777
        %4779 = vrot.lane.b32.xlu0 %v1883, 32
        %v4780 = vpop.permute.xlu0 %4779
        %4781 = vrot.lane.b32.xlu0 %v1884, 32
        %v4782 = vpop.permute.xlu0 %4781
        %4783 = vrot.lane.b32.xlu0 %v1885, 32
        %v4784 = vpop.permute.xlu0 %4783
        %4785 = vrot.lane.b32.xlu0 %v1886, 32
        %v4786 = vpop.permute.xlu0 %4785
        %4787 = vrot.lane.b32.xlu0 %v1887, 32
        %v4788 = vpop.permute.xlu0 %4787
        %4789 = vrot.lane.b32.xlu0 %v1888, 32
        %v4790 = vpop.permute.xlu0 %4789
        %4791 = vrot.lane.b32.xlu0 %v1889, 32
        %v4792 = vpop.permute.xlu0 %4791
        %4793 = vrot.lane.b32.xlu0 %v1996, 32
        %v4794 = vpop.permute.xlu0 %4793
        %4795 = vrot.lane.b32.xlu0 %v1998, 32
        %v4796 = vpop.permute.xlu0 %4795
        %4797 = vrot.lane.b32.xlu0 %v2001, 32
        %v4798 = vpop.permute.xlu0 %4797
        %4799 = vrot.lane.b32.xlu0 %v2003, 32
        %v4800 = vpop.permute.xlu0 %4799
        %4801 = vrot.lane.b32.xlu0 %v2006, 32
        %v4802 = vpop.permute.xlu0 %4801
        %4803 = vrot.lane.b32.xlu0 %v2008, 32
        %v4804 = vpop.permute.xlu0 %4803
        %4805 = vrot.lane.b32.xlu0 %v2011, 32
        %v4806 = vpop.permute.xlu0 %4805
        %4807 = vrot.lane.b32.xlu0 %v2013, 32
        %v4808 = vpop.permute.xlu0 %4807
        %4809 = vrot.lane.b32.xlu0 %v2016, 32
        %v4810 = vpop.permute.xlu0 %4809
        %4811 = vrot.lane.b32.xlu0 %v2018, 32
        %v4812 = vpop.permute.xlu0 %4811
        %4813 = vrot.lane.b32.xlu0 %v2021, 32
        %v4814 = vpop.permute.xlu0 %4813
        %4815 = vrot.lane.b32.xlu0 %v2023, 32
        %v4816 = vpop.permute.xlu0 %4815
        %4817 = vrot.lane.b32.xlu0 %v2026, 32
        %v4818 = vpop.permute.xlu0 %4817
        %4819 = vrot.lane.b32.xlu0 %v2028, 32
        %v4820 = vpop.permute.xlu0 %4819
        %4821 = vrot.lane.b32.xlu0 %v2031, 32
        %v4822 = vpop.permute.xlu0 %4821
        %4823 = vrot.lane.b32.xlu0 %v2033, 32
        %v4824 = vpop.permute.xlu0 %4823
        %4825 = vrot.lane.b32.xlu0 %v2036, 32
        %v4826 = vpop.permute.xlu0 %4825
        %4827 = vrot.lane.b32.xlu0 %v2038, 32
        %v4828 = vpop.permute.xlu0 %4827
        %4829 = vrot.lane.b32.xlu0 %v2041, 32
        %v4830 = vpop.permute.xlu0 %4829
        %4831 = vrot.lane.b32.xlu0 %v2043, 32
        %v4832 = vpop.permute.xlu0 %4831
        %4833 = vrot.lane.b32.xlu0 %v2046, 32
        %v4834 = vpop.permute.xlu0 %4833
        %4835 = vrot.lane.b32.xlu0 %v2048, 32
        %v4836 = vpop.permute.xlu0 %4835
        %4837 = vrot.lane.b32.xlu0 %v2051, 32
        %v4838 = vpop.permute.xlu0 %4837
        %4839 = vrot.lane.b32.xlu0 %v2053, 32
        %v4840 = vpop.permute.xlu0 %4839
        %4841 = vrot.lane.b32.xlu0 %v2056, 32
        %v4842 = vpop.permute.xlu0 %4841
        %4843 = vrot.lane.b32.xlu0 %v2058, 32
        %v4844 = vpop.permute.xlu0 %4843
        %4845 = vrot.lane.b32.xlu0 %v2061, 32
        %v4846 = vpop.permute.xlu0 %4845
        %4847 = vrot.lane.b32.xlu0 %v2063, 32
        %v4848 = vpop.permute.xlu0 %4847
        %4849 = vrot.lane.b32.xlu0 %v2066, 32
        %v4850 = vpop.permute.xlu0 %4849
        %4851 = vrot.lane.b32.xlu0 %v2068, 32
        %v4852 = vpop.permute.xlu0 %4851
        %4853 = vrot.lane.b32.xlu0 %v2071, 32
        %v4854 = vpop.permute.xlu0 %4853
        %4855 = vrot.lane.b32.xlu0 %v2073, 32
        %v4856 = vpop.permute.xlu0 %4855
        %v4857 = vsel %vm2234, %v4762, 0
        %v4859 = vsel %vm2234, %v4764, 0
        %v4861 = vsel %vm2234, %v4766, 0
        %v4863 = vsel %vm2234, %v4768, 0
        %v4865 = vsel %vm2234, %v4770, 0
        %v4867 = vsel %vm2234, %v4772, 0
        %v4869 = vsel %vm2234, %v4774, 0
        %v4871 = vsel %vm2234, %v4776, 0
        %v4873 = vsel %vm2234, %v4778, 0
        %v4875 = vsel %vm2234, %v4780, 0
        %v4877 = vsel %vm2234, %v4782, 0
        %v4879 = vsel %vm2234, %v4784, 0
        %v4881 = vsel %vm2234, %v4786, 0
        %v4883 = vsel %vm2234, %v4788, 0
        %v4885 = vsel %vm2234, %v4790, 0
        %v4887 = vsel %vm2234, %v4792, 0
        %v4889 = vsel %vm2234, %v4794, 0
        %v4891 = vsel %vm2234, %v4796, 0
        %v4893 = vsel %vm2234, %v4798, 0
        %v4895 = vsel %vm2234, %v4800, 0
        %v4897 = vsel %vm2234, %v4802, 0
        %v4899 = vsel %vm2234, %v4804, 0
        %v4901 = vsel %vm2234, %v4806, 0
        %v4903 = vsel %vm2234, %v4808, 0
        %v4905 = vsel %vm2234, %v4810, 0
        %v4907 = vsel %vm2234, %v4812, 0
        %v4909 = vsel %vm2234, %v4814, 0
        %v4911 = vsel %vm2234, %v4816, 0
        %v4913 = vsel %vm2234, %v4818, 0
        %v4915 = vsel %vm2234, %v4820, 0
        %v4917 = vsel %vm2234, %v4822, 0
        %v4919 = vsel %vm2234, %v4824, 0
        %v4921 = vsel %vm2234, %v4826, 0
        %v4923 = vsel %vm2234, %v4828, 0
        %v4925 = vsel %vm2234, %v4830, 0
        %v4927 = vsel %vm2234, %v4832, 0
        %v4929 = vsel %vm2234, %v4834, 0
        %v4931 = vsel %vm2234, %v4836, 0
        %v4933 = vsel %vm2234, %v4838, 0
        %v4935 = vsel %vm2234, %v4840, 0
        %v4937 = vsel %vm2234, %v4842, 0
        %v4939 = vsel %vm2234, %v4844, 0
        %v4941 = vsel %vm2234, %v4846, 0
        %v4943 = vsel %vm2234, %v4848, 0
        %v4945 = vsel %vm2234, %v4850, 0
        %v4947 = vsel %vm2234, %v4852, 0
        %v4949 = vsel %vm2234, %v4854, 0
        %v4951 = vsel %vm2234, %v4856, 0
        %4953 = vmatpush.xpose.msra.mxu0 %v4919
        %4954 = vmatpush.xpose.msra.mxu0 %v4917
        %4955 = vmatpush.xpose.msra.mxu0 %v4915
        %4956 = vmatpush.xpose.msra.mxu0 %v4913
        %4957 = vmatpush.xpose.msra.mxu0 %v4911
        %4958 = vmatpush.xpose.msra.mxu0 %v4909
        %4959 = vmatpush.xpose.msra.mxu0 %v4907
        %4960 = vmatpush.xpose.msra.mxu0 %v4905
        %4961 = vmatpush.xpose.msra.mxu0 %v4903
        %4962 = vmatpush.xpose.msra.mxu0 %v4901
        %4963 = vmatpush.xpose.msra.mxu0 %v4899
        %4964 = vmatpush.xpose.msra.mxu0 %v4897
        %4965 = vmatpush.xpose.msra.mxu0 %v4895
        %4966 = vmatpush.xpose.msra.mxu0 %v4893
        %4967 = vmatpush.xpose.msra.mxu0 %v4891
        %4968 = vmatpush.xpose.msra.mxu0 %v4889
        %4969 = vmatmul.f32.gmra.mxu0 %v4857
        %v4970 = vpop.f32.mrf.mxu0
        %v4971 = vadd.f32 0.0, %v4970
        %4972 = vmatmul.f32.gmra.mxu0 %v4859
        %v4973 = vpop.f32.mrf.mxu0
        %v4974 = vadd.f32 0.0, %v4973
        %4975 = vmatmul.f32.gmra.mxu0 %v4861
        %v4976 = vpop.f32.mrf.mxu0
        %v4977 = vadd.f32 0.0, %v4976
        %4978 = vmatmul.f32.gmra.mxu0 %v4863
        %v4979 = vpop.f32.mrf.mxu0
        %v4980 = vadd.f32 0.0, %v4979
        %4981 = vmatmul.f32.gmra.mxu0 %v4865
        %v4982 = vpop.f32.mrf.mxu0
        %v4983 = vadd.f32 0.0, %v4982
        %4984 = vmatmul.f32.gmra.mxu0 %v4867
        %v4985 = vpop.f32.mrf.mxu0
        %v4986 = vadd.f32 0.0, %v4985
        %4987 = vmatmul.f32.gmra.mxu0 %v4869
        %v4988 = vpop.f32.mrf.mxu0
        %v4989 = vadd.f32 0.0, %v4988
        %4990 = vmatmul.f32.gmra.mxu0 %v4871
        %v4991 = vpop.f32.mrf.mxu0
        %v4992 = vadd.f32 0.0, %v4991
        %4993 = vmatmul.f32.gmra.mxu0 %v4873
        %v4994 = vpop.f32.mrf.mxu0
        %v4995 = vadd.f32 0.0, %v4994
        %4996 = vmatmul.f32.gmra.mxu0 %v4875
        %v4997 = vpop.f32.mrf.mxu0
        %v4998 = vadd.f32 0.0, %v4997
        %4999 = vmatmul.f32.gmra.mxu0 %v4877
        %v5000 = vpop.f32.mrf.mxu0
        %v5001 = vadd.f32 0.0, %v5000
        %5002 = vmatmul.f32.gmra.mxu0 %v4879
        %v5003 = vpop.f32.mrf.mxu0
        %v5004 = vadd.f32 0.0, %v5003
        %5005 = vmatmul.f32.gmra.mxu0 %v4881
        %v5006 = vpop.f32.mrf.mxu0
        %v5007 = vadd.f32 0.0, %v5006
        %5008 = vmatmul.f32.gmra.mxu0 %v4883
        %v5009 = vpop.f32.mrf.mxu0
        %v5010 = vadd.f32 0.0, %v5009
        %5011 = vmatmul.f32.gmra.mxu0 %v4885
        %v5012 = vpop.f32.mrf.mxu0
        %v5013 = vadd.f32 0.0, %v5012
        %5014 = vmatmul.f32.gmra.mxu0 %v4887
        %v5015 = vpop.f32.mrf.mxu0
        %v5016 = vadd.f32 0.0, %v5015
        %5017 = vdwg.mxu0
        %5018 = vmatpush.xpose.msra.mxu0 %v4951
        %5019 = vmatpush.xpose.msra.mxu0 %v4949
        %5020 = vmatpush.xpose.msra.mxu0 %v4947
        %5021 = vmatpush.xpose.msra.mxu0 %v4945
        %5022 = vmatpush.xpose.msra.mxu0 %v4943
        %5023 = vmatpush.xpose.msra.mxu0 %v4941
        %5024 = vmatpush.xpose.msra.mxu0 %v4939
        %5025 = vmatpush.xpose.msra.mxu0 %v4937
        %5026 = vmatpush.xpose.msra.mxu0 %v4935
        %5027 = vmatpush.xpose.msra.mxu0 %v4933
        %5028 = vmatpush.xpose.msra.mxu0 %v4931
        %5029 = vmatpush.xpose.msra.mxu0 %v4929
        %5030 = vmatpush.xpose.msra.mxu0 %v4927
        %5031 = vmatpush.xpose.msra.mxu0 %v4925
        %5032 = vmatpush.xpose.msra.mxu0 %v4923
        %5033 = vmatpush.xpose.msra.mxu0 %v4921
        %5034 = vmatmul.f32.gmra.mxu0 %v4857
        %v5035 = vpop.f32.mrf.mxu0
        %v5036 = vadd.f32 0.0, %v5035
        %5037 = vmatmul.f32.gmra.mxu0 %v4859
        %v5038 = vpop.f32.mrf.mxu0
        %v5039 = vadd.f32 0.0, %v5038
        %5040 = vmatmul.f32.gmra.mxu0 %v4861
        %v5041 = vpop.f32.mrf.mxu0
        %v5042 = vadd.f32 0.0, %v5041
        %5043 = vmatmul.f32.gmra.mxu0 %v4863
        %v5044 = vpop.f32.mrf.mxu0
        %v5045 = vadd.f32 0.0, %v5044
        %5046 = vmatmul.f32.gmra.mxu0 %v4865
        %v5047 = vpop.f32.mrf.mxu0
        %v5048 = vadd.f32 0.0, %v5047
        %5049 = vmatmul.f32.gmra.mxu0 %v4867
        %v5050 = vpop.f32.mrf.mxu0
        %v5051 = vadd.f32 0.0, %v5050
        %5052 = vmatmul.f32.gmra.mxu0 %v4869
        %v5053 = vpop.f32.mrf.mxu0
        %v5054 = vadd.f32 0.0, %v5053
        %5055 = vmatmul.f32.gmra.mxu0 %v4871
        %v5056 = vpop.f32.mrf.mxu0
        %v5057 = vadd.f32 0.0, %v5056
        %5058 = vmatmul.f32.gmra.mxu0 %v4873
        %v5059 = vpop.f32.mrf.mxu0
        %v5060 = vadd.f32 0.0, %v5059
        %5061 = vmatmul.f32.gmra.mxu0 %v4875
        %v5062 = vpop.f32.mrf.mxu0
        %v5063 = vadd.f32 0.0, %v5062
        %5064 = vmatmul.f32.gmra.mxu0 %v4877
        %v5065 = vpop.f32.mrf.mxu0
        %v5066 = vadd.f32 0.0, %v5065
        %5067 = vmatmul.f32.gmra.mxu0 %v4879
        %v5068 = vpop.f32.mrf.mxu0
        %v5069 = vadd.f32 0.0, %v5068
        %5070 = vmatmul.f32.gmra.mxu0 %v4881
        %v5071 = vpop.f32.mrf.mxu0
        %v5072 = vadd.f32 0.0, %v5071
        %5073 = vmatmul.f32.gmra.mxu0 %v4883
        %v5074 = vpop.f32.mrf.mxu0
        %v5075 = vadd.f32 0.0, %v5074
        %5076 = vmatmul.f32.gmra.mxu0 %v4885
        %v5077 = vpop.f32.mrf.mxu0
        %v5078 = vadd.f32 0.0, %v5077
        %5079 = vmatmul.f32.gmra.mxu0 %v4887
        %v5080 = vpop.f32.mrf.mxu0
        %v5081 = vadd.f32 0.0, %v5080
        %5082 = vdwg.mxu0
        %v5083 = vsel %vm2202, %v4971, -1e+30
        %v5084 = vsel %vm2203, %v5036, -1e+30
        %v5085 = vsel %vm2204, %v4974, -1e+30
        %v5086 = vsel %vm2205, %v5039, -1e+30
        %v5087 = vsel %vm2206, %v4977, -1e+30
        %v5088 = vsel %vm2207, %v5042, -1e+30
        %v5089 = vsel %vm2208, %v4980, -1e+30
        %v5090 = vsel %vm2209, %v5045, -1e+30
        %v5091 = vsel %vm2210, %v4983, -1e+30
        %v5092 = vsel %vm2211, %v5048, -1e+30
        %v5093 = vsel %vm2212, %v4986, -1e+30
        %v5094 = vsel %vm2213, %v5051, -1e+30
        %v5095 = vsel %vm2214, %v4989, -1e+30
        %v5096 = vsel %vm2215, %v5054, -1e+30
        %v5097 = vsel %vm2216, %v4992, -1e+30
        %v5098 = vsel %vm2217, %v5057, -1e+30
        %v5099 = vsel %vm2218, %v4995, -1e+30
        %v5100 = vsel %vm2219, %v5060, -1e+30
        %v5101 = vsel %vm2220, %v4998, -1e+30
        %v5102 = vsel %vm2221, %v5063, -1e+30
        %v5103 = vsel %vm2222, %v5001, -1e+30
        %v5104 = vsel %vm2223, %v5066, -1e+30
        %v5105 = vsel %vm2224, %v5004, -1e+30
        %v5106 = vsel %vm2225, %v5069, -1e+30
        %v5107 = vsel %vm2226, %v5007, -1e+30
        %v5108 = vsel %vm2227, %v5072, -1e+30
        %v5109 = vsel %vm2228, %v5010, -1e+30
        %v5110 = vsel %vm2229, %v5075, -1e+30
        %v5111 = vsel %vm2230, %v5013, -1e+30
        %v5112 = vsel %vm2231, %v5078, -1e+30
        %v5113 = vsel %vm2232, %v5016, -1e+30
        %v5114 = vsel %vm2233, %v5081, -1e+30
        %v5115 = vmax.f32 %v5083, %v5084
        %5116 = vmax.xlane.f32.xlu0 %v5115
        %v5117 = vpop.xlane.xlu0 %5116
        %v5118 = vmax.f32 %v5085, %v5086
        %5119 = vmax.xlane.f32.xlu0 %v5118
        %v5120 = vpop.xlane.xlu0 %5119
        %v5121 = vmax.f32 %v5087, %v5088
        %5122 = vmax.xlane.f32.xlu0 %v5121
        %v5123 = vpop.xlane.xlu0 %5122
        %v5124 = vmax.f32 %v5089, %v5090
        %5125 = vmax.xlane.f32.xlu0 %v5124
        %v5126 = vpop.xlane.xlu0 %5125
        %v5127 = vmax.f32 %v5091, %v5092
        %5128 = vmax.xlane.f32.xlu0 %v5127
        %v5129 = vpop.xlane.xlu0 %5128
        %v5130 = vmax.f32 %v5093, %v5094
        %5131 = vmax.xlane.f32.xlu0 %v5130
        %v5132 = vpop.xlane.xlu0 %5131
        %v5133 = vmax.f32 %v5095, %v5096
        %5134 = vmax.xlane.f32.xlu0 %v5133
        %v5135 = vpop.xlane.xlu0 %5134
        %v5136 = vmax.f32 %v5097, %v5098
        %5137 = vmax.xlane.f32.xlu0 %v5136
        %v5138 = vpop.xlane.xlu0 %5137
        %v5139 = vmax.f32 %v5099, %v5100
        %5140 = vmax.xlane.f32.xlu0 %v5139
        %v5141 = vpop.xlane.xlu0 %5140
        %v5142 = vmax.f32 %v5101, %v5102
        %5143 = vmax.xlane.f32.xlu0 %v5142
        %v5144 = vpop.xlane.xlu0 %5143
        %v5145 = vmax.f32 %v5103, %v5104
        %5146 = vmax.xlane.f32.xlu0 %v5145
        %v5147 = vpop.xlane.xlu0 %5146
        %v5148 = vmax.f32 %v5105, %v5106
        %5149 = vmax.xlane.f32.xlu0 %v5148
        %v5150 = vpop.xlane.xlu0 %5149
        %v5151 = vmax.f32 %v5107, %v5108
        %5152 = vmax.xlane.f32.xlu0 %v5151
        %v5153 = vpop.xlane.xlu0 %5152
        %v5154 = vmax.f32 %v5109, %v5110
        %5155 = vmax.xlane.f32.xlu0 %v5154
        %v5156 = vpop.xlane.xlu0 %5155
        %v5157 = vmax.f32 %v5111, %v5112
        %5158 = vmax.xlane.f32.xlu0 %v5157
        %v5159 = vpop.xlane.xlu0 %5158
        %v5160 = vmax.f32 %v5113, %v5114
        %5161 = vmax.xlane.f32.xlu0 %v5160
        %v5162 = vpop.xlane.xlu0 %5161
        %v5163 = vsub.f32 %v5083, %v5117
        %v5164 = vsub.f32 %v5084, %v5117
        %v5165 = vsub.f32 %v5085, %v5120
        %v5166 = vsub.f32 %v5086, %v5120
        %v5167 = vsub.f32 %v5087, %v5123
        %v5168 = vsub.f32 %v5088, %v5123
        %v5169 = vsub.f32 %v5089, %v5126
        %v5170 = vsub.f32 %v5090, %v5126
        %v5171 = vsub.f32 %v5091, %v5129
        %v5172 = vsub.f32 %v5092, %v5129
        %v5173 = vsub.f32 %v5093, %v5132
        %v5174 = vsub.f32 %v5094, %v5132
        %v5175 = vsub.f32 %v5095, %v5135
        %v5176 = vsub.f32 %v5096, %v5135
        %v5177 = vsub.f32 %v5097, %v5138
        %v5178 = vsub.f32 %v5098, %v5138
        %v5179 = vsub.f32 %v5099, %v5141
        %v5180 = vsub.f32 %v5100, %v5141
        %v5181 = vsub.f32 %v5101, %v5144
        %v5182 = vsub.f32 %v5102, %v5144
        %v5183 = vsub.f32 %v5103, %v5147
        %v5184 = vsub.f32 %v5104, %v5147
        %v5185 = vsub.f32 %v5105, %v5150
        %v5186 = vsub.f32 %v5106, %v5150
        %v5187 = vsub.f32 %v5107, %v5153
        %v5188 = vsub.f32 %v5108, %v5153
        %v5189 = vsub.f32 %v5109, %v5156
        %v5190 = vsub.f32 %v5110, %v5156
        %v5191 = vsub.f32 %v5111, %v5159
        %v5192 = vsub.f32 %v5112, %v5159
        %v5193 = vsub.f32 %v5113, %v5162
        %v5194 = vsub.f32 %v5114, %v5162
        %v5195 = vmul.f32 %v5163, 1.442695
        %v5196 = vpow.pop %v5195
        %v5197 = vmul.f32 %v5164, 1.442695
        %v5198 = vpow.pop %v5197
        %v5199 = vmul.f32 %v5165, 1.442695
        %v5200 = vpow.pop %v5199
        %v5201 = vmul.f32 %v5166, 1.442695
        %v5202 = vpow.pop %v5201
        %v5203 = vmul.f32 %v5167, 1.442695
        %v5204 = vpow.pop %v5203
        %v5205 = vmul.f32 %v5168, 1.442695
        %v5206 = vpow.pop %v5205
        %v5207 = vmul.f32 %v5169, 1.442695
        %v5208 = vpow.pop %v5207
        %v5209 = vmul.f32 %v5170, 1.442695
        %v5210 = vpow.pop %v5209
        %v5211 = vmul.f32 %v5171, 1.442695
        %v5212 = vpow.pop %v5211
        %v5213 = vmul.f32 %v5172, 1.442695
        %v5214 = vpow.pop %v5213
        %v5215 = vmul.f32 %v5173, 1.442695
        %v5216 = vpow.pop %v5215
        %v5217 = vmul.f32 %v5174, 1.442695
        %v5218 = vpow.pop %v5217
        %v5219 = vmul.f32 %v5175, 1.442695
        %v5220 = vpow.pop %v5219
        %v5221 = vmul.f32 %v5176, 1.442695
        %v5222 = vpow.pop %v5221
        %v5223 = vmul.f32 %v5177, 1.442695
        %v5224 = vpow.pop %v5223
        %v5225 = vmul.f32 %v5178, 1.442695
        %v5226 = vpow.pop %v5225
        %v5227 = vmul.f32 %v5179, 1.442695
        %v5228 = vpow.pop %v5227
        %v5229 = vmul.f32 %v5180, 1.442695
        %v5230 = vpow.pop %v5229
        %v5231 = vmul.f32 %v5181, 1.442695
        %v5232 = vpow.pop %v5231
        %v5233 = vmul.f32 %v5182, 1.442695
        %v5234 = vpow.pop %v5233
        %v5235 = vmul.f32 %v5183, 1.442695
        %v5236 = vpow.pop %v5235
        %v5237 = vmul.f32 %v5184, 1.442695
        %v5238 = vpow.pop %v5237
        %v5239 = vmul.f32 %v5185, 1.442695
        %v5240 = vpow.pop %v5239
        %v5241 = vmul.f32 %v5186, 1.442695
        %v5242 = vpow.pop %v5241
        %v5243 = vmul.f32 %v5187, 1.442695
        %v5244 = vpow.pop %v5243
        %v5245 = vmul.f32 %v5188, 1.442695
        %v5246 = vpow.pop %v5245
        %v5247 = vmul.f32 %v5189, 1.442695
        %v5248 = vpow.pop %v5247
        %v5249 = vmul.f32 %v5190, 1.442695
        %v5250 = vpow.pop %v5249
        %v5251 = vmul.f32 %v5191, 1.442695
        %v5252 = vpow.pop %v5251
        %v5253 = vmul.f32 %v5192, 1.442695
        %v5254 = vpow.pop %v5253
        %v5255 = vmul.f32 %v5193, 1.442695
        %v5256 = vpow.pop %v5255
        %v5257 = vmul.f32 %v5194, 1.442695
        %v5258 = vpow.pop %v5257
        %v5259 = vadd.f32 %v5196, %v5198
        %5260 = vadd.xlane.f32.xlu0 %v5259
        %v5261 = vpop.xlane.xlu0 %5260
        %v5262 = vadd.f32 %v5200, %v5202
        %5263 = vadd.xlane.f32.xlu0 %v5262
        %v5264 = vpop.xlane.xlu0 %5263
        %v5265 = vadd.f32 %v5204, %v5206
        %5266 = vadd.xlane.f32.xlu0 %v5265
        %v5267 = vpop.xlane.xlu0 %5266
        %v5268 = vadd.f32 %v5208, %v5210
        %5269 = vadd.xlane.f32.xlu0 %v5268
        %v5270 = vpop.xlane.xlu0 %5269
        %v5271 = vadd.f32 %v5212, %v5214
        %5272 = vadd.xlane.f32.xlu0 %v5271
        %v5273 = vpop.xlane.xlu0 %5272
        %v5274 = vadd.f32 %v5216, %v5218
        %5275 = vadd.xlane.f32.xlu0 %v5274
        %v5276 = vpop.xlane.xlu0 %5275
        %v5277 = vadd.f32 %v5220, %v5222
        %5278 = vadd.xlane.f32.xlu0 %v5277
        %v5279 = vpop.xlane.xlu0 %5278
        %v5280 = vadd.f32 %v5224, %v5226
        %5281 = vadd.xlane.f32.xlu0 %v5280
        %v5282 = vpop.xlane.xlu0 %5281
        %v5283 = vadd.f32 %v5228, %v5230
        %5284 = vadd.xlane.f32.xlu0 %v5283
        %v5285 = vpop.xlane.xlu0 %5284
        %v5286 = vadd.f32 %v5232, %v5234
        %5287 = vadd.xlane.f32.xlu0 %v5286
        %v5288 = vpop.xlane.xlu0 %5287
        %v5289 = vadd.f32 %v5236, %v5238
        %5290 = vadd.xlane.f32.xlu0 %v5289
        %v5291 = vpop.xlane.xlu0 %5290
        %v5292 = vadd.f32 %v5240, %v5242
        %5293 = vadd.xlane.f32.xlu0 %v5292
        %v5294 = vpop.xlane.xlu0 %5293
        %v5295 = vadd.f32 %v5244, %v5246
        %5296 = vadd.xlane.f32.xlu0 %v5295
        %v5297 = vpop.xlane.xlu0 %5296
        %v5298 = vadd.f32 %v5248, %v5250
        %5299 = vadd.xlane.f32.xlu0 %v5298
        %v5300 = vpop.xlane.xlu0 %5299
        %v5301 = vadd.f32 %v5252, %v5254
        %5302 = vadd.xlane.f32.xlu0 %v5301
        %v5303 = vpop.xlane.xlu0 %5302
        %v5304 = vadd.f32 %v5256, %v5258
        %5305 = vadd.xlane.f32.xlu0 %v5304
        %v5306 = vpop.xlane.xlu0 %5305
        %v5307 = vrcp.pop %v5261
        %v5308 = vrcp.pop %v5264
        %v5309 = vrcp.pop %v5267
        %v5310 = vrcp.pop %v5270
        %v5311 = vrcp.pop %v5273
        %v5312 = vrcp.pop %v5276
        %v5313 = vrcp.pop %v5279
        %v5314 = vrcp.pop %v5282
        %v5315 = vrcp.pop %v5285
        %v5316 = vrcp.pop %v5288
        %v5317 = vrcp.pop %v5291
        %v5318 = vrcp.pop %v5294
        %v5319 = vrcp.pop %v5297
        %v5320 = vrcp.pop %v5300
        %v5321 = vrcp.pop %v5303
        %v5322 = vrcp.pop %v5306
        %v5323 = vmul.f32 %v5196, %v5307
        %v5324 = vmul.f32 %v5198, %v5307
        %v5325 = vmul.f32 %v5200, %v5308
        %v5326 = vmul.f32 %v5202, %v5308
        %v5327 = vmul.f32 %v5204, %v5309
        %v5328 = vmul.f32 %v5206, %v5309
        %v5329 = vmul.f32 %v5208, %v5310
        %v5330 = vmul.f32 %v5210, %v5310
        %v5331 = vmul.f32 %v5212, %v5311
        %v5332 = vmul.f32 %v5214, %v5311
        %v5333 = vmul.f32 %v5216, %v5312
        %v5334 = vmul.f32 %v5218, %v5312
        %v5335 = vmul.f32 %v5220, %v5313
        %v5336 = vmul.f32 %v5222, %v5313
        %v5337 = vmul.f32 %v5224, %v5314
        %v5338 = vmul.f32 %v5226, %v5314
        %v5339 = vmul.f32 %v5228, %v5315
        %v5340 = vmul.f32 %v5230, %v5315
        %v5341 = vmul.f32 %v5232, %v5316
        %v5342 = vmul.f32 %v5234, %v5316
        %v5343 = vmul.f32 %v5236, %v5317
        %v5344 = vmul.f32 %v5238, %v5317
        %v5345 = vmul.f32 %v5240, %v5318
        %v5346 = vmul.f32 %v5242, %v5318
        %v5347 = vmul.f32 %v5244, %v5319
        %v5348 = vmul.f32 %v5246, %v5319
        %v5349 = vmul.f32 %v5248, %v5320
        %v5350 = vmul.f32 %v5250, %v5320
        %v5351 = vmul.f32 %v5252, %v5321
        %v5352 = vmul.f32 %v5254, %v5321
        %v5353 = vmul.f32 %v5256, %v5322
        %v5354 = vmul.f32 %v5258, %v5322
        %5355 = vrot.lane.b32.xlu0 %v2085, 32
        %v5356 = vpop.permute.xlu0 %5355
        %5357 = vrot.lane.b32.xlu0 %v2087, 32
        %v5358 = vpop.permute.xlu0 %5357
        %5359 = vrot.lane.b32.xlu0 %v2090, 32
        %v5360 = vpop.permute.xlu0 %5359
        %5361 = vrot.lane.b32.xlu0 %v2092, 32
        %v5362 = vpop.permute.xlu0 %5361
        %5363 = vrot.lane.b32.xlu0 %v2095, 32
        %v5364 = vpop.permute.xlu0 %5363
        %5365 = vrot.lane.b32.xlu0 %v2097, 32
        %v5366 = vpop.permute.xlu0 %5365
        %5367 = vrot.lane.b32.xlu0 %v2100, 32
        %v5368 = vpop.permute.xlu0 %5367
        %5369 = vrot.lane.b32.xlu0 %v2102, 32
        %v5370 = vpop.permute.xlu0 %5369
        %5371 = vrot.lane.b32.xlu0 %v2105, 32
        %v5372 = vpop.permute.xlu0 %5371
        %5373 = vrot.lane.b32.xlu0 %v2107, 32
        %v5374 = vpop.permute.xlu0 %5373
        %5375 = vrot.lane.b32.xlu0 %v2110, 32
        %v5376 = vpop.permute.xlu0 %5375
        %5377 = vrot.lane.b32.xlu0 %v2112, 32
        %v5378 = vpop.permute.xlu0 %5377
        %5379 = vrot.lane.b32.xlu0 %v2115, 32
        %v5380 = vpop.permute.xlu0 %5379
        %5381 = vrot.lane.b32.xlu0 %v2117, 32
        %v5382 = vpop.permute.xlu0 %5381
        %5383 = vrot.lane.b32.xlu0 %v2120, 32
        %v5384 = vpop.permute.xlu0 %5383
        %5385 = vrot.lane.b32.xlu0 %v2122, 32
        %v5386 = vpop.permute.xlu0 %5385
        %5387 = vrot.lane.b32.xlu0 %v2125, 32
        %v5388 = vpop.permute.xlu0 %5387
        %5389 = vrot.lane.b32.xlu0 %v2127, 32
        %v5390 = vpop.permute.xlu0 %5389
        %5391 = vrot.lane.b32.xlu0 %v2130, 32
        %v5392 = vpop.permute.xlu0 %5391
        %5393 = vrot.lane.b32.xlu0 %v2132, 32
        %v5394 = vpop.permute.xlu0 %5393
        %5395 = vrot.lane.b32.xlu0 %v2135, 32
        %v5396 = vpop.permute.xlu0 %5395
        %5397 = vrot.lane.b32.xlu0 %v2137, 32
        %v5398 = vpop.permute.xlu0 %5397
        %5399 = vrot.lane.b32.xlu0 %v2140, 32
        %v5400 = vpop.permute.xlu0 %5399
        %5401 = vrot.lane.b32.xlu0 %v2142, 32
        %v5402 = vpop.permute.xlu0 %5401
        %5403 = vrot.lane.b32.xlu0 %v2145, 32
        %v5404 = vpop.permute.xlu0 %5403
        %5405 = vrot.lane.b32.xlu0 %v2147, 32
        %v5406 = vpop.permute.xlu0 %5405
        %5407 = vrot.lane.b32.xlu0 %v2150, 32
        %v5408 = vpop.permute.xlu0 %5407
        %5409 = vrot.lane.b32.xlu0 %v2152, 32
        %v5410 = vpop.permute.xlu0 %5409
        %5411 = vrot.lane.b32.xlu0 %v2155, 32
        %v5412 = vpop.permute.xlu0 %5411
        %5413 = vrot.lane.b32.xlu0 %v2157, 32
        %v5414 = vpop.permute.xlu0 %5413
        %5415 = vrot.lane.b32.xlu0 %v2160, 32
        %v5416 = vpop.permute.xlu0 %5415
        %5417 = vrot.lane.b32.xlu0 %v2162, 32
        %v5418 = vpop.permute.xlu0 %5417
        %5451 = vmatpush.msra.mxu0 %v5386
        %5452 = vmatpush.msra.mxu0 %v5384
        %5453 = vmatpush.msra.mxu0 %v5382
        %5454 = vmatpush.msra.mxu0 %v5380
        %5455 = vmatpush.msra.mxu0 %v5378
        %5456 = vmatpush.msra.mxu0 %v5376
        %5457 = vmatpush.msra.mxu0 %v5374
        %5458 = vmatpush.msra.mxu0 %v5372
        %5459 = vmatpush.msra.mxu0 %v5370
        %5460 = vmatpush.msra.mxu0 %v5368
        %5461 = vmatpush.msra.mxu0 %v5366
        %5462 = vmatpush.msra.mxu0 %v5364
        %5463 = vmatpush.msra.mxu0 %v5362
        %5464 = vmatpush.msra.mxu0 %v5360
        %5465 = vmatpush.msra.mxu0 %v5358
        %5466 = vmatpush.msra.mxu0 %v5356
        %5467 = vmatmul.f32.gmra.mxu0 %v5323
        %v5468 = vpop.f32.mrf.mxu0
        %v5469 = vadd.f32 0.0, %v5468
        %5470 = vmatmul.f32.gmra.mxu0 %v5325
        %v5471 = vpop.f32.mrf.mxu0
        %v5472 = vadd.f32 0.0, %v5471
        %5473 = vmatmul.f32.gmra.mxu0 %v5327
        %v5474 = vpop.f32.mrf.mxu0
        %v5475 = vadd.f32 0.0, %v5474
        %5476 = vmatmul.f32.gmra.mxu0 %v5329
        %v5477 = vpop.f32.mrf.mxu0
        %v5478 = vadd.f32 0.0, %v5477
        %5479 = vmatmul.f32.gmra.mxu0 %v5331
        %v5480 = vpop.f32.mrf.mxu0
        %v5481 = vadd.f32 0.0, %v5480
        %5482 = vmatmul.f32.gmra.mxu0 %v5333
        %v5483 = vpop.f32.mrf.mxu0
        %v5484 = vadd.f32 0.0, %v5483
        %5485 = vmatmul.f32.gmra.mxu0 %v5335
        %v5486 = vpop.f32.mrf.mxu0
        %v5487 = vadd.f32 0.0, %v5486
        %5488 = vmatmul.f32.gmra.mxu0 %v5337
        %v5489 = vpop.f32.mrf.mxu0
        %v5490 = vadd.f32 0.0, %v5489
        %5491 = vmatmul.f32.gmra.mxu0 %v5339
        %v5492 = vpop.f32.mrf.mxu0
        %v5493 = vadd.f32 0.0, %v5492
        %5494 = vmatmul.f32.gmra.mxu0 %v5341
        %v5495 = vpop.f32.mrf.mxu0
        %v5496 = vadd.f32 0.0, %v5495
        %5497 = vmatmul.f32.gmra.mxu0 %v5343
        %v5498 = vpop.f32.mrf.mxu0
        %v5499 = vadd.f32 0.0, %v5498
        %5500 = vmatmul.f32.gmra.mxu0 %v5345
        %v5501 = vpop.f32.mrf.mxu0
        %v5502 = vadd.f32 0.0, %v5501
        %5503 = vmatmul.f32.gmra.mxu0 %v5347
        %v5504 = vpop.f32.mrf.mxu0
        %v5505 = vadd.f32 0.0, %v5504
        %5506 = vmatmul.f32.gmra.mxu0 %v5349
        %v5507 = vpop.f32.mrf.mxu0
        %v5508 = vadd.f32 0.0, %v5507
        %5509 = vmatmul.f32.gmra.mxu0 %v5351
        %v5510 = vpop.f32.mrf.mxu0
        %v5511 = vadd.f32 0.0, %v5510
        %5512 = vmatmul.f32.gmra.mxu0 %v5353
        %v5513 = vpop.f32.mrf.mxu0
        %v5514 = vadd.f32 0.0, %v5513
        %5515 = vdwg.mxu0
        %5516 = vmatpush.msra.mxu0 %v5418
        %5517 = vmatpush.msra.mxu0 %v5416
        %5518 = vmatpush.msra.mxu0 %v5414
        %5519 = vmatpush.msra.mxu0 %v5412
        %5520 = vmatpush.msra.mxu0 %v5410
        %5521 = vmatpush.msra.mxu0 %v5408
        %5522 = vmatpush.msra.mxu0 %v5406
        %5523 = vmatpush.msra.mxu0 %v5404
        %5524 = vmatpush.msra.mxu0 %v5402
        %5525 = vmatpush.msra.mxu0 %v5400
        %5526 = vmatpush.msra.mxu0 %v5398
        %5527 = vmatpush.msra.mxu0 %v5396
        %5528 = vmatpush.msra.mxu0 %v5394
        %5529 = vmatpush.msra.mxu0 %v5392
        %5530 = vmatpush.msra.mxu0 %v5390
        %5531 = vmatpush.msra.mxu0 %v5388
        %5532 = vmatmul.f32.gmra.mxu0 %v5324
        %v5533 = vpop.f32.mrf.mxu0
        %v5534 = vadd.f32 %v5469, %v5533
        %5535 = vmatmul.f32.gmra.mxu0 %v5326
        %v5536 = vpop.f32.mrf.mxu0
        %v5537 = vadd.f32 %v5472, %v5536
        %5538 = vmatmul.f32.gmra.mxu0 %v5328
        %v5539 = vpop.f32.mrf.mxu0
        %v5540 = vadd.f32 %v5475, %v5539
        %5541 = vmatmul.f32.gmra.mxu0 %v5330
        %v5542 = vpop.f32.mrf.mxu0
        %v5543 = vadd.f32 %v5478, %v5542
        %5544 = vmatmul.f32.gmra.mxu0 %v5332
        %v5545 = vpop.f32.mrf.mxu0
        %v5546 = vadd.f32 %v5481, %v5545
        %5547 = vmatmul.f32.gmra.mxu0 %v5334
        %v5548 = vpop.f32.mrf.mxu0
        %v5549 = vadd.f32 %v5484, %v5548
        %5550 = vmatmul.f32.gmra.mxu0 %v5336
        %v5551 = vpop.f32.mrf.mxu0
        %v5552 = vadd.f32 %v5487, %v5551
        %5553 = vmatmul.f32.gmra.mxu0 %v5338
        %v5554 = vpop.f32.mrf.mxu0
        %v5555 = vadd.f32 %v5490, %v5554
        %5556 = vmatmul.f32.gmra.mxu0 %v5340
        %v5557 = vpop.f32.mrf.mxu0
        %v5558 = vadd.f32 %v5493, %v5557
        %5559 = vmatmul.f32.gmra.mxu0 %v5342
        %v5560 = vpop.f32.mrf.mxu0
        %v5561 = vadd.f32 %v5496, %v5560
        %5562 = vmatmul.f32.gmra.mxu0 %v5344
        %v5563 = vpop.f32.mrf.mxu0
        %v5564 = vadd.f32 %v5499, %v5563
        %5565 = vmatmul.f32.gmra.mxu0 %v5346
        %v5566 = vpop.f32.mrf.mxu0
        %v5567 = vadd.f32 %v5502, %v5566
        %5568 = vmatmul.f32.gmra.mxu0 %v5348
        %v5569 = vpop.f32.mrf.mxu0
        %v5570 = vadd.f32 %v5505, %v5569
        %5571 = vmatmul.f32.gmra.mxu0 %v5350
        %v5572 = vpop.f32.mrf.mxu0
        %v5573 = vadd.f32 %v5508, %v5572
        %5574 = vmatmul.f32.gmra.mxu0 %v5352
        %v5575 = vpop.f32.mrf.mxu0
        %v5576 = vadd.f32 %v5511, %v5575
        %5577 = vmatmul.f32.gmra.mxu0 %v5354
        %v5578 = vpop.f32.mrf.mxu0
        %v5579 = vadd.f32 %v5514, %v5578
        %5580 = vdwg.mxu0
        %5597 = vrot.lane.b32.xlu0 %v5534, 96
        %v5598 = vpop.permute.xlu0 %5597
        %5599 = vrot.lane.b32.xlu0 %v5537, 96
        %v5600 = vpop.permute.xlu0 %5599
        %5601 = vrot.lane.b32.xlu0 %v5540, 96
        %v5602 = vpop.permute.xlu0 %5601
        %5603 = vrot.lane.b32.xlu0 %v5543, 96
        %v5604 = vpop.permute.xlu0 %5603
        %5605 = vrot.lane.b32.xlu0 %v5546, 96
        %v5606 = vpop.permute.xlu0 %5605
        %5607 = vrot.lane.b32.xlu0 %v5549, 96
        %v5608 = vpop.permute.xlu0 %5607
        %5609 = vrot.lane.b32.xlu0 %v5552, 96
        %v5610 = vpop.permute.xlu0 %5609
        %5611 = vrot.lane.b32.xlu0 %v5555, 96
        %v5612 = vpop.permute.xlu0 %5611
        %5613 = vrot.lane.b32.xlu0 %v5558, 96
        %v5614 = vpop.permute.xlu0 %5613
        %5615 = vrot.lane.b32.xlu0 %v5561, 96
        %v5616 = vpop.permute.xlu0 %5615
        %5617 = vrot.lane.b32.xlu0 %v5564, 96
        %v5618 = vpop.permute.xlu0 %5617
        %5619 = vrot.lane.b32.xlu0 %v5567, 96
        %v5620 = vpop.permute.xlu0 %5619
        %5621 = vrot.lane.b32.xlu0 %v5570, 96
        %v5622 = vpop.permute.xlu0 %5621
        %5623 = vrot.lane.b32.xlu0 %v5573, 96
        %v5624 = vpop.permute.xlu0 %5623
        %5625 = vrot.lane.b32.xlu0 %v5576, 96
        %v5626 = vpop.permute.xlu0 %5625
        %5627 = vrot.lane.b32.xlu0 %v5579, 96
        %v5628 = vpop.permute.xlu0 %5627
        %vm5645 = vcmask 1048320
        %5646 = vst.msk [vmem:[#allocation2] sm:$0xff] %vm5645, %v5598
        %5647 = vst.msk [vmem:[#allocation2 + $0x8] sm:$0xff] %vm5645, %v5600
        %5648 = vst.msk [vmem:[#allocation2 + $0x10] sm:$0xff] %vm5645, %v5602
        %5649 = vst.msk [vmem:[#allocation2 + $0x18] sm:$0xff] %vm5645, %v5604
        %5650 = vst.msk [vmem:[#allocation2 + $0x20] sm:$0xff] %vm5645, %v5606
        %5651 = vst.msk [vmem:[#allocation2 + $0x28] sm:$0xff] %vm5645, %v5608
        %5652 = vst.msk [vmem:[#allocation2 + $0x30] sm:$0xff] %vm5645, %v5610
        %5653 = vst.msk [vmem:[#allocation2 + $0x38] sm:$0xff] %vm5645, %v5612
        %5654 = vst.msk [vmem:[#allocation2 + $0x40] sm:$0xff] %vm5645, %v5614
        %5655 = vst.msk [vmem:[#allocation2 + $0x48] sm:$0xff] %vm5645, %v5616
        %5656 = vst.msk [vmem:[#allocation2 + $0x50] sm:$0xff] %vm5645, %v5618
        %5657 = vst.msk [vmem:[#allocation2 + $0x58] sm:$0xff] %vm5645, %v5620
        %5658 = vst.msk [vmem:[#allocation2 + $0x60] sm:$0xff] %vm5645, %v5622
        %5659 = vst.msk [vmem:[#allocation2 + $0x68] sm:$0xff] %vm5645, %v5624
        %5660 = vst.msk [vmem:[#allocation2 + $0x70] sm:$0xff] %vm5645, %v5626
        %5661 = vst.msk [vmem:[#allocation2 + $0x78] sm:$0xff] %vm5645, %v5628
        %v5662 = vld [vmem:[#allocation2] sm:$0xff]
        %v5663 = vld [vmem:[#allocation2 + $0x8] sm:$0xff]
        %v5664 = vld [vmem:[#allocation2 + $0x10] sm:$0xff]
        %v5665 = vld [vmem:[#allocation2 + $0x18] sm:$0xff]
        %v5666 = vld [vmem:[#allocation2 + $0x20] sm:$0xff]
        %v5667 = vld [vmem:[#allocation2 + $0x28] sm:$0xff]
        %v5668 = vld [vmem:[#allocation2 + $0x30] sm:$0xff]
        %v5669 = vld [vmem:[#allocation2 + $0x38] sm:$0xff]
        %v5670 = vld [vmem:[#allocation2 + $0x40] sm:$0xff]
        %v5671 = vld [vmem:[#allocation2 + $0x48] sm:$0xff]
        %v5672 = vld [vmem:[#allocation2 + $0x50] sm:$0xff]
        %v5673 = vld [vmem:[#allocation2 + $0x58] sm:$0xff]
        %v5674 = vld [vmem:[#allocation2 + $0x60] sm:$0xff]
        %v5675 = vld [vmem:[#allocation2 + $0x68] sm:$0xff]
        %v5676 = vld [vmem:[#allocation2 + $0x70] sm:$0xff]
        %v5677 = vld [vmem:[#allocation2 + $0x78] sm:$0xff]
        %v5678 = vpack.c.bf16 %v5663, %v5662
        %v5679 = vpack.c.bf16 %v5665, %v5664
        %v5680 = vpack.c.bf16 %v5667, %v5666
        %v5681 = vpack.c.bf16 %v5669, %v5668
        %v5682 = vpack.c.bf16 %v5671, %v5670
        %v5683 = vpack.c.bf16 %v5673, %v5672
        %v5684 = vpack.c.bf16 %v5675, %v5674
        %v5685 = vpack.c.bf16 %v5677, %v5676
        %v5686 = vld [vmem:[#allocation11] sm:$0xf]
        %v5687 = vld [vmem:[#allocation11 + $0x4] sm:$0xf]
        %v5688 = vld [vmem:[#allocation11 + $0x8] sm:$0xf]
        %v5689 = vld [vmem:[#allocation11 + $0xc] sm:$0xf]
        %v5690 = vld [vmem:[#allocation11 + $0x10] sm:$0xf]
        %v5691 = vld [vmem:[#allocation11 + $0x14] sm:$0xf]
        %v5692 = vld [vmem:[#allocation11 + $0x18] sm:$0xf]
        %v5693 = vld [vmem:[#allocation11 + $0x1c] sm:$0xf]
        %v5694 = vld [vmem:[#allocation11 + $0x20] sm:$0xf]
        %v5695 = vld [vmem:[#allocation11 + $0x24] sm:$0xf]
        %v5696 = vld [vmem:[#allocation11 + $0x28] sm:$0xf]
        %v5697 = vld [vmem:[#allocation11 + $0x2c] sm:$0xf]
        %v5698 = vld [vmem:[#allocation11 + $0x30] sm:$0xf]
        %v5699 = vld [vmem:[#allocation11 + $0x34] sm:$0xf]
        %v5700 = vld [vmem:[#allocation11 + $0x38] sm:$0xf]
        %v5701 = vld [vmem:[#allocation11 + $0x3c] sm:$0xf]
        %v5702 = vld [vmem:[#allocation12] sm:$0x1]
        %v5704 = vperm.slane %v5702, 0
        %v5722 = vunpack.c.l.b16 %v5686
        %v5723 = vunpack.c.l.b16 %v5687
        %v5724 = vunpack.c.l.b16 %v5688
        %v5725 = vunpack.c.l.b16 %v5689
        %v5726 = vunpack.c.l.b16 %v5690
        %v5727 = vunpack.c.l.b16 %v5691
        %v5728 = vunpack.c.l.b16 %v5692
        %v5729 = vunpack.c.l.b16 %v5693
        %v5730 = vunpack.c.l.b16 %v5694
        %v5731 = vunpack.c.l.b16 %v5695
        %v5732 = vunpack.c.l.b16 %v5696
        %v5733 = vunpack.c.l.b16 %v5697
        %v5734 = vunpack.c.l.b16 %v5698
        %v5735 = vunpack.c.l.b16 %v5699
        %v5736 = vunpack.c.l.b16 %v5700
        %v5737 = vunpack.c.l.b16 %v5701
        %v5738 = vpack.c.b16 %v5723, %v5722
        %v5739 = vpack.c.b16 %v5725, %v5724
        %v5740 = vpack.c.b16 %v5727, %v5726
        %v5741 = vpack.c.b16 %v5729, %v5728
        %v5742 = vpack.c.b16 %v5731, %v5730
        %v5743 = vpack.c.b16 %v5733, %v5732
        %v5744 = vpack.c.b16 %v5735, %v5734
        %v5745 = vpack.c.b16 %v5737, %v5736
        %5754 = vmatpush.bf16.msra.mxu0 %v5745
        %5755 = vmatpush.bf16.msra.mxu0 %v5744
        %5756 = vmatpush.bf16.msra.mxu0 %v5743
        %5757 = vmatpush.bf16.msra.mxu0 %v5742
        %5758 = vmatpush.bf16.msra.mxu0 %v5741
        %5759 = vmatpush.bf16.msra.mxu0 %v5740
        %5760 = vmatpush.bf16.msra.mxu0 %v5739
        %5761 = vmatpush.bf16.msra.mxu0 %v5738
        %5762 = vmatmul.bf16.gmra.mxu0 %v5678
        %v5763 = vpop.f32.mrf.mxu0
        %v5764 = vadd.f32 %v5704, %v5763
        %v5765 = vpop.f32.mrf.mxu0
        %v5766 = vadd.f32 %v5704, %v5765
        %5767 = vmatmul.bf16.gmra.mxu0 %v5679
        %v5768 = vpop.f32.mrf.mxu0
        %v5769 = vadd.f32 %v5704, %v5768
        %v5770 = vpop.f32.mrf.mxu0
        %v5771 = vadd.f32 %v5704, %v5770
        %5772 = vmatmul.bf16.gmra.mxu0 %v5680
        %v5773 = vpop.f32.mrf.mxu0
        %v5774 = vadd.f32 %v5704, %v5773
        %v5775 = vpop.f32.mrf.mxu0
        %v5776 = vadd.f32 %v5704, %v5775
        %5777 = vmatmul.bf16.gmra.mxu0 %v5681
        %v5778 = vpop.f32.mrf.mxu0
        %v5779 = vadd.f32 %v5704, %v5778
        %v5780 = vpop.f32.mrf.mxu0
        %v5781 = vadd.f32 %v5704, %v5780
        %5782 = vmatmul.bf16.gmra.mxu0 %v5682
        %v5783 = vpop.f32.mrf.mxu0
        %v5784 = vadd.f32 %v5704, %v5783
        %v5785 = vpop.f32.mrf.mxu0
        %v5786 = vadd.f32 %v5704, %v5785
        %5787 = vmatmul.bf16.gmra.mxu0 %v5683
        %v5788 = vpop.f32.mrf.mxu0
        %v5789 = vadd.f32 %v5704, %v5788
        %v5790 = vpop.f32.mrf.mxu0
        %v5791 = vadd.f32 %v5704, %v5790
        %5792 = vmatmul.bf16.gmra.mxu0 %v5684
        %v5793 = vpop.f32.mrf.mxu0
        %v5794 = vadd.f32 %v5704, %v5793
        %v5795 = vpop.f32.mrf.mxu0
        %v5796 = vadd.f32 %v5704, %v5795
        %5797 = vmatmul.bf16.gmra.mxu0 %v5685
        %v5798 = vpop.f32.mrf.mxu0
        %v5799 = vadd.f32 %v5704, %v5798
        %v5800 = vpop.f32.mrf.mxu0
        %v5801 = vadd.f32 %v5704, %v5800
        %5802 = vdwg.mxu0
        %v5803 = vadd.f32 %v650, %v5764
        %v5804 = vadd.f32 %v651, %v5766
        %v5805 = vadd.f32 %v652, %v5769
        %v5806 = vadd.f32 %v653, %v5771
        %v5807 = vadd.f32 %v654, %v5774
        %v5808 = vadd.f32 %v655, %v5776
        %v5809 = vadd.f32 %v656, %v5779
        %v5810 = vadd.f32 %v657, %v5781
        %v5811 = vadd.f32 %v658, %v5784
        %v5812 = vadd.f32 %v659, %v5786
        %v5813 = vadd.f32 %v660, %v5789
        %v5814 = vadd.f32 %v661, %v5791
        %v5815 = vadd.f32 %v662, %v5794
        %v5816 = vadd.f32 %v663, %v5796
        %v5817 = vadd.f32 %v664, %v5799
        %v5818 = vadd.f32 %v665, %v5801
        %v5819 = vld [vmem:[%s4] sm:$0x1]
        %v5820 = vld [vmem:[#allocation8] sm:$0x1]
        %5821 = vadd.xlane.f32.xlu0 %v5803
        %v5822 = vpop.xlane.xlu0 %5821
        %5823 = vadd.xlane.f32.xlu0 %v5804
        %v5824 = vpop.xlane.xlu0 %5823
        %5825 = vadd.xlane.f32.xlu0 %v5805
        %v5826 = vpop.xlane.xlu0 %5825
        %5827 = vadd.xlane.f32.xlu0 %v5806
        %v5828 = vpop.xlane.xlu0 %5827
        %5829 = vadd.xlane.f32.xlu0 %v5807
        %v5830 = vpop.xlane.xlu0 %5829
        %5831 = vadd.xlane.f32.xlu0 %v5808
        %v5832 = vpop.xlane.xlu0 %5831
        %5833 = vadd.xlane.f32.xlu0 %v5809
        %v5834 = vpop.xlane.xlu0 %5833
        %5835 = vadd.xlane.f32.xlu0 %v5810
        %v5836 = vpop.xlane.xlu0 %5835
        %5837 = vadd.xlane.f32.xlu0 %v5811
        %v5838 = vpop.xlane.xlu0 %5837
        %5839 = vadd.xlane.f32.xlu0 %v5812
        %v5840 = vpop.xlane.xlu0 %5839
        %5841 = vadd.xlane.f32.xlu0 %v5813
        %v5842 = vpop.xlane.xlu0 %5841
        %5843 = vadd.xlane.f32.xlu0 %v5814
        %v5844 = vpop.xlane.xlu0 %5843
        %5845 = vadd.xlane.f32.xlu0 %v5815
        %v5846 = vpop.xlane.xlu0 %5845
        %5847 = vadd.xlane.f32.xlu0 %v5816
        %v5848 = vpop.xlane.xlu0 %5847
        %5849 = vadd.xlane.f32.xlu0 %v5817
        %v5850 = vpop.xlane.xlu0 %5849
        %5851 = vadd.xlane.f32.xlu0 %v5818
        %v5852 = vpop.xlane.xlu0 %5851
        %v5853 = vmul.f32 %v5822, %v738
        %v5854 = vmul.f32 %v5824, %v738
        %v5855 = vmul.f32 %v5826, %v738
        %v5856 = vmul.f32 %v5828, %v738
        %v5857 = vmul.f32 %v5830, %v738
        %v5858 = vmul.f32 %v5832, %v738
        %v5859 = vmul.f32 %v5834, %v738
        %v5860 = vmul.f32 %v5836, %v738
        %v5861 = vmul.f32 %v5838, %v738
        %v5862 = vmul.f32 %v5840, %v738
        %v5863 = vmul.f32 %v5842, %v738
        %v5864 = vmul.f32 %v5844, %v738
        %v5865 = vmul.f32 %v5846, %v738
        %v5866 = vmul.f32 %v5848, %v738
        %v5867 = vmul.f32 %v5850, %v738
        %v5868 = vmul.f32 %v5852, %v738
        %v5869 = vsub.f32 %v5803, %v5853
        %v5870 = vsub.f32 %v5804, %v5854
        %v5871 = vsub.f32 %v5805, %v5855
        %v5872 = vsub.f32 %v5806, %v5856
        %v5873 = vsub.f32 %v5807, %v5857
        %v5874 = vsub.f32 %v5808, %v5858
        %v5875 = vsub.f32 %v5809, %v5859
        %v5876 = vsub.f32 %v5810, %v5860
        %v5877 = vsub.f32 %v5811, %v5861
        %v5878 = vsub.f32 %v5812, %v5862
        %v5879 = vsub.f32 %v5813, %v5863
        %v5880 = vsub.f32 %v5814, %v5864
        %v5881 = vsub.f32 %v5815, %v5865
        %v5882 = vsub.f32 %v5816, %v5866
        %v5883 = vsub.f32 %v5817, %v5867
        %v5884 = vsub.f32 %v5818, %v5868
        %v5885 = vmul.f32 %v5869, %v5869
        %v5886 = vmul.f32 %v5870, %v5870
        %v5887 = vmul.f32 %v5871, %v5871
        %v5888 = vmul.f32 %v5872, %v5872
        %v5889 = vmul.f32 %v5873, %v5873
        %v5890 = vmul.f32 %v5874, %v5874
        %v5891 = vmul.f32 %v5875, %v5875
        %v5892 = vmul.f32 %v5876, %v5876
        %v5893 = vmul.f32 %v5877, %v5877
        %v5894 = vmul.f32 %v5878, %v5878
        %v5895 = vmul.f32 %v5879, %v5879
        %v5896 = vmul.f32 %v5880, %v5880
        %v5897 = vmul.f32 %v5881, %v5881
        %v5898 = vmul.f32 %v5882, %v5882
        %v5899 = vmul.f32 %v5883, %v5883
        %v5900 = vmul.f32 %v5884, %v5884
        %5901 = vadd.xlane.f32.xlu0 %v5885
        %v5902 = vpop.xlane.xlu0 %5901
        %5903 = vadd.xlane.f32.xlu0 %v5886
        %v5904 = vpop.xlane.xlu0 %5903
        %5905 = vadd.xlane.f32.xlu0 %v5887
        %v5906 = vpop.xlane.xlu0 %5905
        %5907 = vadd.xlane.f32.xlu0 %v5888
        %v5908 = vpop.xlane.xlu0 %5907
        %5909 = vadd.xlane.f32.xlu0 %v5889
        %v5910 = vpop.xlane.xlu0 %5909
        %5911 = vadd.xlane.f32.xlu0 %v5890
        %v5912 = vpop.xlane.xlu0 %5911
        %5913 = vadd.xlane.f32.xlu0 %v5891
        %v5914 = vpop.xlane.xlu0 %5913
        %5915 = vadd.xlane.f32.xlu0 %v5892
        %v5916 = vpop.xlane.xlu0 %5915
        %5917 = vadd.xlane.f32.xlu0 %v5893
        %v5918 = vpop.xlane.xlu0 %5917
        %5919 = vadd.xlane.f32.xlu0 %v5894
        %v5920 = vpop.xlane.xlu0 %5919
        %5921 = vadd.xlane.f32.xlu0 %v5895
        %v5922 = vpop.xlane.xlu0 %5921
        %5923 = vadd.xlane.f32.xlu0 %v5896
        %v5924 = vpop.xlane.xlu0 %5923
        %5925 = vadd.xlane.f32.xlu0 %v5897
        %v5926 = vpop.xlane.xlu0 %5925
        %5927 = vadd.xlane.f32.xlu0 %v5898
        %v5928 = vpop.xlane.xlu0 %5927
        %5929 = vadd.xlane.f32.xlu0 %v5899
        %v5930 = vpop.xlane.xlu0 %5929
        %5931 = vadd.xlane.f32.xlu0 %v5900
        %v5932 = vpop.xlane.xlu0 %5931
        %v5933 = vmul.f32 %v5902, %v738
        %v5934 = vmul.f32 %v5904, %v738
        %v5935 = vmul.f32 %v5906, %v738
        %v5936 = vmul.f32 %v5908, %v738
        %v5937 = vmul.f32 %v5910, %v738
        %v5938 = vmul.f32 %v5912, %v738
        %v5939 = vmul.f32 %v5914, %v738
        %v5940 = vmul.f32 %v5916, %v738
        %v5941 = vmul.f32 %v5918, %v738
        %v5942 = vmul.f32 %v5920, %v738
        %v5943 = vmul.f32 %v5922, %v738
        %v5944 = vmul.f32 %v5924, %v738
        %v5945 = vmul.f32 %v5926, %v738
        %v5946 = vmul.f32 %v5928, %v738
        %v5947 = vmul.f32 %v5930, %v738
        %v5948 = vmul.f32 %v5932, %v738
        %v5949 = vadd.f32 %v5933, 1e-05
        %v5950 = vadd.f32 %v5934, 1e-05
        %v5951 = vadd.f32 %v5935, 1e-05
        %v5952 = vadd.f32 %v5936, 1e-05
        %v5953 = vadd.f32 %v5937, 1e-05
        %v5954 = vadd.f32 %v5938, 1e-05
        %v5955 = vadd.f32 %v5939, 1e-05
        %v5956 = vadd.f32 %v5940, 1e-05
        %v5957 = vadd.f32 %v5941, 1e-05
        %v5958 = vadd.f32 %v5942, 1e-05
        %v5959 = vadd.f32 %v5943, 1e-05
        %v5960 = vadd.f32 %v5944, 1e-05
        %v5961 = vadd.f32 %v5945, 1e-05
        %v5962 = vadd.f32 %v5946, 1e-05
        %v5963 = vadd.f32 %v5947, 1e-05
        %v5964 = vadd.f32 %v5948, 1e-05
        %v5965 = vrsqrt.pop %v5949
        %v5966 = vmul.f32 %v5965, %v5949
        %v5967 = vmul.f32 %v5966, %v5965
        %v5968 = vmul.f32 0.5, %v5967
        %v5969 = vsub.f32 1.5, %v5968
        %v5970 = vmul.f32 %v5965, %v5969
        %vm5971 = vweird.f32 %v5949
        %vm5972 = vweird.f32 %v5965
        %vm5973 = vmor %vm5971, %vm5972
        %v5974 = vsel %vm5973, %v5965, %v5970
        %v5975 = vrsqrt.pop %v5950
        %v5976 = vmul.f32 %v5975, %v5950
        %v5977 = vmul.f32 %v5976, %v5975
        %v5978 = vmul.f32 0.5, %v5977
        %v5979 = vsub.f32 1.5, %v5978
        %v5980 = vmul.f32 %v5975, %v5979
        %vm5981 = vweird.f32 %v5950
        %vm5982 = vweird.f32 %v5975
        %vm5983 = vmor %vm5981, %vm5982
        %v5984 = vsel %vm5983, %v5975, %v5980
        %v5985 = vrsqrt.pop %v5951
        %v5986 = vmul.f32 %v5985, %v5951
        %v5987 = vmul.f32 %v5986, %v5985
        %v5988 = vmul.f32 0.5, %v5987
        %v5989 = vsub.f32 1.5, %v5988
        %v5990 = vmul.f32 %v5985, %v5989
        %vm5991 = vweird.f32 %v5951
        %vm5992 = vweird.f32 %v5985
        %vm5993 = vmor %vm5991, %vm5992
        %v5994 = vsel %vm5993, %v5985, %v5990
        %v5995 = vrsqrt.pop %v5952
        %v5996 = vmul.f32 %v5995, %v5952
        %v5997 = vmul.f32 %v5996, %v5995
        %v5998 = vmul.f32 0.5, %v5997
        %v5999 = vsub.f32 1.5, %v5998
        %v6000 = vmul.f32 %v5995, %v5999
        %vm6001 = vweird.f32 %v5952
        %vm6002 = vweird.f32 %v5995
        %vm6003 = vmor %vm6001, %vm6002
        %v6004 = vsel %vm6003, %v5995, %v6000
        %v6005 = vrsqrt.pop %v5953
        %v6006 = vmul.f32 %v6005, %v5953
        %v6007 = vmul.f32 %v6006, %v6005
        %v6008 = vmul.f32 0.5, %v6007
        %v6009 = vsub.f32 1.5, %v6008
        %v6010 = vmul.f32 %v6005, %v6009
        %vm6011 = vweird.f32 %v5953
        %vm6012 = vweird.f32 %v6005
        %vm6013 = vmor %vm6011, %vm6012
        %v6014 = vsel %vm6013, %v6005, %v6010
        %v6015 = vrsqrt.pop %v5954
        %v6016 = vmul.f32 %v6015, %v5954
        %v6017 = vmul.f32 %v6016, %v6015
        %v6018 = vmul.f32 0.5, %v6017
        %v6019 = vsub.f32 1.5, %v6018
        %v6020 = vmul.f32 %v6015, %v6019
        %vm6021 = vweird.f32 %v5954
        %vm6022 = vweird.f32 %v6015
        %vm6023 = vmor %vm6021, %vm6022
        %v6024 = vsel %vm6023, %v6015, %v6020
        %v6025 = vrsqrt.pop %v5955
        %v6026 = vmul.f32 %v6025, %v5955
        %v6027 = vmul.f32 %v6026, %v6025
        %v6028 = vmul.f32 0.5, %v6027
        %v6029 = vsub.f32 1.5, %v6028
        %v6030 = vmul.f32 %v6025, %v6029
        %vm6031 = vweird.f32 %v5955
        %vm6032 = vweird.f32 %v6025
        %vm6033 = vmor %vm6031, %vm6032
        %v6034 = vsel %vm6033, %v6025, %v6030
        %v6035 = vrsqrt.pop %v5956
        %v6036 = vmul.f32 %v6035, %v5956
        %v6037 = vmul.f32 %v6036, %v6035
        %v6038 = vmul.f32 0.5, %v6037
        %v6039 = vsub.f32 1.5, %v6038
        %v6040 = vmul.f32 %v6035, %v6039
        %vm6041 = vweird.f32 %v5956
        %vm6042 = vweird.f32 %v6035
        %vm6043 = vmor %vm6041, %vm6042
        %v6044 = vsel %vm6043, %v6035, %v6040
        %v6045 = vrsqrt.pop %v5957
        %v6046 = vmul.f32 %v6045, %v5957
        %v6047 = vmul.f32 %v6046, %v6045
        %v6048 = vmul.f32 0.5, %v6047
        %v6049 = vsub.f32 1.5, %v6048
        %v6050 = vmul.f32 %v6045, %v6049
        %vm6051 = vweird.f32 %v5957
        %vm6052 = vweird.f32 %v6045
        %vm6053 = vmor %vm6051, %vm6052
        %v6054 = vsel %vm6053, %v6045, %v6050
        %v6055 = vrsqrt.pop %v5958
        %v6056 = vmul.f32 %v6055, %v5958
        %v6057 = vmul.f32 %v6056, %v6055
        %v6058 = vmul.f32 0.5, %v6057
        %v6059 = vsub.f32 1.5, %v6058
        %v6060 = vmul.f32 %v6055, %v6059
        %vm6061 = vweird.f32 %v5958
        %vm6062 = vweird.f32 %v6055
        %vm6063 = vmor %vm6061, %vm6062
        %v6064 = vsel %vm6063, %v6055, %v6060
        %v6065 = vrsqrt.pop %v5959
        %v6066 = vmul.f32 %v6065, %v5959
        %v6067 = vmul.f32 %v6066, %v6065
        %v6068 = vmul.f32 0.5, %v6067
        %v6069 = vsub.f32 1.5, %v6068
        %v6070 = vmul.f32 %v6065, %v6069
        %vm6071 = vweird.f32 %v5959
        %vm6072 = vweird.f32 %v6065
        %vm6073 = vmor %vm6071, %vm6072
        %v6074 = vsel %vm6073, %v6065, %v6070
        %v6075 = vrsqrt.pop %v5960
        %v6076 = vmul.f32 %v6075, %v5960
        %v6077 = vmul.f32 %v6076, %v6075
        %v6078 = vmul.f32 0.5, %v6077
        %v6079 = vsub.f32 1.5, %v6078
        %v6080 = vmul.f32 %v6075, %v6079
        %vm6081 = vweird.f32 %v5960
        %vm6082 = vweird.f32 %v6075
        %vm6083 = vmor %vm6081, %vm6082
        %v6084 = vsel %vm6083, %v6075, %v6080
        %v6085 = vrsqrt.pop %v5961
        %v6086 = vmul.f32 %v6085, %v5961
        %v6087 = vmul.f32 %v6086, %v6085
        %v6088 = vmul.f32 0.5, %v6087
        %v6089 = vsub.f32 1.5, %v6088
        %v6090 = vmul.f32 %v6085, %v6089
        %vm6091 = vweird.f32 %v5961
        %vm6092 = vweird.f32 %v6085
        %vm6093 = vmor %vm6091, %vm6092
        %v6094 = vsel %vm6093, %v6085, %v6090
        %v6095 = vrsqrt.pop %v5962
        %v6096 = vmul.f32 %v6095, %v5962
        %v6097 = vmul.f32 %v6096, %v6095
        %v6098 = vmul.f32 0.5, %v6097
        %v6099 = vsub.f32 1.5, %v6098
        %v6100 = vmul.f32 %v6095, %v6099
        %vm6101 = vweird.f32 %v5962
        %vm6102 = vweird.f32 %v6095
        %vm6103 = vmor %vm6101, %vm6102
        %v6104 = vsel %vm6103, %v6095, %v6100
        %v6105 = vrsqrt.pop %v5963
        %v6106 = vmul.f32 %v6105, %v5963
        %v6107 = vmul.f32 %v6106, %v6105
        %v6108 = vmul.f32 0.5, %v6107
        %v6109 = vsub.f32 1.5, %v6108
        %v6110 = vmul.f32 %v6105, %v6109
        %vm6111 = vweird.f32 %v5963
        %vm6112 = vweird.f32 %v6105
        %vm6113 = vmor %vm6111, %vm6112
        %v6114 = vsel %vm6113, %v6105, %v6110
        %v6115 = vrsqrt.pop %v5964
        %v6116 = vmul.f32 %v6115, %v5964
        %v6117 = vmul.f32 %v6116, %v6115
        %v6118 = vmul.f32 0.5, %v6117
        %v6119 = vsub.f32 1.5, %v6118
        %v6120 = vmul.f32 %v6115, %v6119
        %vm6121 = vweird.f32 %v5964
        %vm6122 = vweird.f32 %v6115
        %vm6123 = vmor %vm6121, %vm6122
        %v6124 = vsel %vm6123, %v6115, %v6120
        %v6125 = vmul.f32 %v5869, %v5974
        %v6126 = vmul.f32 %v5870, %v5984
        %v6127 = vmul.f32 %v5871, %v5994
        %v6128 = vmul.f32 %v5872, %v6004
        %v6129 = vmul.f32 %v5873, %v6014
        %v6130 = vmul.f32 %v5874, %v6024
        %v6131 = vmul.f32 %v5875, %v6034
        %v6132 = vmul.f32 %v5876, %v6044
        %v6133 = vmul.f32 %v5877, %v6054
        %v6134 = vmul.f32 %v5878, %v6064
        %v6135 = vmul.f32 %v5879, %v6074
        %v6136 = vmul.f32 %v5880, %v6084
        %v6137 = vmul.f32 %v5881, %v6094
        %v6138 = vmul.f32 %v5882, %v6104
        %v6139 = vmul.f32 %v5883, %v6114
        %v6140 = vmul.f32 %v5884, %v6124
        %v6142 = vperm.slane %v5819, 0
        %v6144 = vmul.f32 %v6125, %v6142
        %v6145 = vmul.f32 %v6126, %v6142
        %v6146 = vmul.f32 %v6127, %v6142
        %v6147 = vmul.f32 %v6128, %v6142
        %v6148 = vmul.f32 %v6129, %v6142
        %v6149 = vmul.f32 %v6130, %v6142
        %v6150 = vmul.f32 %v6131, %v6142
        %v6151 = vmul.f32 %v6132, %v6142
        %v6152 = vmul.f32 %v6133, %v6142
        %v6153 = vmul.f32 %v6134, %v6142
        %v6154 = vmul.f32 %v6135, %v6142
        %v6155 = vmul.f32 %v6136, %v6142
        %v6156 = vmul.f32 %v6137, %v6142
        %v6157 = vmul.f32 %v6138, %v6142
        %v6158 = vmul.f32 %v6139, %v6142
        %v6159 = vmul.f32 %v6140, %v6142
        %v6161 = vperm.slane %v5820, 0
        %v6163 = vadd.f32 %v6144, %v6161
        %v6164 = vadd.f32 %v6145, %v6161
        %v6165 = vadd.f32 %v6146, %v6161
        %v6166 = vadd.f32 %v6147, %v6161
        %v6167 = vadd.f32 %v6148, %v6161
        %v6168 = vadd.f32 %v6149, %v6161
        %v6169 = vadd.f32 %v6150, %v6161
        %v6170 = vadd.f32 %v6151, %v6161
        %v6171 = vadd.f32 %v6152, %v6161
        %v6172 = vadd.f32 %v6153, %v6161
        %v6173 = vadd.f32 %v6154, %v6161
        %v6174 = vadd.f32 %v6155, %v6161
        %v6175 = vadd.f32 %v6156, %v6161
        %v6176 = vadd.f32 %v6157, %v6161
        %v6177 = vadd.f32 %v6158, %v6161
        %v6178 = vadd.f32 %v6159, %v6161
        %v6179 = vpack.c.bf16 %v6164, %v6163
        %v6180 = vpack.c.bf16 %v6166, %v6165
        %v6181 = vpack.c.bf16 %v6168, %v6167
        %v6182 = vpack.c.bf16 %v6170, %v6169
        %v6183 = vpack.c.bf16 %v6172, %v6171
        %v6184 = vpack.c.bf16 %v6174, %v6173
        %v6185 = vpack.c.bf16 %v6176, %v6175
        %v6186 = vpack.c.bf16 %v6178, %v6177
        %v6187 = vld [vmem:[#allocation14] sm:$0xff]
        %v6188 = vld [vmem:[#allocation14 + $0x8] sm:$0xff]
        %v6189 = vld [vmem:[#allocation14 + $0x10] sm:$0xff]
        %v6190 = vld [vmem:[#allocation14 + $0x18] sm:$0xff]
        %v6191 = vld [vmem:[#allocation14 + $0x20] sm:$0xff]
        %v6192 = vld [vmem:[#allocation14 + $0x28] sm:$0xff]
        %v6193 = vld [vmem:[#allocation14 + $0x30] sm:$0xff]
        %v6194 = vld [vmem:[#allocation14 + $0x38] sm:$0xff]
        %v6195 = vld [vmem:[#allocation14 + $0x40] sm:$0xff]
        %v6196 = vld [vmem:[#allocation14 + $0x48] sm:$0xff]
        %v6197 = vld [vmem:[#allocation14 + $0x50] sm:$0xff]
        %v6198 = vld [vmem:[#allocation14 + $0x58] sm:$0xff]
        %v6199 = vld [vmem:[#allocation14 + $0x60] sm:$0xff]
        %v6200 = vld [vmem:[#allocation14 + $0x68] sm:$0xff]
        %v6201 = vld [vmem:[#allocation14 + $0x70] sm:$0xff]
        %v6202 = vld [vmem:[#allocation14 + $0x78] sm:$0xff]
        %v6203 = vld [vmem:[#allocation14 + $0x80] sm:$0xff]
        %v6204 = vld [vmem:[#allocation14 + $0x88] sm:$0xff]
        %v6205 = vld [vmem:[#allocation14 + $0x90] sm:$0xff]
        %v6206 = vld [vmem:[#allocation14 + $0x98] sm:$0xff]
        %v6207 = vld [vmem:[#allocation14 + $0xa0] sm:$0xff]
        %v6208 = vld [vmem:[#allocation14 + $0xa8] sm:$0xff]
        %v6209 = vld [vmem:[#allocation14 + $0xb0] sm:$0xff]
        %v6210 = vld [vmem:[#allocation14 + $0xb8] sm:$0xff]
        %v6211 = vld [vmem:[#allocation14 + $0xc0] sm:$0xff]
        %v6212 = vld [vmem:[#allocation14 + $0xc8] sm:$0xff]
        %v6213 = vld [vmem:[#allocation14 + $0xd0] sm:$0xff]
        %v6214 = vld [vmem:[#allocation14 + $0xd8] sm:$0xff]
        %v6215 = vld [vmem:[#allocation14 + $0xe0] sm:$0xff]
        %v6216 = vld [vmem:[#allocation14 + $0xe8] sm:$0xff]
        %v6217 = vld [vmem:[#allocation14 + $0xf0] sm:$0xff]
        %v6218 = vld [vmem:[#allocation14 + $0xf8] sm:$0xff]
        %v6219 = vld [vmem:[%s10] sm:$0xf]
        %v6221 = vperm.slane %v6219, 0
        %v6222 = vperm.slane %v6219, 1
        %v6223 = vperm.slane %v6219, 2
        %v6224 = vperm.slane %v6219, 3
        %v6261 = vunpack.c.l.b16 %v6187
        %v6262 = vunpack.c.h.b16 %v6187
        %v6263 = vunpack.c.l.b16 %v6188
        %v6264 = vunpack.c.h.b16 %v6188
        %v6265 = vunpack.c.l.b16 %v6189
        %v6266 = vunpack.c.h.b16 %v6189
        %v6267 = vunpack.c.l.b16 %v6190
        %v6268 = vunpack.c.h.b16 %v6190
        %v6269 = vunpack.c.l.b16 %v6191
        %v6270 = vunpack.c.h.b16 %v6191
        %v6271 = vunpack.c.l.b16 %v6192
        %v6272 = vunpack.c.h.b16 %v6192
        %v6273 = vunpack.c.l.b16 %v6193
        %v6274 = vunpack.c.h.b16 %v6193
        %v6275 = vunpack.c.l.b16 %v6194
        %v6276 = vunpack.c.h.b16 %v6194
        %v6277 = vunpack.c.l.b16 %v6195
        %v6278 = vunpack.c.h.b16 %v6195
        %v6279 = vunpack.c.l.b16 %v6196
        %v6280 = vunpack.c.h.b16 %v6196
        %v6281 = vunpack.c.l.b16 %v6197
        %v6282 = vunpack.c.h.b16 %v6197
        %v6283 = vunpack.c.l.b16 %v6198
        %v6284 = vunpack.c.h.b16 %v6198
        %v6285 = vunpack.c.l.b16 %v6199
        %v6286 = vunpack.c.h.b16 %v6199
        %v6287 = vunpack.c.l.b16 %v6200
        %v6288 = vunpack.c.h.b16 %v6200
        %v6289 = vunpack.c.l.b16 %v6201
        %v6290 = vunpack.c.h.b16 %v6201
        %v6291 = vunpack.c.l.b16 %v6202
        %v6292 = vunpack.c.h.b16 %v6202
        %v6293 = vunpack.c.l.b16 %v6203
        %v6294 = vunpack.c.h.b16 %v6203
        %v6295 = vunpack.c.l.b16 %v6204
        %v6296 = vunpack.c.h.b16 %v6204
        %v6297 = vunpack.c.l.b16 %v6205
        %v6298 = vunpack.c.h.b16 %v6205
        %v6299 = vunpack.c.l.b16 %v6206
        %v6300 = vunpack.c.h.b16 %v6206
        %v6301 = vunpack.c.l.b16 %v6207
        %v6302 = vunpack.c.h.b16 %v6207
        %v6303 = vunpack.c.l.b16 %v6208
        %v6304 = vunpack.c.h.b16 %v6208
        %v6305 = vunpack.c.l.b16 %v6209
        %v6306 = vunpack.c.h.b16 %v6209
        %v6307 = vunpack.c.l.b16 %v6210
        %v6308 = vunpack.c.h.b16 %v6210
        %v6309 = vunpack.c.l.b16 %v6211
        %v6310 = vunpack.c.h.b16 %v6211
        %v6311 = vunpack.c.l.b16 %v6212
        %v6312 = vunpack.c.h.b16 %v6212
        %v6313 = vunpack.c.l.b16 %v6213
        %v6314 = vunpack.c.h.b16 %v6213
        %v6315 = vunpack.c.l.b16 %v6214
        %v6316 = vunpack.c.h.b16 %v6214
        %v6317 = vunpack.c.l.b16 %v6215
        %v6318 = vunpack.c.h.b16 %v6215
        %v6319 = vunpack.c.l.b16 %v6216
        %v6320 = vunpack.c.h.b16 %v6216
        %v6321 = vunpack.c.l.b16 %v6217
        %v6322 = vunpack.c.h.b16 %v6217
        %v6323 = vunpack.c.l.b16 %v6218
        %v6324 = vunpack.c.h.b16 %v6218
        %v6325 = vpack.c.b16 %v6265, %v6261
        %v6326 = vpack.c.b16 %v6266, %v6262
        %v6327 = vpack.c.b16 %v6267, %v6263
        %v6328 = vpack.c.b16 %v6268, %v6264
        %v6329 = vpack.c.b16 %v6273, %v6269
        %v6330 = vpack.c.b16 %v6274, %v6270
        %v6331 = vpack.c.b16 %v6275, %v6271
        %v6332 = vpack.c.b16 %v6276, %v6272
        %v6333 = vpack.c.b16 %v6281, %v6277
        %v6334 = vpack.c.b16 %v6282, %v6278
        %v6335 = vpack.c.b16 %v6283, %v6279
        %v6336 = vpack.c.b16 %v6284, %v6280
        %v6337 = vpack.c.b16 %v6289, %v6285
        %v6338 = vpack.c.b16 %v6290, %v6286
        %v6339 = vpack.c.b16 %v6291, %v6287
        %v6340 = vpack.c.b16 %v6292, %v6288
        %v6341 = vpack.c.b16 %v6297, %v6293
        %v6342 = vpack.c.b16 %v6298, %v6294
        %v6343 = vpack.c.b16 %v6299, %v6295
        %v6344 = vpack.c.b16 %v6300, %v6296
        %v6345 = vpack.c.b16 %v6305, %v6301
        %v6346 = vpack.c.b16 %v6306, %v6302
        %v6347 = vpack.c.b16 %v6307, %v6303
        %v6348 = vpack.c.b16 %v6308, %v6304
        %v6349 = vpack.c.b16 %v6313, %v6309
        %v6350 = vpack.c.b16 %v6314, %v6310
        %v6351 = vpack.c.b16 %v6315, %v6311
        %v6352 = vpack.c.b16 %v6316, %v6312
        %v6353 = vpack.c.b16 %v6321, %v6317
        %v6354 = vpack.c.b16 %v6322, %v6318
        %v6355 = vpack.c.b16 %v6323, %v6319
        %v6356 = vpack.c.b16 %v6324, %v6320
        %6389 = vmatpush.bf16.msra.mxu0 %v6353
        %6390 = vmatpush.bf16.msra.mxu0 %v6349
        %6391 = vmatpush.bf16.msra.mxu0 %v6345
        %6392 = vmatpush.bf16.msra.mxu0 %v6341
        %6393 = vmatpush.bf16.msra.mxu0 %v6337
        %6394 = vmatpush.bf16.msra.mxu0 %v6333
        %6395 = vmatpush.bf16.msra.mxu0 %v6329
        %6396 = vmatpush.bf16.msra.mxu0 %v6325
        %6397 = vmatmul.bf16.gmra.mxu0 %v6179
        %v6398 = vpop.f32.mrf.mxu0
        %v6399 = vadd.f32 %v6221, %v6398
        %v6400 = vpop.f32.mrf.mxu0
        %v6401 = vadd.f32 %v6221, %v6400
        %6402 = vmatmul.bf16.gmra.mxu0 %v6180
        %v6403 = vpop.f32.mrf.mxu0
        %v6404 = vadd.f32 %v6221, %v6403
        %v6405 = vpop.f32.mrf.mxu0
        %v6406 = vadd.f32 %v6221, %v6405
        %6407 = vmatmul.bf16.gmra.mxu0 %v6181
        %v6408 = vpop.f32.mrf.mxu0
        %v6409 = vadd.f32 %v6221, %v6408
        %v6410 = vpop.f32.mrf.mxu0
        %v6411 = vadd.f32 %v6221, %v6410
        %6412 = vmatmul.bf16.gmra.mxu0 %v6182
        %v6413 = vpop.f32.mrf.mxu0
        %v6414 = vadd.f32 %v6221, %v6413
        %v6415 = vpop.f32.mrf.mxu0
        %v6416 = vadd.f32 %v6221, %v6415
        %6417 = vmatmul.bf16.gmra.mxu0 %v6183
        %v6418 = vpop.f32.mrf.mxu0
        %v6419 = vadd.f32 %v6221, %v6418
        %v6420 = vpop.f32.mrf.mxu0
        %v6421 = vadd.f32 %v6221, %v6420
        %6422 = vmatmul.bf16.gmra.mxu0 %v6184
        %v6423 = vpop.f32.mrf.mxu0
        %v6424 = vadd.f32 %v6221, %v6423
        %v6425 = vpop.f32.mrf.mxu0
        %v6426 = vadd.f32 %v6221, %v6425
        %6427 = vmatmul.bf16.gmra.mxu0 %v6185
        %v6428 = vpop.f32.mrf.mxu0
        %v6429 = vadd.f32 %v6221, %v6428
        %v6430 = vpop.f32.mrf.mxu0
        %v6431 = vadd.f32 %v6221, %v6430
        %6432 = vmatmul.bf16.gmra.mxu0 %v6186
        %v6433 = vpop.f32.mrf.mxu0
        %v6434 = vadd.f32 %v6221, %v6433
        %v6435 = vpop.f32.mrf.mxu0
        %v6436 = vadd.f32 %v6221, %v6435
        %6437 = vdwg.mxu0
        %6438 = vmatpush.bf16.msra.mxu0 %v6354
        %6439 = vmatpush.bf16.msra.mxu0 %v6350
        %6440 = vmatpush.bf16.msra.mxu0 %v6346
        %6441 = vmatpush.bf16.msra.mxu0 %v6342
        %6442 = vmatpush.bf16.msra.mxu0 %v6338
        %6443 = vmatpush.bf16.msra.mxu0 %v6334
        %6444 = vmatpush.bf16.msra.mxu0 %v6330
        %6445 = vmatpush.bf16.msra.mxu0 %v6326
        %6446 = vmatmul.bf16.gmra.mxu0 %v6179
        %v6447 = vpop.f32.mrf.mxu0
        %v6448 = vadd.f32 %v6222, %v6447
        %v6449 = vpop.f32.mrf.mxu0
        %v6450 = vadd.f32 %v6222, %v6449
        %6451 = vmatmul.bf16.gmra.mxu0 %v6180
        %v6452 = vpop.f32.mrf.mxu0
        %v6453 = vadd.f32 %v6222, %v6452
        %v6454 = vpop.f32.mrf.mxu0
        %v6455 = vadd.f32 %v6222, %v6454
        %6456 = vmatmul.bf16.gmra.mxu0 %v6181
        %v6457 = vpop.f32.mrf.mxu0
        %v6458 = vadd.f32 %v6222, %v6457
        %v6459 = vpop.f32.mrf.mxu0
        %v6460 = vadd.f32 %v6222, %v6459
        %6461 = vmatmul.bf16.gmra.mxu0 %v6182
        %v6462 = vpop.f32.mrf.mxu0
        %v6463 = vadd.f32 %v6222, %v6462
        %v6464 = vpop.f32.mrf.mxu0
        %v6465 = vadd.f32 %v6222, %v6464
        %6466 = vmatmul.bf16.gmra.mxu0 %v6183
        %v6467 = vpop.f32.mrf.mxu0
        %v6468 = vadd.f32 %v6222, %v6467
        %v6469 = vpop.f32.mrf.mxu0
        %v6470 = vadd.f32 %v6222, %v6469
        %6471 = vmatmul.bf16.gmra.mxu0 %v6184
        %v6472 = vpop.f32.mrf.mxu0
        %v6473 = vadd.f32 %v6222, %v6472
        %v6474 = vpop.f32.mrf.mxu0
        %v6475 = vadd.f32 %v6222, %v6474
        %6476 = vmatmul.bf16.gmra.mxu0 %v6185
        %v6477 = vpop.f32.mrf.mxu0
        %v6478 = vadd.f32 %v6222, %v6477
        %v6479 = vpop.f32.mrf.mxu0
        %v6480 = vadd.f32 %v6222, %v6479
        %6481 = vmatmul.bf16.gmra.mxu0 %v6186
        %v6482 = vpop.f32.mrf.mxu0
        %v6483 = vadd.f32 %v6222, %v6482
        %v6484 = vpop.f32.mrf.mxu0
        %v6485 = vadd.f32 %v6222, %v6484
        %6486 = vdwg.mxu0
        %6487 = vmatpush.bf16.msra.mxu0 %v6355
        %6488 = vmatpush.bf16.msra.mxu0 %v6351
        %6489 = vmatpush.bf16.msra.mxu0 %v6347
        %6490 = vmatpush.bf16.msra.mxu0 %v6343
        %6491 = vmatpush.bf16.msra.mxu0 %v6339
        %6492 = vmatpush.bf16.msra.mxu0 %v6335
        %6493 = vmatpush.bf16.msra.mxu0 %v6331
        %6494 = vmatpush.bf16.msra.mxu0 %v6327
        %6495 = vmatmul.bf16.gmra.mxu0 %v6179
        %v6496 = vpop.f32.mrf.mxu0
        %v6497 = vadd.f32 %v6223, %v6496
        %v6498 = vpop.f32.mrf.mxu0
        %v6499 = vadd.f32 %v6223, %v6498
        %6500 = vmatmul.bf16.gmra.mxu0 %v6180
        %v6501 = vpop.f32.mrf.mxu0
        %v6502 = vadd.f32 %v6223, %v6501
        %v6503 = vpop.f32.mrf.mxu0
        %v6504 = vadd.f32 %v6223, %v6503
        %6505 = vmatmul.bf16.gmra.mxu0 %v6181
        %v6506 = vpop.f32.mrf.mxu0
        %v6507 = vadd.f32 %v6223, %v6506
        %v6508 = vpop.f32.mrf.mxu0
        %v6509 = vadd.f32 %v6223, %v6508
        %6510 = vmatmul.bf16.gmra.mxu0 %v6182
        %v6511 = vpop.f32.mrf.mxu0
        %v6512 = vadd.f32 %v6223, %v6511
        %v6513 = vpop.f32.mrf.mxu0
        %v6514 = vadd.f32 %v6223, %v6513
        %6515 = vmatmul.bf16.gmra.mxu0 %v6183
        %v6516 = vpop.f32.mrf.mxu0
        %v6517 = vadd.f32 %v6223, %v6516
        %v6518 = vpop.f32.mrf.mxu0
        %v6519 = vadd.f32 %v6223, %v6518
        %6520 = vmatmul.bf16.gmra.mxu0 %v6184
        %v6521 = vpop.f32.mrf.mxu0
        %v6522 = vadd.f32 %v6223, %v6521
        %v6523 = vpop.f32.mrf.mxu0
        %v6524 = vadd.f32 %v6223, %v6523
        %6525 = vmatmul.bf16.gmra.mxu0 %v6185
        %v6526 = vpop.f32.mrf.mxu0
        %v6527 = vadd.f32 %v6223, %v6526
        %v6528 = vpop.f32.mrf.mxu0
        %v6529 = vadd.f32 %v6223, %v6528
        %6530 = vmatmul.bf16.gmra.mxu0 %v6186
        %v6531 = vpop.f32.mrf.mxu0
        %v6532 = vadd.f32 %v6223, %v6531
        %v6533 = vpop.f32.mrf.mxu0
        %v6534 = vadd.f32 %v6223, %v6533
        %6535 = vdwg.mxu0
        %6536 = vmatpush.bf16.msra.mxu0 %v6356
        %6537 = vmatpush.bf16.msra.mxu0 %v6352
        %6538 = vmatpush.bf16.msra.mxu0 %v6348
        %6539 = vmatpush.bf16.msra.mxu0 %v6344
        %6540 = vmatpush.bf16.msra.mxu0 %v6340
        %6541 = vmatpush.bf16.msra.mxu0 %v6336
        %6542 = vmatpush.bf16.msra.mxu0 %v6332
        %6543 = vmatpush.bf16.msra.mxu0 %v6328
        %6544 = vmatmul.bf16.gmra.mxu0 %v6179
        %v6545 = vpop.f32.mrf.mxu0
        %v6546 = vadd.f32 %v6224, %v6545
        %v6547 = vpop.f32.mrf.mxu0
        %v6548 = vadd.f32 %v6224, %v6547
        %6549 = vmatmul.bf16.gmra.mxu0 %v6180
        %v6550 = vpop.f32.mrf.mxu0
        %v6551 = vadd.f32 %v6224, %v6550
        %v6552 = vpop.f32.mrf.mxu0
        %v6553 = vadd.f32 %v6224, %v6552
        %6554 = vmatmul.bf16.gmra.mxu0 %v6181
        %v6555 = vpop.f32.mrf.mxu0
        %v6556 = vadd.f32 %v6224, %v6555
        %v6557 = vpop.f32.mrf.mxu0
        %v6558 = vadd.f32 %v6224, %v6557
        %6559 = vmatmul.bf16.gmra.mxu0 %v6182
        %v6560 = vpop.f32.mrf.mxu0
        %v6561 = vadd.f32 %v6224, %v6560
        %v6562 = vpop.f32.mrf.mxu0
        %v6563 = vadd.f32 %v6224, %v6562
        %6564 = vmatmul.bf16.gmra.mxu0 %v6183
        %v6565 = vpop.f32.mrf.mxu0
        %v6566 = vadd.f32 %v6224, %v6565
        %v6567 = vpop.f32.mrf.mxu0
        %v6568 = vadd.f32 %v6224, %v6567
        %6569 = vmatmul.bf16.gmra.mxu0 %v6184
        %v6570 = vpop.f32.mrf.mxu0
        %v6571 = vadd.f32 %v6224, %v6570
        %v6572 = vpop.f32.mrf.mxu0
        %v6573 = vadd.f32 %v6224, %v6572
        %6574 = vmatmul.bf16.gmra.mxu0 %v6185
        %v6575 = vpop.f32.mrf.mxu0
        %v6576 = vadd.f32 %v6224, %v6575
        %v6577 = vpop.f32.mrf.mxu0
        %v6578 = vadd.f32 %v6224, %v6577
        %6579 = vmatmul.bf16.gmra.mxu0 %v6186
        %v6580 = vpop.f32.mrf.mxu0
        %v6581 = vadd.f32 %v6224, %v6580
        %v6582 = vpop.f32.mrf.mxu0
        %v6583 = vadd.f32 %v6224, %v6582
        %6584 = vdwg.mxu0
        %v6585 = vmax.f32 %v6399, 0.0
        %v6586 = vmax.f32 %v6448, 0.0
        %v6587 = vmax.f32 %v6497, 0.0
        %v6588 = vmax.f32 %v6546, 0.0
        %v6589 = vmax.f32 %v6401, 0.0
        %v6590 = vmax.f32 %v6450, 0.0
        %v6591 = vmax.f32 %v6499, 0.0
        %v6592 = vmax.f32 %v6548, 0.0
        %v6593 = vmax.f32 %v6404, 0.0
        %v6594 = vmax.f32 %v6453, 0.0
        %v6595 = vmax.f32 %v6502, 0.0
        %v6596 = vmax.f32 %v6551, 0.0
        %v6597 = vmax.f32 %v6406, 0.0
        %v6598 = vmax.f32 %v6455, 0.0
        %v6599 = vmax.f32 %v6504, 0.0
        %v6600 = vmax.f32 %v6553, 0.0
        %v6601 = vmax.f32 %v6409, 0.0
        %v6602 = vmax.f32 %v6458, 0.0
        %v6603 = vmax.f32 %v6507, 0.0
        %v6604 = vmax.f32 %v6556, 0.0
        %v6605 = vmax.f32 %v6411, 0.0
        %v6606 = vmax.f32 %v6460, 0.0
        %v6607 = vmax.f32 %v6509, 0.0
        %v6608 = vmax.f32 %v6558, 0.0
        %v6609 = vmax.f32 %v6414, 0.0
        %v6610 = vmax.f32 %v6463, 0.0
        %v6611 = vmax.f32 %v6512, 0.0
        %v6612 = vmax.f32 %v6561, 0.0
        %v6613 = vmax.f32 %v6416, 0.0
        %v6614 = vmax.f32 %v6465, 0.0
        %v6615 = vmax.f32 %v6514, 0.0
        %v6616 = vmax.f32 %v6563, 0.0
        %v6617 = vmax.f32 %v6419, 0.0
        %v6618 = vmax.f32 %v6468, 0.0
        %v6619 = vmax.f32 %v6517, 0.0
        %v6620 = vmax.f32 %v6566, 0.0
        %v6621 = vmax.f32 %v6421, 0.0
        %v6622 = vmax.f32 %v6470, 0.0
        %v6623 = vmax.f32 %v6519, 0.0
        %v6624 = vmax.f32 %v6568, 0.0
        %v6625 = vmax.f32 %v6424, 0.0
        %v6626 = vmax.f32 %v6473, 0.0
        %v6627 = vmax.f32 %v6522, 0.0
        %v6628 = vmax.f32 %v6571, 0.0
        %v6629 = vmax.f32 %v6426, 0.0
        %v6630 = vmax.f32 %v6475, 0.0
        %v6631 = vmax.f32 %v6524, 0.0
        %v6632 = vmax.f32 %v6573, 0.0
        %v6633 = vmax.f32 %v6429, 0.0
        %v6634 = vmax.f32 %v6478, 0.0
        %v6635 = vmax.f32 %v6527, 0.0
        %v6636 = vmax.f32 %v6576, 0.0
        %v6637 = vmax.f32 %v6431, 0.0
        %v6638 = vmax.f32 %v6480, 0.0
        %v6639 = vmax.f32 %v6529, 0.0
        %v6640 = vmax.f32 %v6578, 0.0
        %v6641 = vmax.f32 %v6434, 0.0
        %v6642 = vmax.f32 %v6483, 0.0
        %v6643 = vmax.f32 %v6532, 0.0
        %v6644 = vmax.f32 %v6581, 0.0
        %v6645 = vmax.f32 %v6436, 0.0
        %v6646 = vmax.f32 %v6485, 0.0
        %v6647 = vmax.f32 %v6534, 0.0
        %v6648 = vmax.f32 %v6583, 0.0
        %v6649 = vpack.c.bf16 %v6589, %v6585
        %v6650 = vpack.c.bf16 %v6590, %v6586
        %v6651 = vpack.c.bf16 %v6591, %v6587
        %v6652 = vpack.c.bf16 %v6592, %v6588
        %v6653 = vpack.c.bf16 %v6597, %v6593
        %v6654 = vpack.c.bf16 %v6598, %v6594
        %v6655 = vpack.c.bf16 %v6599, %v6595
        %v6656 = vpack.c.bf16 %v6600, %v6596
        %v6657 = vpack.c.bf16 %v6605, %v6601
        %v6658 = vpack.c.bf16 %v6606, %v6602
        %v6659 = vpack.c.bf16 %v6607, %v6603
        %v6660 = vpack.c.bf16 %v6608, %v6604
        %v6661 = vpack.c.bf16 %v6613, %v6609
        %v6662 = vpack.c.bf16 %v6614, %v6610
        %v6663 = vpack.c.bf16 %v6615, %v6611
        %v6664 = vpack.c.bf16 %v6616, %v6612
        %v6665 = vpack.c.bf16 %v6621, %v6617
        %v6666 = vpack.c.bf16 %v6622, %v6618
        %v6667 = vpack.c.bf16 %v6623, %v6619
        %v6668 = vpack.c.bf16 %v6624, %v6620
        %v6669 = vpack.c.bf16 %v6629, %v6625
        %v6670 = vpack.c.bf16 %v6630, %v6626
        %v6671 = vpack.c.bf16 %v6631, %v6627
        %v6672 = vpack.c.bf16 %v6632, %v6628
        %v6673 = vpack.c.bf16 %v6637, %v6633
        %v6674 = vpack.c.bf16 %v6638, %v6634
        %v6675 = vpack.c.bf16 %v6639, %v6635
        %v6676 = vpack.c.bf16 %v6640, %v6636
        %v6677 = vpack.c.bf16 %v6645, %v6641
        %v6678 = vpack.c.bf16 %v6646, %v6642
        %v6679 = vpack.c.bf16 %v6647, %v6643
        %v6680 = vpack.c.bf16 %v6648, %v6644
        %v6681 = vld [vmem:[#allocation15] sm:$0xf]
        %v6682 = vld [vmem:[#allocation15 + $0x4] sm:$0xf]
        %v6683 = vld [vmem:[#allocation15 + $0x8] sm:$0xf]
        %v6684 = vld [vmem:[#allocation15 + $0xc] sm:$0xf]
        %v6685 = vld [vmem:[#allocation15 + $0x10] sm:$0xf]
        %v6686 = vld [vmem:[#allocation15 + $0x14] sm:$0xf]
        %v6687 = vld [vmem:[#allocation15 + $0x18] sm:$0xf]
        %v6688 = vld [vmem:[#allocation15 + $0x1c] sm:$0xf]
        %v6689 = vld [vmem:[#allocation15 + $0x20] sm:$0xf]
        %v6690 = vld [vmem:[#allocation15 + $0x24] sm:$0xf]
        %v6691 = vld [vmem:[#allocation15 + $0x28] sm:$0xf]
        %v6692 = vld [vmem:[#allocation15 + $0x2c] sm:$0xf]
        %v6693 = vld [vmem:[#allocation15 + $0x30] sm:$0xf]
        %v6694 = vld [vmem:[#allocation15 + $0x34] sm:$0xf]
        %v6695 = vld [vmem:[#allocation15 + $0x38] sm:$0xf]
        %v6696 = vld [vmem:[#allocation15 + $0x3c] sm:$0xf]
        %v6697 = vld [vmem:[#allocation15 + $0x40] sm:$0xf]
        %v6698 = vld [vmem:[#allocation15 + $0x44] sm:$0xf]
        %v6699 = vld [vmem:[#allocation15 + $0x48] sm:$0xf]
        %v6700 = vld [vmem:[#allocation15 + $0x4c] sm:$0xf]
        %v6701 = vld [vmem:[#allocation15 + $0x50] sm:$0xf]
        %v6702 = vld [vmem:[#allocation15 + $0x54] sm:$0xf]
        %v6703 = vld [vmem:[#allocation15 + $0x58] sm:$0xf]
        %v6704 = vld [vmem:[#allocation15 + $0x5c] sm:$0xf]
        %v6705 = vld [vmem:[#allocation15 + $0x60] sm:$0xf]
        %v6706 = vld [vmem:[#allocation15 + $0x64] sm:$0xf]
        %v6707 = vld [vmem:[#allocation15 + $0x68] sm:$0xf]
        %v6708 = vld [vmem:[#allocation15 + $0x6c] sm:$0xf]
        %v6709 = vld [vmem:[#allocation15 + $0x70] sm:$0xf]
        %v6710 = vld [vmem:[#allocation15 + $0x74] sm:$0xf]
        %v6711 = vld [vmem:[#allocation15 + $0x78] sm:$0xf]
        %v6712 = vld [vmem:[#allocation15 + $0x7c] sm:$0xf]
        %v6713 = vld [vmem:[#allocation15 + $0x80] sm:$0xf]
        %v6714 = vld [vmem:[#allocation15 + $0x84] sm:$0xf]
        %v6715 = vld [vmem:[#allocation15 + $0x88] sm:$0xf]
        %v6716 = vld [vmem:[#allocation15 + $0x8c] sm:$0xf]
        %v6717 = vld [vmem:[#allocation15 + $0x90] sm:$0xf]
        %v6718 = vld [vmem:[#allocation15 + $0x94] sm:$0xf]
        %v6719 = vld [vmem:[#allocation15 + $0x98] sm:$0xf]
        %v6720 = vld [vmem:[#allocation15 + $0x9c] sm:$0xf]
        %v6721 = vld [vmem:[#allocation15 + $0xa0] sm:$0xf]
        %v6722 = vld [vmem:[#allocation15 + $0xa4] sm:$0xf]
        %v6723 = vld [vmem:[#allocation15 + $0xa8] sm:$0xf]
        %v6724 = vld [vmem:[#allocation15 + $0xac] sm:$0xf]
        %v6725 = vld [vmem:[#allocation15 + $0xb0] sm:$0xf]
        %v6726 = vld [vmem:[#allocation15 + $0xb4] sm:$0xf]
        %v6727 = vld [vmem:[#allocation15 + $0xb8] sm:$0xf]
        %v6728 = vld [vmem:[#allocation15 + $0xbc] sm:$0xf]
        %v6729 = vld [vmem:[#allocation15 + $0xc0] sm:$0xf]
        %v6730 = vld [vmem:[#allocation15 + $0xc4] sm:$0xf]
        %v6731 = vld [vmem:[#allocation15 + $0xc8] sm:$0xf]
        %v6732 = vld [vmem:[#allocation15 + $0xcc] sm:$0xf]
        %v6733 = vld [vmem:[#allocation15 + $0xd0] sm:$0xf]
        %v6734 = vld [vmem:[#allocation15 + $0xd4] sm:$0xf]
        %v6735 = vld [vmem:[#allocation15 + $0xd8] sm:$0xf]
        %v6736 = vld [vmem:[#allocation15 + $0xdc] sm:$0xf]
        %v6737 = vld [vmem:[#allocation15 + $0xe0] sm:$0xf]
        %v6738 = vld [vmem:[#allocation15 + $0xe4] sm:$0xf]
        %v6739 = vld [vmem:[#allocation15 + $0xe8] sm:$0xf]
        %v6740 = vld [vmem:[#allocation15 + $0xec] sm:$0xf]
        %v6741 = vld [vmem:[#allocation15 + $0xf0] sm:$0xf]
        %v6742 = vld [vmem:[#allocation15 + $0xf4] sm:$0xf]
        %v6743 = vld [vmem:[#allocation15 + $0xf8] sm:$0xf]
        %v6744 = vld [vmem:[#allocation15 + $0xfc] sm:$0xf]
        %v6745 = vld [vmem:[%s12] sm:$0x1]
        %v6747 = vperm.slane %v6745, 0
        %v6813 = vunpack.c.l.b16 %v6681
        %v6814 = vunpack.c.l.b16 %v6682
        %v6815 = vunpack.c.l.b16 %v6683
        %v6816 = vunpack.c.l.b16 %v6684
        %v6817 = vunpack.c.l.b16 %v6685
        %v6818 = vunpack.c.l.b16 %v6686
        %v6819 = vunpack.c.l.b16 %v6687
        %v6820 = vunpack.c.l.b16 %v6688
        %v6821 = vunpack.c.l.b16 %v6689
        %v6822 = vunpack.c.l.b16 %v6690
        %v6823 = vunpack.c.l.b16 %v6691
        %v6824 = vunpack.c.l.b16 %v6692
        %v6825 = vunpack.c.l.b16 %v6693
        %v6826 = vunpack.c.l.b16 %v6694
        %v6827 = vunpack.c.l.b16 %v6695
        %v6828 = vunpack.c.l.b16 %v6696
        %v6829 = vunpack.c.l.b16 %v6697
        %v6830 = vunpack.c.l.b16 %v6698
        %v6831 = vunpack.c.l.b16 %v6699
        %v6832 = vunpack.c.l.b16 %v6700
        %v6833 = vunpack.c.l.b16 %v6701
        %v6834 = vunpack.c.l.b16 %v6702
        %v6835 = vunpack.c.l.b16 %v6703
        %v6836 = vunpack.c.l.b16 %v6704
        %v6837 = vunpack.c.l.b16 %v6705
        %v6838 = vunpack.c.l.b16 %v6706
        %v6839 = vunpack.c.l.b16 %v6707
        %v6840 = vunpack.c.l.b16 %v6708
        %v6841 = vunpack.c.l.b16 %v6709
        %v6842 = vunpack.c.l.b16 %v6710
        %v6843 = vunpack.c.l.b16 %v6711
        %v6844 = vunpack.c.l.b16 %v6712
        %v6845 = vunpack.c.l.b16 %v6713
        %v6846 = vunpack.c.l.b16 %v6714
        %v6847 = vunpack.c.l.b16 %v6715
        %v6848 = vunpack.c.l.b16 %v6716
        %v6849 = vunpack.c.l.b16 %v6717
        %v6850 = vunpack.c.l.b16 %v6718
        %v6851 = vunpack.c.l.b16 %v6719
        %v6852 = vunpack.c.l.b16 %v6720
        %v6853 = vunpack.c.l.b16 %v6721
        %v6854 = vunpack.c.l.b16 %v6722
        %v6855 = vunpack.c.l.b16 %v6723
        %v6856 = vunpack.c.l.b16 %v6724
        %v6857 = vunpack.c.l.b16 %v6725
        %v6858 = vunpack.c.l.b16 %v6726
        %v6859 = vunpack.c.l.b16 %v6727
        %v6860 = vunpack.c.l.b16 %v6728
        %v6861 = vunpack.c.l.b16 %v6729
        %v6862 = vunpack.c.l.b16 %v6730
        %v6863 = vunpack.c.l.b16 %v6731
        %v6864 = vunpack.c.l.b16 %v6732
        %v6865 = vunpack.c.l.b16 %v6733
        %v6866 = vunpack.c.l.b16 %v6734
        %v6867 = vunpack.c.l.b16 %v6735
        %v6868 = vunpack.c.l.b16 %v6736
        %v6869 = vunpack.c.l.b16 %v6737
        %v6870 = vunpack.c.l.b16 %v6738
        %v6871 = vunpack.c.l.b16 %v6739
        %v6872 = vunpack.c.l.b16 %v6740
        %v6873 = vunpack.c.l.b16 %v6741
        %v6874 = vunpack.c.l.b16 %v6742
        %v6875 = vunpack.c.l.b16 %v6743
        %v6876 = vunpack.c.l.b16 %v6744
        %v6877 = vpack.c.b16 %v6814, %v6813
        %v6878 = vpack.c.b16 %v6816, %v6815
        %v6879 = vpack.c.b16 %v6818, %v6817
        %v6880 = vpack.c.b16 %v6820, %v6819
        %v6881 = vpack.c.b16 %v6822, %v6821
        %v6882 = vpack.c.b16 %v6824, %v6823
        %v6883 = vpack.c.b16 %v6826, %v6825
        %v6884 = vpack.c.b16 %v6828, %v6827
        %v6885 = vpack.c.b16 %v6830, %v6829
        %v6886 = vpack.c.b16 %v6832, %v6831
        %v6887 = vpack.c.b16 %v6834, %v6833
        %v6888 = vpack.c.b16 %v6836, %v6835
        %v6889 = vpack.c.b16 %v6838, %v6837
        %v6890 = vpack.c.b16 %v6840, %v6839
        %v6891 = vpack.c.b16 %v6842, %v6841
        %v6892 = vpack.c.b16 %v6844, %v6843
        %v6893 = vpack.c.b16 %v6846, %v6845
        %v6894 = vpack.c.b16 %v6848, %v6847
        %v6895 = vpack.c.b16 %v6850, %v6849
        %v6896 = vpack.c.b16 %v6852, %v6851
        %v6897 = vpack.c.b16 %v6854, %v6853
        %v6898 = vpack.c.b16 %v6856, %v6855
        %v6899 = vpack.c.b16 %v6858, %v6857
        %v6900 = vpack.c.b16 %v6860, %v6859
        %v6901 = vpack.c.b16 %v6862, %v6861
        %v6902 = vpack.c.b16 %v6864, %v6863
        %v6903 = vpack.c.b16 %v6866, %v6865
        %v6904 = vpack.c.b16 %v6868, %v6867
        %v6905 = vpack.c.b16 %v6870, %v6869
        %v6906 = vpack.c.b16 %v6872, %v6871
        %v6907 = vpack.c.b16 %v6874, %v6873
        %v6908 = vpack.c.b16 %v6876, %v6875
        %6941 = vmatpush.bf16.msra.mxu0 %v6884
        %6942 = vmatpush.bf16.msra.mxu0 %v6883
        %6943 = vmatpush.bf16.msra.mxu0 %v6882
        %6944 = vmatpush.bf16.msra.mxu0 %v6881
        %6945 = vmatpush.bf16.msra.mxu0 %v6880
        %6946 = vmatpush.bf16.msra.mxu0 %v6879
        %6947 = vmatpush.bf16.msra.mxu0 %v6878
        %6948 = vmatpush.bf16.msra.mxu0 %v6877
        %6949 = vmatmul.bf16.gmra.mxu0 %v6649
        %v6950 = vpop.f32.mrf.mxu0
        %v6951 = vadd.f32 %v6747, %v6950
        %v6952 = vpop.f32.mrf.mxu0
        %v6953 = vadd.f32 %v6747, %v6952
        %6954 = vmatmul.bf16.gmra.mxu0 %v6653
        %v6955 = vpop.f32.mrf.mxu0
        %v6956 = vadd.f32 %v6747, %v6955
        %v6957 = vpop.f32.mrf.mxu0
        %v6958 = vadd.f32 %v6747, %v6957
        %6959 = vmatmul.bf16.gmra.mxu0 %v6657
        %v6960 = vpop.f32.mrf.mxu0
        %v6961 = vadd.f32 %v6747, %v6960
        %v6962 = vpop.f32.mrf.mxu0
        %v6963 = vadd.f32 %v6747, %v6962
        %6964 = vmatmul.bf16.gmra.mxu0 %v6661
        %v6965 = vpop.f32.mrf.mxu0
        %v6966 = vadd.f32 %v6747, %v6965
        %v6967 = vpop.f32.mrf.mxu0
        %v6968 = vadd.f32 %v6747, %v6967
        %6969 = vmatmul.bf16.gmra.mxu0 %v6665
        %v6970 = vpop.f32.mrf.mxu0
        %v6971 = vadd.f32 %v6747, %v6970
        %v6972 = vpop.f32.mrf.mxu0
        %v6973 = vadd.f32 %v6747, %v6972
        %6974 = vmatmul.bf16.gmra.mxu0 %v6669
        %v6975 = vpop.f32.mrf.mxu0
        %v6976 = vadd.f32 %v6747, %v6975
        %v6977 = vpop.f32.mrf.mxu0
        %v6978 = vadd.f32 %v6747, %v6977
        %6979 = vmatmul.bf16.gmra.mxu0 %v6673
        %v6980 = vpop.f32.mrf.mxu0
        %v6981 = vadd.f32 %v6747, %v6980
        %v6982 = vpop.f32.mrf.mxu0
        %v6983 = vadd.f32 %v6747, %v6982
        %6984 = vmatmul.bf16.gmra.mxu0 %v6677
        %v6985 = vpop.f32.mrf.mxu0
        %v6986 = vadd.f32 %v6747, %v6985
        %v6987 = vpop.f32.mrf.mxu0
        %v6988 = vadd.f32 %v6747, %v6987
        %6989 = vdwg.mxu0
        %6990 = vmatpush.bf16.msra.mxu0 %v6892
        %6991 = vmatpush.bf16.msra.mxu0 %v6891
        %6992 = vmatpush.bf16.msra.mxu0 %v6890
        %6993 = vmatpush.bf16.msra.mxu0 %v6889
        %6994 = vmatpush.bf16.msra.mxu0 %v6888
        %6995 = vmatpush.bf16.msra.mxu0 %v6887
        %6996 = vmatpush.bf16.msra.mxu0 %v6886
        %6997 = vmatpush.bf16.msra.mxu0 %v6885
        %6998 = vmatmul.bf16.gmra.mxu0 %v6650
        %v6999 = vpop.f32.mrf.mxu0
        %v7000 = vadd.f32 %v6951, %v6999
        %v7001 = vpop.f32.mrf.mxu0
        %v7002 = vadd.f32 %v6953, %v7001
        %7003 = vmatmul.bf16.gmra.mxu0 %v6654
        %v7004 = vpop.f32.mrf.mxu0
        %v7005 = vadd.f32 %v6956, %v7004
        %v7006 = vpop.f32.mrf.mxu0
        %v7007 = vadd.f32 %v6958, %v7006
        %7008 = vmatmul.bf16.gmra.mxu0 %v6658
        %v7009 = vpop.f32.mrf.mxu0
        %v7010 = vadd.f32 %v6961, %v7009
        %v7011 = vpop.f32.mrf.mxu0
        %v7012 = vadd.f32 %v6963, %v7011
        %7013 = vmatmul.bf16.gmra.mxu0 %v6662
        %v7014 = vpop.f32.mrf.mxu0
        %v7015 = vadd.f32 %v6966, %v7014
        %v7016 = vpop.f32.mrf.mxu0
        %v7017 = vadd.f32 %v6968, %v7016
        %7018 = vmatmul.bf16.gmra.mxu0 %v6666
        %v7019 = vpop.f32.mrf.mxu0
        %v7020 = vadd.f32 %v6971, %v7019
        %v7021 = vpop.f32.mrf.mxu0
        %v7022 = vadd.f32 %v6973, %v7021
        %7023 = vmatmul.bf16.gmra.mxu0 %v6670
        %v7024 = vpop.f32.mrf.mxu0
        %v7025 = vadd.f32 %v6976, %v7024
        %v7026 = vpop.f32.mrf.mxu0
        %v7027 = vadd.f32 %v6978, %v7026
        %7028 = vmatmul.bf16.gmra.mxu0 %v6674
        %v7029 = vpop.f32.mrf.mxu0
        %v7030 = vadd.f32 %v6981, %v7029
        %v7031 = vpop.f32.mrf.mxu0
        %v7032 = vadd.f32 %v6983, %v7031
        %7033 = vmatmul.bf16.gmra.mxu0 %v6678
        %v7034 = vpop.f32.mrf.mxu0
        %v7035 = vadd.f32 %v6986, %v7034
        %v7036 = vpop.f32.mrf.mxu0
        %v7037 = vadd.f32 %v6988, %v7036
        %7038 = vdwg.mxu0
        %7039 = vmatpush.bf16.msra.mxu0 %v6900
        %7040 = vmatpush.bf16.msra.mxu0 %v6899
        %7041 = vmatpush.bf16.msra.mxu0 %v6898
        %7042 = vmatpush.bf16.msra.mxu0 %v6897
        %7043 = vmatpush.bf16.msra.mxu0 %v6896
        %7044 = vmatpush.bf16.msra.mxu0 %v6895
        %7045 = vmatpush.bf16.msra.mxu0 %v6894
        %7046 = vmatpush.bf16.msra.mxu0 %v6893
        %7047 = vmatmul.bf16.gmra.mxu0 %v6651
        %v7048 = vpop.f32.mrf.mxu0
        %v7049 = vadd.f32 %v7000, %v7048
        %v7050 = vpop.f32.mrf.mxu0
        %v7051 = vadd.f32 %v7002, %v7050
        %7052 = vmatmul.bf16.gmra.mxu0 %v6655
        %v7053 = vpop.f32.mrf.mxu0
        %v7054 = vadd.f32 %v7005, %v7053
        %v7055 = vpop.f32.mrf.mxu0
        %v7056 = vadd.f32 %v7007, %v7055
        %7057 = vmatmul.bf16.gmra.mxu0 %v6659
        %v7058 = vpop.f32.mrf.mxu0
        %v7059 = vadd.f32 %v7010, %v7058
        %v7060 = vpop.f32.mrf.mxu0
        %v7061 = vadd.f32 %v7012, %v7060
        %7062 = vmatmul.bf16.gmra.mxu0 %v6663
        %v7063 = vpop.f32.mrf.mxu0
        %v7064 = vadd.f32 %v7015, %v7063
        %v7065 = vpop.f32.mrf.mxu0
        %v7066 = vadd.f32 %v7017, %v7065
        %7067 = vmatmul.bf16.gmra.mxu0 %v6667
        %v7068 = vpop.f32.mrf.mxu0
        %v7069 = vadd.f32 %v7020, %v7068
        %v7070 = vpop.f32.mrf.mxu0
        %v7071 = vadd.f32 %v7022, %v7070
        %7072 = vmatmul.bf16.gmra.mxu0 %v6671
        %v7073 = vpop.f32.mrf.mxu0
        %v7074 = vadd.f32 %v7025, %v7073
        %v7075 = vpop.f32.mrf.mxu0
        %v7076 = vadd.f32 %v7027, %v7075
        %7077 = vmatmul.bf16.gmra.mxu0 %v6675
        %v7078 = vpop.f32.mrf.mxu0
        %v7079 = vadd.f32 %v7030, %v7078
        %v7080 = vpop.f32.mrf.mxu0
        %v7081 = vadd.f32 %v7032, %v7080
        %7082 = vmatmul.bf16.gmra.mxu0 %v6679
        %v7083 = vpop.f32.mrf.mxu0
        %v7084 = vadd.f32 %v7035, %v7083
        %v7085 = vpop.f32.mrf.mxu0
        %v7086 = vadd.f32 %v7037, %v7085
        %7087 = vdwg.mxu0
        %7088 = vmatpush.bf16.msra.mxu0 %v6908
        %7089 = vmatpush.bf16.msra.mxu0 %v6907
        %7090 = vmatpush.bf16.msra.mxu0 %v6906
        %7091 = vmatpush.bf16.msra.mxu0 %v6905
        %7092 = vmatpush.bf16.msra.mxu0 %v6904
        %7093 = vmatpush.bf16.msra.mxu0 %v6903
        %7094 = vmatpush.bf16.msra.mxu0 %v6902
        %7095 = vmatpush.bf16.msra.mxu0 %v6901
        %7096 = vmatmul.bf16.gmra.mxu0 %v6652
        %v7097 = vpop.f32.mrf.mxu0
        %v7098 = vadd.f32 %v7049, %v7097
        %v7099 = vpop.f32.mrf.mxu0
        %v7100 = vadd.f32 %v7051, %v7099
        %7101 = vmatmul.bf16.gmra.mxu0 %v6656
        %v7102 = vpop.f32.mrf.mxu0
        %v7103 = vadd.f32 %v7054, %v7102
        %v7104 = vpop.f32.mrf.mxu0
        %v7105 = vadd.f32 %v7056, %v7104
        %7106 = vmatmul.bf16.gmra.mxu0 %v6660
        %v7107 = vpop.f32.mrf.mxu0
        %v7108 = vadd.f32 %v7059, %v7107
        %v7109 = vpop.f32.mrf.mxu0
        %v7110 = vadd.f32 %v7061, %v7109
        %7111 = vmatmul.bf16.gmra.mxu0 %v6664
        %v7112 = vpop.f32.mrf.mxu0
        %v7113 = vadd.f32 %v7064, %v7112
        %v7114 = vpop.f32.mrf.mxu0
        %v7115 = vadd.f32 %v7066, %v7114
        %7116 = vmatmul.bf16.gmra.mxu0 %v6668
        %v7117 = vpop.f32.mrf.mxu0
        %v7118 = vadd.f32 %v7069, %v7117
        %v7119 = vpop.f32.mrf.mxu0
        %v7120 = vadd.f32 %v7071, %v7119
        %7121 = vmatmul.bf16.gmra.mxu0 %v6672
        %v7122 = vpop.f32.mrf.mxu0
        %v7123 = vadd.f32 %v7074, %v7122
        %v7124 = vpop.f32.mrf.mxu0
        %v7125 = vadd.f32 %v7076, %v7124
        %7126 = vmatmul.bf16.gmra.mxu0 %v6676
        %v7127 = vpop.f32.mrf.mxu0
        %v7128 = vadd.f32 %v7079, %v7127
        %v7129 = vpop.f32.mrf.mxu0
        %v7130 = vadd.f32 %v7081, %v7129
        %7131 = vmatmul.bf16.gmra.mxu0 %v6680
        %v7132 = vpop.f32.mrf.mxu0
        %v7133 = vadd.f32 %v7084, %v7132
        %v7134 = vpop.f32.mrf.mxu0
        %v7135 = vadd.f32 %v7086, %v7134
        %7136 = vdwg.mxu0
        %v7137 = vadd.f32 %v5803, %v7098
        %v7138 = vadd.f32 %v5804, %v7100
        %v7139 = vadd.f32 %v5805, %v7103
        %v7140 = vadd.f32 %v5806, %v7105
        %v7141 = vadd.f32 %v5807, %v7108
        %v7142 = vadd.f32 %v5808, %v7110
        %v7143 = vadd.f32 %v5809, %v7113
        %v7144 = vadd.f32 %v5810, %v7115
        %v7145 = vadd.f32 %v5811, %v7118
        %v7146 = vadd.f32 %v5812, %v7120
        %v7147 = vadd.f32 %v5813, %v7123
        %v7148 = vadd.f32 %v5814, %v7125
        %v7149 = vadd.f32 %v5815, %v7128
        %v7150 = vadd.f32 %v5816, %v7130
        %v7151 = vadd.f32 %v5817, %v7133
        %v7152 = vadd.f32 %v5818, %v7135
        %7153 = vst [vmem:[%s615] sm:$0xff] %v7137
        %7154 = vst [vmem:[%s615 + $0x8] sm:$0xff] %v7138
        %7155 = vst [vmem:[%s615 + $0x10] sm:$0xff] %v7139
        %7156 = vst [vmem:[%s615 + $0x18] sm:$0xff] %v7140
        %7157 = vst [vmem:[%s615 + $0x20] sm:$0xff] %v7141
        %7158 = vst [vmem:[%s615 + $0x28] sm:$0xff] %v7142
        %7159 = vst [vmem:[%s615 + $0x30] sm:$0xff] %v7143
        %7160 = vst [vmem:[%s615 + $0x38] sm:$0xff] %v7144
        %7161 = vst [vmem:[%s615 + $0x40] sm:$0xff] %v7145
        %7162 = vst [vmem:[%s615 + $0x48] sm:$0xff] %v7146
        %7163 = vst [vmem:[%s615 + $0x50] sm:$0xff] %v7147
        %7164 = vst [vmem:[%s615 + $0x58] sm:$0xff] %v7148
        %7165 = vst [vmem:[%s615 + $0x60] sm:$0xff] %v7149
        %7166 = vst [vmem:[%s615 + $0x68] sm:$0xff] %v7150
        %7167 = vst [vmem:[%s615 + $0x70] sm:$0xff] %v7151
        %7168 = vst [vmem:[%s615 + $0x78] sm:$0xff] %v7152
        %s7169 = sand.u32 %s343, 1
        %s7170 = scalar_lea.sflag [#allocation5], %s7169
        %s7171 = sand.u32 %s343, 1
        %s7172 = smul.addr %s7171, 128
        %s7173 = scalar_lea.vmem [#allocation17], %s7172
        // Predicated region
        $region105: #{tpu_custom_call.1} parent=71 // pred_check
          %p7174 = pneg %p353
        $region106: #{tpu_custom_call.1} parent=71 // pred_check_branch
          %7176 = sbr.rel (%p7174) target = $region108
        $region107: #{tpu_custom_call.1} parent=71 // pred_region
          %s7177 = smul.u32 16, %s41
          %7179 = vsyncadd %s7170, 0
          %s7180 = smul.addr %s40, 32
          %s7181 = sadd.s32 %s7177, %s7180
          %s7182 = smul.addr %s7181, 8
          %s7183 = scalar_lea.hbm %s13, %s7182
          %s7184 = sshll.u32 %s7173, 4
          %s7185 = int_to_ptr.vmem [resolvable:$true] %s7184
          %s7186 = sshll.u32 %s7183, 4
          %s7187 = int_to_ptr.hbm [resolvable:$true] %s7186
          %7192 = dma.vmem_to_hbm [thread:$0]  %s7185, 2048, %s7187, %s7170, 128, 128, 8
        $region108: #{tpu_custom_call.1} parent=71 // pred_fallthru
          _
      $region72: #{tpu_custom_call.1} parent=5 // pred_fallthru
        _
      %p7193 = scmp.le.s32.totalorder 2, %s31
      // Predicated region
      $region109: #{tpu_custom_call.1} parent=5 // pred_check
        %p7194 = pneg %p7193
      $region110: #{tpu_custom_call.1} parent=5 // pred_check_branch
        %7196 = sbr.rel (%p7194) target = $region112
      $region111: #{tpu_custom_call.1} parent=5 // pred_region
        %s7197 = ssub.s32 %s31, 2
        // Predicated region
        $region113: #{tpu_custom_call.1} parent=111 // pred_check
          %p7198 = pneg %p359
        $region114: #{tpu_custom_call.1} parent=111 // pred_check_branch
          %7200 = sbr.rel (%p7198) target = $region116
        $region115: #{tpu_custom_call.1} parent=111 // pred_region
          %s7201 = sand.u32 %s344, 1
          %s7202 = scalar_lea.sflag [#allocation5], %s7201
          %s7203 = sand.u32 %s344, 1
          %s7204 = smul.addr %s7203, 128
          %s7205 = scalar_lea.vmem [#allocation17], %s7204
          %7207 = dma.done %s7202, 2048
        $region116: #{tpu_custom_call.1} parent=111 // pred_fallthru
          _
      $region112: #{tpu_custom_call.1} parent=5 // pred_fallthru
        _
    $region6: #{tpu_custom_call.1} parent=1 // loop_footer
      %s35 = sadd.s32 1, %s31
    $region7: #{tpu_custom_call.1} parent=1 // loop_footer_branch
      %30 = sbr.rel target = $region3
    $region8: #{tpu_custom_call.1} parent=1 // loop_exit
      _
    %7208 = vsyncpa [#allocation4], 1
    %s7209 = scalar_lea.sflag [#allocation4], 1
    %7210 = vsyncpa %s7209, 1
    %7211 = vsyncpa [#allocation7], 1
    %s7212 = scalar_lea.sflag [#allocation7], 1
    %7213 = vsyncpa %s7212, 1
    %7214 = vsyncpa [#allocation10], 1
    %7215 = vsyncpa [#allocation13], 1
    %7216 = vsyncpa [#allocation16], 1
    %7217 = vsyncpa [#allocation5], 1
    %s7218 = scalar_lea.sflag [#allocation5], 1
    %7219 = vsyncpa %s7218, 1

</llo_original>
